<compile_context>
chip_gen: v5e
topology: v5e:2x2
jax: 0.10.0
libtpu: 0.0.40
codegen_flags: <defaults>
</compile_context>

<pallas_src>
import functools

import jax
import jax.numpy as jnp
import numpy as np
from jax import lax
from jax.experimental import pallas as pl
from jax.experimental.pallas import tpu as pltpu

EPS = 1e-5


def _double_conv3d_kernel(
    x_ref,      # (N*Cin, V)          f32  flat input rows, V = D*H*W on lanes
    mask_ref,   # (27, V)             f32  per-tap validity masks (1 = in-bounds)
    w1_ref,     # (Cout, 27*Cin)      f32  conv1 weight slab (col idx = k*Cin+ci)
    g1_ref,     # (Cout, 1)           f32  BN1 gamma
    be1_ref,    # (Cout, 1)           f32  BN1 beta
    w2_ref,     # (Cout, 27*Cout)     f32  conv2 weight slab
    g2_ref,     # (Cout, 1)           f32  BN2 gamma
    be2_ref,    # (Cout, 1)           f32  BN2 beta
    out_ref,    # (N, Cout, V)        f32  lane-dense output
    xm_ref,     # scratch (N*Cin, 2*margin+V)     f32  margin-padded input rows
    am_ref,     # scratch (Cout, N*(2*margin+V))  f32  margin-padded ReLU(BN1)
    col_ref,    # scratch (27*Cmax, N*V)          f32  shared im2col slab
    *,
    N, D, H, W, Cin, Cout, margin,
):
    V = D * H * W
    HW = H * W
    SEG = 2 * margin + V
    inv_cnt = 1.0 / (N * V)

    # flat-index shift of tap (kd, kh, kw); k = kd*9 + kh*3 + kw.  |shift| <= margin.
    shifts = [(kd - 1) * HW + (kh - 1) * W + (kw - 1)
              for kd in range(3) for kh in range(3) for kw in range(3)]

    def build_col(read_tap, C):
        # 27*N dense (C, V) lane slices.  The per-tap mask zeroes positions whose
        # flat shift crossed a D/H/W boundary (== the conv's implicit zero pad),
        # so reads from the zeroed margins are never used with weight != 0.
        for n in range(N):
            for k in range(27):
                m = mask_ref[k:k + 1, :]                       # (1, V)
                col_ref[k * C:(k + 1) * C, n * V:(n + 1) * V] = (
                    read_tap(n, shifts[k]) * m)

    def batch_norm_relu(y, g, be):
        # training-mode BN over (N, D, H, W) per channel; biased variance.
        # NOTE: E[x^2] - mean^2 in f32 is fine at these scales (see TODO header).
        s = jnp.sum(y, axis=1, keepdims=True)
        ss = jnp.sum(y * y, axis=1, keepdims=True)
        mean = s * inv_cnt
        var = ss * inv_cnt - mean * mean
        scale = lax.rsqrt(var + EPS) * g
        shift = be - mean * scale
        return jnp.maximum(y * scale + shift, 0.0)

    # ---- stage raw input into the margin buffer: one flat memset + one dense copy
    xm_ref[...] = jnp.zeros(xm_ref.shape, jnp.float32)
    xm_ref[:, margin:margin + V] = x_ref[...]

    # ---------------- conv1: ONE matmul (Cout, 27*Cin) @ (27*Cin, N*V) ----------
    build_col(
        lambda n, s: xm_ref[n * Cin:(n + 1) * Cin, margin + s:margin + s + V],
        Cin)
    y1 = jnp.dot(w1_ref[...], col_ref[0:27 * Cin, :],
                 preferred_element_type=jnp.float32)           # (Cout, N*V) f32
    a1 = batch_norm_relu(y1, g1_ref[...], be1_ref[...])        # lane-dense BN1+ReLU

    # ---- stage conv2 input: flat memset (zero margins) + N dense segment copies
    am_ref[...] = jnp.zeros(am_ref.shape, jnp.float32)
    for n in range(N):
        am_ref[:, n * SEG + margin:n * SEG + margin + V] = a1[:, n * V:(n + 1) * V]

    # ---------------- conv2: ONE matmul (Cout, 27*Cout) @ (27*Cout, N*V) --------
    build_col(
        lambda n, s: am_ref[:, n * SEG + margin + s:n * SEG + margin + s + V],
        Cout)
    y2 = jnp.dot(w2_ref[...], col_ref[0:27 * Cout, :],
                 preferred_element_type=jnp.float32)           # (Cout, N*V)
    res = batch_norm_relu(y2, g2_ref[...], be2_ref[...])

    # ---------------- lane-dense output stores (Cout x V per sample) ------------
    for n in range(N):
        out_ref[n] = res[:, n * V:(n + 1) * V]


def double_conv3d(x_ncdhw, params):
    """x_ncdhw: (N, Cin, D, H, W) float32. Returns (N, Cout, D, H, W)."""
    w1, b1, g1, be1, w2, b2, g2, be2 = params   # b1/b2 unused: cancelled by train-mode BN
    N, Cin, D, H, W = x_ncdhw.shape
    Cout = w1.shape[-1]
    V = D * H * W
    Cmax = max(Cin, Cout)

    # lane margin so every tap's shifted slice stays in-bounds (|shift| <= HW+W+1)
    margin = ((H * W + W + 1 + 127) // 128) * 128
    seg = 2 * margin + V

    # pure reshape (no pad, no transpose): rows = (n, ci), lanes = flat (d, h, w)
    x_rows = x_ncdhw.reshape(N * Cin, V)

    # per-tap validity masks: 1 where (d+kd-1, h+kh-1, w+kw-1) is inside the volume
    d_i = np.arange(D)[:, None, None]
    h_i = np.arange(H)[None, :, None]
    w_i = np.arange(W)[None, None, :]
    masks = np.zeros((27, V), np.float32)
    for kd in range(3):
        for kh in range(3):
            for kw in range(3):
                ok = ((d_i + kd - 1 >= 0) & (d_i + kd - 1 < D) &
                      (h_i + kh - 1 >= 0) & (h_i + kh - 1 < H) &
                      (w_i + kw - 1 >= 0) & (w_i + kw - 1 < W))
                masks[kd * 9 + kh * 3 + kw] = ok.reshape(-1)
    masks = jnp.asarray(masks)

    # im2col weight slabs: (Cout, 27*C), column index k*C + ci, k = kd*9 + kh*3 + kw
    w1_slab = jnp.transpose(w1.reshape(27 * Cin, Cout))
    w2_slab = jnp.transpose(w2.reshape(27 * Cout, Cout))
    g1c, be1c = g1.reshape(Cout, 1), be1.reshape(Cout, 1)
    g2c, be2c = g2.reshape(Cout, 1), be2.reshape(Cout, 1)

    kernel = functools.partial(
        _double_conv3d_kernel,
        N=N, D=D, H=H, W=W, Cin=Cin, Cout=Cout, margin=margin)

    # size the scoped VMEM budget from the actual buffers; cap well under v7x's
    # 64 MiB physical VMEM per TensorCore
    buf_bytes = 4 * (
        x_rows.size + masks.size + w1_slab.size + w2_slab.size + 4 * Cout
        + N * Cout * V                     # output
        + N * Cin * seg                    # xm scratch
        + Cout * N * seg                   # am scratch
        + 27 * Cmax * N * V)               # shared im2col slab
    vmem_limit = int(min(56 << 20, max(16 << 20, 2 * buf_bytes)))

    vmem_spec = pl.BlockSpec(memory_space=pltpu.MemorySpace.VMEM)
    out = pl.pallas_call(
        kernel,
        out_shape=jax.ShapeDtypeStruct((N, Cout, V), jnp.float32),
        in_specs=[vmem_spec] * 8,
        out_specs=vmem_spec,
        scratch_shapes=[
            pltpu.VMEM((N * Cin, seg), jnp.float32),
            pltpu.VMEM((Cout, N * seg), jnp.float32),
            pltpu.VMEM((27 * Cmax, N * V), jnp.float32),
        ],
        compiler_params=pltpu.CompilerParams(vmem_limit_bytes=vmem_limit),
    )(x_rows, masks, w1_slab, g1c, be1c, w2_slab, g2c, be2c)

    # lane-dense (N, Cout, V) -> NCDHW is a pure reshape (no transpose, no slice)
    return out.reshape(N, Cout, D, H, W)


def _reference(x_ncdhw, params):
    """Pure-JAX reference (matches PyTorch training-mode forward, f32 HIGHEST)."""
    w1, b1, g1, be1, w2, b2, g2, be2 = params
    Cout = w1.shape[-1]

    def conv_bn_relu(x, w27, b, g, be):
        cin = w27.shape[1]
        w_dhwio = w27.reshape(3, 3, 3, cin, Cout)
        y = lax.conv_general_dilated(
            x, w_dhwio, window_strides=(1, 1, 1), padding=[(1, 1)] * 3,
            dimension_numbers=("NCDHW", "DHWIO", "NCDHW"),
            precision=lax.Precision.HIGHEST,
        )
        y = y + b.reshape(1, Cout, 1, 1, 1)
        mean = jnp.mean(y, axis=(0, 2, 3, 4), keepdims=True)
        var = jnp.mean((y - mean) ** 2, axis=(0, 2, 3, 4), keepdims=True)
        y = (y - mean) * lax.rsqrt(var + EPS)
        y = y * g.reshape(1, Cout, 1, 1, 1) + be.reshape(1, Cout, 1, 1, 1)
        return jnp.maximum(y, 0.0)

    h = conv_bn_relu(x_ncdhw, w1, b1, g1, be1)
    return conv_bn_relu(h, w2, b2, g2, be2)


def _init_params(key, in_ch, out_ch):
    ks = jax.random.split(key, 8)
    # conv weights stored as (27, Cin, Cout) == (kd*9 + kh*3 + kw, Cin, Cout)
    w1 = 0.1 * jax.random.normal(ks[0], (27, in_ch, out_ch), jnp.float32)
    b1 = 0.1 * jax.random.normal(ks[1], (1, out_ch), jnp.float32)
    g1 = 1.0 + 0.1 * jax.random.normal(ks[2], (1, out_ch), jnp.float32)
    be1 = 0.1 * jax.random.normal(ks[3], (1, out_ch), jnp.float32)
    w2 = 0.1 * jax.random.normal(ks[4], (27, out_ch, out_ch), jnp.float32)
    b2 = 0.1 * jax.random.normal(ks[5], (1, out_ch), jnp.float32)
    g2 = 1.0 + 0.1 * jax.random.normal(ks[6], (1, out_ch), jnp.float32)
    be2 = 0.1 * jax.random.normal(ks[7], (1, out_ch), jnp.float32)
    return (w1, b1, g1, be1, w2, b2, g2, be2)


if __name__ == "__main__":
    key = jax.random.PRNGKey(0)
    k_x, k_p = jax.random.split(key)

    N, IN_CH, OUT_CH, D, H, W = 2, 4, 8, 8, 8, 8
    x = jax.random.normal(k_x, (N, IN_CH, D, H, W), jnp.float32)
    params = _init_params(k_p, IN_CH, OUT_CH)

    out = double_conv3d(x, params)
    out = jax.block_until_ready(out)

    ref = jax.block_until_ready(_reference(x, params))
    assert out.shape == (N, OUT_CH, D, H, W)
    # all-f32 matmuls (no bf16 operands anymore): expected error is ~1e-5;
    # tolerance leaves comfortable headroom over MXU multi-pass f32 rounding.
    np.testing.assert_allclose(np.asarray(out), np.asarray(ref), rtol=2e-3, atol=2e-3)

    print("KERNEL_OK")
</pallas_src>

<mosaic_0001>
module attributes {stable_mosaic.version = 11 : i64} {
  func.func @_double_conv3d_kernel(%arg0: memref<8x512xf32, #tpu.memory_space<vmem>>, %arg1: memref<27x512xf32, #tpu.memory_space<vmem>>, %arg2: memref<8x108xf32, #tpu.memory_space<vmem>>, %arg3: memref<8x1xf32, #tpu.memory_space<vmem>>, %arg4: memref<8x1xf32, #tpu.memory_space<vmem>>, %arg5: memref<8x216xf32, #tpu.memory_space<vmem>>, %arg6: memref<8x1xf32, #tpu.memory_space<vmem>>, %arg7: memref<8x1xf32, #tpu.memory_space<vmem>>, %arg8: memref<2x8x512xf32, #tpu.memory_space<vmem>>, %arg9: memref<8x768xf32, #tpu.memory_space<vmem>>, %arg10: memref<8x1536xf32, #tpu.memory_space<vmem>>, %arg11: memref<216x1024xf32, #tpu.memory_space<vmem>>) attributes {dimension_semantics = [], scalar_prefetch = 0 : i64, scratch_operands = 3 : i64, tpu.core_type = #tpu.core_type<tc>} {
    %cst = arith.constant 0.000000e+00 : f32
    %0 = vector.broadcast %cst : f32 to vector<8x768xf32>
    %c0 = arith.constant 0 : index
    %c0_0 = arith.constant 0 : index
    %1 = vector.load %arg9[%c0, %c0_0] : memref<8x768xf32, #tpu.memory_space<vmem>>, vector<8x768xf32>
    tpu.vector_store %arg9[%c0, %c0_0], %0 {strides = array<i32>} : memref<8x768xf32, #tpu.memory_space<vmem>>, vector<8x768xf32>,
    %c0_1 = arith.constant 0 : index
    %c0_2 = arith.constant 0 : index
    %2 = vector.load %arg0[%c0_1, %c0_2] : memref<8x512xf32, #tpu.memory_space<vmem>>, vector<8x512xf32>
    %c0_3 = arith.constant 0 : index
    %c128 = arith.constant 128 : index
    %3 = vector.load %arg9[%c0_3, %c128] : memref<8x768xf32, #tpu.memory_space<vmem>>, vector<8x512xf32>
    tpu.vector_store %arg9[%c0_3, %c128], %2 {strides = array<i32>} : memref<8x768xf32, #tpu.memory_space<vmem>>, vector<8x512xf32>,
    %c0_4 = arith.constant 0 : index
    %c0_5 = arith.constant 0 : index
    %4 = vector.load %arg1[%c0_4, %c0_5] : memref<27x512xf32, #tpu.memory_space<vmem>>, vector<1x512xf32>
    %c0_6 = arith.constant 0 : index
    %c55 = arith.constant 55 : index
    %5 = vector.load %arg9[%c0_6, %c55] : memref<8x768xf32, #tpu.memory_space<vmem>>, vector<4x512xf32>
    %6 = vector.broadcast %4 : vector<1x512xf32> to vector<4x512xf32>
    %7 = arith.mulf %5, %6 : vector<4x512xf32>
    %c0_7 = arith.constant 0 : index
    %c0_8 = arith.constant 0 : index
    %8 = vector.load %arg11[%c0_7, %c0_8] : memref<216x1024xf32, #tpu.memory_space<vmem>>, vector<4x512xf32>
    tpu.vector_store %arg11[%c0_7, %c0_8], %7 {strides = array<i32>} : memref<216x1024xf32, #tpu.memory_space<vmem>>, vector<4x512xf32>,
    %c1 = arith.constant 1 : index
    %c0_9 = arith.constant 0 : index
    %9 = vector.load %arg1[%c1, %c0_9] : memref<27x512xf32, #tpu.memory_space<vmem>>, vector<1x512xf32>
    %c0_10 = arith.constant 0 : index
    %c56 = arith.constant 56 : index
    %10 = vector.load %arg9[%c0_10, %c56] : memref<8x768xf32, #tpu.memory_space<vmem>>, vector<4x512xf32>
    %11 = vector.broadcast %9 : vector<1x512xf32> to vector<4x512xf32>
    %12 = arith.mulf %10, %11 : vector<4x512xf32>
    %c4 = arith.constant 4 : index
    %c0_11 = arith.constant 0 : index
    %13 = vector.load %arg11[%c4, %c0_11] : memref<216x1024xf32, #tpu.memory_space<vmem>>, vector<4x512xf32>
    tpu.vector_store %arg11[%c4, %c0_11], %12 {strides = array<i32>} : memref<216x1024xf32, #tpu.memory_space<vmem>>, vector<4x512xf32>,
    %c2 = arith.constant 2 : index
    %c0_12 = arith.constant 0 : index
    %14 = vector.load %arg1[%c2, %c0_12] : memref<27x512xf32, #tpu.memory_space<vmem>>, vector<1x512xf32>
    %c0_13 = arith.constant 0 : index
    %c57 = arith.constant 57 : index
    %15 = vector.load %arg9[%c0_13, %c57] : memref<8x768xf32, #tpu.memory_space<vmem>>, vector<4x512xf32>
    %16 = vector.broadcast %14 : vector<1x512xf32> to vector<4x512xf32>
    %17 = arith.mulf %15, %16 : vector<4x512xf32>
    %c8 = arith.constant 8 : index
    %c0_14 = arith.constant 0 : index
    %18 = vector.load %arg11[%c8, %c0_14] : memref<216x1024xf32, #tpu.memory_space<vmem>>, vector<4x512xf32>
    tpu.vector_store %arg11[%c8, %c0_14], %17 {strides = array<i32>} : memref<216x1024xf32, #tpu.memory_space<vmem>>, vector<4x512xf32>,
    %c3 = arith.constant 3 : index
    %c0_15 = arith.constant 0 : index
    %19 = vector.load %arg1[%c3, %c0_15] : memref<27x512xf32, #tpu.memory_space<vmem>>, vector<1x512xf32>
    %c0_16 = arith.constant 0 : index
    %c63 = arith.constant 63 : index
    %20 = vector.load %arg9[%c0_16, %c63] : memref<8x768xf32, #tpu.memory_space<vmem>>, vector<4x512xf32>
    %21 = vector.broadcast %19 : vector<1x512xf32> to vector<4x512xf32>
    %22 = arith.mulf %20, %21 : vector<4x512xf32>
    %c12 = arith.constant 12 : index
    %c0_17 = arith.constant 0 : index
    %23 = vector.load %arg11[%c12, %c0_17] : memref<216x1024xf32, #tpu.memory_space<vmem>>, vector<4x512xf32>
    tpu.vector_store %arg11[%c12, %c0_17], %22 {strides = array<i32>} : memref<216x1024xf32, #tpu.memory_space<vmem>>, vector<4x512xf32>,
    %c4_18 = arith.constant 4 : index
    %c0_19 = arith.constant 0 : index
    %24 = vector.load %arg1[%c4_18, %c0_19] : memref<27x512xf32, #tpu.memory_space<vmem>>, vector<1x512xf32>
    %c0_20 = arith.constant 0 : index
    %c64 = arith.constant 64 : index
    %25 = vector.load %arg9[%c0_20, %c64] : memref<8x768xf32, #tpu.memory_space<vmem>>, vector<4x512xf32>
    %26 = vector.broadcast %24 : vector<1x512xf32> to vector<4x512xf32>
    %27 = arith.mulf %25, %26 : vector<4x512xf32>
    %c16 = arith.constant 16 : index
    %c0_21 = arith.constant 0 : index
    %28 = vector.load %arg11[%c16, %c0_21] : memref<216x1024xf32, #tpu.memory_space<vmem>>, vector<4x512xf32>
    tpu.vector_store %arg11[%c16, %c0_21], %27 {strides = array<i32>} : memref<216x1024xf32, #tpu.memory_space<vmem>>, vector<4x512xf32>,
    %c5 = arith.constant 5 : index
    %c0_22 = arith.constant 0 : index
    %29 = vector.load %arg1[%c5, %c0_22] : memref<27x512xf32, #tpu.memory_space<vmem>>, vector<1x512xf32>
    %c0_23 = arith.constant 0 : index
    %c65 = arith.constant 65 : index
    %30 = vector.load %arg9[%c0_23, %c65] : memref<8x768xf32, #tpu.memory_space<vmem>>, vector<4x512xf32>
    %31 = vector.broadcast %29 : vector<1x512xf32> to vector<4x512xf32>
    %32 = arith.mulf %30, %31 : vector<4x512xf32>
    %c20 = arith.constant 20 : index
    %c0_24 = arith.constant 0 : index
    %33 = vector.load %arg11[%c20, %c0_24] : memref<216x1024xf32, #tpu.memory_space<vmem>>, vector<4x512xf32>
    tpu.vector_store %arg11[%c20, %c0_24], %32 {strides = array<i32>} : memref<216x1024xf32, #tpu.memory_space<vmem>>, vector<4x512xf32>,
    %c6 = arith.constant 6 : index
    %c0_25 = arith.constant 0 : index
    %34 = vector.load %arg1[%c6, %c0_25] : memref<27x512xf32, #tpu.memory_space<vmem>>, vector<1x512xf32>
    %c0_26 = arith.constant 0 : index
    %c71 = arith.constant 71 : index
    %35 = vector.load %arg9[%c0_26, %c71] : memref<8x768xf32, #tpu.memory_space<vmem>>, vector<4x512xf32>
    %36 = vector.broadcast %34 : vector<1x512xf32> to vector<4x512xf32>
    %37 = arith.mulf %35, %36 : vector<4x512xf32>
    %c24 = arith.constant 24 : index
    %c0_27 = arith.constant 0 : index
    %38 = vector.load %arg11[%c24, %c0_27] : memref<216x1024xf32, #tpu.memory_space<vmem>>, vector<4x512xf32>
    tpu.vector_store %arg11[%c24, %c0_27], %37 {strides = array<i32>} : memref<216x1024xf32, #tpu.memory_space<vmem>>, vector<4x512xf32>,
    %c7 = arith.constant 7 : index
    %c0_28 = arith.constant 0 : index
    %39 = vector.load %arg1[%c7, %c0_28] : memref<27x512xf32, #tpu.memory_space<vmem>>, vector<1x512xf32>
    %c0_29 = arith.constant 0 : index
    %c72 = arith.constant 72 : index
    %40 = vector.load %arg9[%c0_29, %c72] : memref<8x768xf32, #tpu.memory_space<vmem>>, vector<4x512xf32>
    %41 = vector.broadcast %39 : vector<1x512xf32> to vector<4x512xf32>
    %42 = arith.mulf %40, %41 : vector<4x512xf32>
    %c28 = arith.constant 28 : index
    %c0_30 = arith.constant 0 : index
    %43 = vector.load %arg11[%c28, %c0_30] : memref<216x1024xf32, #tpu.memory_space<vmem>>, vector<4x512xf32>
    tpu.vector_store %arg11[%c28, %c0_30], %42 {strides = array<i32>} : memref<216x1024xf32, #tpu.memory_space<vmem>>, vector<4x512xf32>,
    %c8_31 = arith.constant 8 : index
    %c0_32 = arith.constant 0 : index
    %44 = vector.load %arg1[%c8_31, %c0_32] : memref<27x512xf32, #tpu.memory_space<vmem>>, vector<1x512xf32>
    %c0_33 = arith.constant 0 : index
    %c73 = arith.constant 73 : index
    %45 = vector.load %arg9[%c0_33, %c73] : memref<8x768xf32, #tpu.memory_space<vmem>>, vector<4x512xf32>
    %46 = vector.broadcast %44 : vector<1x512xf32> to vector<4x512xf32>
    %47 = arith.mulf %45, %46 : vector<4x512xf32>
    %c32 = arith.constant 32 : index
    %c0_34 = arith.constant 0 : index
    %48 = vector.load %arg11[%c32, %c0_34] : memref<216x1024xf32, #tpu.memory_space<vmem>>, vector<4x512xf32>
    tpu.vector_store %arg11[%c32, %c0_34], %47 {strides = array<i32>} : memref<216x1024xf32, #tpu.memory_space<vmem>>, vector<4x512xf32>,
    %c9 = arith.constant 9 : index
    %c0_35 = arith.constant 0 : index
    %49 = vector.load %arg1[%c9, %c0_35] : memref<27x512xf32, #tpu.memory_space<vmem>>, vector<1x512xf32>
    %c0_36 = arith.constant 0 : index
    %c119 = arith.constant 119 : index
    %50 = vector.load %arg9[%c0_36, %c119] : memref<8x768xf32, #tpu.memory_space<vmem>>, vector<4x512xf32>
    %51 = vector.broadcast %49 : vector<1x512xf32> to vector<4x512xf32>
    %52 = arith.mulf %50, %51 : vector<4x512xf32>
    %c36 = arith.constant 36 : index
    %c0_37 = arith.constant 0 : index
    %53 = vector.load %arg11[%c36, %c0_37] : memref<216x1024xf32, #tpu.memory_space<vmem>>, vector<4x512xf32>
    tpu.vector_store %arg11[%c36, %c0_37], %52 {strides = array<i32>} : memref<216x1024xf32, #tpu.memory_space<vmem>>, vector<4x512xf32>,
    %c10 = arith.constant 10 : index
    %c0_38 = arith.constant 0 : index
    %54 = vector.load %arg1[%c10, %c0_38] : memref<27x512xf32, #tpu.memory_space<vmem>>, vector<1x512xf32>
    %c0_39 = arith.constant 0 : index
    %c120 = arith.constant 120 : index
    %55 = vector.load %arg9[%c0_39, %c120] : memref<8x768xf32, #tpu.memory_space<vmem>>, vector<4x512xf32>
    %56 = vector.broadcast %54 : vector<1x512xf32> to vector<4x512xf32>
    %57 = arith.mulf %55, %56 : vector<4x512xf32>
    %c40 = arith.constant 40 : index
    %c0_40 = arith.constant 0 : index
    %58 = vector.load %arg11[%c40, %c0_40] : memref<216x1024xf32, #tpu.memory_space<vmem>>, vector<4x512xf32>
    tpu.vector_store %arg11[%c40, %c0_40], %57 {strides = array<i32>} : memref<216x1024xf32, #tpu.memory_space<vmem>>, vector<4x512xf32>,
    %c11 = arith.constant 11 : index
    %c0_41 = arith.constant 0 : index
    %59 = vector.load %arg1[%c11, %c0_41] : memref<27x512xf32, #tpu.memory_space<vmem>>, vector<1x512xf32>
    %c0_42 = arith.constant 0 : index
    %c121 = arith.constant 121 : index
    %60 = vector.load %arg9[%c0_42, %c121] : memref<8x768xf32, #tpu.memory_space<vmem>>, vector<4x512xf32>
    %61 = vector.broadcast %59 : vector<1x512xf32> to vector<4x512xf32>
    %62 = arith.mulf %60, %61 : vector<4x512xf32>
    %c44 = arith.constant 44 : index
    %c0_43 = arith.constant 0 : index
    %63 = vector.load %arg11[%c44, %c0_43] : memref<216x1024xf32, #tpu.memory_space<vmem>>, vector<4x512xf32>
    tpu.vector_store %arg11[%c44, %c0_43], %62 {strides = array<i32>} : memref<216x1024xf32, #tpu.memory_space<vmem>>, vector<4x512xf32>,
    %c12_44 = arith.constant 12 : index
    %c0_45 = arith.constant 0 : index
    %64 = vector.load %arg1[%c12_44, %c0_45] : memref<27x512xf32, #tpu.memory_space<vmem>>, vector<1x512xf32>
    %c0_46 = arith.constant 0 : index
    %c127 = arith.constant 127 : index
    %65 = vector.load %arg9[%c0_46, %c127] : memref<8x768xf32, #tpu.memory_space<vmem>>, vector<4x512xf32>
    %66 = vector.broadcast %64 : vector<1x512xf32> to vector<4x512xf32>
    %67 = arith.mulf %65, %66 : vector<4x512xf32>
    %c48 = arith.constant 48 : index
    %c0_47 = arith.constant 0 : index
    %68 = vector.load %arg11[%c48, %c0_47] : memref<216x1024xf32, #tpu.memory_space<vmem>>, vector<4x512xf32>
    tpu.vector_store %arg11[%c48, %c0_47], %67 {strides = array<i32>} : memref<216x1024xf32, #tpu.memory_space<vmem>>, vector<4x512xf32>,
    %c13 = arith.constant 13 : index
    %c0_48 = arith.constant 0 : index
    %69 = vector.load %arg1[%c13, %c0_48] : memref<27x512xf32, #tpu.memory_space<vmem>>, vector<1x512xf32>
    %c0_49 = arith.constant 0 : index
    %c128_50 = arith.constant 128 : index
    %70 = vector.load %arg9[%c0_49, %c128_50] : memref<8x768xf32, #tpu.memory_space<vmem>>, vector<4x512xf32>
    %71 = vector.broadcast %69 : vector<1x512xf32> to vector<4x512xf32>
    %72 = arith.mulf %70, %71 : vector<4x512xf32>
    %c52 = arith.constant 52 : index
    %c0_51 = arith.constant 0 : index
    %73 = vector.load %arg11[%c52, %c0_51] : memref<216x1024xf32, #tpu.memory_space<vmem>>, vector<4x512xf32>
    tpu.vector_store %arg11[%c52, %c0_51], %72 {strides = array<i32>} : memref<216x1024xf32, #tpu.memory_space<vmem>>, vector<4x512xf32>,
    %c14 = arith.constant 14 : index
    %c0_52 = arith.constant 0 : index
    %74 = vector.load %arg1[%c14, %c0_52] : memref<27x512xf32, #tpu.memory_space<vmem>>, vector<1x512xf32>
    %c0_53 = arith.constant 0 : index
    %c129 = arith.constant 129 : index
    %75 = vector.load %arg9[%c0_53, %c129] : memref<8x768xf32, #tpu.memory_space<vmem>>, vector<4x512xf32>
    %76 = vector.broadcast %74 : vector<1x512xf32> to vector<4x512xf32>
    %77 = arith.mulf %75, %76 : vector<4x512xf32>
    %c56_54 = arith.constant 56 : index
    %c0_55 = arith.constant 0 : index
    %78 = vector.load %arg11[%c56_54, %c0_55] : memref<216x1024xf32, #tpu.memory_space<vmem>>, vector<4x512xf32>
    tpu.vector_store %arg11[%c56_54, %c0_55], %77 {strides = array<i32>} : memref<216x1024xf32, #tpu.memory_space<vmem>>, vector<4x512xf32>,
    %c15 = arith.constant 15 : index
    %c0_56 = arith.constant 0 : index
    %79 = vector.load %arg1[%c15, %c0_56] : memref<27x512xf32, #tpu.memory_space<vmem>>, vector<1x512xf32>
    %c0_57 = arith.constant 0 : index
    %c135 = arith.constant 135 : index
    %80 = vector.load %arg9[%c0_57, %c135] : memref<8x768xf32, #tpu.memory_space<vmem>>, vector<4x512xf32>
    %81 = vector.broadcast %79 : vector<1x512xf32> to vector<4x512xf32>
    %82 = arith.mulf %80, %81 : vector<4x512xf32>
    %c60 = arith.constant 60 : index
    %c0_58 = arith.constant 0 : index
    %83 = vector.load %arg11[%c60, %c0_58] : memref<216x1024xf32, #tpu.memory_space<vmem>>, vector<4x512xf32>
    tpu.vector_store %arg11[%c60, %c0_58], %82 {strides = array<i32>} : memref<216x1024xf32, #tpu.memory_space<vmem>>, vector<4x512xf32>,
    %c16_59 = arith.constant 16 : index
    %c0_60 = arith.constant 0 : index
    %84 = vector.load %arg1[%c16_59, %c0_60] : memref<27x512xf32, #tpu.memory_space<vmem>>, vector<1x512xf32>
    %c0_61 = arith.constant 0 : index
    %c136 = arith.constant 136 : index
    %85 = vector.load %arg9[%c0_61, %c136] : memref<8x768xf32, #tpu.memory_space<vmem>>, vector<4x512xf32>
    %86 = vector.broadcast %84 : vector<1x512xf32> to vector<4x512xf32>
    %87 = arith.mulf %85, %86 : vector<4x512xf32>
    %c64_62 = arith.constant 64 : index
    %c0_63 = arith.constant 0 : index
    %88 = vector.load %arg11[%c64_62, %c0_63] : memref<216x1024xf32, #tpu.memory_space<vmem>>, vector<4x512xf32>
    tpu.vector_store %arg11[%c64_62, %c0_63], %87 {strides = array<i32>} : memref<216x1024xf32, #tpu.memory_space<vmem>>, vector<4x512xf32>,
    %c17 = arith.constant 17 : index
    %c0_64 = arith.constant 0 : index
    %89 = vector.load %arg1[%c17, %c0_64] : memref<27x512xf32, #tpu.memory_space<vmem>>, vector<1x512xf32>
    %c0_65 = arith.constant 0 : index
    %c137 = arith.constant 137 : index
    %90 = vector.load %arg9[%c0_65, %c137] : memref<8x768xf32, #tpu.memory_space<vmem>>, vector<4x512xf32>
    %91 = vector.broadcast %89 : vector<1x512xf32> to vector<4x512xf32>
    %92 = arith.mulf %90, %91 : vector<4x512xf32>
    %c68 = arith.constant 68 : index
    %c0_66 = arith.constant 0 : index
    %93 = vector.load %arg11[%c68, %c0_66] : memref<216x1024xf32, #tpu.memory_space<vmem>>, vector<4x512xf32>
    tpu.vector_store %arg11[%c68, %c0_66], %92 {strides = array<i32>} : memref<216x1024xf32, #tpu.memory_space<vmem>>, vector<4x512xf32>,
    %c18 = arith.constant 18 : index
    %c0_67 = arith.constant 0 : index
    %94 = vector.load %arg1[%c18, %c0_67] : memref<27x512xf32, #tpu.memory_space<vmem>>, vector<1x512xf32>
    %c0_68 = arith.constant 0 : index
    %c183 = arith.constant 183 : index
    %95 = vector.load %arg9[%c0_68, %c183] : memref<8x768xf32, #tpu.memory_space<vmem>>, vector<4x512xf32>
    %96 = vector.broadcast %94 : vector<1x512xf32> to vector<4x512xf32>
    %97 = arith.mulf %95, %96 : vector<4x512xf32>
    %c72_69 = arith.constant 72 : index
    %c0_70 = arith.constant 0 : index
    %98 = vector.load %arg11[%c72_69, %c0_70] : memref<216x1024xf32, #tpu.memory_space<vmem>>, vector<4x512xf32>
    tpu.vector_store %arg11[%c72_69, %c0_70], %97 {strides = array<i32>} : memref<216x1024xf32, #tpu.memory_space<vmem>>, vector<4x512xf32>,
    %c19 = arith.constant 19 : index
    %c0_71 = arith.constant 0 : index
    %99 = vector.load %arg1[%c19, %c0_71] : memref<27x512xf32, #tpu.memory_space<vmem>>, vector<1x512xf32>
    %c0_72 = arith.constant 0 : index
    %c184 = arith.constant 184 : index
    %100 = vector.load %arg9[%c0_72, %c184] : memref<8x768xf32, #tpu.memory_space<vmem>>, vector<4x512xf32>
    %101 = vector.broadcast %99 : vector<1x512xf32> to vector<4x512xf32>
    %102 = arith.mulf %100, %101 : vector<4x512xf32>
    %c76 = arith.constant 76 : index
    %c0_73 = arith.constant 0 : index
    %103 = vector.load %arg11[%c76, %c0_73] : memref<216x1024xf32, #tpu.memory_space<vmem>>, vector<4x512xf32>
    tpu.vector_store %arg11[%c76, %c0_73], %102 {strides = array<i32>} : memref<216x1024xf32, #tpu.memory_space<vmem>>, vector<4x512xf32>,
    %c20_74 = arith.constant 20 : index
    %c0_75 = arith.constant 0 : index
    %104 = vector.load %arg1[%c20_74, %c0_75] : memref<27x512xf32, #tpu.memory_space<vmem>>, vector<1x512xf32>
    %c0_76 = arith.constant 0 : index
    %c185 = arith.constant 185 : index
    %105 = vector.load %arg9[%c0_76, %c185] : memref<8x768xf32, #tpu.memory_space<vmem>>, vector<4x512xf32>
    %106 = vector.broadcast %104 : vector<1x512xf32> to vector<4x512xf32>
    %107 = arith.mulf %105, %106 : vector<4x512xf32>
    %c80 = arith.constant 80 : index
    %c0_77 = arith.constant 0 : index
    %108 = vector.load %arg11[%c80, %c0_77] : memref<216x1024xf32, #tpu.memory_space<vmem>>, vector<4x512xf32>
    tpu.vector_store %arg11[%c80, %c0_77], %107 {strides = array<i32>} : memref<216x1024xf32, #tpu.memory_space<vmem>>, vector<4x512xf32>,
    %c21 = arith.constant 21 : index
    %c0_78 = arith.constant 0 : index
    %109 = vector.load %arg1[%c21, %c0_78] : memref<27x512xf32, #tpu.memory_space<vmem>>, vector<1x512xf32>
    %c0_79 = arith.constant 0 : index
    %c191 = arith.constant 191 : index
    %110 = vector.load %arg9[%c0_79, %c191] : memref<8x768xf32, #tpu.memory_space<vmem>>, vector<4x512xf32>
    %111 = vector.broadcast %109 : vector<1x512xf32> to vector<4x512xf32>
    %112 = arith.mulf %110, %111 : vector<4x512xf32>
    %c84 = arith.constant 84 : index
    %c0_80 = arith.constant 0 : index
    %113 = vector.load %arg11[%c84, %c0_80] : memref<216x1024xf32, #tpu.memory_space<vmem>>, vector<4x512xf32>
    tpu.vector_store %arg11[%c84, %c0_80], %112 {strides = array<i32>} : memref<216x1024xf32, #tpu.memory_space<vmem>>, vector<4x512xf32>,
    %c22 = arith.constant 22 : index
    %c0_81 = arith.constant 0 : index
    %114 = vector.load %arg1[%c22, %c0_81] : memref<27x512xf32, #tpu.memory_space<vmem>>, vector<1x512xf32>
    %c0_82 = arith.constant 0 : index
    %c192 = arith.constant 192 : index
    %115 = vector.load %arg9[%c0_82, %c192] : memref<8x768xf32, #tpu.memory_space<vmem>>, vector<4x512xf32>
    %116 = vector.broadcast %114 : vector<1x512xf32> to vector<4x512xf32>
    %117 = arith.mulf %115, %116 : vector<4x512xf32>
    %c88 = arith.constant 88 : index
    %c0_83 = arith.constant 0 : index
    %118 = vector.load %arg11[%c88, %c0_83] : memref<216x1024xf32, #tpu.memory_space<vmem>>, vector<4x512xf32>
    tpu.vector_store %arg11[%c88, %c0_83], %117 {strides = array<i32>} : memref<216x1024xf32, #tpu.memory_space<vmem>>, vector<4x512xf32>,
    %c23 = arith.constant 23 : index
    %c0_84 = arith.constant 0 : index
    %119 = vector.load %arg1[%c23, %c0_84] : memref<27x512xf32, #tpu.memory_space<vmem>>, vector<1x512xf32>
    %c0_85 = arith.constant 0 : index
    %c193 = arith.constant 193 : index
    %120 = vector.load %arg9[%c0_85, %c193] : memref<8x768xf32, #tpu.memory_space<vmem>>, vector<4x512xf32>
    %121 = vector.broadcast %119 : vector<1x512xf32> to vector<4x512xf32>
    %122 = arith.mulf %120, %121 : vector<4x512xf32>
    %c92 = arith.constant 92 : index
    %c0_86 = arith.constant 0 : index
    %123 = vector.load %arg11[%c92, %c0_86] : memref<216x1024xf32, #tpu.memory_space<vmem>>, vector<4x512xf32>
    tpu.vector_store %arg11[%c92, %c0_86], %122 {strides = array<i32>} : memref<216x1024xf32, #tpu.memory_space<vmem>>, vector<4x512xf32>,
    %c24_87 = arith.constant 24 : index
    %c0_88 = arith.constant 0 : index
    %124 = vector.load %arg1[%c24_87, %c0_88] : memref<27x512xf32, #tpu.memory_space<vmem>>, vector<1x512xf32>
    %c0_89 = arith.constant 0 : index
    %c199 = arith.constant 199 : index
    %125 = vector.load %arg9[%c0_89, %c199] : memref<8x768xf32, #tpu.memory_space<vmem>>, vector<4x512xf32>
    %126 = vector.broadcast %124 : vector<1x512xf32> to vector<4x512xf32>
    %127 = arith.mulf %125, %126 : vector<4x512xf32>
    %c96 = arith.constant 96 : index
    %c0_90 = arith.constant 0 : index
    %128 = vector.load %arg11[%c96, %c0_90] : memref<216x1024xf32, #tpu.memory_space<vmem>>, vector<4x512xf32>
    tpu.vector_store %arg11[%c96, %c0_90], %127 {strides = array<i32>} : memref<216x1024xf32, #tpu.memory_space<vmem>>, vector<4x512xf32>,
    %c25 = arith.constant 25 : index
    %c0_91 = arith.constant 0 : index
    %129 = vector.load %arg1[%c25, %c0_91] : memref<27x512xf32, #tpu.memory_space<vmem>>, vector<1x512xf32>
    %c0_92 = arith.constant 0 : index
    %c200 = arith.constant 200 : index
    %130 = vector.load %arg9[%c0_92, %c200] : memref<8x768xf32, #tpu.memory_space<vmem>>, vector<4x512xf32>
    %131 = vector.broadcast %129 : vector<1x512xf32> to vector<4x512xf32>
    %132 = arith.mulf %130, %131 : vector<4x512xf32>
    %c100 = arith.constant 100 : index
    %c0_93 = arith.constant 0 : index
    %133 = vector.load %arg11[%c100, %c0_93] : memref<216x1024xf32, #tpu.memory_space<vmem>>, vector<4x512xf32>
    tpu.vector_store %arg11[%c100, %c0_93], %132 {strides = array<i32>} : memref<216x1024xf32, #tpu.memory_space<vmem>>, vector<4x512xf32>,
    %c26 = arith.constant 26 : index
    %c0_94 = arith.constant 0 : index
    %134 = vector.load %arg1[%c26, %c0_94] : memref<27x512xf32, #tpu.memory_space<vmem>>, vector<1x512xf32>
    %c0_95 = arith.constant 0 : index
    %c201 = arith.constant 201 : index
    %135 = vector.load %arg9[%c0_95, %c201] : memref<8x768xf32, #tpu.memory_space<vmem>>, vector<4x512xf32>
    %136 = vector.broadcast %134 : vector<1x512xf32> to vector<4x512xf32>
    %137 = arith.mulf %135, %136 : vector<4x512xf32>
    %c104 = arith.constant 104 : index
    %c0_96 = arith.constant 0 : index
    %138 = vector.load %arg11[%c104, %c0_96] : memref<216x1024xf32, #tpu.memory_space<vmem>>, vector<4x512xf32>
    tpu.vector_store %arg11[%c104, %c0_96], %137 {strides = array<i32>} : memref<216x1024xf32, #tpu.memory_space<vmem>>, vector<4x512xf32>,
    %c0_97 = arith.constant 0 : index
    %c0_98 = arith.constant 0 : index
    %139 = vector.load %arg1[%c0_97, %c0_98] : memref<27x512xf32, #tpu.memory_space<vmem>>, vector<1x512xf32>
    %c4_99 = arith.constant 4 : index
    %c55_100 = arith.constant 55 : index
    %140 = vector.load %arg9[%c4_99, %c55_100] : memref<8x768xf32, #tpu.memory_space<vmem>>, vector<4x512xf32>
    %141 = vector.broadcast %139 : vector<1x512xf32> to vector<4x512xf32>
    %142 = arith.mulf %140, %141 : vector<4x512xf32>
    %c0_101 = arith.constant 0 : index
    %c512 = arith.constant 512 : index
    %143 = vector.load %arg11[%c0_101, %c512] : memref<216x1024xf32, #tpu.memory_space<vmem>>, vector<4x512xf32>
    tpu.vector_store %arg11[%c0_101, %c512], %142 {strides = array<i32>} : memref<216x1024xf32, #tpu.memory_space<vmem>>, vector<4x512xf32>,
    %c1_102 = arith.constant 1 : index
    %c0_103 = arith.constant 0 : index
    %144 = vector.load %arg1[%c1_102, %c0_103] : memref<27x512xf32, #tpu.memory_space<vmem>>, vector<1x512xf32>
    %c4_104 = arith.constant 4 : index
    %c56_105 = arith.constant 56 : index
    %145 = vector.load %arg9[%c4_104, %c56_105] : memref<8x768xf32, #tpu.memory_space<vmem>>, vector<4x512xf32>
    %146 = vector.broadcast %144 : vector<1x512xf32> to vector<4x512xf32>
    %147 = arith.mulf %145, %146 : vector<4x512xf32>
    %c4_106 = arith.constant 4 : index
    %c512_107 = arith.constant 512 : index
    %148 = vector.load %arg11[%c4_106, %c512_107] : memref<216x1024xf32, #tpu.memory_space<vmem>>, vector<4x512xf32>
    tpu.vector_store %arg11[%c4_106, %c512_107], %147 {strides = array<i32>} : memref<216x1024xf32, #tpu.memory_space<vmem>>, vector<4x512xf32>,
    %c2_108 = arith.constant 2 : index
    %c0_109 = arith.constant 0 : index
    %149 = vector.load %arg1[%c2_108, %c0_109] : memref<27x512xf32, #tpu.memory_space<vmem>>, vector<1x512xf32>
    %c4_110 = arith.constant 4 : index
    %c57_111 = arith.constant 57 : index
    %150 = vector.load %arg9[%c4_110, %c57_111] : memref<8x768xf32, #tpu.memory_space<vmem>>, vector<4x512xf32>
    %151 = vector.broadcast %149 : vector<1x512xf32> to vector<4x512xf32>
    %152 = arith.mulf %150, %151 : vector<4x512xf32>
    %c8_112 = arith.constant 8 : index
    %c512_113 = arith.constant 512 : index
    %153 = vector.load %arg11[%c8_112, %c512_113] : memref<216x1024xf32, #tpu.memory_space<vmem>>, vector<4x512xf32>
    tpu.vector_store %arg11[%c8_112, %c512_113], %152 {strides = array<i32>} : memref<216x1024xf32, #tpu.memory_space<vmem>>, vector<4x512xf32>,
    %c3_114 = arith.constant 3 : index
    %c0_115 = arith.constant 0 : index
    %154 = vector.load %arg1[%c3_114, %c0_115] : memref<27x512xf32, #tpu.memory_space<vmem>>, vector<1x512xf32>
    %c4_116 = arith.constant 4 : index
    %c63_117 = arith.constant 63 : index
    %155 = vector.load %arg9[%c4_116, %c63_117] : memref<8x768xf32, #tpu.memory_space<vmem>>, vector<4x512xf32>
    %156 = vector.broadcast %154 : vector<1x512xf32> to vector<4x512xf32>
    %157 = arith.mulf %155, %156 : vector<4x512xf32>
    %c12_118 = arith.constant 12 : index
    %c512_119 = arith.constant 512 : index
    %158 = vector.load %arg11[%c12_118, %c512_119] : memref<216x1024xf32, #tpu.memory_space<vmem>>, vector<4x512xf32>
    tpu.vector_store %arg11[%c12_118, %c512_119], %157 {strides = array<i32>} : memref<216x1024xf32, #tpu.memory_space<vmem>>, vector<4x512xf32>,
    %c4_120 = arith.constant 4 : index
    %c0_121 = arith.constant 0 : index
    %159 = vector.load %arg1[%c4_120, %c0_121] : memref<27x512xf32, #tpu.memory_space<vmem>>, vector<1x512xf32>
    %c4_122 = arith.constant 4 : index
    %c64_123 = arith.constant 64 : index
    %160 = vector.load %arg9[%c4_122, %c64_123] : memref<8x768xf32, #tpu.memory_space<vmem>>, vector<4x512xf32>
    %161 = vector.broadcast %159 : vector<1x512xf32> to vector<4x512xf32>
    %162 = arith.mulf %160, %161 : vector<4x512xf32>
    %c16_124 = arith.constant 16 : index
    %c512_125 = arith.constant 512 : index
    %163 = vector.load %arg11[%c16_124, %c512_125] : memref<216x1024xf32, #tpu.memory_space<vmem>>, vector<4x512xf32>
    tpu.vector_store %arg11[%c16_124, %c512_125], %162 {strides = array<i32>} : memref<216x1024xf32, #tpu.memory_space<vmem>>, vector<4x512xf32>,
    %c5_126 = arith.constant 5 : index
    %c0_127 = arith.constant 0 : index
    %164 = vector.load %arg1[%c5_126, %c0_127] : memref<27x512xf32, #tpu.memory_space<vmem>>, vector<1x512xf32>
    %c4_128 = arith.constant 4 : index
    %c65_129 = arith.constant 65 : index
    %165 = vector.load %arg9[%c4_128, %c65_129] : memref<8x768xf32, #tpu.memory_space<vmem>>, vector<4x512xf32>
    %166 = vector.broadcast %164 : vector<1x512xf32> to vector<4x512xf32>
    %167 = arith.mulf %165, %166 : vector<4x512xf32>
    %c20_130 = arith.constant 20 : index
    %c512_131 = arith.constant 512 : index
    %168 = vector.load %arg11[%c20_130, %c512_131] : memref<216x1024xf32, #tpu.memory_space<vmem>>, vector<4x512xf32>
    tpu.vector_store %arg11[%c20_130, %c512_131], %167 {strides = array<i32>} : memref<216x1024xf32, #tpu.memory_space<vmem>>, vector<4x512xf32>,
    %c6_132 = arith.constant 6 : index
    %c0_133 = arith.constant 0 : index
    %169 = vector.load %arg1[%c6_132, %c0_133] : memref<27x512xf32, #tpu.memory_space<vmem>>, vector<1x512xf32>
    %c4_134 = arith.constant 4 : index
    %c71_135 = arith.constant 71 : index
    %170 = vector.load %arg9[%c4_134, %c71_135] : memref<8x768xf32, #tpu.memory_space<vmem>>, vector<4x512xf32>
    %171 = vector.broadcast %169 : vector<1x512xf32> to vector<4x512xf32>
    %172 = arith.mulf %170, %171 : vector<4x512xf32>
    %c24_136 = arith.constant 24 : index
    %c512_137 = arith.constant 512 : index
    %173 = vector.load %arg11[%c24_136, %c512_137] : memref<216x1024xf32, #tpu.memory_space<vmem>>, vector<4x512xf32>
    tpu.vector_store %arg11[%c24_136, %c512_137], %172 {strides = array<i32>} : memref<216x1024xf32, #tpu.memory_space<vmem>>, vector<4x512xf32>,
    %c7_138 = arith.constant 7 : index
    %c0_139 = arith.constant 0 : index
    %174 = vector.load %arg1[%c7_138, %c0_139] : memref<27x512xf32, #tpu.memory_space<vmem>>, vector<1x512xf32>
    %c4_140 = arith.constant 4 : index
    %c72_141 = arith.constant 72 : index
    %175 = vector.load %arg9[%c4_140, %c72_141] : memref<8x768xf32, #tpu.memory_space<vmem>>, vector<4x512xf32>
    %176 = vector.broadcast %174 : vector<1x512xf32> to vector<4x512xf32>
    %177 = arith.mulf %175, %176 : vector<4x512xf32>
    %c28_142 = arith.constant 28 : index
    %c512_143 = arith.constant 512 : index
    %178 = vector.load %arg11[%c28_142, %c512_143] : memref<216x1024xf32, #tpu.memory_space<vmem>>, vector<4x512xf32>
    tpu.vector_store %arg11[%c28_142, %c512_143], %177 {strides = array<i32>} : memref<216x1024xf32, #tpu.memory_space<vmem>>, vector<4x512xf32>,
    %c8_144 = arith.constant 8 : index
    %c0_145 = arith.constant 0 : index
    %179 = vector.load %arg1[%c8_144, %c0_145] : memref<27x512xf32, #tpu.memory_space<vmem>>, vector<1x512xf32>
    %c4_146 = arith.constant 4 : index
    %c73_147 = arith.constant 73 : index
    %180 = vector.load %arg9[%c4_146, %c73_147] : memref<8x768xf32, #tpu.memory_space<vmem>>, vector<4x512xf32>
    %181 = vector.broadcast %179 : vector<1x512xf32> to vector<4x512xf32>
    %182 = arith.mulf %180, %181 : vector<4x512xf32>
    %c32_148 = arith.constant 32 : index
    %c512_149 = arith.constant 512 : index
    %183 = vector.load %arg11[%c32_148, %c512_149] : memref<216x1024xf32, #tpu.memory_space<vmem>>, vector<4x512xf32>
    tpu.vector_store %arg11[%c32_148, %c512_149], %182 {strides = array<i32>} : memref<216x1024xf32, #tpu.memory_space<vmem>>, vector<4x512xf32>,
    %c9_150 = arith.constant 9 : index
    %c0_151 = arith.constant 0 : index
    %184 = vector.load %arg1[%c9_150, %c0_151] : memref<27x512xf32, #tpu.memory_space<vmem>>, vector<1x512xf32>
    %c4_152 = arith.constant 4 : index
    %c119_153 = arith.constant 119 : index
    %185 = vector.load %arg9[%c4_152, %c119_153] : memref<8x768xf32, #tpu.memory_space<vmem>>, vector<4x512xf32>
    %186 = vector.broadcast %184 : vector<1x512xf32> to vector<4x512xf32>
    %187 = arith.mulf %185, %186 : vector<4x512xf32>
    %c36_154 = arith.constant 36 : index
    %c512_155 = arith.constant 512 : index
    %188 = vector.load %arg11[%c36_154, %c512_155] : memref<216x1024xf32, #tpu.memory_space<vmem>>, vector<4x512xf32>
    tpu.vector_store %arg11[%c36_154, %c512_155], %187 {strides = array<i32>} : memref<216x1024xf32, #tpu.memory_space<vmem>>, vector<4x512xf32>,
    %c10_156 = arith.constant 10 : index
    %c0_157 = arith.constant 0 : index
    %189 = vector.load %arg1[%c10_156, %c0_157] : memref<27x512xf32, #tpu.memory_space<vmem>>, vector<1x512xf32>
    %c4_158 = arith.constant 4 : index
    %c120_159 = arith.constant 120 : index
    %190 = vector.load %arg9[%c4_158, %c120_159] : memref<8x768xf32, #tpu.memory_space<vmem>>, vector<4x512xf32>
    %191 = vector.broadcast %189 : vector<1x512xf32> to vector<4x512xf32>
    %192 = arith.mulf %190, %191 : vector<4x512xf32>
    %c40_160 = arith.constant 40 : index
    %c512_161 = arith.constant 512 : index
    %193 = vector.load %arg11[%c40_160, %c512_161] : memref<216x1024xf32, #tpu.memory_space<vmem>>, vector<4x512xf32>
    tpu.vector_store %arg11[%c40_160, %c512_161], %192 {strides = array<i32>} : memref<216x1024xf32, #tpu.memory_space<vmem>>, vector<4x512xf32>,
    %c11_162 = arith.constant 11 : index
    %c0_163 = arith.constant 0 : index
    %194 = vector.load %arg1[%c11_162, %c0_163] : memref<27x512xf32, #tpu.memory_space<vmem>>, vector<1x512xf32>
    %c4_164 = arith.constant 4 : index
    %c121_165 = arith.constant 121 : index
    %195 = vector.load %arg9[%c4_164, %c121_165] : memref<8x768xf32, #tpu.memory_space<vmem>>, vector<4x512xf32>
    %196 = vector.broadcast %194 : vector<1x512xf32> to vector<4x512xf32>
    %197 = arith.mulf %195, %196 : vector<4x512xf32>
    %c44_166 = arith.constant 44 : index
    %c512_167 = arith.constant 512 : index
    %198 = vector.load %arg11[%c44_166, %c512_167] : memref<216x1024xf32, #tpu.memory_space<vmem>>, vector<4x512xf32>
    tpu.vector_store %arg11[%c44_166, %c512_167], %197 {strides = array<i32>} : memref<216x1024xf32, #tpu.memory_space<vmem>>, vector<4x512xf32>,
    %c12_168 = arith.constant 12 : index
    %c0_169 = arith.constant 0 : index
    %199 = vector.load %arg1[%c12_168, %c0_169] : memref<27x512xf32, #tpu.memory_space<vmem>>, vector<1x512xf32>
    %c4_170 = arith.constant 4 : index
    %c127_171 = arith.constant 127 : index
    %200 = vector.load %arg9[%c4_170, %c127_171] : memref<8x768xf32, #tpu.memory_space<vmem>>, vector<4x512xf32>
    %201 = vector.broadcast %199 : vector<1x512xf32> to vector<4x512xf32>
    %202 = arith.mulf %200, %201 : vector<4x512xf32>
    %c48_172 = arith.constant 48 : index
    %c512_173 = arith.constant 512 : index
    %203 = vector.load %arg11[%c48_172, %c512_173] : memref<216x1024xf32, #tpu.memory_space<vmem>>, vector<4x512xf32>
    tpu.vector_store %arg11[%c48_172, %c512_173], %202 {strides = array<i32>} : memref<216x1024xf32, #tpu.memory_space<vmem>>, vector<4x512xf32>,
    %c13_174 = arith.constant 13 : index
    %c0_175 = arith.constant 0 : index
    %204 = vector.load %arg1[%c13_174, %c0_175] : memref<27x512xf32, #tpu.memory_space<vmem>>, vector<1x512xf32>
    %c4_176 = arith.constant 4 : index
    %c128_177 = arith.constant 128 : index
    %205 = vector.load %arg9[%c4_176, %c128_177] : memref<8x768xf32, #tpu.memory_space<vmem>>, vector<4x512xf32>
    %206 = vector.broadcast %204 : vector<1x512xf32> to vector<4x512xf32>
    %207 = arith.mulf %205, %206 : vector<4x512xf32>
    %c52_178 = arith.constant 52 : index
    %c512_179 = arith.constant 512 : index
    %208 = vector.load %arg11[%c52_178, %c512_179] : memref<216x1024xf32, #tpu.memory_space<vmem>>, vector<4x512xf32>
    tpu.vector_store %arg11[%c52_178, %c512_179], %207 {strides = array<i32>} : memref<216x1024xf32, #tpu.memory_space<vmem>>, vector<4x512xf32>,
    %c14_180 = arith.constant 14 : index
    %c0_181 = arith.constant 0 : index
    %209 = vector.load %arg1[%c14_180, %c0_181] : memref<27x512xf32, #tpu.memory_space<vmem>>, vector<1x512xf32>
    %c4_182 = arith.constant 4 : index
    %c129_183 = arith.constant 129 : index
    %210 = vector.load %arg9[%c4_182, %c129_183] : memref<8x768xf32, #tpu.memory_space<vmem>>, vector<4x512xf32>
    %211 = vector.broadcast %209 : vector<1x512xf32> to vector<4x512xf32>
    %212 = arith.mulf %210, %211 : vector<4x512xf32>
    %c56_184 = arith.constant 56 : index
    %c512_185 = arith.constant 512 : index
    %213 = vector.load %arg11[%c56_184, %c512_185] : memref<216x1024xf32, #tpu.memory_space<vmem>>, vector<4x512xf32>
    tpu.vector_store %arg11[%c56_184, %c512_185], %212 {strides = array<i32>} : memref<216x1024xf32, #tpu.memory_space<vmem>>, vector<4x512xf32>,
    %c15_186 = arith.constant 15 : index
    %c0_187 = arith.constant 0 : index
    %214 = vector.load %arg1[%c15_186, %c0_187] : memref<27x512xf32, #tpu.memory_space<vmem>>, vector<1x512xf32>
    %c4_188 = arith.constant 4 : index
    %c135_189 = arith.constant 135 : index
    %215 = vector.load %arg9[%c4_188, %c135_189] : memref<8x768xf32, #tpu.memory_space<vmem>>, vector<4x512xf32>
    %216 = vector.broadcast %214 : vector<1x512xf32> to vector<4x512xf32>
    %217 = arith.mulf %215, %216 : vector<4x512xf32>
    %c60_190 = arith.constant 60 : index
    %c512_191 = arith.constant 512 : index
    %218 = vector.load %arg11[%c60_190, %c512_191] : memref<216x1024xf32, #tpu.memory_space<vmem>>, vector<4x512xf32>
    tpu.vector_store %arg11[%c60_190, %c512_191], %217 {strides = array<i32>} : memref<216x1024xf32, #tpu.memory_space<vmem>>, vector<4x512xf32>,
    %c16_192 = arith.constant 16 : index
    %c0_193 = arith.constant 0 : index
    %219 = vector.load %arg1[%c16_192, %c0_193] : memref<27x512xf32, #tpu.memory_space<vmem>>, vector<1x512xf32>
    %c4_194 = arith.constant 4 : index
    %c136_195 = arith.constant 136 : index
    %220 = vector.load %arg9[%c4_194, %c136_195] : memref<8x768xf32, #tpu.memory_space<vmem>>, vector<4x512xf32>
    %221 = vector.broadcast %219 : vector<1x512xf32> to vector<4x512xf32>
    %222 = arith.mulf %220, %221 : vector<4x512xf32>
    %c64_196 = arith.constant 64 : index
    %c512_197 = arith.constant 512 : index
    %223 = vector.load %arg11[%c64_196, %c512_197] : memref<216x1024xf32, #tpu.memory_space<vmem>>, vector<4x512xf32>
    tpu.vector_store %arg11[%c64_196, %c512_197], %222 {strides = array<i32>} : memref<216x1024xf32, #tpu.memory_space<vmem>>, vector<4x512xf32>,
    %c17_198 = arith.constant 17 : index
    %c0_199 = arith.constant 0 : index
    %224 = vector.load %arg1[%c17_198, %c0_199] : memref<27x512xf32, #tpu.memory_space<vmem>>, vector<1x512xf32>
    %c4_200 = arith.constant 4 : index
    %c137_201 = arith.constant 137 : index
    %225 = vector.load %arg9[%c4_200, %c137_201] : memref<8x768xf32, #tpu.memory_space<vmem>>, vector<4x512xf32>
    %226 = vector.broadcast %224 : vector<1x512xf32> to vector<4x512xf32>
    %227 = arith.mulf %225, %226 : vector<4x512xf32>
    %c68_202 = arith.constant 68 : index
    %c512_203 = arith.constant 512 : index
    %228 = vector.load %arg11[%c68_202, %c512_203] : memref<216x1024xf32, #tpu.memory_space<vmem>>, vector<4x512xf32>
    tpu.vector_store %arg11[%c68_202, %c512_203], %227 {strides = array<i32>} : memref<216x1024xf32, #tpu.memory_space<vmem>>, vector<4x512xf32>,
    %c18_204 = arith.constant 18 : index
    %c0_205 = arith.constant 0 : index
    %229 = vector.load %arg1[%c18_204, %c0_205] : memref<27x512xf32, #tpu.memory_space<vmem>>, vector<1x512xf32>
    %c4_206 = arith.constant 4 : index
    %c183_207 = arith.constant 183 : index
    %230 = vector.load %arg9[%c4_206, %c183_207] : memref<8x768xf32, #tpu.memory_space<vmem>>, vector<4x512xf32>
    %231 = vector.broadcast %229 : vector<1x512xf32> to vector<4x512xf32>
    %232 = arith.mulf %230, %231 : vector<4x512xf32>
    %c72_208 = arith.constant 72 : index
    %c512_209 = arith.constant 512 : index
    %233 = vector.load %arg11[%c72_208, %c512_209] : memref<216x1024xf32, #tpu.memory_space<vmem>>, vector<4x512xf32>
    tpu.vector_store %arg11[%c72_208, %c512_209], %232 {strides = array<i32>} : memref<216x1024xf32, #tpu.memory_space<vmem>>, vector<4x512xf32>,
    %c19_210 = arith.constant 19 : index
    %c0_211 = arith.constant 0 : index
    %234 = vector.load %arg1[%c19_210, %c0_211] : memref<27x512xf32, #tpu.memory_space<vmem>>, vector<1x512xf32>
    %c4_212 = arith.constant 4 : index
    %c184_213 = arith.constant 184 : index
    %235 = vector.load %arg9[%c4_212, %c184_213] : memref<8x768xf32, #tpu.memory_space<vmem>>, vector<4x512xf32>
    %236 = vector.broadcast %234 : vector<1x512xf32> to vector<4x512xf32>
    %237 = arith.mulf %235, %236 : vector<4x512xf32>
    %c76_214 = arith.constant 76 : index
    %c512_215 = arith.constant 512 : index
    %238 = vector.load %arg11[%c76_214, %c512_215] : memref<216x1024xf32, #tpu.memory_space<vmem>>, vector<4x512xf32>
    tpu.vector_store %arg11[%c76_214, %c512_215], %237 {strides = array<i32>} : memref<216x1024xf32, #tpu.memory_space<vmem>>, vector<4x512xf32>,
    %c20_216 = arith.constant 20 : index
    %c0_217 = arith.constant 0 : index
    %239 = vector.load %arg1[%c20_216, %c0_217] : memref<27x512xf32, #tpu.memory_space<vmem>>, vector<1x512xf32>
    %c4_218 = arith.constant 4 : index
    %c185_219 = arith.constant 185 : index
    %240 = vector.load %arg9[%c4_218, %c185_219] : memref<8x768xf32, #tpu.memory_space<vmem>>, vector<4x512xf32>
    %241 = vector.broadcast %239 : vector<1x512xf32> to vector<4x512xf32>
    %242 = arith.mulf %240, %241 : vector<4x512xf32>
    %c80_220 = arith.constant 80 : index
    %c512_221 = arith.constant 512 : index
    %243 = vector.load %arg11[%c80_220, %c512_221] : memref<216x1024xf32, #tpu.memory_space<vmem>>, vector<4x512xf32>
    tpu.vector_store %arg11[%c80_220, %c512_221], %242 {strides = array<i32>} : memref<216x1024xf32, #tpu.memory_space<vmem>>, vector<4x512xf32>,
    %c21_222 = arith.constant 21 : index
    %c0_223 = arith.constant 0 : index
    %244 = vector.load %arg1[%c21_222, %c0_223] : memref<27x512xf32, #tpu.memory_space<vmem>>, vector<1x512xf32>
    %c4_224 = arith.constant 4 : index
    %c191_225 = arith.constant 191 : index
    %245 = vector.load %arg9[%c4_224, %c191_225] : memref<8x768xf32, #tpu.memory_space<vmem>>, vector<4x512xf32>
    %246 = vector.broadcast %244 : vector<1x512xf32> to vector<4x512xf32>
    %247 = arith.mulf %245, %246 : vector<4x512xf32>
    %c84_226 = arith.constant 84 : index
    %c512_227 = arith.constant 512 : index
    %248 = vector.load %arg11[%c84_226, %c512_227] : memref<216x1024xf32, #tpu.memory_space<vmem>>, vector<4x512xf32>
    tpu.vector_store %arg11[%c84_226, %c512_227], %247 {strides = array<i32>} : memref<216x1024xf32, #tpu.memory_space<vmem>>, vector<4x512xf32>,
    %c22_228 = arith.constant 22 : index
    %c0_229 = arith.constant 0 : index
    %249 = vector.load %arg1[%c22_228, %c0_229] : memref<27x512xf32, #tpu.memory_space<vmem>>, vector<1x512xf32>
    %c4_230 = arith.constant 4 : index
    %c192_231 = arith.constant 192 : index
    %250 = vector.load %arg9[%c4_230, %c192_231] : memref<8x768xf32, #tpu.memory_space<vmem>>, vector<4x512xf32>
    %251 = vector.broadcast %249 : vector<1x512xf32> to vector<4x512xf32>
    %252 = arith.mulf %250, %251 : vector<4x512xf32>
    %c88_232 = arith.constant 88 : index
    %c512_233 = arith.constant 512 : index
    %253 = vector.load %arg11[%c88_232, %c512_233] : memref<216x1024xf32, #tpu.memory_space<vmem>>, vector<4x512xf32>
    tpu.vector_store %arg11[%c88_232, %c512_233], %252 {strides = array<i32>} : memref<216x1024xf32, #tpu.memory_space<vmem>>, vector<4x512xf32>,
    %c23_234 = arith.constant 23 : index
    %c0_235 = arith.constant 0 : index
    %254 = vector.load %arg1[%c23_234, %c0_235] : memref<27x512xf32, #tpu.memory_space<vmem>>, vector<1x512xf32>
    %c4_236 = arith.constant 4 : index
    %c193_237 = arith.constant 193 : index
    %255 = vector.load %arg9[%c4_236, %c193_237] : memref<8x768xf32, #tpu.memory_space<vmem>>, vector<4x512xf32>
    %256 = vector.broadcast %254 : vector<1x512xf32> to vector<4x512xf32>
    %257 = arith.mulf %255, %256 : vector<4x512xf32>
    %c92_238 = arith.constant 92 : index
    %c512_239 = arith.constant 512 : index
    %258 = vector.load %arg11[%c92_238, %c512_239] : memref<216x1024xf32, #tpu.memory_space<vmem>>, vector<4x512xf32>
    tpu.vector_store %arg11[%c92_238, %c512_239], %257 {strides = array<i32>} : memref<216x1024xf32, #tpu.memory_space<vmem>>, vector<4x512xf32>,
    %c24_240 = arith.constant 24 : index
    %c0_241 = arith.constant 0 : index
    %259 = vector.load %arg1[%c24_240, %c0_241] : memref<27x512xf32, #tpu.memory_space<vmem>>, vector<1x512xf32>
    %c4_242 = arith.constant 4 : index
    %c199_243 = arith.constant 199 : index
    %260 = vector.load %arg9[%c4_242, %c199_243] : memref<8x768xf32, #tpu.memory_space<vmem>>, vector<4x512xf32>
    %261 = vector.broadcast %259 : vector<1x512xf32> to vector<4x512xf32>
    %262 = arith.mulf %260, %261 : vector<4x512xf32>
    %c96_244 = arith.constant 96 : index
    %c512_245 = arith.constant 512 : index
    %263 = vector.load %arg11[%c96_244, %c512_245] : memref<216x1024xf32, #tpu.memory_space<vmem>>, vector<4x512xf32>
    tpu.vector_store %arg11[%c96_244, %c512_245], %262 {strides = array<i32>} : memref<216x1024xf32, #tpu.memory_space<vmem>>, vector<4x512xf32>,
    %c25_246 = arith.constant 25 : index
    %c0_247 = arith.constant 0 : index
    %264 = vector.load %arg1[%c25_246, %c0_247] : memref<27x512xf32, #tpu.memory_space<vmem>>, vector<1x512xf32>
    %c4_248 = arith.constant 4 : index
    %c200_249 = arith.constant 200 : index
    %265 = vector.load %arg9[%c4_248, %c200_249] : memref<8x768xf32, #tpu.memory_space<vmem>>, vector<4x512xf32>
    %266 = vector.broadcast %264 : vector<1x512xf32> to vector<4x512xf32>
    %267 = arith.mulf %265, %266 : vector<4x512xf32>
    %c100_250 = arith.constant 100 : index
    %c512_251 = arith.constant 512 : index
    %268 = vector.load %arg11[%c100_250, %c512_251] : memref<216x1024xf32, #tpu.memory_space<vmem>>, vector<4x512xf32>
    tpu.vector_store %arg11[%c100_250, %c512_251], %267 {strides = array<i32>} : memref<216x1024xf32, #tpu.memory_space<vmem>>, vector<4x512xf32>,
    %c26_252 = arith.constant 26 : index
    %c0_253 = arith.constant 0 : index
    %269 = vector.load %arg1[%c26_252, %c0_253] : memref<27x512xf32, #tpu.memory_space<vmem>>, vector<1x512xf32>
    %c4_254 = arith.constant 4 : index
    %c201_255 = arith.constant 201 : index
    %270 = vector.load %arg9[%c4_254, %c201_255] : memref<8x768xf32, #tpu.memory_space<vmem>>, vector<4x512xf32>
    %271 = vector.broadcast %269 : vector<1x512xf32> to vector<4x512xf32>
    %272 = arith.mulf %270, %271 : vector<4x512xf32>
    %c104_256 = arith.constant 104 : index
    %c512_257 = arith.constant 512 : index
    %273 = vector.load %arg11[%c104_256, %c512_257] : memref<216x1024xf32, #tpu.memory_space<vmem>>, vector<4x512xf32>
    tpu.vector_store %arg11[%c104_256, %c512_257], %272 {strides = array<i32>} : memref<216x1024xf32, #tpu.memory_space<vmem>>, vector<4x512xf32>,
    %c0_258 = arith.constant 0 : index
    %c0_259 = arith.constant 0 : index
    %274 = vector.load %arg2[%c0_258, %c0_259] : memref<8x108xf32, #tpu.memory_space<vmem>>, vector<8x108xf32>
    %c0_260 = arith.constant 0 : index
    %c0_261 = arith.constant 0 : index
    %275 = vector.load %arg11[%c0_260, %c0_261] : memref<216x1024xf32, #tpu.memory_space<vmem>>, vector<108x1024xf32>
    %cst_262 = arith.constant dense<0.000000e+00> : vector<8x1024xf32>
    %276 = tpu.matmul %274, %275, %cst_262 {dimension_numbers = #tpu.dot_dimension_numbers<[1], [0], [0], [1], [0, 0, 1, 1], [], []>} : vector<8x108xf32>, vector<108x1024xf32>, vector<8x1024xf32> -> vector<8x1024xf32>
    %c0_263 = arith.constant 0 : index
    %c0_264 = arith.constant 0 : index
    %277 = vector.load %arg3[%c0_263, %c0_264] : memref<8x1xf32, #tpu.memory_space<vmem>>, vector<8x1xf32>
    %c0_265 = arith.constant 0 : index
    %c0_266 = arith.constant 0 : index
    %278 = vector.load %arg4[%c0_265, %c0_266] : memref<8x1xf32, #tpu.memory_space<vmem>>, vector<8x1xf32>
    %cst_267 = arith.constant dense<0.000000e+00> : vector<8xf32>
    %279 = vector.multi_reduction <add>, %276, %cst_267 [1] : vector<8x1024xf32> to vector<8xf32>
    %280 = vector.shape_cast %279 : vector<8xf32> to vector<8x1xf32>
    %281 = arith.mulf %276, %276 : vector<8x1024xf32>
    %cst_268 = arith.constant dense<0.000000e+00> : vector<8xf32>
    %282 = vector.multi_reduction <add>, %281, %cst_268 [1] : vector<8x1024xf32> to vector<8xf32>
    %283 = vector.shape_cast %282 : vector<8xf32> to vector<8x1xf32>
    %cst_269 = arith.constant 9.765625E-4 : f32
    %284 = vector.broadcast %cst_269 : f32 to vector<8x1xf32>
    %285 = arith.mulf %280, %284 : vector<8x1xf32>
    %cst_270 = arith.constant 9.765625E-4 : f32
    %286 = vector.broadcast %cst_270 : f32 to vector<8x1xf32>
    %287 = arith.mulf %283, %286 : vector<8x1xf32>
    %288 = arith.mulf %285, %285 : vector<8x1xf32>
    %289 = arith.subf %287, %288 : vector<8x1xf32>
    %cst_271 = arith.constant 9.99999974E-6 : f32
    %290 = vector.broadcast %cst_271 : f32 to vector<8x1xf32>
    %291 = arith.addf %289, %290 : vector<8x1xf32>
    %292 = math.rsqrt %291 : vector<8x1xf32>
    %293 = arith.mulf %292, %277 : vector<8x1xf32>
    %294 = arith.mulf %285, %293 : vector<8x1xf32>
    %295 = arith.subf %278, %294 : vector<8x1xf32>
    %296 = vector.broadcast %293 : vector<8x1xf32> to vector<8x1024xf32>
    %297 = arith.mulf %276, %296 : vector<8x1024xf32>
    %298 = vector.broadcast %295 : vector<8x1xf32> to vector<8x1024xf32>
    %299 = arith.addf %297, %298 : vector<8x1024xf32>
    %cst_272 = arith.constant 0.000000e+00 : f32
    %300 = vector.broadcast %cst_272 : f32 to vector<8x1024xf32>
    %301 = arith.maximumf %299, %300 : vector<8x1024xf32>
    %cst_273 = arith.constant 0.000000e+00 : f32
    %302 = vector.broadcast %cst_273 : f32 to vector<8x1536xf32>
    %c0_274 = arith.constant 0 : index
    %c0_275 = arith.constant 0 : index
    %303 = vector.load %arg10[%c0_274, %c0_275] : memref<8x1536xf32, #tpu.memory_space<vmem>>, vector<8x1536xf32>
    tpu.vector_store %arg10[%c0_274, %c0_275], %302 {strides = array<i32>} : memref<8x1536xf32, #tpu.memory_space<vmem>>, vector<8x1536xf32>,
    %304 = vector.extract_strided_slice %301 {offsets = [0, 0], sizes = [8, 512], strides = [1, 1]} : vector<8x1024xf32> to vector<8x512xf32>
    %c0_276 = arith.constant 0 : index
    %c128_277 = arith.constant 128 : index
    %305 = vector.load %arg10[%c0_276, %c128_277] : memref<8x1536xf32, #tpu.memory_space<vmem>>, vector<8x512xf32>
    tpu.vector_store %arg10[%c0_276, %c128_277], %304 {strides = array<i32>} : memref<8x1536xf32, #tpu.memory_space<vmem>>, vector<8x512xf32>,
    %306 = vector.extract_strided_slice %301 {offsets = [0, 512], sizes = [8, 512], strides = [1, 1]} : vector<8x1024xf32> to vector<8x512xf32>
    %c0_278 = arith.constant 0 : index
    %c896 = arith.constant 896 : index
    %307 = vector.load %arg10[%c0_278, %c896] : memref<8x1536xf32, #tpu.memory_space<vmem>>, vector<8x512xf32>
    tpu.vector_store %arg10[%c0_278, %c896], %306 {strides = array<i32>} : memref<8x1536xf32, #tpu.memory_space<vmem>>, vector<8x512xf32>,
    %c0_279 = arith.constant 0 : index
    %c0_280 = arith.constant 0 : index
    %308 = vector.load %arg1[%c0_279, %c0_280] : memref<27x512xf32, #tpu.memory_space<vmem>>, vector<1x512xf32>
    %c0_281 = arith.constant 0 : index
    %c55_282 = arith.constant 55 : index
    %309 = vector.load %arg10[%c0_281, %c55_282] : memref<8x1536xf32, #tpu.memory_space<vmem>>, vector<8x512xf32>
    %310 = vector.broadcast %308 : vector<1x512xf32> to vector<8x512xf32>
    %311 = arith.mulf %309, %310 : vector<8x512xf32>
    %c0_283 = arith.constant 0 : index
    %c0_284 = arith.constant 0 : index
    %312 = vector.load %arg11[%c0_283, %c0_284] : memref<216x1024xf32, #tpu.memory_space<vmem>>, vector<8x512xf32>
    tpu.vector_store %arg11[%c0_283, %c0_284], %311 {strides = array<i32>} : memref<216x1024xf32, #tpu.memory_space<vmem>>, vector<8x512xf32>,
    %c1_285 = arith.constant 1 : index
    %c0_286 = arith.constant 0 : index
    %313 = vector.load %arg1[%c1_285, %c0_286] : memref<27x512xf32, #tpu.memory_space<vmem>>, vector<1x512xf32>
    %c0_287 = arith.constant 0 : index
    %c56_288 = arith.constant 56 : index
    %314 = vector.load %arg10[%c0_287, %c56_288] : memref<8x1536xf32, #tpu.memory_space<vmem>>, vector<8x512xf32>
    %315 = vector.broadcast %313 : vector<1x512xf32> to vector<8x512xf32>
    %316 = arith.mulf %314, %315 : vector<8x512xf32>
    %c8_289 = arith.constant 8 : index
    %c0_290 = arith.constant 0 : index
    %317 = vector.load %arg11[%c8_289, %c0_290] : memref<216x1024xf32, #tpu.memory_space<vmem>>, vector<8x512xf32>
    tpu.vector_store %arg11[%c8_289, %c0_290], %316 {strides = array<i32>} : memref<216x1024xf32, #tpu.memory_space<vmem>>, vector<8x512xf32>,
    %c2_291 = arith.constant 2 : index
    %c0_292 = arith.constant 0 : index
    %318 = vector.load %arg1[%c2_291, %c0_292] : memref<27x512xf32, #tpu.memory_space<vmem>>, vector<1x512xf32>
    %c0_293 = arith.constant 0 : index
    %c57_294 = arith.constant 57 : index
    %319 = vector.load %arg10[%c0_293, %c57_294] : memref<8x1536xf32, #tpu.memory_space<vmem>>, vector<8x512xf32>
    %320 = vector.broadcast %318 : vector<1x512xf32> to vector<8x512xf32>
    %321 = arith.mulf %319, %320 : vector<8x512xf32>
    %c16_295 = arith.constant 16 : index
    %c0_296 = arith.constant 0 : index
    %322 = vector.load %arg11[%c16_295, %c0_296] : memref<216x1024xf32, #tpu.memory_space<vmem>>, vector<8x512xf32>
    tpu.vector_store %arg11[%c16_295, %c0_296], %321 {strides = array<i32>} : memref<216x1024xf32, #tpu.memory_space<vmem>>, vector<8x512xf32>,
    %c3_297 = arith.constant 3 : index
    %c0_298 = arith.constant 0 : index
    %323 = vector.load %arg1[%c3_297, %c0_298] : memref<27x512xf32, #tpu.memory_space<vmem>>, vector<1x512xf32>
    %c0_299 = arith.constant 0 : index
    %c63_300 = arith.constant 63 : index
    %324 = vector.load %arg10[%c0_299, %c63_300] : memref<8x1536xf32, #tpu.memory_space<vmem>>, vector<8x512xf32>
    %325 = vector.broadcast %323 : vector<1x512xf32> to vector<8x512xf32>
    %326 = arith.mulf %324, %325 : vector<8x512xf32>
    %c24_301 = arith.constant 24 : index
    %c0_302 = arith.constant 0 : index
    %327 = vector.load %arg11[%c24_301, %c0_302] : memref<216x1024xf32, #tpu.memory_space<vmem>>, vector<8x512xf32>
    tpu.vector_store %arg11[%c24_301, %c0_302], %326 {strides = array<i32>} : memref<216x1024xf32, #tpu.memory_space<vmem>>, vector<8x512xf32>,
    %c4_303 = arith.constant 4 : index
    %c0_304 = arith.constant 0 : index
    %328 = vector.load %arg1[%c4_303, %c0_304] : memref<27x512xf32, #tpu.memory_space<vmem>>, vector<1x512xf32>
    %c0_305 = arith.constant 0 : index
    %c64_306 = arith.constant 64 : index
    %329 = vector.load %arg10[%c0_305, %c64_306] : memref<8x1536xf32, #tpu.memory_space<vmem>>, vector<8x512xf32>
    %330 = vector.broadcast %328 : vector<1x512xf32> to vector<8x512xf32>
    %331 = arith.mulf %329, %330 : vector<8x512xf32>
    %c32_307 = arith.constant 32 : index
    %c0_308 = arith.constant 0 : index
    %332 = vector.load %arg11[%c32_307, %c0_308] : memref<216x1024xf32, #tpu.memory_space<vmem>>, vector<8x512xf32>
    tpu.vector_store %arg11[%c32_307, %c0_308], %331 {strides = array<i32>} : memref<216x1024xf32, #tpu.memory_space<vmem>>, vector<8x512xf32>,
    %c5_309 = arith.constant 5 : index
    %c0_310 = arith.constant 0 : index
    %333 = vector.load %arg1[%c5_309, %c0_310] : memref<27x512xf32, #tpu.memory_space<vmem>>, vector<1x512xf32>
    %c0_311 = arith.constant 0 : index
    %c65_312 = arith.constant 65 : index
    %334 = vector.load %arg10[%c0_311, %c65_312] : memref<8x1536xf32, #tpu.memory_space<vmem>>, vector<8x512xf32>
    %335 = vector.broadcast %333 : vector<1x512xf32> to vector<8x512xf32>
    %336 = arith.mulf %334, %335 : vector<8x512xf32>
    %c40_313 = arith.constant 40 : index
    %c0_314 = arith.constant 0 : index
    %337 = vector.load %arg11[%c40_313, %c0_314] : memref<216x1024xf32, #tpu.memory_space<vmem>>, vector<8x512xf32>
    tpu.vector_store %arg11[%c40_313, %c0_314], %336 {strides = array<i32>} : memref<216x1024xf32, #tpu.memory_space<vmem>>, vector<8x512xf32>,
    %c6_315 = arith.constant 6 : index
    %c0_316 = arith.constant 0 : index
    %338 = vector.load %arg1[%c6_315, %c0_316] : memref<27x512xf32, #tpu.memory_space<vmem>>, vector<1x512xf32>
    %c0_317 = arith.constant 0 : index
    %c71_318 = arith.constant 71 : index
    %339 = vector.load %arg10[%c0_317, %c71_318] : memref<8x1536xf32, #tpu.memory_space<vmem>>, vector<8x512xf32>
    %340 = vector.broadcast %338 : vector<1x512xf32> to vector<8x512xf32>
    %341 = arith.mulf %339, %340 : vector<8x512xf32>
    %c48_319 = arith.constant 48 : index
    %c0_320 = arith.constant 0 : index
    %342 = vector.load %arg11[%c48_319, %c0_320] : memref<216x1024xf32, #tpu.memory_space<vmem>>, vector<8x512xf32>
    tpu.vector_store %arg11[%c48_319, %c0_320], %341 {strides = array<i32>} : memref<216x1024xf32, #tpu.memory_space<vmem>>, vector<8x512xf32>,
    %c7_321 = arith.constant 7 : index
    %c0_322 = arith.constant 0 : index
    %343 = vector.load %arg1[%c7_321, %c0_322] : memref<27x512xf32, #tpu.memory_space<vmem>>, vector<1x512xf32>
    %c0_323 = arith.constant 0 : index
    %c72_324 = arith.constant 72 : index
    %344 = vector.load %arg10[%c0_323, %c72_324] : memref<8x1536xf32, #tpu.memory_space<vmem>>, vector<8x512xf32>
    %345 = vector.broadcast %343 : vector<1x512xf32> to vector<8x512xf32>
    %346 = arith.mulf %344, %345 : vector<8x512xf32>
    %c56_325 = arith.constant 56 : index
    %c0_326 = arith.constant 0 : index
    %347 = vector.load %arg11[%c56_325, %c0_326] : memref<216x1024xf32, #tpu.memory_space<vmem>>, vector<8x512xf32>
    tpu.vector_store %arg11[%c56_325, %c0_326], %346 {strides = array<i32>} : memref<216x1024xf32, #tpu.memory_space<vmem>>, vector<8x512xf32>,
    %c8_327 = arith.constant 8 : index
    %c0_328 = arith.constant 0 : index
    %348 = vector.load %arg1[%c8_327, %c0_328] : memref<27x512xf32, #tpu.memory_space<vmem>>, vector<1x512xf32>
    %c0_329 = arith.constant 0 : index
    %c73_330 = arith.constant 73 : index
    %349 = vector.load %arg10[%c0_329, %c73_330] : memref<8x1536xf32, #tpu.memory_space<vmem>>, vector<8x512xf32>
    %350 = vector.broadcast %348 : vector<1x512xf32> to vector<8x512xf32>
    %351 = arith.mulf %349, %350 : vector<8x512xf32>
    %c64_331 = arith.constant 64 : index
    %c0_332 = arith.constant 0 : index
    %352 = vector.load %arg11[%c64_331, %c0_332] : memref<216x1024xf32, #tpu.memory_space<vmem>>, vector<8x512xf32>
    tpu.vector_store %arg11[%c64_331, %c0_332], %351 {strides = array<i32>} : memref<216x1024xf32, #tpu.memory_space<vmem>>, vector<8x512xf32>,
    %c9_333 = arith.constant 9 : index
    %c0_334 = arith.constant 0 : index
    %353 = vector.load %arg1[%c9_333, %c0_334] : memref<27x512xf32, #tpu.memory_space<vmem>>, vector<1x512xf32>
    %c0_335 = arith.constant 0 : index
    %c119_336 = arith.constant 119 : index
    %354 = vector.load %arg10[%c0_335, %c119_336] : memref<8x1536xf32, #tpu.memory_space<vmem>>, vector<8x512xf32>
    %355 = vector.broadcast %353 : vector<1x512xf32> to vector<8x512xf32>
    %356 = arith.mulf %354, %355 : vector<8x512xf32>
    %c72_337 = arith.constant 72 : index
    %c0_338 = arith.constant 0 : index
    %357 = vector.load %arg11[%c72_337, %c0_338] : memref<216x1024xf32, #tpu.memory_space<vmem>>, vector<8x512xf32>
    tpu.vector_store %arg11[%c72_337, %c0_338], %356 {strides = array<i32>} : memref<216x1024xf32, #tpu.memory_space<vmem>>, vector<8x512xf32>,
    %c10_339 = arith.constant 10 : index
    %c0_340 = arith.constant 0 : index
    %358 = vector.load %arg1[%c10_339, %c0_340] : memref<27x512xf32, #tpu.memory_space<vmem>>, vector<1x512xf32>
    %c0_341 = arith.constant 0 : index
    %c120_342 = arith.constant 120 : index
    %359 = vector.load %arg10[%c0_341, %c120_342] : memref<8x1536xf32, #tpu.memory_space<vmem>>, vector<8x512xf32>
    %360 = vector.broadcast %358 : vector<1x512xf32> to vector<8x512xf32>
    %361 = arith.mulf %359, %360 : vector<8x512xf32>
    %c80_343 = arith.constant 80 : index
    %c0_344 = arith.constant 0 : index
    %362 = vector.load %arg11[%c80_343, %c0_344] : memref<216x1024xf32, #tpu.memory_space<vmem>>, vector<8x512xf32>
    tpu.vector_store %arg11[%c80_343, %c0_344], %361 {strides = array<i32>} : memref<216x1024xf32, #tpu.memory_space<vmem>>, vector<8x512xf32>,
    %c11_345 = arith.constant 11 : index
    %c0_346 = arith.constant 0 : index
    %363 = vector.load %arg1[%c11_345, %c0_346] : memref<27x512xf32, #tpu.memory_space<vmem>>, vector<1x512xf32>
    %c0_347 = arith.constant 0 : index
    %c121_348 = arith.constant 121 : index
    %364 = vector.load %arg10[%c0_347, %c121_348] : memref<8x1536xf32, #tpu.memory_space<vmem>>, vector<8x512xf32>
    %365 = vector.broadcast %363 : vector<1x512xf32> to vector<8x512xf32>
    %366 = arith.mulf %364, %365 : vector<8x512xf32>
    %c88_349 = arith.constant 88 : index
    %c0_350 = arith.constant 0 : index
    %367 = vector.load %arg11[%c88_349, %c0_350] : memref<216x1024xf32, #tpu.memory_space<vmem>>, vector<8x512xf32>
    tpu.vector_store %arg11[%c88_349, %c0_350], %366 {strides = array<i32>} : memref<216x1024xf32, #tpu.memory_space<vmem>>, vector<8x512xf32>,
    %c12_351 = arith.constant 12 : index
    %c0_352 = arith.constant 0 : index
    %368 = vector.load %arg1[%c12_351, %c0_352] : memref<27x512xf32, #tpu.memory_space<vmem>>, vector<1x512xf32>
    %c0_353 = arith.constant 0 : index
    %c127_354 = arith.constant 127 : index
    %369 = vector.load %arg10[%c0_353, %c127_354] : memref<8x1536xf32, #tpu.memory_space<vmem>>, vector<8x512xf32>
    %370 = vector.broadcast %368 : vector<1x512xf32> to vector<8x512xf32>
    %371 = arith.mulf %369, %370 : vector<8x512xf32>
    %c96_355 = arith.constant 96 : index
    %c0_356 = arith.constant 0 : index
    %372 = vector.load %arg11[%c96_355, %c0_356] : memref<216x1024xf32, #tpu.memory_space<vmem>>, vector<8x512xf32>
    tpu.vector_store %arg11[%c96_355, %c0_356], %371 {strides = array<i32>} : memref<216x1024xf32, #tpu.memory_space<vmem>>, vector<8x512xf32>,
    %c13_357 = arith.constant 13 : index
    %c0_358 = arith.constant 0 : index
    %373 = vector.load %arg1[%c13_357, %c0_358] : memref<27x512xf32, #tpu.memory_space<vmem>>, vector<1x512xf32>
    %c0_359 = arith.constant 0 : index
    %c128_360 = arith.constant 128 : index
    %374 = vector.load %arg10[%c0_359, %c128_360] : memref<8x1536xf32, #tpu.memory_space<vmem>>, vector<8x512xf32>
    %375 = vector.broadcast %373 : vector<1x512xf32> to vector<8x512xf32>
    %376 = arith.mulf %374, %375 : vector<8x512xf32>
    %c104_361 = arith.constant 104 : index
    %c0_362 = arith.constant 0 : index
    %377 = vector.load %arg11[%c104_361, %c0_362] : memref<216x1024xf32, #tpu.memory_space<vmem>>, vector<8x512xf32>
    tpu.vector_store %arg11[%c104_361, %c0_362], %376 {strides = array<i32>} : memref<216x1024xf32, #tpu.memory_space<vmem>>, vector<8x512xf32>,
    %c14_363 = arith.constant 14 : index
    %c0_364 = arith.constant 0 : index
    %378 = vector.load %arg1[%c14_363, %c0_364] : memref<27x512xf32, #tpu.memory_space<vmem>>, vector<1x512xf32>
    %c0_365 = arith.constant 0 : index
    %c129_366 = arith.constant 129 : index
    %379 = vector.load %arg10[%c0_365, %c129_366] : memref<8x1536xf32, #tpu.memory_space<vmem>>, vector<8x512xf32>
    %380 = vector.broadcast %378 : vector<1x512xf32> to vector<8x512xf32>
    %381 = arith.mulf %379, %380 : vector<8x512xf32>
    %c112 = arith.constant 112 : index
    %c0_367 = arith.constant 0 : index
    %382 = vector.load %arg11[%c112, %c0_367] : memref<216x1024xf32, #tpu.memory_space<vmem>>, vector<8x512xf32>
    tpu.vector_store %arg11[%c112, %c0_367], %381 {strides = array<i32>} : memref<216x1024xf32, #tpu.memory_space<vmem>>, vector<8x512xf32>,
    %c15_368 = arith.constant 15 : index
    %c0_369 = arith.constant 0 : index
    %383 = vector.load %arg1[%c15_368, %c0_369] : memref<27x512xf32, #tpu.memory_space<vmem>>, vector<1x512xf32>
    %c0_370 = arith.constant 0 : index
    %c135_371 = arith.constant 135 : index
    %384 = vector.load %arg10[%c0_370, %c135_371] : memref<8x1536xf32, #tpu.memory_space<vmem>>, vector<8x512xf32>
    %385 = vector.broadcast %383 : vector<1x512xf32> to vector<8x512xf32>
    %386 = arith.mulf %384, %385 : vector<8x512xf32>
    %c120_372 = arith.constant 120 : index
    %c0_373 = arith.constant 0 : index
    %387 = vector.load %arg11[%c120_372, %c0_373] : memref<216x1024xf32, #tpu.memory_space<vmem>>, vector<8x512xf32>
    tpu.vector_store %arg11[%c120_372, %c0_373], %386 {strides = array<i32>} : memref<216x1024xf32, #tpu.memory_space<vmem>>, vector<8x512xf32>,
    %c16_374 = arith.constant 16 : index
    %c0_375 = arith.constant 0 : index
    %388 = vector.load %arg1[%c16_374, %c0_375] : memref<27x512xf32, #tpu.memory_space<vmem>>, vector<1x512xf32>
    %c0_376 = arith.constant 0 : index
    %c136_377 = arith.constant 136 : index
    %389 = vector.load %arg10[%c0_376, %c136_377] : memref<8x1536xf32, #tpu.memory_space<vmem>>, vector<8x512xf32>
    %390 = vector.broadcast %388 : vector<1x512xf32> to vector<8x512xf32>
    %391 = arith.mulf %389, %390 : vector<8x512xf32>
    %c128_378 = arith.constant 128 : index
    %c0_379 = arith.constant 0 : index
    %392 = vector.load %arg11[%c128_378, %c0_379] : memref<216x1024xf32, #tpu.memory_space<vmem>>, vector<8x512xf32>
    tpu.vector_store %arg11[%c128_378, %c0_379], %391 {strides = array<i32>} : memref<216x1024xf32, #tpu.memory_space<vmem>>, vector<8x512xf32>,
    %c17_380 = arith.constant 17 : index
    %c0_381 = arith.constant 0 : index
    %393 = vector.load %arg1[%c17_380, %c0_381] : memref<27x512xf32, #tpu.memory_space<vmem>>, vector<1x512xf32>
    %c0_382 = arith.constant 0 : index
    %c137_383 = arith.constant 137 : index
    %394 = vector.load %arg10[%c0_382, %c137_383] : memref<8x1536xf32, #tpu.memory_space<vmem>>, vector<8x512xf32>
    %395 = vector.broadcast %393 : vector<1x512xf32> to vector<8x512xf32>
    %396 = arith.mulf %394, %395 : vector<8x512xf32>
    %c136_384 = arith.constant 136 : index
    %c0_385 = arith.constant 0 : index
    %397 = vector.load %arg11[%c136_384, %c0_385] : memref<216x1024xf32, #tpu.memory_space<vmem>>, vector<8x512xf32>
    tpu.vector_store %arg11[%c136_384, %c0_385], %396 {strides = array<i32>} : memref<216x1024xf32, #tpu.memory_space<vmem>>, vector<8x512xf32>,
    %c18_386 = arith.constant 18 : index
    %c0_387 = arith.constant 0 : index
    %398 = vector.load %arg1[%c18_386, %c0_387] : memref<27x512xf32, #tpu.memory_space<vmem>>, vector<1x512xf32>
    %c0_388 = arith.constant 0 : index
    %c183_389 = arith.constant 183 : index
    %399 = vector.load %arg10[%c0_388, %c183_389] : memref<8x1536xf32, #tpu.memory_space<vmem>>, vector<8x512xf32>
    %400 = vector.broadcast %398 : vector<1x512xf32> to vector<8x512xf32>
    %401 = arith.mulf %399, %400 : vector<8x512xf32>
    %c144 = arith.constant 144 : index
    %c0_390 = arith.constant 0 : index
    %402 = vector.load %arg11[%c144, %c0_390] : memref<216x1024xf32, #tpu.memory_space<vmem>>, vector<8x512xf32>
    tpu.vector_store %arg11[%c144, %c0_390], %401 {strides = array<i32>} : memref<216x1024xf32, #tpu.memory_space<vmem>>, vector<8x512xf32>,
    %c19_391 = arith.constant 19 : index
    %c0_392 = arith.constant 0 : index
    %403 = vector.load %arg1[%c19_391, %c0_392] : memref<27x512xf32, #tpu.memory_space<vmem>>, vector<1x512xf32>
    %c0_393 = arith.constant 0 : index
    %c184_394 = arith.constant 184 : index
    %404 = vector.load %arg10[%c0_393, %c184_394] : memref<8x1536xf32, #tpu.memory_space<vmem>>, vector<8x512xf32>
    %405 = vector.broadcast %403 : vector<1x512xf32> to vector<8x512xf32>
    %406 = arith.mulf %404, %405 : vector<8x512xf32>
    %c152 = arith.constant 152 : index
    %c0_395 = arith.constant 0 : index
    %407 = vector.load %arg11[%c152, %c0_395] : memref<216x1024xf32, #tpu.memory_space<vmem>>, vector<8x512xf32>
    tpu.vector_store %arg11[%c152, %c0_395], %406 {strides = array<i32>} : memref<216x1024xf32, #tpu.memory_space<vmem>>, vector<8x512xf32>,
    %c20_396 = arith.constant 20 : index
    %c0_397 = arith.constant 0 : index
    %408 = vector.load %arg1[%c20_396, %c0_397] : memref<27x512xf32, #tpu.memory_space<vmem>>, vector<1x512xf32>
    %c0_398 = arith.constant 0 : index
    %c185_399 = arith.constant 185 : index
    %409 = vector.load %arg10[%c0_398, %c185_399] : memref<8x1536xf32, #tpu.memory_space<vmem>>, vector<8x512xf32>
    %410 = vector.broadcast %408 : vector<1x512xf32> to vector<8x512xf32>
    %411 = arith.mulf %409, %410 : vector<8x512xf32>
    %c160 = arith.constant 160 : index
    %c0_400 = arith.constant 0 : index
    %412 = vector.load %arg11[%c160, %c0_400] : memref<216x1024xf32, #tpu.memory_space<vmem>>, vector<8x512xf32>
    tpu.vector_store %arg11[%c160, %c0_400], %411 {strides = array<i32>} : memref<216x1024xf32, #tpu.memory_space<vmem>>, vector<8x512xf32>,
    %c21_401 = arith.constant 21 : index
    %c0_402 = arith.constant 0 : index
    %413 = vector.load %arg1[%c21_401, %c0_402] : memref<27x512xf32, #tpu.memory_space<vmem>>, vector<1x512xf32>
    %c0_403 = arith.constant 0 : index
    %c191_404 = arith.constant 191 : index
    %414 = vector.load %arg10[%c0_403, %c191_404] : memref<8x1536xf32, #tpu.memory_space<vmem>>, vector<8x512xf32>
    %415 = vector.broadcast %413 : vector<1x512xf32> to vector<8x512xf32>
    %416 = arith.mulf %414, %415 : vector<8x512xf32>
    %c168 = arith.constant 168 : index
    %c0_405 = arith.constant 0 : index
    %417 = vector.load %arg11[%c168, %c0_405] : memref<216x1024xf32, #tpu.memory_space<vmem>>, vector<8x512xf32>
    tpu.vector_store %arg11[%c168, %c0_405], %416 {strides = array<i32>} : memref<216x1024xf32, #tpu.memory_space<vmem>>, vector<8x512xf32>,
    %c22_406 = arith.constant 22 : index
    %c0_407 = arith.constant 0 : index
    %418 = vector.load %arg1[%c22_406, %c0_407] : memref<27x512xf32, #tpu.memory_space<vmem>>, vector<1x512xf32>
    %c0_408 = arith.constant 0 : index
    %c192_409 = arith.constant 192 : index
    %419 = vector.load %arg10[%c0_408, %c192_409] : memref<8x1536xf32, #tpu.memory_space<vmem>>, vector<8x512xf32>
    %420 = vector.broadcast %418 : vector<1x512xf32> to vector<8x512xf32>
    %421 = arith.mulf %419, %420 : vector<8x512xf32>
    %c176 = arith.constant 176 : index
    %c0_410 = arith.constant 0 : index
    %422 = vector.load %arg11[%c176, %c0_410] : memref<216x1024xf32, #tpu.memory_space<vmem>>, vector<8x512xf32>
    tpu.vector_store %arg11[%c176, %c0_410], %421 {strides = array<i32>} : memref<216x1024xf32, #tpu.memory_space<vmem>>, vector<8x512xf32>,
    %c23_411 = arith.constant 23 : index
    %c0_412 = arith.constant 0 : index
    %423 = vector.load %arg1[%c23_411, %c0_412] : memref<27x512xf32, #tpu.memory_space<vmem>>, vector<1x512xf32>
    %c0_413 = arith.constant 0 : index
    %c193_414 = arith.constant 193 : index
    %424 = vector.load %arg10[%c0_413, %c193_414] : memref<8x1536xf32, #tpu.memory_space<vmem>>, vector<8x512xf32>
    %425 = vector.broadcast %423 : vector<1x512xf32> to vector<8x512xf32>
    %426 = arith.mulf %424, %425 : vector<8x512xf32>
    %c184_415 = arith.constant 184 : index
    %c0_416 = arith.constant 0 : index
    %427 = vector.load %arg11[%c184_415, %c0_416] : memref<216x1024xf32, #tpu.memory_space<vmem>>, vector<8x512xf32>
    tpu.vector_store %arg11[%c184_415, %c0_416], %426 {strides = array<i32>} : memref<216x1024xf32, #tpu.memory_space<vmem>>, vector<8x512xf32>,
    %c24_417 = arith.constant 24 : index
    %c0_418 = arith.constant 0 : index
    %428 = vector.load %arg1[%c24_417, %c0_418] : memref<27x512xf32, #tpu.memory_space<vmem>>, vector<1x512xf32>
    %c0_419 = arith.constant 0 : index
    %c199_420 = arith.constant 199 : index
    %429 = vector.load %arg10[%c0_419, %c199_420] : memref<8x1536xf32, #tpu.memory_space<vmem>>, vector<8x512xf32>
    %430 = vector.broadcast %428 : vector<1x512xf32> to vector<8x512xf32>
    %431 = arith.mulf %429, %430 : vector<8x512xf32>
    %c192_421 = arith.constant 192 : index
    %c0_422 = arith.constant 0 : index
    %432 = vector.load %arg11[%c192_421, %c0_422] : memref<216x1024xf32, #tpu.memory_space<vmem>>, vector<8x512xf32>
    tpu.vector_store %arg11[%c192_421, %c0_422], %431 {strides = array<i32>} : memref<216x1024xf32, #tpu.memory_space<vmem>>, vector<8x512xf32>,
    %c25_423 = arith.constant 25 : index
    %c0_424 = arith.constant 0 : index
    %433 = vector.load %arg1[%c25_423, %c0_424] : memref<27x512xf32, #tpu.memory_space<vmem>>, vector<1x512xf32>
    %c0_425 = arith.constant 0 : index
    %c200_426 = arith.constant 200 : index
    %434 = vector.load %arg10[%c0_425, %c200_426] : memref<8x1536xf32, #tpu.memory_space<vmem>>, vector<8x512xf32>
    %435 = vector.broadcast %433 : vector<1x512xf32> to vector<8x512xf32>
    %436 = arith.mulf %434, %435 : vector<8x512xf32>
    %c200_427 = arith.constant 200 : index
    %c0_428 = arith.constant 0 : index
    %437 = vector.load %arg11[%c200_427, %c0_428] : memref<216x1024xf32, #tpu.memory_space<vmem>>, vector<8x512xf32>
    tpu.vector_store %arg11[%c200_427, %c0_428], %436 {strides = array<i32>} : memref<216x1024xf32, #tpu.memory_space<vmem>>, vector<8x512xf32>,
    %c26_429 = arith.constant 26 : index
    %c0_430 = arith.constant 0 : index
    %438 = vector.load %arg1[%c26_429, %c0_430] : memref<27x512xf32, #tpu.memory_space<vmem>>, vector<1x512xf32>
    %c0_431 = arith.constant 0 : index
    %c201_432 = arith.constant 201 : index
    %439 = vector.load %arg10[%c0_431, %c201_432] : memref<8x1536xf32, #tpu.memory_space<vmem>>, vector<8x512xf32>
    %440 = vector.broadcast %438 : vector<1x512xf32> to vector<8x512xf32>
    %441 = arith.mulf %439, %440 : vector<8x512xf32>
    %c208 = arith.constant 208 : index
    %c0_433 = arith.constant 0 : index
    %442 = vector.load %arg11[%c208, %c0_433] : memref<216x1024xf32, #tpu.memory_space<vmem>>, vector<8x512xf32>
    tpu.vector_store %arg11[%c208, %c0_433], %441 {strides = array<i32>} : memref<216x1024xf32, #tpu.memory_space<vmem>>, vector<8x512xf32>,
    %c0_434 = arith.constant 0 : index
    %c0_435 = arith.constant 0 : index
    %443 = vector.load %arg1[%c0_434, %c0_435] : memref<27x512xf32, #tpu.memory_space<vmem>>, vector<1x512xf32>
    %c0_436 = arith.constant 0 : index
    %c823 = arith.constant 823 : index
    %444 = vector.load %arg10[%c0_436, %c823] : memref<8x1536xf32, #tpu.memory_space<vmem>>, vector<8x512xf32>
    %445 = vector.broadcast %443 : vector<1x512xf32> to vector<8x512xf32>
    %446 = arith.mulf %444, %445 : vector<8x512xf32>
    %c0_437 = arith.constant 0 : index
    %c512_438 = arith.constant 512 : index
    %447 = vector.load %arg11[%c0_437, %c512_438] : memref<216x1024xf32, #tpu.memory_space<vmem>>, vector<8x512xf32>
    tpu.vector_store %arg11[%c0_437, %c512_438], %446 {strides = array<i32>} : memref<216x1024xf32, #tpu.memory_space<vmem>>, vector<8x512xf32>,
    %c1_439 = arith.constant 1 : index
    %c0_440 = arith.constant 0 : index
    %448 = vector.load %arg1[%c1_439, %c0_440] : memref<27x512xf32, #tpu.memory_space<vmem>>, vector<1x512xf32>
    %c0_441 = arith.constant 0 : index
    %c824 = arith.constant 824 : index
    %449 = vector.load %arg10[%c0_441, %c824] : memref<8x1536xf32, #tpu.memory_space<vmem>>, vector<8x512xf32>
    %450 = vector.broadcast %448 : vector<1x512xf32> to vector<8x512xf32>
    %451 = arith.mulf %449, %450 : vector<8x512xf32>
    %c8_442 = arith.constant 8 : index
    %c512_443 = arith.constant 512 : index
    %452 = vector.load %arg11[%c8_442, %c512_443] : memref<216x1024xf32, #tpu.memory_space<vmem>>, vector<8x512xf32>
    tpu.vector_store %arg11[%c8_442, %c512_443], %451 {strides = array<i32>} : memref<216x1024xf32, #tpu.memory_space<vmem>>, vector<8x512xf32>,
    %c2_444 = arith.constant 2 : index
    %c0_445 = arith.constant 0 : index
    %453 = vector.load %arg1[%c2_444, %c0_445] : memref<27x512xf32, #tpu.memory_space<vmem>>, vector<1x512xf32>
    %c0_446 = arith.constant 0 : index
    %c825 = arith.constant 825 : index
    %454 = vector.load %arg10[%c0_446, %c825] : memref<8x1536xf32, #tpu.memory_space<vmem>>, vector<8x512xf32>
    %455 = vector.broadcast %453 : vector<1x512xf32> to vector<8x512xf32>
    %456 = arith.mulf %454, %455 : vector<8x512xf32>
    %c16_447 = arith.constant 16 : index
    %c512_448 = arith.constant 512 : index
    %457 = vector.load %arg11[%c16_447, %c512_448] : memref<216x1024xf32, #tpu.memory_space<vmem>>, vector<8x512xf32>
    tpu.vector_store %arg11[%c16_447, %c512_448], %456 {strides = array<i32>} : memref<216x1024xf32, #tpu.memory_space<vmem>>, vector<8x512xf32>,
    %c3_449 = arith.constant 3 : index
    %c0_450 = arith.constant 0 : index
    %458 = vector.load %arg1[%c3_449, %c0_450] : memref<27x512xf32, #tpu.memory_space<vmem>>, vector<1x512xf32>
    %c0_451 = arith.constant 0 : index
    %c831 = arith.constant 831 : index
    %459 = vector.load %arg10[%c0_451, %c831] : memref<8x1536xf32, #tpu.memory_space<vmem>>, vector<8x512xf32>
    %460 = vector.broadcast %458 : vector<1x512xf32> to vector<8x512xf32>
    %461 = arith.mulf %459, %460 : vector<8x512xf32>
    %c24_452 = arith.constant 24 : index
    %c512_453 = arith.constant 512 : index
    %462 = vector.load %arg11[%c24_452, %c512_453] : memref<216x1024xf32, #tpu.memory_space<vmem>>, vector<8x512xf32>
    tpu.vector_store %arg11[%c24_452, %c512_453], %461 {strides = array<i32>} : memref<216x1024xf32, #tpu.memory_space<vmem>>, vector<8x512xf32>,
    %c4_454 = arith.constant 4 : index
    %c0_455 = arith.constant 0 : index
    %463 = vector.load %arg1[%c4_454, %c0_455] : memref<27x512xf32, #tpu.memory_space<vmem>>, vector<1x512xf32>
    %c0_456 = arith.constant 0 : index
    %c832 = arith.constant 832 : index
    %464 = vector.load %arg10[%c0_456, %c832] : memref<8x1536xf32, #tpu.memory_space<vmem>>, vector<8x512xf32>
    %465 = vector.broadcast %463 : vector<1x512xf32> to vector<8x512xf32>
    %466 = arith.mulf %464, %465 : vector<8x512xf32>
    %c32_457 = arith.constant 32 : index
    %c512_458 = arith.constant 512 : index
    %467 = vector.load %arg11[%c32_457, %c512_458] : memref<216x1024xf32, #tpu.memory_space<vmem>>, vector<8x512xf32>
    tpu.vector_store %arg11[%c32_457, %c512_458], %466 {strides = array<i32>} : memref<216x1024xf32, #tpu.memory_space<vmem>>, vector<8x512xf32>,
    %c5_459 = arith.constant 5 : index
    %c0_460 = arith.constant 0 : index
    %468 = vector.load %arg1[%c5_459, %c0_460] : memref<27x512xf32, #tpu.memory_space<vmem>>, vector<1x512xf32>
    %c0_461 = arith.constant 0 : index
    %c833 = arith.constant 833 : index
    %469 = vector.load %arg10[%c0_461, %c833] : memref<8x1536xf32, #tpu.memory_space<vmem>>, vector<8x512xf32>
    %470 = vector.broadcast %468 : vector<1x512xf32> to vector<8x512xf32>
    %471 = arith.mulf %469, %470 : vector<8x512xf32>
    %c40_462 = arith.constant 40 : index
    %c512_463 = arith.constant 512 : index
    %472 = vector.load %arg11[%c40_462, %c512_463] : memref<216x1024xf32, #tpu.memory_space<vmem>>, vector<8x512xf32>
    tpu.vector_store %arg11[%c40_462, %c512_463], %471 {strides = array<i32>} : memref<216x1024xf32, #tpu.memory_space<vmem>>, vector<8x512xf32>,
    %c6_464 = arith.constant 6 : index
    %c0_465 = arith.constant 0 : index
    %473 = vector.load %arg1[%c6_464, %c0_465] : memref<27x512xf32, #tpu.memory_space<vmem>>, vector<1x512xf32>
    %c0_466 = arith.constant 0 : index
    %c839 = arith.constant 839 : index
    %474 = vector.load %arg10[%c0_466, %c839] : memref<8x1536xf32, #tpu.memory_space<vmem>>, vector<8x512xf32>
    %475 = vector.broadcast %473 : vector<1x512xf32> to vector<8x512xf32>
    %476 = arith.mulf %474, %475 : vector<8x512xf32>
    %c48_467 = arith.constant 48 : index
    %c512_468 = arith.constant 512 : index
    %477 = vector.load %arg11[%c48_467, %c512_468] : memref<216x1024xf32, #tpu.memory_space<vmem>>, vector<8x512xf32>
    tpu.vector_store %arg11[%c48_467, %c512_468], %476 {strides = array<i32>} : memref<216x1024xf32, #tpu.memory_space<vmem>>, vector<8x512xf32>,
    %c7_469 = arith.constant 7 : index
    %c0_470 = arith.constant 0 : index
    %478 = vector.load %arg1[%c7_469, %c0_470] : memref<27x512xf32, #tpu.memory_space<vmem>>, vector<1x512xf32>
    %c0_471 = arith.constant 0 : index
    %c840 = arith.constant 840 : index
    %479 = vector.load %arg10[%c0_471, %c840] : memref<8x1536xf32, #tpu.memory_space<vmem>>, vector<8x512xf32>
    %480 = vector.broadcast %478 : vector<1x512xf32> to vector<8x512xf32>
    %481 = arith.mulf %479, %480 : vector<8x512xf32>
    %c56_472 = arith.constant 56 : index
    %c512_473 = arith.constant 512 : index
    %482 = vector.load %arg11[%c56_472, %c512_473] : memref<216x1024xf32, #tpu.memory_space<vmem>>, vector<8x512xf32>
    tpu.vector_store %arg11[%c56_472, %c512_473], %481 {strides = array<i32>} : memref<216x1024xf32, #tpu.memory_space<vmem>>, vector<8x512xf32>,
    %c8_474 = arith.constant 8 : index
    %c0_475 = arith.constant 0 : index
    %483 = vector.load %arg1[%c8_474, %c0_475] : memref<27x512xf32, #tpu.memory_space<vmem>>, vector<1x512xf32>
    %c0_476 = arith.constant 0 : index
    %c841 = arith.constant 841 : index
    %484 = vector.load %arg10[%c0_476, %c841] : memref<8x1536xf32, #tpu.memory_space<vmem>>, vector<8x512xf32>
    %485 = vector.broadcast %483 : vector<1x512xf32> to vector<8x512xf32>
    %486 = arith.mulf %484, %485 : vector<8x512xf32>
    %c64_477 = arith.constant 64 : index
    %c512_478 = arith.constant 512 : index
    %487 = vector.load %arg11[%c64_477, %c512_478] : memref<216x1024xf32, #tpu.memory_space<vmem>>, vector<8x512xf32>
    tpu.vector_store %arg11[%c64_477, %c512_478], %486 {strides = array<i32>} : memref<216x1024xf32, #tpu.memory_space<vmem>>, vector<8x512xf32>,
    %c9_479 = arith.constant 9 : index
    %c0_480 = arith.constant 0 : index
    %488 = vector.load %arg1[%c9_479, %c0_480] : memref<27x512xf32, #tpu.memory_space<vmem>>, vector<1x512xf32>
    %c0_481 = arith.constant 0 : index
    %c887 = arith.constant 887 : index
    %489 = vector.load %arg10[%c0_481, %c887] : memref<8x1536xf32, #tpu.memory_space<vmem>>, vector<8x512xf32>
    %490 = vector.broadcast %488 : vector<1x512xf32> to vector<8x512xf32>
    %491 = arith.mulf %489, %490 : vector<8x512xf32>
    %c72_482 = arith.constant 72 : index
    %c512_483 = arith.constant 512 : index
    %492 = vector.load %arg11[%c72_482, %c512_483] : memref<216x1024xf32, #tpu.memory_space<vmem>>, vector<8x512xf32>
    tpu.vector_store %arg11[%c72_482, %c512_483], %491 {strides = array<i32>} : memref<216x1024xf32, #tpu.memory_space<vmem>>, vector<8x512xf32>,
    %c10_484 = arith.constant 10 : index
    %c0_485 = arith.constant 0 : index
    %493 = vector.load %arg1[%c10_484, %c0_485] : memref<27x512xf32, #tpu.memory_space<vmem>>, vector<1x512xf32>
    %c0_486 = arith.constant 0 : index
    %c888 = arith.constant 888 : index
    %494 = vector.load %arg10[%c0_486, %c888] : memref<8x1536xf32, #tpu.memory_space<vmem>>, vector<8x512xf32>
    %495 = vector.broadcast %493 : vector<1x512xf32> to vector<8x512xf32>
    %496 = arith.mulf %494, %495 : vector<8x512xf32>
    %c80_487 = arith.constant 80 : index
    %c512_488 = arith.constant 512 : index
    %497 = vector.load %arg11[%c80_487, %c512_488] : memref<216x1024xf32, #tpu.memory_space<vmem>>, vector<8x512xf32>
    tpu.vector_store %arg11[%c80_487, %c512_488], %496 {strides = array<i32>} : memref<216x1024xf32, #tpu.memory_space<vmem>>, vector<8x512xf32>,
    %c11_489 = arith.constant 11 : index
    %c0_490 = arith.constant 0 : index
    %498 = vector.load %arg1[%c11_489, %c0_490] : memref<27x512xf32, #tpu.memory_space<vmem>>, vector<1x512xf32>
    %c0_491 = arith.constant 0 : index
    %c889 = arith.constant 889 : index
    %499 = vector.load %arg10[%c0_491, %c889] : memref<8x1536xf32, #tpu.memory_space<vmem>>, vector<8x512xf32>
    %500 = vector.broadcast %498 : vector<1x512xf32> to vector<8x512xf32>
    %501 = arith.mulf %499, %500 : vector<8x512xf32>
    %c88_492 = arith.constant 88 : index
    %c512_493 = arith.constant 512 : index
    %502 = vector.load %arg11[%c88_492, %c512_493] : memref<216x1024xf32, #tpu.memory_space<vmem>>, vector<8x512xf32>
    tpu.vector_store %arg11[%c88_492, %c512_493], %501 {strides = array<i32>} : memref<216x1024xf32, #tpu.memory_space<vmem>>, vector<8x512xf32>,
    %c12_494 = arith.constant 12 : index
    %c0_495 = arith.constant 0 : index
    %503 = vector.load %arg1[%c12_494, %c0_495] : memref<27x512xf32, #tpu.memory_space<vmem>>, vector<1x512xf32>
    %c0_496 = arith.constant 0 : index
    %c895 = arith.constant 895 : index
    %504 = vector.load %arg10[%c0_496, %c895] : memref<8x1536xf32, #tpu.memory_space<vmem>>, vector<8x512xf32>
    %505 = vector.broadcast %503 : vector<1x512xf32> to vector<8x512xf32>
    %506 = arith.mulf %504, %505 : vector<8x512xf32>
    %c96_497 = arith.constant 96 : index
    %c512_498 = arith.constant 512 : index
    %507 = vector.load %arg11[%c96_497, %c512_498] : memref<216x1024xf32, #tpu.memory_space<vmem>>, vector<8x512xf32>
    tpu.vector_store %arg11[%c96_497, %c512_498], %506 {strides = array<i32>} : memref<216x1024xf32, #tpu.memory_space<vmem>>, vector<8x512xf32>,
    %c13_499 = arith.constant 13 : index
    %c0_500 = arith.constant 0 : index
    %508 = vector.load %arg1[%c13_499, %c0_500] : memref<27x512xf32, #tpu.memory_space<vmem>>, vector<1x512xf32>
    %c0_501 = arith.constant 0 : index
    %c896_502 = arith.constant 896 : index
    %509 = vector.load %arg10[%c0_501, %c896_502] : memref<8x1536xf32, #tpu.memory_space<vmem>>, vector<8x512xf32>
    %510 = vector.broadcast %508 : vector<1x512xf32> to vector<8x512xf32>
    %511 = arith.mulf %509, %510 : vector<8x512xf32>
    %c104_503 = arith.constant 104 : index
    %c512_504 = arith.constant 512 : index
    %512 = vector.load %arg11[%c104_503, %c512_504] : memref<216x1024xf32, #tpu.memory_space<vmem>>, vector<8x512xf32>
    tpu.vector_store %arg11[%c104_503, %c512_504], %511 {strides = array<i32>} : memref<216x1024xf32, #tpu.memory_space<vmem>>, vector<8x512xf32>,
    %c14_505 = arith.constant 14 : index
    %c0_506 = arith.constant 0 : index
    %513 = vector.load %arg1[%c14_505, %c0_506] : memref<27x512xf32, #tpu.memory_space<vmem>>, vector<1x512xf32>
    %c0_507 = arith.constant 0 : index
    %c897 = arith.constant 897 : index
    %514 = vector.load %arg10[%c0_507, %c897] : memref<8x1536xf32, #tpu.memory_space<vmem>>, vector<8x512xf32>
    %515 = vector.broadcast %513 : vector<1x512xf32> to vector<8x512xf32>
    %516 = arith.mulf %514, %515 : vector<8x512xf32>
    %c112_508 = arith.constant 112 : index
    %c512_509 = arith.constant 512 : index
    %517 = vector.load %arg11[%c112_508, %c512_509] : memref<216x1024xf32, #tpu.memory_space<vmem>>, vector<8x512xf32>
    tpu.vector_store %arg11[%c112_508, %c512_509], %516 {strides = array<i32>} : memref<216x1024xf32, #tpu.memory_space<vmem>>, vector<8x512xf32>,
    %c15_510 = arith.constant 15 : index
    %c0_511 = arith.constant 0 : index
    %518 = vector.load %arg1[%c15_510, %c0_511] : memref<27x512xf32, #tpu.memory_space<vmem>>, vector<1x512xf32>
    %c0_512 = arith.constant 0 : index
    %c903 = arith.constant 903 : index
    %519 = vector.load %arg10[%c0_512, %c903] : memref<8x1536xf32, #tpu.memory_space<vmem>>, vector<8x512xf32>
    %520 = vector.broadcast %518 : vector<1x512xf32> to vector<8x512xf32>
    %521 = arith.mulf %519, %520 : vector<8x512xf32>
    %c120_513 = arith.constant 120 : index
    %c512_514 = arith.constant 512 : index
    %522 = vector.load %arg11[%c120_513, %c512_514] : memref<216x1024xf32, #tpu.memory_space<vmem>>, vector<8x512xf32>
    tpu.vector_store %arg11[%c120_513, %c512_514], %521 {strides = array<i32>} : memref<216x1024xf32, #tpu.memory_space<vmem>>, vector<8x512xf32>,
    %c16_515 = arith.constant 16 : index
    %c0_516 = arith.constant 0 : index
    %523 = vector.load %arg1[%c16_515, %c0_516] : memref<27x512xf32, #tpu.memory_space<vmem>>, vector<1x512xf32>
    %c0_517 = arith.constant 0 : index
    %c904 = arith.constant 904 : index
    %524 = vector.load %arg10[%c0_517, %c904] : memref<8x1536xf32, #tpu.memory_space<vmem>>, vector<8x512xf32>
    %525 = vector.broadcast %523 : vector<1x512xf32> to vector<8x512xf32>
    %526 = arith.mulf %524, %525 : vector<8x512xf32>
    %c128_518 = arith.constant 128 : index
    %c512_519 = arith.constant 512 : index
    %527 = vector.load %arg11[%c128_518, %c512_519] : memref<216x1024xf32, #tpu.memory_space<vmem>>, vector<8x512xf32>
    tpu.vector_store %arg11[%c128_518, %c512_519], %526 {strides = array<i32>} : memref<216x1024xf32, #tpu.memory_space<vmem>>, vector<8x512xf32>,
    %c17_520 = arith.constant 17 : index
    %c0_521 = arith.constant 0 : index
    %528 = vector.load %arg1[%c17_520, %c0_521] : memref<27x512xf32, #tpu.memory_space<vmem>>, vector<1x512xf32>
    %c0_522 = arith.constant 0 : index
    %c905 = arith.constant 905 : index
    %529 = vector.load %arg10[%c0_522, %c905] : memref<8x1536xf32, #tpu.memory_space<vmem>>, vector<8x512xf32>
    %530 = vector.broadcast %528 : vector<1x512xf32> to vector<8x512xf32>
    %531 = arith.mulf %529, %530 : vector<8x512xf32>
    %c136_523 = arith.constant 136 : index
    %c512_524 = arith.constant 512 : index
    %532 = vector.load %arg11[%c136_523, %c512_524] : memref<216x1024xf32, #tpu.memory_space<vmem>>, vector<8x512xf32>
    tpu.vector_store %arg11[%c136_523, %c512_524], %531 {strides = array<i32>} : memref<216x1024xf32, #tpu.memory_space<vmem>>, vector<8x512xf32>,
    %c18_525 = arith.constant 18 : index
    %c0_526 = arith.constant 0 : index
    %533 = vector.load %arg1[%c18_525, %c0_526] : memref<27x512xf32, #tpu.memory_space<vmem>>, vector<1x512xf32>
    %c0_527 = arith.constant 0 : index
    %c951 = arith.constant 951 : index
    %534 = vector.load %arg10[%c0_527, %c951] : memref<8x1536xf32, #tpu.memory_space<vmem>>, vector<8x512xf32>
    %535 = vector.broadcast %533 : vector<1x512xf32> to vector<8x512xf32>
    %536 = arith.mulf %534, %535 : vector<8x512xf32>
    %c144_528 = arith.constant 144 : index
    %c512_529 = arith.constant 512 : index
    %537 = vector.load %arg11[%c144_528, %c512_529] : memref<216x1024xf32, #tpu.memory_space<vmem>>, vector<8x512xf32>
    tpu.vector_store %arg11[%c144_528, %c512_529], %536 {strides = array<i32>} : memref<216x1024xf32, #tpu.memory_space<vmem>>, vector<8x512xf32>,
    %c19_530 = arith.constant 19 : index
    %c0_531 = arith.constant 0 : index
    %538 = vector.load %arg1[%c19_530, %c0_531] : memref<27x512xf32, #tpu.memory_space<vmem>>, vector<1x512xf32>
    %c0_532 = arith.constant 0 : index
    %c952 = arith.constant 952 : index
    %539 = vector.load %arg10[%c0_532, %c952] : memref<8x1536xf32, #tpu.memory_space<vmem>>, vector<8x512xf32>
    %540 = vector.broadcast %538 : vector<1x512xf32> to vector<8x512xf32>
    %541 = arith.mulf %539, %540 : vector<8x512xf32>
    %c152_533 = arith.constant 152 : index
    %c512_534 = arith.constant 512 : index
    %542 = vector.load %arg11[%c152_533, %c512_534] : memref<216x1024xf32, #tpu.memory_space<vmem>>, vector<8x512xf32>
    tpu.vector_store %arg11[%c152_533, %c512_534], %541 {strides = array<i32>} : memref<216x1024xf32, #tpu.memory_space<vmem>>, vector<8x512xf32>,
    %c20_535 = arith.constant 20 : index
    %c0_536 = arith.constant 0 : index
    %543 = vector.load %arg1[%c20_535, %c0_536] : memref<27x512xf32, #tpu.memory_space<vmem>>, vector<1x512xf32>
    %c0_537 = arith.constant 0 : index
    %c953 = arith.constant 953 : index
    %544 = vector.load %arg10[%c0_537, %c953] : memref<8x1536xf32, #tpu.memory_space<vmem>>, vector<8x512xf32>
    %545 = vector.broadcast %543 : vector<1x512xf32> to vector<8x512xf32>
    %546 = arith.mulf %544, %545 : vector<8x512xf32>
    %c160_538 = arith.constant 160 : index
    %c512_539 = arith.constant 512 : index
    %547 = vector.load %arg11[%c160_538, %c512_539] : memref<216x1024xf32, #tpu.memory_space<vmem>>, vector<8x512xf32>
    tpu.vector_store %arg11[%c160_538, %c512_539], %546 {strides = array<i32>} : memref<216x1024xf32, #tpu.memory_space<vmem>>, vector<8x512xf32>,
    %c21_540 = arith.constant 21 : index
    %c0_541 = arith.constant 0 : index
    %548 = vector.load %arg1[%c21_540, %c0_541] : memref<27x512xf32, #tpu.memory_space<vmem>>, vector<1x512xf32>
    %c0_542 = arith.constant 0 : index
    %c959 = arith.constant 959 : index
    %549 = vector.load %arg10[%c0_542, %c959] : memref<8x1536xf32, #tpu.memory_space<vmem>>, vector<8x512xf32>
    %550 = vector.broadcast %548 : vector<1x512xf32> to vector<8x512xf32>
    %551 = arith.mulf %549, %550 : vector<8x512xf32>
    %c168_543 = arith.constant 168 : index
    %c512_544 = arith.constant 512 : index
    %552 = vector.load %arg11[%c168_543, %c512_544] : memref<216x1024xf32, #tpu.memory_space<vmem>>, vector<8x512xf32>
    tpu.vector_store %arg11[%c168_543, %c512_544], %551 {strides = array<i32>} : memref<216x1024xf32, #tpu.memory_space<vmem>>, vector<8x512xf32>,
    %c22_545 = arith.constant 22 : index
    %c0_546 = arith.constant 0 : index
    %553 = vector.load %arg1[%c22_545, %c0_546] : memref<27x512xf32, #tpu.memory_space<vmem>>, vector<1x512xf32>
    %c0_547 = arith.constant 0 : index
    %c960 = arith.constant 960 : index
    %554 = vector.load %arg10[%c0_547, %c960] : memref<8x1536xf32, #tpu.memory_space<vmem>>, vector<8x512xf32>
    %555 = vector.broadcast %553 : vector<1x512xf32> to vector<8x512xf32>
    %556 = arith.mulf %554, %555 : vector<8x512xf32>
    %c176_548 = arith.constant 176 : index
    %c512_549 = arith.constant 512 : index
    %557 = vector.load %arg11[%c176_548, %c512_549] : memref<216x1024xf32, #tpu.memory_space<vmem>>, vector<8x512xf32>
    tpu.vector_store %arg11[%c176_548, %c512_549], %556 {strides = array<i32>} : memref<216x1024xf32, #tpu.memory_space<vmem>>, vector<8x512xf32>,
    %c23_550 = arith.constant 23 : index
    %c0_551 = arith.constant 0 : index
    %558 = vector.load %arg1[%c23_550, %c0_551] : memref<27x512xf32, #tpu.memory_space<vmem>>, vector<1x512xf32>
    %c0_552 = arith.constant 0 : index
    %c961 = arith.constant 961 : index
    %559 = vector.load %arg10[%c0_552, %c961] : memref<8x1536xf32, #tpu.memory_space<vmem>>, vector<8x512xf32>
    %560 = vector.broadcast %558 : vector<1x512xf32> to vector<8x512xf32>
    %561 = arith.mulf %559, %560 : vector<8x512xf32>
    %c184_553 = arith.constant 184 : index
    %c512_554 = arith.constant 512 : index
    %562 = vector.load %arg11[%c184_553, %c512_554] : memref<216x1024xf32, #tpu.memory_space<vmem>>, vector<8x512xf32>
    tpu.vector_store %arg11[%c184_553, %c512_554], %561 {strides = array<i32>} : memref<216x1024xf32, #tpu.memory_space<vmem>>, vector<8x512xf32>,
    %c24_555 = arith.constant 24 : index
    %c0_556 = arith.constant 0 : index
    %563 = vector.load %arg1[%c24_555, %c0_556] : memref<27x512xf32, #tpu.memory_space<vmem>>, vector<1x512xf32>
    %c0_557 = arith.constant 0 : index
    %c967 = arith.constant 967 : index
    %564 = vector.load %arg10[%c0_557, %c967] : memref<8x1536xf32, #tpu.memory_space<vmem>>, vector<8x512xf32>
    %565 = vector.broadcast %563 : vector<1x512xf32> to vector<8x512xf32>
    %566 = arith.mulf %564, %565 : vector<8x512xf32>
    %c192_558 = arith.constant 192 : index
    %c512_559 = arith.constant 512 : index
    %567 = vector.load %arg11[%c192_558, %c512_559] : memref<216x1024xf32, #tpu.memory_space<vmem>>, vector<8x512xf32>
    tpu.vector_store %arg11[%c192_558, %c512_559], %566 {strides = array<i32>} : memref<216x1024xf32, #tpu.memory_space<vmem>>, vector<8x512xf32>,
    %c25_560 = arith.constant 25 : index
    %c0_561 = arith.constant 0 : index
    %568 = vector.load %arg1[%c25_560, %c0_561] : memref<27x512xf32, #tpu.memory_space<vmem>>, vector<1x512xf32>
    %c0_562 = arith.constant 0 : index
    %c968 = arith.constant 968 : index
    %569 = vector.load %arg10[%c0_562, %c968] : memref<8x1536xf32, #tpu.memory_space<vmem>>, vector<8x512xf32>
    %570 = vector.broadcast %568 : vector<1x512xf32> to vector<8x512xf32>
    %571 = arith.mulf %569, %570 : vector<8x512xf32>
    %c200_563 = arith.constant 200 : index
    %c512_564 = arith.constant 512 : index
    %572 = vector.load %arg11[%c200_563, %c512_564] : memref<216x1024xf32, #tpu.memory_space<vmem>>, vector<8x512xf32>
    tpu.vector_store %arg11[%c200_563, %c512_564], %571 {strides = array<i32>} : memref<216x1024xf32, #tpu.memory_space<vmem>>, vector<8x512xf32>,
    %c26_565 = arith.constant 26 : index
    %c0_566 = arith.constant 0 : index
    %573 = vector.load %arg1[%c26_565, %c0_566] : memref<27x512xf32, #tpu.memory_space<vmem>>, vector<1x512xf32>
    %c0_567 = arith.constant 0 : index
    %c969 = arith.constant 969 : index
    %574 = vector.load %arg10[%c0_567, %c969] : memref<8x1536xf32, #tpu.memory_space<vmem>>, vector<8x512xf32>
    %575 = vector.broadcast %573 : vector<1x512xf32> to vector<8x512xf32>
    %576 = arith.mulf %574, %575 : vector<8x512xf32>
    %c208_568 = arith.constant 208 : index
    %c512_569 = arith.constant 512 : index
    %577 = vector.load %arg11[%c208_568, %c512_569] : memref<216x1024xf32, #tpu.memory_space<vmem>>, vector<8x512xf32>
    tpu.vector_store %arg11[%c208_568, %c512_569], %576 {strides = array<i32>} : memref<216x1024xf32, #tpu.memory_space<vmem>>, vector<8x512xf32>,
    %c0_570 = arith.constant 0 : index
    %c0_571 = arith.constant 0 : index
    %578 = vector.load %arg5[%c0_570, %c0_571] : memref<8x216xf32, #tpu.memory_space<vmem>>, vector<8x216xf32>
    %c0_572 = arith.constant 0 : index
    %c0_573 = arith.constant 0 : index
    %579 = vector.load %arg11[%c0_572, %c0_573] : memref<216x1024xf32, #tpu.memory_space<vmem>>, vector<216x1024xf32>
    %cst_574 = arith.constant dense<0.000000e+00> : vector<8x1024xf32>
    %580 = tpu.matmul %578, %579, %cst_574 {dimension_numbers = #tpu.dot_dimension_numbers<[1], [0], [0], [1], [0, 0, 1, 1], [], []>} : vector<8x216xf32>, vector<216x1024xf32>, vector<8x1024xf32> -> vector<8x1024xf32>
    %c0_575 = arith.constant 0 : index
    %c0_576 = arith.constant 0 : index
    %581 = vector.load %arg6[%c0_575, %c0_576] : memref<8x1xf32, #tpu.memory_space<vmem>>, vector<8x1xf32>
    %c0_577 = arith.constant 0 : index
    %c0_578 = arith.constant 0 : index
    %582 = vector.load %arg7[%c0_577, %c0_578] : memref<8x1xf32, #tpu.memory_space<vmem>>, vector<8x1xf32>
    %cst_579 = arith.constant dense<0.000000e+00> : vector<8xf32>
    %583 = vector.multi_reduction <add>, %580, %cst_579 [1] : vector<8x1024xf32> to vector<8xf32>
    %584 = vector.shape_cast %583 : vector<8xf32> to vector<8x1xf32>
    %585 = arith.mulf %580, %580 : vector<8x1024xf32>
    %cst_580 = arith.constant dense<0.000000e+00> : vector<8xf32>
    %586 = vector.multi_reduction <add>, %585, %cst_580 [1] : vector<8x1024xf32> to vector<8xf32>
    %587 = vector.shape_cast %586 : vector<8xf32> to vector<8x1xf32>
    %cst_581 = arith.constant 9.765625E-4 : f32
    %588 = vector.broadcast %cst_581 : f32 to vector<8x1xf32>
    %589 = arith.mulf %584, %588 : vector<8x1xf32>
    %cst_582 = arith.constant 9.765625E-4 : f32
    %590 = vector.broadcast %cst_582 : f32 to vector<8x1xf32>
    %591 = arith.mulf %587, %590 : vector<8x1xf32>
    %592 = arith.mulf %589, %589 : vector<8x1xf32>
    %593 = arith.subf %591, %592 : vector<8x1xf32>
    %cst_583 = arith.constant 9.99999974E-6 : f32
    %594 = vector.broadcast %cst_583 : f32 to vector<8x1xf32>
    %595 = arith.addf %593, %594 : vector<8x1xf32>
    %596 = math.rsqrt %595 : vector<8x1xf32>
    %597 = arith.mulf %596, %581 : vector<8x1xf32>
    %598 = arith.mulf %589, %597 : vector<8x1xf32>
    %599 = arith.subf %582, %598 : vector<8x1xf32>
    %600 = vector.broadcast %597 : vector<8x1xf32> to vector<8x1024xf32>
    %601 = arith.mulf %580, %600 : vector<8x1024xf32>
    %602 = vector.broadcast %599 : vector<8x1xf32> to vector<8x1024xf32>
    %603 = arith.addf %601, %602 : vector<8x1024xf32>
    %cst_584 = arith.constant 0.000000e+00 : f32
    %604 = vector.broadcast %cst_584 : f32 to vector<8x1024xf32>
    %605 = arith.maximumf %603, %604 : vector<8x1024xf32>
    %606 = vector.extract_strided_slice %605 {offsets = [0, 0], sizes = [8, 512], strides = [1, 1]} : vector<8x1024xf32> to vector<8x512xf32>
    %c0_585 = arith.constant 0 : index
    %c0_586 = arith.constant 0 : index
    %c0_587 = arith.constant 0 : index
    %607 = vector.load %arg8[%c0_585, %c0_586, %c0_587] : memref<2x8x512xf32, #tpu.memory_space<vmem>>, vector<1x8x512xf32>
    %608 = vector.shape_cast %607 : vector<1x8x512xf32> to vector<8x512xf32>
    %609 = vector.shape_cast %606 : vector<8x512xf32> to vector<1x8x512xf32>
    tpu.vector_store %arg8[%c0_585, %c0_586, %c0_587], %609 {strides = array<i32>} : memref<2x8x512xf32, #tpu.memory_space<vmem>>, vector<1x8x512xf32>,
    %610 = vector.extract_strided_slice %605 {offsets = [0, 512], sizes = [8, 512], strides = [1, 1]} : vector<8x1024xf32> to vector<8x512xf32>
    %c1_588 = arith.constant 1 : index
    %c0_589 = arith.constant 0 : index
    %c0_590 = arith.constant 0 : index
    %611 = vector.load %arg8[%c1_588, %c0_589, %c0_590] : memref<2x8x512xf32, #tpu.memory_space<vmem>>, vector<1x8x512xf32>
    %612 = vector.shape_cast %611 : vector<1x8x512xf32> to vector<8x512xf32>
    %613 = vector.shape_cast %610 : vector<8x512xf32> to vector<1x8x512xf32>
    tpu.vector_store %arg8[%c1_588, %c0_589, %c0_590], %613 {strides = array<i32>} : memref<2x8x512xf32, #tpu.memory_space<vmem>>, vector<1x8x512xf32>,
    return
  }
}

</mosaic_0001>

<llo_original>
// kernel: tpu_custom_call.1
$region0: #{tpu_custom_call.1}
  #allocation0 [shape = 'u32[]', space=smem, size = 0x4, offset = 0x4, fixed_abs, tag = 'smem constant byte address 0x4 - core index']
  #allocation1 [shape = 'u32[72,128]{1,0:T(1,128)}', space=vmem, size = 0x9000, scoped, tag = 'internal scratch']
  #allocation2 [shape = 'f32[8,768]{1,0:T(8,128)}', space=vmem, size = 0x6000, scoped, tag = 'scratch operand']
  #allocation3 [shape = 'f32[8,1536]{1,0:T(8,128)}', space=vmem, size = 0xc000, scoped, tag = 'scratch operand']
  #allocation4 [shape = 'f32[216,1024]{1,0:T(8,128)}', space=vmem, size = 0xd8000, scoped, tag = 'scratch operand']
  %s0 = inlined_call_operand.hbm [shape: f32[8,512], index: 0, kind: input, shape index: {}]
  %s1 = inlined_call_operand.hbm [shape: f32[27,512], index: 1, kind: input, shape index: {}]
  %s2 = inlined_call_operand.vmem [shape: f32[8,108], index: 2, kind: input, shape index: {}]
  %s3 = inlined_call_operand.vmem [shape: f32[8,1], index: 3, kind: input, shape index: {}]
  %s4 = inlined_call_operand.vmem [shape: f32[8,1], index: 4, kind: input, shape index: {}]
  %s5 = inlined_call_operand.vmem [shape: f32[8,216], index: 5, kind: input, shape index: {}]
  %s6 = inlined_call_operand.vmem [shape: f32[8,1], index: 6, kind: input, shape index: {}]
  %s7 = inlined_call_operand.vmem [shape: f32[8,1], index: 7, kind: input, shape index: {}]
  %s8 = inlined_call_operand.hbm [shape: f32[2,8,512], index: 8, kind: output, shape index: {}]
  %s9 = sld [smem:[#allocation0]]
  $region50: #{tpu_custom_call.1} parent=0
    _
  %s11 = ssub.s32 1, %s9
  %s12 = scalar_select 0, %s11, %s9
  $region1: #{tpu_custom_call.1} parent=0
    #allocation5 [shape = 'u8[16384]{0}', space=vmem, size = 0x4000, scoped, tag = 'input window, operand 0, single buffered']
    #allocation6 [shape = 's32[1]{0}', space=sflag, size = 0x4, scoped, tag = 'scoped memory for tpu_custom_call.1']
    #allocation7 [shape = 's32[1]{0}', space=sflag, size = 0x4, scoped, tag = 'scoped memory for tpu_custom_call.1']
    #allocation8 [shape = 'u8[65536]{0}', space=vmem, size = 0x10000, scoped, tag = 'input window, operand 1, single buffered']
    #allocation9 [shape = 's32[1]{0}', space=sflag, size = 0x4, scoped, tag = 'scoped memory for tpu_custom_call.1']
    #allocation10 [shape = 'u8[32768]{0}', space=vmem, size = 0x8000, scoped, tag = 'output window, operand 0, single buffered']
    %13 = vsyncpa [#allocation6], 0
    %14 = vsyncpa [#allocation9], 0
    %15 = vsyncpa [#allocation7], 0
    // Predicated region
    $region2: #{tpu_custom_call.1} parent=1 // pred_check
      _
    $region3: #{tpu_custom_call.1} parent=1 // pred_check_branch
      %17 = sbr.rel (0) target = $region5
    $region4: #{tpu_custom_call.1} parent=1 // pred_region
      %19 = vsyncadd [#allocation6], 0
      %s21 = sshll.u32 %s0, 4
      %s22 = int_to_ptr.hbm [resolvable:$true] %s21
      %s23 = sshll.u32 [#allocation5], 4
      %s24 = int_to_ptr.vmem [resolvable:$true] %s23
      %26 = dma.hbm_to_vmem [thread:$0]  %s22, 512, %s24, [#allocation6]
    $region5: #{tpu_custom_call.1} parent=1 // pred_fallthru
      _
    // Predicated region
    $region6: #{tpu_custom_call.1} parent=1 // pred_check
      _
    $region7: #{tpu_custom_call.1} parent=1 // pred_check_branch
      %28 = sbr.rel (0) target = $region9
    $region8: #{tpu_custom_call.1} parent=1 // pred_region
      %30 = vsyncadd [#allocation9], 0
      %s31 = sshll.u32 %s1, 4
      %s32 = int_to_ptr.hbm [resolvable:$true] %s31
      %s33 = sshll.u32 [#allocation8], 4
      %s34 = int_to_ptr.vmem [resolvable:$true] %s33
      %39 = dma.hbm_to_vmem [thread:$0]  %s32, 2048, %s34, [#allocation9], 512, 512, 32
    $region9: #{tpu_custom_call.1} parent=1 // pred_fallthru
      _
    // Predicated region
    $region10: #{tpu_custom_call.1} parent=1 // pred_check
      _
    $region11: #{tpu_custom_call.1} parent=1 // pred_check_branch
      %41 = sbr.rel (0) target = $region13
    $region12: #{tpu_custom_call.1} parent=1 // pred_region
      _
    $region13: #{tpu_custom_call.1} parent=1 // pred_fallthru
      _
    // Predicated region
    $region14: #{tpu_custom_call.1} parent=1 // pred_check
      _
    $region15: #{tpu_custom_call.1} parent=1 // pred_check_branch
      %43 = sbr.rel (0) target = $region17
    $region16: #{tpu_custom_call.1} parent=1 // pred_region
      _
    $region17: #{tpu_custom_call.1} parent=1 // pred_fallthru
      _
    // Predicated region
    $region18: #{tpu_custom_call.1} parent=1 // pred_check
      _
    $region19: #{tpu_custom_call.1} parent=1 // pred_check_branch
      %45 = sbr.rel (0) target = $region21
    $region20: #{tpu_custom_call.1} parent=1 // pred_region
      _
    $region21: #{tpu_custom_call.1} parent=1 // pred_fallthru
      _
    // Predicated region
    $region22: #{tpu_custom_call.1} parent=1 // pred_check
      _
    $region23: #{tpu_custom_call.1} parent=1 // pred_check_branch
      %47 = sbr.rel (0) target = $region25
    $region24: #{tpu_custom_call.1} parent=1 // pred_region
      _
    $region25: #{tpu_custom_call.1} parent=1 // pred_fallthru
      _
    // Predicated region
    $region26: #{tpu_custom_call.1} parent=1 // pred_check
      _
    $region27: #{tpu_custom_call.1} parent=1 // pred_check_branch
      %49 = sbr.rel (0) target = $region29
    $region28: #{tpu_custom_call.1} parent=1 // pred_region
      _
    $region29: #{tpu_custom_call.1} parent=1 // pred_fallthru
      _
    // Predicated region
    $region30: #{tpu_custom_call.1} parent=1 // pred_check
      _
    $region31: #{tpu_custom_call.1} parent=1 // pred_check_branch
      %51 = sbr.rel (0) target = $region33
    $region32: #{tpu_custom_call.1} parent=1 // pred_region
      _
    $region33: #{tpu_custom_call.1} parent=1 // pred_fallthru
      _
    // Predicated region
    $region34: #{tpu_custom_call.1} parent=1 // pred_check
      _
    $region35: #{tpu_custom_call.1} parent=1 // pred_check_branch
      %53 = sbr.rel (0) target = $region37
    $region36: #{tpu_custom_call.1} parent=1 // pred_region
      %55 = dma.done [#allocation6], 512
    $region37: #{tpu_custom_call.1} parent=1 // pred_fallthru
      _
    // Predicated region
    $region38: #{tpu_custom_call.1} parent=1 // pred_check
      _
    $region39: #{tpu_custom_call.1} parent=1 // pred_check_branch
      %57 = sbr.rel (0) target = $region41
    $region40: #{tpu_custom_call.1} parent=1 // pred_region
      %59 = dma.done [#allocation9], 2048
    $region41: #{tpu_custom_call.1} parent=1 // pred_fallthru
      _
    %60 = vst [vmem:[#allocation2] sm:$0xff] 0.0
    %61 = vst [vmem:[#allocation2 + $0x8] sm:$0xff] 0.0
    %62 = vst [vmem:[#allocation2 + $0x10] sm:$0xff] 0.0
    %63 = vst [vmem:[#allocation2 + $0x18] sm:$0xff] 0.0
    %64 = vst [vmem:[#allocation2 + $0x20] sm:$0xff] 0.0
    %65 = vst [vmem:[#allocation2 + $0x28] sm:$0xff] 0.0
    %v66 = vld [vmem:[#allocation5] sm:$0xff]
    %v67 = vld [vmem:[#allocation5 + $0x8] sm:$0xff]
    %v68 = vld [vmem:[#allocation5 + $0x10] sm:$0xff]
    %v69 = vld [vmem:[#allocation5 + $0x18] sm:$0xff]
    %70 = vst [vmem:[#allocation2 + $0x8] sm:$0xff] %v66
    %71 = vst [vmem:[#allocation2 + $0x10] sm:$0xff] %v67
    %72 = vst [vmem:[#allocation2 + $0x18] sm:$0xff] %v68
    %73 = vst [vmem:[#allocation2 + $0x20] sm:$0xff] %v69
    %v74 = vld [vmem:[#allocation8] ss:$8 sm:$0xf]
    %v75 = vld [vmem:[#allocation2] sm:$0xf]
    %v76 = vld [vmem:[#allocation2 + $0x8] sm:$0xf]
    %v77 = vld [vmem:[#allocation2 + $0x10] sm:$0xf]
    %v78 = vld [vmem:[#allocation2 + $0x18] sm:$0xf]
    %v79 = vld [vmem:[#allocation2 + $0x20] sm:$0xf]
    %v81 = vperm.slane %v74, 0
    %v82 = vperm.slane %v74, 1
    %v83 = vperm.slane %v74, 2
    %v84 = vperm.slane %v74, 3
    %85 = vrot.lane.b32.xlu0 %v81, 55
    %v86 = vpop.permute.xlu0 %85
    %87 = vrot.lane.b32.xlu0 %v82, 55
    %v88 = vpop.permute.xlu0 %87
    %89 = vrot.lane.b32.xlu0 %v83, 55
    %v90 = vpop.permute.xlu0 %89
    %91 = vrot.lane.b32.xlu0 %v84, 55
    %v92 = vpop.permute.xlu0 %91
    %vm93 = vcmask 449536
    %v94 = vsel %vm93, %v86, %v88
    %v95 = vsel %vm93, %v88, %v90
    %v96 = vsel %vm93, %v90, %v92
    %v102 = vmul.f32 %v75, %v86
    %v103 = vmul.f32 %v76, %v94
    %v104 = vmul.f32 %v77, %v95
    %v105 = vmul.f32 %v78, %v96
    %v106 = vmul.f32 %v79, %v92
    %112 = vrot.lane.b32.xlu0 %v102, 73
    %v113 = vpop.permute.xlu0 %112
    %114 = vrot.lane.b32.xlu0 %v103, 73
    %v115 = vpop.permute.xlu0 %114
    %116 = vrot.lane.b32.xlu0 %v104, 73
    %v117 = vpop.permute.xlu0 %116
    %118 = vrot.lane.b32.xlu0 %v105, 73
    %v119 = vpop.permute.xlu0 %118
    %120 = vrot.lane.b32.xlu0 %v106, 73
    %v121 = vpop.permute.xlu0 %120
    %vm122 = vcmask 596992
    %v123 = vsel %vm122, %v113, %v115
    %v124 = vsel %vm122, %v115, %v117
    %v125 = vsel %vm122, %v117, %v119
    %v126 = vsel %vm122, %v119, %v121
    %131 = vst [vmem:[#allocation4] sm:$0xf] %v123
    %132 = vst [vmem:[#allocation4 + $0x8] sm:$0xf] %v124
    %133 = vst [vmem:[#allocation4 + $0x10] sm:$0xf] %v125
    %134 = vst [vmem:[#allocation4 + $0x18] sm:$0xf] %v126
    %s135 = scalar_lea.vmem [#allocation8], 1
    %v136 = vld [vmem:[%s135] ss:$8 sm:$0xf]
    %v137 = vld [vmem:[#allocation2] sm:$0xf]
    %v138 = vld [vmem:[#allocation2 + $0x8] sm:$0xf]
    %v139 = vld [vmem:[#allocation2 + $0x10] sm:$0xf]
    %v140 = vld [vmem:[#allocation2 + $0x18] sm:$0xf]
    %v141 = vld [vmem:[#allocation2 + $0x20] sm:$0xf]
    %v143 = vperm.slane %v136, 0
    %v144 = vperm.slane %v136, 1
    %v145 = vperm.slane %v136, 2
    %v146 = vperm.slane %v136, 3
    %147 = vrot.lane.b32.xlu0 %v143, 56
    %v148 = vpop.permute.xlu0 %147
    %149 = vrot.lane.b32.xlu0 %v144, 56
    %v150 = vpop.permute.xlu0 %149
    %151 = vrot.lane.b32.xlu0 %v145, 56
    %v152 = vpop.permute.xlu0 %151
    %153 = vrot.lane.b32.xlu0 %v146, 56
    %v154 = vpop.permute.xlu0 %153
    %vm155 = vcmask 457728
    %v156 = vsel %vm155, %v148, %v150
    %v157 = vsel %vm155, %v150, %v152
    %v158 = vsel %vm155, %v152, %v154
    %v164 = vmul.f32 %v137, %v148
    %v165 = vmul.f32 %v138, %v156
    %v166 = vmul.f32 %v139, %v157
    %v167 = vmul.f32 %v140, %v158
    %v168 = vmul.f32 %v141, %v154
    %v174 = vrot.slane %v164, 4
    %v175 = vrot.slane %v165, 4
    %v176 = vrot.slane %v166, 4
    %v177 = vrot.slane %v167, 4
    %v178 = vrot.slane %v168, 4
    %179 = vrot.lane.b32.xlu0 %v174, 72
    %v180 = vpop.permute.xlu0 %179
    %181 = vrot.lane.b32.xlu0 %v175, 72
    %v182 = vpop.permute.xlu0 %181
    %183 = vrot.lane.b32.xlu0 %v176, 72
    %v184 = vpop.permute.xlu0 %183
    %185 = vrot.lane.b32.xlu0 %v177, 72
    %v186 = vpop.permute.xlu0 %185
    %187 = vrot.lane.b32.xlu0 %v178, 72
    %v188 = vpop.permute.xlu0 %187
    %vm189 = vcmask 588800
    %v190 = vsel %vm189, %v180, %v182
    %v191 = vsel %vm189, %v182, %v184
    %v192 = vsel %vm189, %v184, %v186
    %v193 = vsel %vm189, %v186, %v188
    %198 = vst [vmem:[#allocation4] sm:$0xf0] %v190
    %199 = vst [vmem:[#allocation4 + $0x8] sm:$0xf0] %v191
    %200 = vst [vmem:[#allocation4 + $0x10] sm:$0xf0] %v192
    %201 = vst [vmem:[#allocation4 + $0x18] sm:$0xf0] %v193
    %s202 = scalar_lea.vmem [#allocation8], 2
    %v203 = vld [vmem:[%s202] ss:$8 sm:$0xf]
    %v204 = vld [vmem:[#allocation2] sm:$0xf]
    %v205 = vld [vmem:[#allocation2 + $0x8] sm:$0xf]
    %v206 = vld [vmem:[#allocation2 + $0x10] sm:$0xf]
    %v207 = vld [vmem:[#allocation2 + $0x18] sm:$0xf]
    %v208 = vld [vmem:[#allocation2 + $0x20] sm:$0xf]
    %v210 = vperm.slane %v203, 0
    %v211 = vperm.slane %v203, 1
    %v212 = vperm.slane %v203, 2
    %v213 = vperm.slane %v203, 3
    %214 = vrot.lane.b32.xlu0 %v210, 57
    %v215 = vpop.permute.xlu0 %214
    %216 = vrot.lane.b32.xlu0 %v211, 57
    %v217 = vpop.permute.xlu0 %216
    %218 = vrot.lane.b32.xlu0 %v212, 57
    %v219 = vpop.permute.xlu0 %218
    %220 = vrot.lane.b32.xlu0 %v213, 57
    %v221 = vpop.permute.xlu0 %220
    %vm222 = vcmask 465920
    %v223 = vsel %vm222, %v215, %v217
    %v224 = vsel %vm222, %v217, %v219
    %v225 = vsel %vm222, %v219, %v221
    %v231 = vmul.f32 %v204, %v215
    %v232 = vmul.f32 %v205, %v223
    %v233 = vmul.f32 %v206, %v224
    %v234 = vmul.f32 %v207, %v225
    %v235 = vmul.f32 %v208, %v221
    %241 = vrot.lane.b32.xlu0 %v231, 71
    %v242 = vpop.permute.xlu0 %241
    %243 = vrot.lane.b32.xlu0 %v232, 71
    %v244 = vpop.permute.xlu0 %243
    %245 = vrot.lane.b32.xlu0 %v233, 71
    %v246 = vpop.permute.xlu0 %245
    %247 = vrot.lane.b32.xlu0 %v234, 71
    %v248 = vpop.permute.xlu0 %247
    %249 = vrot.lane.b32.xlu0 %v235, 71
    %v250 = vpop.permute.xlu0 %249
    %vm251 = vcmask 580608
    %v252 = vsel %vm251, %v242, %v244
    %v253 = vsel %vm251, %v244, %v246
    %v254 = vsel %vm251, %v246, %v248
    %v255 = vsel %vm251, %v248, %v250
    %260 = vst [vmem:[#allocation4 + $0x40] sm:$0xf] %v252
    %261 = vst [vmem:[#allocation4 + $0x48] sm:$0xf] %v253
    %262 = vst [vmem:[#allocation4 + $0x50] sm:$0xf] %v254
    %263 = vst [vmem:[#allocation4 + $0x58] sm:$0xf] %v255
    %s264 = scalar_lea.vmem [#allocation8], 3
    %v265 = vld [vmem:[%s264] ss:$8 sm:$0xf]
    %v266 = vld [vmem:[#allocation2] sm:$0xf]
    %v267 = vld [vmem:[#allocation2 + $0x8] sm:$0xf]
    %v268 = vld [vmem:[#allocation2 + $0x10] sm:$0xf]
    %v269 = vld [vmem:[#allocation2 + $0x18] sm:$0xf]
    %v270 = vld [vmem:[#allocation2 + $0x20] sm:$0xf]
    %v272 = vperm.slane %v265, 0
    %v273 = vperm.slane %v265, 1
    %v274 = vperm.slane %v265, 2
    %v275 = vperm.slane %v265, 3
    %276 = vrot.lane.b32.xlu0 %v272, 63
    %v277 = vpop.permute.xlu0 %276
    %278 = vrot.lane.b32.xlu0 %v273, 63
    %v279 = vpop.permute.xlu0 %278
    %280 = vrot.lane.b32.xlu0 %v274, 63
    %v281 = vpop.permute.xlu0 %280
    %282 = vrot.lane.b32.xlu0 %v275, 63
    %v283 = vpop.permute.xlu0 %282
    %vm284 = vcmask 515072
    %v285 = vsel %vm284, %v277, %v279
    %v286 = vsel %vm284, %v279, %v281
    %v287 = vsel %vm284, %v281, %v283
    %v293 = vmul.f32 %v266, %v277
    %v294 = vmul.f32 %v267, %v285
    %v295 = vmul.f32 %v268, %v286
    %v296 = vmul.f32 %v269, %v287
    %v297 = vmul.f32 %v270, %v283
    %v303 = vrot.slane %v293, 4
    %v304 = vrot.slane %v294, 4
    %v305 = vrot.slane %v295, 4
    %v306 = vrot.slane %v296, 4
    %v307 = vrot.slane %v297, 4
    %308 = vrot.lane.b32.xlu0 %v303, 65
    %v309 = vpop.permute.xlu0 %308
    %310 = vrot.lane.b32.xlu0 %v304, 65
    %v311 = vpop.permute.xlu0 %310
    %312 = vrot.lane.b32.xlu0 %v305, 65
    %v313 = vpop.permute.xlu0 %312
    %314 = vrot.lane.b32.xlu0 %v306, 65
    %v315 = vpop.permute.xlu0 %314
    %316 = vrot.lane.b32.xlu0 %v307, 65
    %v317 = vpop.permute.xlu0 %316
    %vm318 = vcmask 531456
    %v319 = vsel %vm318, %v309, %v311
    %v320 = vsel %vm318, %v311, %v313
    %v321 = vsel %vm318, %v313, %v315
    %v322 = vsel %vm318, %v315, %v317
    %327 = vst [vmem:[#allocation4 + $0x40] sm:$0xf0] %v319
    %328 = vst [vmem:[#allocation4 + $0x48] sm:$0xf0] %v320
    %329 = vst [vmem:[#allocation4 + $0x50] sm:$0xf0] %v321
    %330 = vst [vmem:[#allocation4 + $0x58] sm:$0xf0] %v322
    %s331 = scalar_lea.vmem [#allocation8], 4
    %v332 = vld [vmem:[%s331] ss:$8 sm:$0xf]
    %v333 = vld [vmem:[#allocation2] sm:$0xf]
    %v334 = vld [vmem:[#allocation2 + $0x8] sm:$0xf]
    %v335 = vld [vmem:[#allocation2 + $0x10] sm:$0xf]
    %v336 = vld [vmem:[#allocation2 + $0x18] sm:$0xf]
    %v337 = vld [vmem:[#allocation2 + $0x20] sm:$0xf]
    %v339 = vperm.slane %v332, 0
    %v340 = vperm.slane %v332, 1
    %v341 = vperm.slane %v332, 2
    %v342 = vperm.slane %v332, 3
    %343 = vrot.lane.b32.xlu0 %v339, 64
    %v344 = vpop.permute.xlu0 %343
    %345 = vrot.lane.b32.xlu0 %v340, 64
    %v346 = vpop.permute.xlu0 %345
    %347 = vrot.lane.b32.xlu0 %v341, 64
    %v348 = vpop.permute.xlu0 %347
    %349 = vrot.lane.b32.xlu0 %v342, 64
    %v350 = vpop.permute.xlu0 %349
    %vm351 = vcmask 523264
    %v352 = vsel %vm351, %v344, %v346
    %v353 = vsel %vm351, %v346, %v348
    %v354 = vsel %vm351, %v348, %v350
    %v360 = vmul.f32 %v333, %v344
    %v361 = vmul.f32 %v334, %v352
    %v362 = vmul.f32 %v335, %v353
    %v363 = vmul.f32 %v336, %v354
    %v364 = vmul.f32 %v337, %v350
    %370 = vrot.lane.b32.xlu0 %v360, 64
    %v371 = vpop.permute.xlu0 %370
    %372 = vrot.lane.b32.xlu0 %v361, 64
    %v373 = vpop.permute.xlu0 %372
    %374 = vrot.lane.b32.xlu0 %v362, 64
    %v375 = vpop.permute.xlu0 %374
    %376 = vrot.lane.b32.xlu0 %v363, 64
    %v377 = vpop.permute.xlu0 %376
    %378 = vrot.lane.b32.xlu0 %v364, 64
    %v379 = vpop.permute.xlu0 %378
    %v380 = vsel %vm351, %v371, %v373
    %v381 = vsel %vm351, %v373, %v375
    %v382 = vsel %vm351, %v375, %v377
    %v383 = vsel %vm351, %v377, %v379
    %388 = vst [vmem:[#allocation4 + $0x80] sm:$0xf] %v380
    %389 = vst [vmem:[#allocation4 + $0x88] sm:$0xf] %v381
    %390 = vst [vmem:[#allocation4 + $0x90] sm:$0xf] %v382
    %391 = vst [vmem:[#allocation4 + $0x98] sm:$0xf] %v383
    %s392 = scalar_lea.vmem [#allocation8], 5
    %v393 = vld [vmem:[%s392] ss:$8 sm:$0xf]
    %v394 = vld [vmem:[#allocation2] sm:$0xf]
    %v395 = vld [vmem:[#allocation2 + $0x8] sm:$0xf]
    %v396 = vld [vmem:[#allocation2 + $0x10] sm:$0xf]
    %v397 = vld [vmem:[#allocation2 + $0x18] sm:$0xf]
    %v398 = vld [vmem:[#allocation2 + $0x20] sm:$0xf]
    %v400 = vperm.slane %v393, 0
    %v401 = vperm.slane %v393, 1
    %v402 = vperm.slane %v393, 2
    %v403 = vperm.slane %v393, 3
    %404 = vrot.lane.b32.xlu0 %v400, 65
    %v405 = vpop.permute.xlu0 %404
    %406 = vrot.lane.b32.xlu0 %v401, 65
    %v407 = vpop.permute.xlu0 %406
    %408 = vrot.lane.b32.xlu0 %v402, 65
    %v409 = vpop.permute.xlu0 %408
    %410 = vrot.lane.b32.xlu0 %v403, 65
    %v411 = vpop.permute.xlu0 %410
    %v412 = vsel %vm318, %v405, %v407
    %v413 = vsel %vm318, %v407, %v409
    %v414 = vsel %vm318, %v409, %v411
    %v420 = vmul.f32 %v394, %v405
    %v421 = vmul.f32 %v395, %v412
    %v422 = vmul.f32 %v396, %v413
    %v423 = vmul.f32 %v397, %v414
    %v424 = vmul.f32 %v398, %v411
    %v430 = vrot.slane %v420, 4
    %v431 = vrot.slane %v421, 4
    %v432 = vrot.slane %v422, 4
    %v433 = vrot.slane %v423, 4
    %v434 = vrot.slane %v424, 4
    %435 = vrot.lane.b32.xlu0 %v430, 63
    %v436 = vpop.permute.xlu0 %435
    %437 = vrot.lane.b32.xlu0 %v431, 63
    %v438 = vpop.permute.xlu0 %437
    %439 = vrot.lane.b32.xlu0 %v432, 63
    %v440 = vpop.permute.xlu0 %439
    %441 = vrot.lane.b32.xlu0 %v433, 63
    %v442 = vpop.permute.xlu0 %441
    %443 = vrot.lane.b32.xlu0 %v434, 63
    %v444 = vpop.permute.xlu0 %443
    %v445 = vsel %vm284, %v436, %v438
    %v446 = vsel %vm284, %v438, %v440
    %v447 = vsel %vm284, %v440, %v442
    %v448 = vsel %vm284, %v442, %v444
    %453 = vst [vmem:[#allocation4 + $0x80] sm:$0xf0] %v445
    %454 = vst [vmem:[#allocation4 + $0x88] sm:$0xf0] %v446
    %455 = vst [vmem:[#allocation4 + $0x90] sm:$0xf0] %v447
    %456 = vst [vmem:[#allocation4 + $0x98] sm:$0xf0] %v448
    %s457 = scalar_lea.vmem [#allocation8], 6
    %v458 = vld [vmem:[%s457] ss:$8 sm:$0xf]
    %v459 = vld [vmem:[#allocation2] sm:$0xf]
    %v460 = vld [vmem:[#allocation2 + $0x8] sm:$0xf]
    %v461 = vld [vmem:[#allocation2 + $0x10] sm:$0xf]
    %v462 = vld [vmem:[#allocation2 + $0x18] sm:$0xf]
    %v463 = vld [vmem:[#allocation2 + $0x20] sm:$0xf]
    %v465 = vperm.slane %v458, 0
    %v466 = vperm.slane %v458, 1
    %v467 = vperm.slane %v458, 2
    %v468 = vperm.slane %v458, 3
    %469 = vrot.lane.b32.xlu0 %v465, 71
    %v470 = vpop.permute.xlu0 %469
    %471 = vrot.lane.b32.xlu0 %v466, 71
    %v472 = vpop.permute.xlu0 %471
    %473 = vrot.lane.b32.xlu0 %v467, 71
    %v474 = vpop.permute.xlu0 %473
    %475 = vrot.lane.b32.xlu0 %v468, 71
    %v476 = vpop.permute.xlu0 %475
    %v477 = vsel %vm251, %v470, %v472
    %v478 = vsel %vm251, %v472, %v474
    %v479 = vsel %vm251, %v474, %v476
    %v485 = vmul.f32 %v459, %v470
    %v486 = vmul.f32 %v460, %v477
    %v487 = vmul.f32 %v461, %v478
    %v488 = vmul.f32 %v462, %v479
    %v489 = vmul.f32 %v463, %v476
    %495 = vrot.lane.b32.xlu0 %v485, 57
    %v496 = vpop.permute.xlu0 %495
    %497 = vrot.lane.b32.xlu0 %v486, 57
    %v498 = vpop.permute.xlu0 %497
    %499 = vrot.lane.b32.xlu0 %v487, 57
    %v500 = vpop.permute.xlu0 %499
    %501 = vrot.lane.b32.xlu0 %v488, 57
    %v502 = vpop.permute.xlu0 %501
    %503 = vrot.lane.b32.xlu0 %v489, 57
    %v504 = vpop.permute.xlu0 %503
    %v505 = vsel %vm222, %v496, %v498
    %v506 = vsel %vm222, %v498, %v500
    %v507 = vsel %vm222, %v500, %v502
    %v508 = vsel %vm222, %v502, %v504
    %513 = vst [vmem:[#allocation4 + $0xc0] sm:$0xf] %v505
    %514 = vst [vmem:[#allocation4 + $0xc8] sm:$0xf] %v506
    %515 = vst [vmem:[#allocation4 + $0xd0] sm:$0xf] %v507
    %516 = vst [vmem:[#allocation4 + $0xd8] sm:$0xf] %v508
    %s517 = scalar_lea.vmem [#allocation8], 7
    %v518 = vld [vmem:[%s517] ss:$8 sm:$0xf]
    %v519 = vld [vmem:[#allocation2] sm:$0xf]
    %v520 = vld [vmem:[#allocation2 + $0x8] sm:$0xf]
    %v521 = vld [vmem:[#allocation2 + $0x10] sm:$0xf]
    %v522 = vld [vmem:[#allocation2 + $0x18] sm:$0xf]
    %v523 = vld [vmem:[#allocation2 + $0x20] sm:$0xf]
    %v525 = vperm.slane %v518, 0
    %v526 = vperm.slane %v518, 1
    %v527 = vperm.slane %v518, 2
    %v528 = vperm.slane %v518, 3
    %529 = vrot.lane.b32.xlu0 %v525, 72
    %v530 = vpop.permute.xlu0 %529
    %531 = vrot.lane.b32.xlu0 %v526, 72
    %v532 = vpop.permute.xlu0 %531
    %533 = vrot.lane.b32.xlu0 %v527, 72
    %v534 = vpop.permute.xlu0 %533
    %535 = vrot.lane.b32.xlu0 %v528, 72
    %v536 = vpop.permute.xlu0 %535
    %v537 = vsel %vm189, %v530, %v532
    %v538 = vsel %vm189, %v532, %v534
    %v539 = vsel %vm189, %v534, %v536
    %v545 = vmul.f32 %v519, %v530
    %v546 = vmul.f32 %v520, %v537
    %v547 = vmul.f32 %v521, %v538
    %v548 = vmul.f32 %v522, %v539
    %v549 = vmul.f32 %v523, %v536
    %v555 = vrot.slane %v545, 4
    %v556 = vrot.slane %v546, 4
    %v557 = vrot.slane %v547, 4
    %v558 = vrot.slane %v548, 4
    %v559 = vrot.slane %v549, 4
    %560 = vrot.lane.b32.xlu0 %v555, 56
    %v561 = vpop.permute.xlu0 %560
    %562 = vrot.lane.b32.xlu0 %v556, 56
    %v563 = vpop.permute.xlu0 %562
    %564 = vrot.lane.b32.xlu0 %v557, 56
    %v565 = vpop.permute.xlu0 %564
    %566 = vrot.lane.b32.xlu0 %v558, 56
    %v567 = vpop.permute.xlu0 %566
    %568 = vrot.lane.b32.xlu0 %v559, 56
    %v569 = vpop.permute.xlu0 %568
    %v570 = vsel %vm155, %v561, %v563
    %v571 = vsel %vm155, %v563, %v565
    %v572 = vsel %vm155, %v565, %v567
    %v573 = vsel %vm155, %v567, %v569
    %578 = vst [vmem:[#allocation4 + $0xc0] sm:$0xf0] %v570
    %579 = vst [vmem:[#allocation4 + $0xc8] sm:$0xf0] %v571
    %580 = vst [vmem:[#allocation4 + $0xd0] sm:$0xf0] %v572
    %581 = vst [vmem:[#allocation4 + $0xd8] sm:$0xf0] %v573
    %s582 = scalar_lea.vmem [#allocation8], 32
    %v583 = vld [vmem:[%s582] ss:$8 sm:$0xf]
    %v584 = vld [vmem:[#allocation2] sm:$0xf]
    %v585 = vld [vmem:[#allocation2 + $0x8] sm:$0xf]
    %v586 = vld [vmem:[#allocation2 + $0x10] sm:$0xf]
    %v587 = vld [vmem:[#allocation2 + $0x18] sm:$0xf]
    %v588 = vld [vmem:[#allocation2 + $0x20] sm:$0xf]
    %v590 = vperm.slane %v583, 0
    %v591 = vperm.slane %v583, 1
    %v592 = vperm.slane %v583, 2
    %v593 = vperm.slane %v583, 3
    %594 = vrot.lane.b32.xlu0 %v590, 73
    %v595 = vpop.permute.xlu0 %594
    %596 = vrot.lane.b32.xlu0 %v591, 73
    %v597 = vpop.permute.xlu0 %596
    %598 = vrot.lane.b32.xlu0 %v592, 73
    %v599 = vpop.permute.xlu0 %598
    %600 = vrot.lane.b32.xlu0 %v593, 73
    %v601 = vpop.permute.xlu0 %600
    %v602 = vsel %vm122, %v595, %v597
    %v603 = vsel %vm122, %v597, %v599
    %v604 = vsel %vm122, %v599, %v601
    %v610 = vmul.f32 %v584, %v595
    %v611 = vmul.f32 %v585, %v602
    %v612 = vmul.f32 %v586, %v603
    %v613 = vmul.f32 %v587, %v604
    %v614 = vmul.f32 %v588, %v601
    %620 = vrot.lane.b32.xlu0 %v610, 55
    %v621 = vpop.permute.xlu0 %620
    %622 = vrot.lane.b32.xlu0 %v611, 55
    %v623 = vpop.permute.xlu0 %622
    %624 = vrot.lane.b32.xlu0 %v612, 55
    %v625 = vpop.permute.xlu0 %624
    %626 = vrot.lane.b32.xlu0 %v613, 55
    %v627 = vpop.permute.xlu0 %626
    %628 = vrot.lane.b32.xlu0 %v614, 55
    %v629 = vpop.permute.xlu0 %628
    %v630 = vsel %vm93, %v621, %v623
    %v631 = vsel %vm93, %v623, %v625
    %v632 = vsel %vm93, %v625, %v627
    %v633 = vsel %vm93, %v627, %v629
    %638 = vst [vmem:[#allocation4 + $0x100] sm:$0xf] %v630
    %639 = vst [vmem:[#allocation4 + $0x108] sm:$0xf] %v631
    %640 = vst [vmem:[#allocation4 + $0x110] sm:$0xf] %v632
    %641 = vst [vmem:[#allocation4 + $0x118] sm:$0xf] %v633
    %s642 = scalar_lea.vmem [#allocation8], 33
    %v643 = vld [vmem:[%s642] ss:$8 sm:$0xf]
    %v644 = vld [vmem:[#allocation2] sm:$0xf]
    %v645 = vld [vmem:[#allocation2 + $0x8] sm:$0xf]
    %v646 = vld [vmem:[#allocation2 + $0x10] sm:$0xf]
    %v647 = vld [vmem:[#allocation2 + $0x18] sm:$0xf]
    %v648 = vld [vmem:[#allocation2 + $0x20] sm:$0xf]
    %v650 = vperm.slane %v643, 0
    %v651 = vperm.slane %v643, 1
    %v652 = vperm.slane %v643, 2
    %v653 = vperm.slane %v643, 3
    %654 = vrot.lane.b32.xlu0 %v650, 119
    %v655 = vpop.permute.xlu0 %654
    %656 = vrot.lane.b32.xlu0 %v651, 119
    %v657 = vpop.permute.xlu0 %656
    %658 = vrot.lane.b32.xlu0 %v652, 119
    %v659 = vpop.permute.xlu0 %658
    %660 = vrot.lane.b32.xlu0 %v653, 119
    %v661 = vpop.permute.xlu0 %660
    %vm662 = vcmask 973824
    %v663 = vsel %vm662, %v655, %v657
    %v664 = vsel %vm662, %v657, %v659
    %v665 = vsel %vm662, %v659, %v661
    %v671 = vmul.f32 %v644, %v655
    %v672 = vmul.f32 %v645, %v663
    %v673 = vmul.f32 %v646, %v664
    %v674 = vmul.f32 %v647, %v665
    %v675 = vmul.f32 %v648, %v661
    %v681 = vrot.slane %v671, 4
    %v682 = vrot.slane %v672, 4
    %v683 = vrot.slane %v673, 4
    %v684 = vrot.slane %v674, 4
    %v685 = vrot.slane %v675, 4
    %686 = vrot.lane.b32.xlu0 %v681, 9
    %v687 = vpop.permute.xlu0 %686
    %688 = vrot.lane.b32.xlu0 %v682, 9
    %v689 = vpop.permute.xlu0 %688
    %690 = vrot.lane.b32.xlu0 %v683, 9
    %v691 = vpop.permute.xlu0 %690
    %692 = vrot.lane.b32.xlu0 %v684, 9
    %v693 = vpop.permute.xlu0 %692
    %694 = vrot.lane.b32.xlu0 %v685, 9
    %v695 = vpop.permute.xlu0 %694
    %vm696 = vcmask 72704
    %v697 = vsel %vm696, %v687, %v689
    %v698 = vsel %vm696, %v689, %v691
    %v699 = vsel %vm696, %v691, %v693
    %v700 = vsel %vm696, %v693, %v695
    %705 = vst [vmem:[#allocation4 + $0x100] sm:$0xf0] %v697
    %706 = vst [vmem:[#allocation4 + $0x108] sm:$0xf0] %v698
    %707 = vst [vmem:[#allocation4 + $0x110] sm:$0xf0] %v699
    %708 = vst [vmem:[#allocation4 + $0x118] sm:$0xf0] %v700
    %s709 = scalar_lea.vmem [#allocation8], 34
    %v710 = vld [vmem:[%s709] ss:$8 sm:$0xf]
    %v711 = vld [vmem:[#allocation2] sm:$0xf]
    %v712 = vld [vmem:[#allocation2 + $0x8] sm:$0xf]
    %v713 = vld [vmem:[#allocation2 + $0x10] sm:$0xf]
    %v714 = vld [vmem:[#allocation2 + $0x18] sm:$0xf]
    %v715 = vld [vmem:[#allocation2 + $0x20] sm:$0xf]
    %v717 = vperm.slane %v710, 0
    %v718 = vperm.slane %v710, 1
    %v719 = vperm.slane %v710, 2
    %v720 = vperm.slane %v710, 3
    %721 = vrot.lane.b32.xlu0 %v717, 120
    %v722 = vpop.permute.xlu0 %721
    %723 = vrot.lane.b32.xlu0 %v718, 120
    %v724 = vpop.permute.xlu0 %723
    %725 = vrot.lane.b32.xlu0 %v719, 120
    %v726 = vpop.permute.xlu0 %725
    %727 = vrot.lane.b32.xlu0 %v720, 120
    %v728 = vpop.permute.xlu0 %727
    %vm729 = vcmask 982016
    %v730 = vsel %vm729, %v722, %v724
    %v731 = vsel %vm729, %v724, %v726
    %v732 = vsel %vm729, %v726, %v728
    %v738 = vmul.f32 %v711, %v722
    %v739 = vmul.f32 %v712, %v730
    %v740 = vmul.f32 %v713, %v731
    %v741 = vmul.f32 %v714, %v732
    %v742 = vmul.f32 %v715, %v728
    %748 = vrot.lane.b32.xlu0 %v738, 8
    %v749 = vpop.permute.xlu0 %748
    %750 = vrot.lane.b32.xlu0 %v739, 8
    %v751 = vpop.permute.xlu0 %750
    %752 = vrot.lane.b32.xlu0 %v740, 8
    %v753 = vpop.permute.xlu0 %752
    %754 = vrot.lane.b32.xlu0 %v741, 8
    %v755 = vpop.permute.xlu0 %754
    %756 = vrot.lane.b32.xlu0 %v742, 8
    %v757 = vpop.permute.xlu0 %756
    %vm758 = vcmask 64512
    %v759 = vsel %vm758, %v749, %v751
    %v760 = vsel %vm758, %v751, %v753
    %v761 = vsel %vm758, %v753, %v755
    %v762 = vsel %vm758, %v755, %v757
    %767 = vst [vmem:[#allocation4 + $0x140] sm:$0xf] %v759
    %768 = vst [vmem:[#allocation4 + $0x148] sm:$0xf] %v760
    %769 = vst [vmem:[#allocation4 + $0x150] sm:$0xf] %v761
    %770 = vst [vmem:[#allocation4 + $0x158] sm:$0xf] %v762
    %s771 = scalar_lea.vmem [#allocation8], 35
    %v772 = vld [vmem:[%s771] ss:$8 sm:$0xf]
    %v773 = vld [vmem:[#allocation2] sm:$0xf]
    %v774 = vld [vmem:[#allocation2 + $0x8] sm:$0xf]
    %v775 = vld [vmem:[#allocation2 + $0x10] sm:$0xf]
    %v776 = vld [vmem:[#allocation2 + $0x18] sm:$0xf]
    %v777 = vld [vmem:[#allocation2 + $0x20] sm:$0xf]
    %v779 = vperm.slane %v772, 0
    %v780 = vperm.slane %v772, 1
    %v781 = vperm.slane %v772, 2
    %v782 = vperm.slane %v772, 3
    %783 = vrot.lane.b32.xlu0 %v779, 121
    %v784 = vpop.permute.xlu0 %783
    %785 = vrot.lane.b32.xlu0 %v780, 121
    %v786 = vpop.permute.xlu0 %785
    %787 = vrot.lane.b32.xlu0 %v781, 121
    %v788 = vpop.permute.xlu0 %787
    %789 = vrot.lane.b32.xlu0 %v782, 121
    %v790 = vpop.permute.xlu0 %789
    %vm791 = vcmask 990208
    %v792 = vsel %vm791, %v784, %v786
    %v793 = vsel %vm791, %v786, %v788
    %v794 = vsel %vm791, %v788, %v790
    %v800 = vmul.f32 %v773, %v784
    %v801 = vmul.f32 %v774, %v792
    %v802 = vmul.f32 %v775, %v793
    %v803 = vmul.f32 %v776, %v794
    %v804 = vmul.f32 %v777, %v790
    %v810 = vrot.slane %v800, 4
    %v811 = vrot.slane %v801, 4
    %v812 = vrot.slane %v802, 4
    %v813 = vrot.slane %v803, 4
    %v814 = vrot.slane %v804, 4
    %815 = vrot.lane.b32.xlu0 %v810, 7
    %v816 = vpop.permute.xlu0 %815
    %817 = vrot.lane.b32.xlu0 %v811, 7
    %v818 = vpop.permute.xlu0 %817
    %819 = vrot.lane.b32.xlu0 %v812, 7
    %v820 = vpop.permute.xlu0 %819
    %821 = vrot.lane.b32.xlu0 %v813, 7
    %v822 = vpop.permute.xlu0 %821
    %823 = vrot.lane.b32.xlu0 %v814, 7
    %v824 = vpop.permute.xlu0 %823
    %vm825 = vcmask 56320
    %v826 = vsel %vm825, %v816, %v818
    %v827 = vsel %vm825, %v818, %v820
    %v828 = vsel %vm825, %v820, %v822
    %v829 = vsel %vm825, %v822, %v824
    %834 = vst [vmem:[#allocation4 + $0x140] sm:$0xf0] %v826
    %835 = vst [vmem:[#allocation4 + $0x148] sm:$0xf0] %v827
    %836 = vst [vmem:[#allocation4 + $0x150] sm:$0xf0] %v828
    %837 = vst [vmem:[#allocation4 + $0x158] sm:$0xf0] %v829
    %s838 = scalar_lea.vmem [#allocation8], 36
    %v839 = vld [vmem:[%s838] ss:$8 sm:$0xf]
    %v840 = vld [vmem:[#allocation2] sm:$0xf]
    %v841 = vld [vmem:[#allocation2 + $0x8] sm:$0xf]
    %v842 = vld [vmem:[#allocation2 + $0x10] sm:$0xf]
    %v843 = vld [vmem:[#allocation2 + $0x18] sm:$0xf]
    %v844 = vld [vmem:[#allocation2 + $0x20] sm:$0xf]
    %v846 = vperm.slane %v839, 0
    %v847 = vperm.slane %v839, 1
    %v848 = vperm.slane %v839, 2
    %v849 = vperm.slane %v839, 3
    %850 = vrot.lane.b32.xlu0 %v846, 127
    %v851 = vpop.permute.xlu0 %850
    %852 = vrot.lane.b32.xlu0 %v847, 127
    %v853 = vpop.permute.xlu0 %852
    %854 = vrot.lane.b32.xlu0 %v848, 127
    %v855 = vpop.permute.xlu0 %854
    %856 = vrot.lane.b32.xlu0 %v849, 127
    %v857 = vpop.permute.xlu0 %856
    %vm858 = vcmask 1039360
    %v859 = vsel %vm858, %v851, %v853
    %v860 = vsel %vm858, %v853, %v855
    %v861 = vsel %vm858, %v855, %v857
    %v867 = vmul.f32 %v840, %v851
    %v868 = vmul.f32 %v841, %v859
    %v869 = vmul.f32 %v842, %v860
    %v870 = vmul.f32 %v843, %v861
    %v871 = vmul.f32 %v844, %v857
    %877 = vrot.lane.b32.xlu0 %v867, 1
    %v878 = vpop.permute.xlu0 %877
    %879 = vrot.lane.b32.xlu0 %v868, 1
    %v880 = vpop.permute.xlu0 %879
    %881 = vrot.lane.b32.xlu0 %v869, 1
    %v882 = vpop.permute.xlu0 %881
    %883 = vrot.lane.b32.xlu0 %v870, 1
    %v884 = vpop.permute.xlu0 %883
    %885 = vrot.lane.b32.xlu0 %v871, 1
    %v886 = vpop.permute.xlu0 %885
    %vm887 = vcmask 7168
    %v888 = vsel %vm887, %v878, %v880
    %v889 = vsel %vm887, %v880, %v882
    %v890 = vsel %vm887, %v882, %v884
    %v891 = vsel %vm887, %v884, %v886
    %896 = vst [vmem:[#allocation4 + $0x180] sm:$0xf] %v888
    %897 = vst [vmem:[#allocation4 + $0x188] sm:$0xf] %v889
    %898 = vst [vmem:[#allocation4 + $0x190] sm:$0xf] %v890
    %899 = vst [vmem:[#allocation4 + $0x198] sm:$0xf] %v891
    %s900 = scalar_lea.vmem [#allocation8], 37
    %v901 = vld [vmem:[%s900] ss:$8 sm:$0xf]
    %v902 = vld [vmem:[#allocation2 + $0x8] sm:$0xf]
    %v903 = vld [vmem:[#allocation2 + $0x10] sm:$0xf]
    %v904 = vld [vmem:[#allocation2 + $0x18] sm:$0xf]
    %v905 = vld [vmem:[#allocation2 + $0x20] sm:$0xf]
    %v907 = vperm.slane %v901, 0
    %v908 = vperm.slane %v901, 1
    %v909 = vperm.slane %v901, 2
    %v910 = vperm.slane %v901, 3
    %v915 = vmul.f32 %v902, %v907
    %v916 = vmul.f32 %v903, %v908
    %v917 = vmul.f32 %v904, %v909
    %v918 = vmul.f32 %v905, %v910
    %v923 = vrot.slane %v915, 4
    %v924 = vrot.slane %v916, 4
    %v925 = vrot.slane %v917, 4
    %v926 = vrot.slane %v918, 4
    %931 = vst [vmem:[#allocation4 + $0x180] sm:$0xf0] %v923
    %932 = vst [vmem:[#allocation4 + $0x188] sm:$0xf0] %v924
    %933 = vst [vmem:[#allocation4 + $0x190] sm:$0xf0] %v925
    %934 = vst [vmem:[#allocation4 + $0x198] sm:$0xf0] %v926
    %s935 = scalar_lea.vmem [#allocation8], 38
    %v936 = vld [vmem:[%s935] ss:$8 sm:$0xf]
    %v937 = vld [vmem:[#allocation2 + $0x8] sm:$0xf]
    %v938 = vld [vmem:[#allocation2 + $0x10] sm:$0xf]
    %v939 = vld [vmem:[#allocation2 + $0x18] sm:$0xf]
    %v940 = vld [vmem:[#allocation2 + $0x20] sm:$0xf]
    %v941 = vld [vmem:[#allocation2 + $0x28] sm:$0xf]
    %v943 = vperm.slane %v936, 0
    %v944 = vperm.slane %v936, 1
    %v945 = vperm.slane %v936, 2
    %v946 = vperm.slane %v936, 3
    %947 = vrot.lane.b32.xlu0 %v943, 1
    %v948 = vpop.permute.xlu0 %947
    %949 = vrot.lane.b32.xlu0 %v944, 1
    %v950 = vpop.permute.xlu0 %949
    %951 = vrot.lane.b32.xlu0 %v945, 1
    %v952 = vpop.permute.xlu0 %951
    %953 = vrot.lane.b32.xlu0 %v946, 1
    %v954 = vpop.permute.xlu0 %953
    %v955 = vsel %vm887, %v948, %v950
    %v956 = vsel %vm887, %v950, %v952
    %v957 = vsel %vm887, %v952, %v954
    %v963 = vmul.f32 %v937, %v948
    %v964 = vmul.f32 %v938, %v955
    %v965 = vmul.f32 %v939, %v956
    %v966 = vmul.f32 %v940, %v957
    %v967 = vmul.f32 %v941, %v954
    %973 = vrot.lane.b32.xlu0 %v963, 127
    %v974 = vpop.permute.xlu0 %973
    %975 = vrot.lane.b32.xlu0 %v964, 127
    %v976 = vpop.permute.xlu0 %975
    %977 = vrot.lane.b32.xlu0 %v965, 127
    %v978 = vpop.permute.xlu0 %977
    %979 = vrot.lane.b32.xlu0 %v966, 127
    %v980 = vpop.permute.xlu0 %979
    %981 = vrot.lane.b32.xlu0 %v967, 127
    %v982 = vpop.permute.xlu0 %981
    %v983 = vsel %vm858, %v974, %v976
    %v984 = vsel %vm858, %v976, %v978
    %v985 = vsel %vm858, %v978, %v980
    %v986 = vsel %vm858, %v980, %v982
    %991 = vst [vmem:[#allocation4 + $0x1c0] sm:$0xf] %v983
    %992 = vst [vmem:[#allocation4 + $0x1c8] sm:$0xf] %v984
    %993 = vst [vmem:[#allocation4 + $0x1d0] sm:$0xf] %v985
    %994 = vst [vmem:[#allocation4 + $0x1d8] sm:$0xf] %v986
    %s995 = scalar_lea.vmem [#allocation8], 39
    %v996 = vld [vmem:[%s995] ss:$8 sm:$0xf]
    %v997 = vld [vmem:[#allocation2 + $0x8] sm:$0xf]
    %v998 = vld [vmem:[#allocation2 + $0x10] sm:$0xf]
    %v999 = vld [vmem:[#allocation2 + $0x18] sm:$0xf]
    %v1000 = vld [vmem:[#allocation2 + $0x20] sm:$0xf]
    %v1001 = vld [vmem:[#allocation2 + $0x28] sm:$0xf]
    %v1003 = vperm.slane %v996, 0
    %v1004 = vperm.slane %v996, 1
    %v1005 = vperm.slane %v996, 2
    %v1006 = vperm.slane %v996, 3
    %1007 = vrot.lane.b32.xlu0 %v1003, 7
    %v1008 = vpop.permute.xlu0 %1007
    %1009 = vrot.lane.b32.xlu0 %v1004, 7
    %v1010 = vpop.permute.xlu0 %1009
    %1011 = vrot.lane.b32.xlu0 %v1005, 7
    %v1012 = vpop.permute.xlu0 %1011
    %1013 = vrot.lane.b32.xlu0 %v1006, 7
    %v1014 = vpop.permute.xlu0 %1013
    %v1015 = vsel %vm825, %v1008, %v1010
    %v1016 = vsel %vm825, %v1010, %v1012
    %v1017 = vsel %vm825, %v1012, %v1014
    %v1023 = vmul.f32 %v997, %v1008
    %v1024 = vmul.f32 %v998, %v1015
    %v1025 = vmul.f32 %v999, %v1016
    %v1026 = vmul.f32 %v1000, %v1017
    %v1027 = vmul.f32 %v1001, %v1014
    %v1033 = vrot.slane %v1023, 4
    %v1034 = vrot.slane %v1024, 4
    %v1035 = vrot.slane %v1025, 4
    %v1036 = vrot.slane %v1026, 4
    %v1037 = vrot.slane %v1027, 4
    %1038 = vrot.lane.b32.xlu0 %v1033, 121
    %v1039 = vpop.permute.xlu0 %1038
    %1040 = vrot.lane.b32.xlu0 %v1034, 121
    %v1041 = vpop.permute.xlu0 %1040
    %1042 = vrot.lane.b32.xlu0 %v1035, 121
    %v1043 = vpop.permute.xlu0 %1042
    %1044 = vrot.lane.b32.xlu0 %v1036, 121
    %v1045 = vpop.permute.xlu0 %1044
    %1046 = vrot.lane.b32.xlu0 %v1037, 121
    %v1047 = vpop.permute.xlu0 %1046
    %v1048 = vsel %vm791, %v1039, %v1041
    %v1049 = vsel %vm791, %v1041, %v1043
    %v1050 = vsel %vm791, %v1043, %v1045
    %v1051 = vsel %vm791, %v1045, %v1047
    %1056 = vst [vmem:[#allocation4 + $0x1c0] sm:$0xf0] %v1048
    %1057 = vst [vmem:[#allocation4 + $0x1c8] sm:$0xf0] %v1049
    %1058 = vst [vmem:[#allocation4 + $0x1d0] sm:$0xf0] %v1050
    %1059 = vst [vmem:[#allocation4 + $0x1d8] sm:$0xf0] %v1051
    %s1060 = scalar_lea.vmem [#allocation8], 64
    %v1061 = vld [vmem:[%s1060] ss:$8 sm:$0xf]
    %v1062 = vld [vmem:[#allocation2 + $0x8] sm:$0xf]
    %v1063 = vld [vmem:[#allocation2 + $0x10] sm:$0xf]
    %v1064 = vld [vmem:[#allocation2 + $0x18] sm:$0xf]
    %v1065 = vld [vmem:[#allocation2 + $0x20] sm:$0xf]
    %v1066 = vld [vmem:[#allocation2 + $0x28] sm:$0xf]
    %v1068 = vperm.slane %v1061, 0
    %v1069 = vperm.slane %v1061, 1
    %v1070 = vperm.slane %v1061, 2
    %v1071 = vperm.slane %v1061, 3
    %1072 = vrot.lane.b32.xlu0 %v1068, 8
    %v1073 = vpop.permute.xlu0 %1072
    %1074 = vrot.lane.b32.xlu0 %v1069, 8
    %v1075 = vpop.permute.xlu0 %1074
    %1076 = vrot.lane.b32.xlu0 %v1070, 8
    %v1077 = vpop.permute.xlu0 %1076
    %1078 = vrot.lane.b32.xlu0 %v1071, 8
    %v1079 = vpop.permute.xlu0 %1078
    %v1080 = vsel %vm758, %v1073, %v1075
    %v1081 = vsel %vm758, %v1075, %v1077
    %v1082 = vsel %vm758, %v1077, %v1079
    %v1088 = vmul.f32 %v1062, %v1073
    %v1089 = vmul.f32 %v1063, %v1080
    %v1090 = vmul.f32 %v1064, %v1081
    %v1091 = vmul.f32 %v1065, %v1082
    %v1092 = vmul.f32 %v1066, %v1079
    %1098 = vrot.lane.b32.xlu0 %v1088, 120
    %v1099 = vpop.permute.xlu0 %1098
    %1100 = vrot.lane.b32.xlu0 %v1089, 120
    %v1101 = vpop.permute.xlu0 %1100
    %1102 = vrot.lane.b32.xlu0 %v1090, 120
    %v1103 = vpop.permute.xlu0 %1102
    %1104 = vrot.lane.b32.xlu0 %v1091, 120
    %v1105 = vpop.permute.xlu0 %1104
    %1106 = vrot.lane.b32.xlu0 %v1092, 120
    %v1107 = vpop.permute.xlu0 %1106
    %v1108 = vsel %vm729, %v1099, %v1101
    %v1109 = vsel %vm729, %v1101, %v1103
    %v1110 = vsel %vm729, %v1103, %v1105
    %v1111 = vsel %vm729, %v1105, %v1107
    %1116 = vst [vmem:[#allocation4 + $0x200] sm:$0xf] %v1108
    %1117 = vst [vmem:[#allocation4 + $0x208] sm:$0xf] %v1109
    %1118 = vst [vmem:[#allocation4 + $0x210] sm:$0xf] %v1110
    %1119 = vst [vmem:[#allocation4 + $0x218] sm:$0xf] %v1111
    %s1120 = scalar_lea.vmem [#allocation8], 65
    %v1121 = vld [vmem:[%s1120] ss:$8 sm:$0xf]
    %v1122 = vld [vmem:[#allocation2 + $0x8] sm:$0xf]
    %v1123 = vld [vmem:[#allocation2 + $0x10] sm:$0xf]
    %v1124 = vld [vmem:[#allocation2 + $0x18] sm:$0xf]
    %v1125 = vld [vmem:[#allocation2 + $0x20] sm:$0xf]
    %v1126 = vld [vmem:[#allocation2 + $0x28] sm:$0xf]
    %v1128 = vperm.slane %v1121, 0
    %v1129 = vperm.slane %v1121, 1
    %v1130 = vperm.slane %v1121, 2
    %v1131 = vperm.slane %v1121, 3
    %1132 = vrot.lane.b32.xlu0 %v1128, 9
    %v1133 = vpop.permute.xlu0 %1132
    %1134 = vrot.lane.b32.xlu0 %v1129, 9
    %v1135 = vpop.permute.xlu0 %1134
    %1136 = vrot.lane.b32.xlu0 %v1130, 9
    %v1137 = vpop.permute.xlu0 %1136
    %1138 = vrot.lane.b32.xlu0 %v1131, 9
    %v1139 = vpop.permute.xlu0 %1138
    %v1140 = vsel %vm696, %v1133, %v1135
    %v1141 = vsel %vm696, %v1135, %v1137
    %v1142 = vsel %vm696, %v1137, %v1139
    %v1148 = vmul.f32 %v1122, %v1133
    %v1149 = vmul.f32 %v1123, %v1140
    %v1150 = vmul.f32 %v1124, %v1141
    %v1151 = vmul.f32 %v1125, %v1142
    %v1152 = vmul.f32 %v1126, %v1139
    %v1158 = vrot.slane %v1148, 4
    %v1159 = vrot.slane %v1149, 4
    %v1160 = vrot.slane %v1150, 4
    %v1161 = vrot.slane %v1151, 4
    %v1162 = vrot.slane %v1152, 4
    %1163 = vrot.lane.b32.xlu0 %v1158, 119
    %v1164 = vpop.permute.xlu0 %1163
    %1165 = vrot.lane.b32.xlu0 %v1159, 119
    %v1166 = vpop.permute.xlu0 %1165
    %1167 = vrot.lane.b32.xlu0 %v1160, 119
    %v1168 = vpop.permute.xlu0 %1167
    %1169 = vrot.lane.b32.xlu0 %v1161, 119
    %v1170 = vpop.permute.xlu0 %1169
    %1171 = vrot.lane.b32.xlu0 %v1162, 119
    %v1172 = vpop.permute.xlu0 %1171
    %v1173 = vsel %vm662, %v1164, %v1166
    %v1174 = vsel %vm662, %v1166, %v1168
    %v1175 = vsel %vm662, %v1168, %v1170
    %v1176 = vsel %vm662, %v1170, %v1172
    %1181 = vst [vmem:[#allocation4 + $0x200] sm:$0xf0] %v1173
    %1182 = vst [vmem:[#allocation4 + $0x208] sm:$0xf0] %v1174
    %1183 = vst [vmem:[#allocation4 + $0x210] sm:$0xf0] %v1175
    %1184 = vst [vmem:[#allocation4 + $0x218] sm:$0xf0] %v1176
    %s1185 = scalar_lea.vmem [#allocation8], 66
    %v1186 = vld [vmem:[%s1185] ss:$8 sm:$0xf]
    %v1187 = vld [vmem:[#allocation2 + $0x8] sm:$0xf]
    %v1188 = vld [vmem:[#allocation2 + $0x10] sm:$0xf]
    %v1189 = vld [vmem:[#allocation2 + $0x18] sm:$0xf]
    %v1190 = vld [vmem:[#allocation2 + $0x20] sm:$0xf]
    %v1191 = vld [vmem:[#allocation2 + $0x28] sm:$0xf]
    %v1193 = vperm.slane %v1186, 0
    %v1194 = vperm.slane %v1186, 1
    %v1195 = vperm.slane %v1186, 2
    %v1196 = vperm.slane %v1186, 3
    %1197 = vrot.lane.b32.xlu0 %v1193, 55
    %v1198 = vpop.permute.xlu0 %1197
    %1199 = vrot.lane.b32.xlu0 %v1194, 55
    %v1200 = vpop.permute.xlu0 %1199
    %1201 = vrot.lane.b32.xlu0 %v1195, 55
    %v1202 = vpop.permute.xlu0 %1201
    %1203 = vrot.lane.b32.xlu0 %v1196, 55
    %v1204 = vpop.permute.xlu0 %1203
    %v1205 = vsel %vm93, %v1198, %v1200
    %v1206 = vsel %vm93, %v1200, %v1202
    %v1207 = vsel %vm93, %v1202, %v1204
    %v1213 = vmul.f32 %v1187, %v1198
    %v1214 = vmul.f32 %v1188, %v1205
    %v1215 = vmul.f32 %v1189, %v1206
    %v1216 = vmul.f32 %v1190, %v1207
    %v1217 = vmul.f32 %v1191, %v1204
    %1223 = vrot.lane.b32.xlu0 %v1213, 73
    %v1224 = vpop.permute.xlu0 %1223
    %1225 = vrot.lane.b32.xlu0 %v1214, 73
    %v1226 = vpop.permute.xlu0 %1225
    %1227 = vrot.lane.b32.xlu0 %v1215, 73
    %v1228 = vpop.permute.xlu0 %1227
    %1229 = vrot.lane.b32.xlu0 %v1216, 73
    %v1230 = vpop.permute.xlu0 %1229
    %1231 = vrot.lane.b32.xlu0 %v1217, 73
    %v1232 = vpop.permute.xlu0 %1231
    %v1233 = vsel %vm122, %v1224, %v1226
    %v1234 = vsel %vm122, %v1226, %v1228
    %v1235 = vsel %vm122, %v1228, %v1230
    %v1236 = vsel %vm122, %v1230, %v1232
    %1241 = vst [vmem:[#allocation4 + $0x240] sm:$0xf] %v1233
    %1242 = vst [vmem:[#allocation4 + $0x248] sm:$0xf] %v1234
    %1243 = vst [vmem:[#allocation4 + $0x250] sm:$0xf] %v1235
    %1244 = vst [vmem:[#allocation4 + $0x258] sm:$0xf] %v1236
    %s1245 = scalar_lea.vmem [#allocation8], 67
    %v1246 = vld [vmem:[%s1245] ss:$8 sm:$0xf]
    %v1247 = vld [vmem:[#allocation2 + $0x8] sm:$0xf]
    %v1248 = vld [vmem:[#allocation2 + $0x10] sm:$0xf]
    %v1249 = vld [vmem:[#allocation2 + $0x18] sm:$0xf]
    %v1250 = vld [vmem:[#allocation2 + $0x20] sm:$0xf]
    %v1251 = vld [vmem:[#allocation2 + $0x28] sm:$0xf]
    %v1253 = vperm.slane %v1246, 0
    %v1254 = vperm.slane %v1246, 1
    %v1255 = vperm.slane %v1246, 2
    %v1256 = vperm.slane %v1246, 3
    %1257 = vrot.lane.b32.xlu0 %v1253, 56
    %v1258 = vpop.permute.xlu0 %1257
    %1259 = vrot.lane.b32.xlu0 %v1254, 56
    %v1260 = vpop.permute.xlu0 %1259
    %1261 = vrot.lane.b32.xlu0 %v1255, 56
    %v1262 = vpop.permute.xlu0 %1261
    %1263 = vrot.lane.b32.xlu0 %v1256, 56
    %v1264 = vpop.permute.xlu0 %1263
    %v1265 = vsel %vm155, %v1258, %v1260
    %v1266 = vsel %vm155, %v1260, %v1262
    %v1267 = vsel %vm155, %v1262, %v1264
    %v1273 = vmul.f32 %v1247, %v1258
    %v1274 = vmul.f32 %v1248, %v1265
    %v1275 = vmul.f32 %v1249, %v1266
    %v1276 = vmul.f32 %v1250, %v1267
    %v1277 = vmul.f32 %v1251, %v1264
    %v1283 = vrot.slane %v1273, 4
    %v1284 = vrot.slane %v1274, 4
    %v1285 = vrot.slane %v1275, 4
    %v1286 = vrot.slane %v1276, 4
    %v1287 = vrot.slane %v1277, 4
    %1288 = vrot.lane.b32.xlu0 %v1283, 72
    %v1289 = vpop.permute.xlu0 %1288
    %1290 = vrot.lane.b32.xlu0 %v1284, 72
    %v1291 = vpop.permute.xlu0 %1290
    %1292 = vrot.lane.b32.xlu0 %v1285, 72
    %v1293 = vpop.permute.xlu0 %1292
    %1294 = vrot.lane.b32.xlu0 %v1286, 72
    %v1295 = vpop.permute.xlu0 %1294
    %1296 = vrot.lane.b32.xlu0 %v1287, 72
    %v1297 = vpop.permute.xlu0 %1296
    %v1298 = vsel %vm189, %v1289, %v1291
    %v1299 = vsel %vm189, %v1291, %v1293
    %v1300 = vsel %vm189, %v1293, %v1295
    %v1301 = vsel %vm189, %v1295, %v1297
    %1306 = vst [vmem:[#allocation4 + $0x240] sm:$0xf0] %v1298
    %1307 = vst [vmem:[#allocation4 + $0x248] sm:$0xf0] %v1299
    %1308 = vst [vmem:[#allocation4 + $0x250] sm:$0xf0] %v1300
    %1309 = vst [vmem:[#allocation4 + $0x258] sm:$0xf0] %v1301
    %s1310 = scalar_lea.vmem [#allocation8], 68
    %v1311 = vld [vmem:[%s1310] ss:$8 sm:$0xf]
    %v1312 = vld [vmem:[#allocation2 + $0x8] sm:$0xf]
    %v1313 = vld [vmem:[#allocation2 + $0x10] sm:$0xf]
    %v1314 = vld [vmem:[#allocation2 + $0x18] sm:$0xf]
    %v1315 = vld [vmem:[#allocation2 + $0x20] sm:$0xf]
    %v1316 = vld [vmem:[#allocation2 + $0x28] sm:$0xf]
    %v1318 = vperm.slane %v1311, 0
    %v1319 = vperm.slane %v1311, 1
    %v1320 = vperm.slane %v1311, 2
    %v1321 = vperm.slane %v1311, 3
    %1322 = vrot.lane.b32.xlu0 %v1318, 57
    %v1323 = vpop.permute.xlu0 %1322
    %1324 = vrot.lane.b32.xlu0 %v1319, 57
    %v1325 = vpop.permute.xlu0 %1324
    %1326 = vrot.lane.b32.xlu0 %v1320, 57
    %v1327 = vpop.permute.xlu0 %1326
    %1328 = vrot.lane.b32.xlu0 %v1321, 57
    %v1329 = vpop.permute.xlu0 %1328
    %v1330 = vsel %vm222, %v1323, %v1325
    %v1331 = vsel %vm222, %v1325, %v1327
    %v1332 = vsel %vm222, %v1327, %v1329
    %v1338 = vmul.f32 %v1312, %v1323
    %v1339 = vmul.f32 %v1313, %v1330
    %v1340 = vmul.f32 %v1314, %v1331
    %v1341 = vmul.f32 %v1315, %v1332
    %v1342 = vmul.f32 %v1316, %v1329
    %1348 = vrot.lane.b32.xlu0 %v1338, 71
    %v1349 = vpop.permute.xlu0 %1348
    %1350 = vrot.lane.b32.xlu0 %v1339, 71
    %v1351 = vpop.permute.xlu0 %1350
    %1352 = vrot.lane.b32.xlu0 %v1340, 71
    %v1353 = vpop.permute.xlu0 %1352
    %1354 = vrot.lane.b32.xlu0 %v1341, 71
    %v1355 = vpop.permute.xlu0 %1354
    %1356 = vrot.lane.b32.xlu0 %v1342, 71
    %v1357 = vpop.permute.xlu0 %1356
    %v1358 = vsel %vm251, %v1349, %v1351
    %v1359 = vsel %vm251, %v1351, %v1353
    %v1360 = vsel %vm251, %v1353, %v1355
    %v1361 = vsel %vm251, %v1355, %v1357
    %1366 = vst [vmem:[#allocation4 + $0x280] sm:$0xf] %v1358
    %1367 = vst [vmem:[#allocation4 + $0x288] sm:$0xf] %v1359
    %1368 = vst [vmem:[#allocation4 + $0x290] sm:$0xf] %v1360
    %1369 = vst [vmem:[#allocation4 + $0x298] sm:$0xf] %v1361
    %s1370 = scalar_lea.vmem [#allocation8], 69
    %v1371 = vld [vmem:[%s1370] ss:$8 sm:$0xf]
    %v1372 = vld [vmem:[#allocation2 + $0x8] sm:$0xf]
    %v1373 = vld [vmem:[#allocation2 + $0x10] sm:$0xf]
    %v1374 = vld [vmem:[#allocation2 + $0x18] sm:$0xf]
    %v1375 = vld [vmem:[#allocation2 + $0x20] sm:$0xf]
    %v1376 = vld [vmem:[#allocation2 + $0x28] sm:$0xf]
    %v1378 = vperm.slane %v1371, 0
    %v1379 = vperm.slane %v1371, 1
    %v1380 = vperm.slane %v1371, 2
    %v1381 = vperm.slane %v1371, 3
    %1382 = vrot.lane.b32.xlu0 %v1378, 63
    %v1383 = vpop.permute.xlu0 %1382
    %1384 = vrot.lane.b32.xlu0 %v1379, 63
    %v1385 = vpop.permute.xlu0 %1384
    %1386 = vrot.lane.b32.xlu0 %v1380, 63
    %v1387 = vpop.permute.xlu0 %1386
    %1388 = vrot.lane.b32.xlu0 %v1381, 63
    %v1389 = vpop.permute.xlu0 %1388
    %v1390 = vsel %vm284, %v1383, %v1385
    %v1391 = vsel %vm284, %v1385, %v1387
    %v1392 = vsel %vm284, %v1387, %v1389
    %v1398 = vmul.f32 %v1372, %v1383
    %v1399 = vmul.f32 %v1373, %v1390
    %v1400 = vmul.f32 %v1374, %v1391
    %v1401 = vmul.f32 %v1375, %v1392
    %v1402 = vmul.f32 %v1376, %v1389
    %v1408 = vrot.slane %v1398, 4
    %v1409 = vrot.slane %v1399, 4
    %v1410 = vrot.slane %v1400, 4
    %v1411 = vrot.slane %v1401, 4
    %v1412 = vrot.slane %v1402, 4
    %1413 = vrot.lane.b32.xlu0 %v1408, 65
    %v1414 = vpop.permute.xlu0 %1413
    %1415 = vrot.lane.b32.xlu0 %v1409, 65
    %v1416 = vpop.permute.xlu0 %1415
    %1417 = vrot.lane.b32.xlu0 %v1410, 65
    %v1418 = vpop.permute.xlu0 %1417
    %1419 = vrot.lane.b32.xlu0 %v1411, 65
    %v1420 = vpop.permute.xlu0 %1419
    %1421 = vrot.lane.b32.xlu0 %v1412, 65
    %v1422 = vpop.permute.xlu0 %1421
    %v1423 = vsel %vm318, %v1414, %v1416
    %v1424 = vsel %vm318, %v1416, %v1418
    %v1425 = vsel %vm318, %v1418, %v1420
    %v1426 = vsel %vm318, %v1420, %v1422
    %1431 = vst [vmem:[#allocation4 + $0x280] sm:$0xf0] %v1423
    %1432 = vst [vmem:[#allocation4 + $0x288] sm:$0xf0] %v1424
    %1433 = vst [vmem:[#allocation4 + $0x290] sm:$0xf0] %v1425
    %1434 = vst [vmem:[#allocation4 + $0x298] sm:$0xf0] %v1426
    %s1435 = scalar_lea.vmem [#allocation8], 70
    %v1436 = vld [vmem:[%s1435] ss:$8 sm:$0xf]
    %v1437 = vld [vmem:[#allocation2 + $0x8] sm:$0xf]
    %v1438 = vld [vmem:[#allocation2 + $0x10] sm:$0xf]
    %v1439 = vld [vmem:[#allocation2 + $0x18] sm:$0xf]
    %v1440 = vld [vmem:[#allocation2 + $0x20] sm:$0xf]
    %v1441 = vld [vmem:[#allocation2 + $0x28] sm:$0xf]
    %v1443 = vperm.slane %v1436, 0
    %v1444 = vperm.slane %v1436, 1
    %v1445 = vperm.slane %v1436, 2
    %v1446 = vperm.slane %v1436, 3
    %1447 = vrot.lane.b32.xlu0 %v1443, 64
    %v1448 = vpop.permute.xlu0 %1447
    %1449 = vrot.lane.b32.xlu0 %v1444, 64
    %v1450 = vpop.permute.xlu0 %1449
    %1451 = vrot.lane.b32.xlu0 %v1445, 64
    %v1452 = vpop.permute.xlu0 %1451
    %1453 = vrot.lane.b32.xlu0 %v1446, 64
    %v1454 = vpop.permute.xlu0 %1453
    %v1455 = vsel %vm351, %v1448, %v1450
    %v1456 = vsel %vm351, %v1450, %v1452
    %v1457 = vsel %vm351, %v1452, %v1454
    %v1463 = vmul.f32 %v1437, %v1448
    %v1464 = vmul.f32 %v1438, %v1455
    %v1465 = vmul.f32 %v1439, %v1456
    %v1466 = vmul.f32 %v1440, %v1457
    %v1467 = vmul.f32 %v1441, %v1454
    %1473 = vrot.lane.b32.xlu0 %v1463, 64
    %v1474 = vpop.permute.xlu0 %1473
    %1475 = vrot.lane.b32.xlu0 %v1464, 64
    %v1476 = vpop.permute.xlu0 %1475
    %1477 = vrot.lane.b32.xlu0 %v1465, 64
    %v1478 = vpop.permute.xlu0 %1477
    %1479 = vrot.lane.b32.xlu0 %v1466, 64
    %v1480 = vpop.permute.xlu0 %1479
    %1481 = vrot.lane.b32.xlu0 %v1467, 64
    %v1482 = vpop.permute.xlu0 %1481
    %v1483 = vsel %vm351, %v1474, %v1476
    %v1484 = vsel %vm351, %v1476, %v1478
    %v1485 = vsel %vm351, %v1478, %v1480
    %v1486 = vsel %vm351, %v1480, %v1482
    %1491 = vst [vmem:[#allocation4 + $0x2c0] sm:$0xf] %v1483
    %1492 = vst [vmem:[#allocation4 + $0x2c8] sm:$0xf] %v1484
    %1493 = vst [vmem:[#allocation4 + $0x2d0] sm:$0xf] %v1485
    %1494 = vst [vmem:[#allocation4 + $0x2d8] sm:$0xf] %v1486
    %s1495 = scalar_lea.vmem [#allocation8], 71
    %v1496 = vld [vmem:[%s1495] ss:$8 sm:$0xf]
    %v1497 = vld [vmem:[#allocation2 + $0x8] sm:$0xf]
    %v1498 = vld [vmem:[#allocation2 + $0x10] sm:$0xf]
    %v1499 = vld [vmem:[#allocation2 + $0x18] sm:$0xf]
    %v1500 = vld [vmem:[#allocation2 + $0x20] sm:$0xf]
    %v1501 = vld [vmem:[#allocation2 + $0x28] sm:$0xf]
    %v1503 = vperm.slane %v1496, 0
    %v1504 = vperm.slane %v1496, 1
    %v1505 = vperm.slane %v1496, 2
    %v1506 = vperm.slane %v1496, 3
    %1507 = vrot.lane.b32.xlu0 %v1503, 65
    %v1508 = vpop.permute.xlu0 %1507
    %1509 = vrot.lane.b32.xlu0 %v1504, 65
    %v1510 = vpop.permute.xlu0 %1509
    %1511 = vrot.lane.b32.xlu0 %v1505, 65
    %v1512 = vpop.permute.xlu0 %1511
    %1513 = vrot.lane.b32.xlu0 %v1506, 65
    %v1514 = vpop.permute.xlu0 %1513
    %v1515 = vsel %vm318, %v1508, %v1510
    %v1516 = vsel %vm318, %v1510, %v1512
    %v1517 = vsel %vm318, %v1512, %v1514
    %v1523 = vmul.f32 %v1497, %v1508
    %v1524 = vmul.f32 %v1498, %v1515
    %v1525 = vmul.f32 %v1499, %v1516
    %v1526 = vmul.f32 %v1500, %v1517
    %v1527 = vmul.f32 %v1501, %v1514
    %v1533 = vrot.slane %v1523, 4
    %v1534 = vrot.slane %v1524, 4
    %v1535 = vrot.slane %v1525, 4
    %v1536 = vrot.slane %v1526, 4
    %v1537 = vrot.slane %v1527, 4
    %1538 = vrot.lane.b32.xlu0 %v1533, 63
    %v1539 = vpop.permute.xlu0 %1538
    %1540 = vrot.lane.b32.xlu0 %v1534, 63
    %v1541 = vpop.permute.xlu0 %1540
    %1542 = vrot.lane.b32.xlu0 %v1535, 63
    %v1543 = vpop.permute.xlu0 %1542
    %1544 = vrot.lane.b32.xlu0 %v1536, 63
    %v1545 = vpop.permute.xlu0 %1544
    %1546 = vrot.lane.b32.xlu0 %v1537, 63
    %v1547 = vpop.permute.xlu0 %1546
    %v1548 = vsel %vm284, %v1539, %v1541
    %v1549 = vsel %vm284, %v1541, %v1543
    %v1550 = vsel %vm284, %v1543, %v1545
    %v1551 = vsel %vm284, %v1545, %v1547
    %1556 = vst [vmem:[#allocation4 + $0x2c0] sm:$0xf0] %v1548
    %1557 = vst [vmem:[#allocation4 + $0x2c8] sm:$0xf0] %v1549
    %1558 = vst [vmem:[#allocation4 + $0x2d0] sm:$0xf0] %v1550
    %1559 = vst [vmem:[#allocation4 + $0x2d8] sm:$0xf0] %v1551
    %s1560 = scalar_lea.vmem [#allocation8], 96
    %v1561 = vld [vmem:[%s1560] ss:$8 sm:$0xf]
    %v1562 = vld [vmem:[#allocation2 + $0x8] sm:$0xf]
    %v1563 = vld [vmem:[#allocation2 + $0x10] sm:$0xf]
    %v1564 = vld [vmem:[#allocation2 + $0x18] sm:$0xf]
    %v1565 = vld [vmem:[#allocation2 + $0x20] sm:$0xf]
    %v1566 = vld [vmem:[#allocation2 + $0x28] sm:$0xf]
    %v1568 = vperm.slane %v1561, 0
    %v1569 = vperm.slane %v1561, 1
    %v1570 = vperm.slane %v1561, 2
    %v1571 = vperm.slane %v1561, 3
    %1572 = vrot.lane.b32.xlu0 %v1568, 71
    %v1573 = vpop.permute.xlu0 %1572
    %1574 = vrot.lane.b32.xlu0 %v1569, 71
    %v1575 = vpop.permute.xlu0 %1574
    %1576 = vrot.lane.b32.xlu0 %v1570, 71
    %v1577 = vpop.permute.xlu0 %1576
    %1578 = vrot.lane.b32.xlu0 %v1571, 71
    %v1579 = vpop.permute.xlu0 %1578
    %v1580 = vsel %vm251, %v1573, %v1575
    %v1581 = vsel %vm251, %v1575, %v1577
    %v1582 = vsel %vm251, %v1577, %v1579
    %v1588 = vmul.f32 %v1562, %v1573
    %v1589 = vmul.f32 %v1563, %v1580
    %v1590 = vmul.f32 %v1564, %v1581
    %v1591 = vmul.f32 %v1565, %v1582
    %v1592 = vmul.f32 %v1566, %v1579
    %1598 = vrot.lane.b32.xlu0 %v1588, 57
    %v1599 = vpop.permute.xlu0 %1598
    %1600 = vrot.lane.b32.xlu0 %v1589, 57
    %v1601 = vpop.permute.xlu0 %1600
    %1602 = vrot.lane.b32.xlu0 %v1590, 57
    %v1603 = vpop.permute.xlu0 %1602
    %1604 = vrot.lane.b32.xlu0 %v1591, 57
    %v1605 = vpop.permute.xlu0 %1604
    %1606 = vrot.lane.b32.xlu0 %v1592, 57
    %v1607 = vpop.permute.xlu0 %1606
    %v1608 = vsel %vm222, %v1599, %v1601
    %v1609 = vsel %vm222, %v1601, %v1603
    %v1610 = vsel %vm222, %v1603, %v1605
    %v1611 = vsel %vm222, %v1605, %v1607
    %1616 = vst [vmem:[#allocation4 + $0x300] sm:$0xf] %v1608
    %1617 = vst [vmem:[#allocation4 + $0x308] sm:$0xf] %v1609
    %1618 = vst [vmem:[#allocation4 + $0x310] sm:$0xf] %v1610
    %1619 = vst [vmem:[#allocation4 + $0x318] sm:$0xf] %v1611
    %s1620 = scalar_lea.vmem [#allocation8], 97
    %v1621 = vld [vmem:[%s1620] ss:$8 sm:$0xf]
    %v1622 = vld [vmem:[#allocation2 + $0x8] sm:$0xf]
    %v1623 = vld [vmem:[#allocation2 + $0x10] sm:$0xf]
    %v1624 = vld [vmem:[#allocation2 + $0x18] sm:$0xf]
    %v1625 = vld [vmem:[#allocation2 + $0x20] sm:$0xf]
    %v1626 = vld [vmem:[#allocation2 + $0x28] sm:$0xf]
    %v1628 = vperm.slane %v1621, 0
    %v1629 = vperm.slane %v1621, 1
    %v1630 = vperm.slane %v1621, 2
    %v1631 = vperm.slane %v1621, 3
    %1632 = vrot.lane.b32.xlu0 %v1628, 72
    %v1633 = vpop.permute.xlu0 %1632
    %1634 = vrot.lane.b32.xlu0 %v1629, 72
    %v1635 = vpop.permute.xlu0 %1634
    %1636 = vrot.lane.b32.xlu0 %v1630, 72
    %v1637 = vpop.permute.xlu0 %1636
    %1638 = vrot.lane.b32.xlu0 %v1631, 72
    %v1639 = vpop.permute.xlu0 %1638
    %v1640 = vsel %vm189, %v1633, %v1635
    %v1641 = vsel %vm189, %v1635, %v1637
    %v1642 = vsel %vm189, %v1637, %v1639
    %v1648 = vmul.f32 %v1622, %v1633
    %v1649 = vmul.f32 %v1623, %v1640
    %v1650 = vmul.f32 %v1624, %v1641
    %v1651 = vmul.f32 %v1625, %v1642
    %v1652 = vmul.f32 %v1626, %v1639
    %v1658 = vrot.slane %v1648, 4
    %v1659 = vrot.slane %v1649, 4
    %v1660 = vrot.slane %v1650, 4
    %v1661 = vrot.slane %v1651, 4
    %v1662 = vrot.slane %v1652, 4
    %1663 = vrot.lane.b32.xlu0 %v1658, 56
    %v1664 = vpop.permute.xlu0 %1663
    %1665 = vrot.lane.b32.xlu0 %v1659, 56
    %v1666 = vpop.permute.xlu0 %1665
    %1667 = vrot.lane.b32.xlu0 %v1660, 56
    %v1668 = vpop.permute.xlu0 %1667
    %1669 = vrot.lane.b32.xlu0 %v1661, 56
    %v1670 = vpop.permute.xlu0 %1669
    %1671 = vrot.lane.b32.xlu0 %v1662, 56
    %v1672 = vpop.permute.xlu0 %1671
    %v1673 = vsel %vm155, %v1664, %v1666
    %v1674 = vsel %vm155, %v1666, %v1668
    %v1675 = vsel %vm155, %v1668, %v1670
    %v1676 = vsel %vm155, %v1670, %v1672
    %1681 = vst [vmem:[#allocation4 + $0x300] sm:$0xf0] %v1673
    %1682 = vst [vmem:[#allocation4 + $0x308] sm:$0xf0] %v1674
    %1683 = vst [vmem:[#allocation4 + $0x310] sm:$0xf0] %v1675
    %1684 = vst [vmem:[#allocation4 + $0x318] sm:$0xf0] %v1676
    %s1685 = scalar_lea.vmem [#allocation8], 98
    %v1686 = vld [vmem:[%s1685] ss:$8 sm:$0xf]
    %v1687 = vld [vmem:[#allocation2 + $0x8] sm:$0xf]
    %v1688 = vld [vmem:[#allocation2 + $0x10] sm:$0xf]
    %v1689 = vld [vmem:[#allocation2 + $0x18] sm:$0xf]
    %v1690 = vld [vmem:[#allocation2 + $0x20] sm:$0xf]
    %v1691 = vld [vmem:[#allocation2 + $0x28] sm:$0xf]
    %v1693 = vperm.slane %v1686, 0
    %v1694 = vperm.slane %v1686, 1
    %v1695 = vperm.slane %v1686, 2
    %v1696 = vperm.slane %v1686, 3
    %1697 = vrot.lane.b32.xlu0 %v1693, 73
    %v1698 = vpop.permute.xlu0 %1697
    %1699 = vrot.lane.b32.xlu0 %v1694, 73
    %v1700 = vpop.permute.xlu0 %1699
    %1701 = vrot.lane.b32.xlu0 %v1695, 73
    %v1702 = vpop.permute.xlu0 %1701
    %1703 = vrot.lane.b32.xlu0 %v1696, 73
    %v1704 = vpop.permute.xlu0 %1703
    %v1705 = vsel %vm122, %v1698, %v1700
    %v1706 = vsel %vm122, %v1700, %v1702
    %v1707 = vsel %vm122, %v1702, %v1704
    %v1713 = vmul.f32 %v1687, %v1698
    %v1714 = vmul.f32 %v1688, %v1705
    %v1715 = vmul.f32 %v1689, %v1706
    %v1716 = vmul.f32 %v1690, %v1707
    %v1717 = vmul.f32 %v1691, %v1704
    %1723 = vrot.lane.b32.xlu0 %v1713, 55
    %v1724 = vpop.permute.xlu0 %1723
    %1725 = vrot.lane.b32.xlu0 %v1714, 55
    %v1726 = vpop.permute.xlu0 %1725
    %1727 = vrot.lane.b32.xlu0 %v1715, 55
    %v1728 = vpop.permute.xlu0 %1727
    %1729 = vrot.lane.b32.xlu0 %v1716, 55
    %v1730 = vpop.permute.xlu0 %1729
    %1731 = vrot.lane.b32.xlu0 %v1717, 55
    %v1732 = vpop.permute.xlu0 %1731
    %v1733 = vsel %vm93, %v1724, %v1726
    %v1734 = vsel %vm93, %v1726, %v1728
    %v1735 = vsel %vm93, %v1728, %v1730
    %v1736 = vsel %vm93, %v1730, %v1732
    %1741 = vst [vmem:[#allocation4 + $0x340] sm:$0xf] %v1733
    %1742 = vst [vmem:[#allocation4 + $0x348] sm:$0xf] %v1734
    %1743 = vst [vmem:[#allocation4 + $0x350] sm:$0xf] %v1735
    %1744 = vst [vmem:[#allocation4 + $0x358] sm:$0xf] %v1736
    %v1745 = vld [vmem:[#allocation8] ss:$8 sm:$0xf]
    %v1746 = vld [vmem:[#allocation2] sm:$0xf0]
    %v1747 = vld [vmem:[#allocation2 + $0x8] sm:$0xf0]
    %v1748 = vld [vmem:[#allocation2 + $0x10] sm:$0xf0]
    %v1749 = vld [vmem:[#allocation2 + $0x18] sm:$0xf0]
    %v1750 = vld [vmem:[#allocation2 + $0x20] sm:$0xf0]
    %v1752 = vperm.slane %v1745, 0
    %v1753 = vperm.slane %v1745, 1
    %v1754 = vperm.slane %v1745, 2
    %v1755 = vperm.slane %v1745, 3
    %1756 = vrot.lane.b32.xlu0 %v1752, 55
    %v1757 = vpop.permute.xlu0 %1756
    %1758 = vrot.lane.b32.xlu0 %v1753, 55
    %v1759 = vpop.permute.xlu0 %1758
    %1760 = vrot.lane.b32.xlu0 %v1754, 55
    %v1761 = vpop.permute.xlu0 %1760
    %1762 = vrot.lane.b32.xlu0 %v1755, 55
    %v1763 = vpop.permute.xlu0 %1762
    %v1764 = vsel %vm93, %v1757, %v1759
    %v1765 = vsel %vm93, %v1759, %v1761
    %v1766 = vsel %vm93, %v1761, %v1763
    %v1772 = vmul.f32 %v1746, %v1757
    %v1773 = vmul.f32 %v1747, %v1764
    %v1774 = vmul.f32 %v1748, %v1765
    %v1775 = vmul.f32 %v1749, %v1766
    %v1776 = vmul.f32 %v1750, %v1763
    %v1782 = vrot.slane %v1772, 4
    %v1783 = vrot.slane %v1773, 4
    %v1784 = vrot.slane %v1774, 4
    %v1785 = vrot.slane %v1775, 4
    %v1786 = vrot.slane %v1776, 4
    %1787 = vrot.lane.b32.xlu0 %v1782, 73
    %v1788 = vpop.permute.xlu0 %1787
    %1789 = vrot.lane.b32.xlu0 %v1783, 73
    %v1790 = vpop.permute.xlu0 %1789
    %1791 = vrot.lane.b32.xlu0 %v1784, 73
    %v1792 = vpop.permute.xlu0 %1791
    %1793 = vrot.lane.b32.xlu0 %v1785, 73
    %v1794 = vpop.permute.xlu0 %1793
    %1795 = vrot.lane.b32.xlu0 %v1786, 73
    %v1796 = vpop.permute.xlu0 %1795
    %v1797 = vsel %vm122, %v1788, %v1790
    %v1798 = vsel %vm122, %v1790, %v1792
    %v1799 = vsel %vm122, %v1792, %v1794
    %v1800 = vsel %vm122, %v1794, %v1796
    %1805 = vst [vmem:[#allocation4 + $0x20] sm:$0xf] %v1797
    %1806 = vst [vmem:[#allocation4 + $0x28] sm:$0xf] %v1798
    %1807 = vst [vmem:[#allocation4 + $0x30] sm:$0xf] %v1799
    %1808 = vst [vmem:[#allocation4 + $0x38] sm:$0xf] %v1800
    %v1809 = vld [vmem:[%s135] ss:$8 sm:$0xf]
    %v1810 = vld [vmem:[#allocation2] sm:$0xf0]
    %v1811 = vld [vmem:[#allocation2 + $0x8] sm:$0xf0]
    %v1812 = vld [vmem:[#allocation2 + $0x10] sm:$0xf0]
    %v1813 = vld [vmem:[#allocation2 + $0x18] sm:$0xf0]
    %v1814 = vld [vmem:[#allocation2 + $0x20] sm:$0xf0]
    %v1816 = vperm.slane %v1809, 0
    %v1817 = vperm.slane %v1809, 1
    %v1818 = vperm.slane %v1809, 2
    %v1819 = vperm.slane %v1809, 3
    %1820 = vrot.lane.b32.xlu0 %v1816, 56
    %v1821 = vpop.permute.xlu0 %1820
    %1822 = vrot.lane.b32.xlu0 %v1817, 56
    %v1823 = vpop.permute.xlu0 %1822
    %1824 = vrot.lane.b32.xlu0 %v1818, 56
    %v1825 = vpop.permute.xlu0 %1824
    %1826 = vrot.lane.b32.xlu0 %v1819, 56
    %v1827 = vpop.permute.xlu0 %1826
    %v1828 = vsel %vm155, %v1821, %v1823
    %v1829 = vsel %vm155, %v1823, %v1825
    %v1830 = vsel %vm155, %v1825, %v1827
    %v1836 = vmul.f32 %v1810, %v1821
    %v1837 = vmul.f32 %v1811, %v1828
    %v1838 = vmul.f32 %v1812, %v1829
    %v1839 = vmul.f32 %v1813, %v1830
    %v1840 = vmul.f32 %v1814, %v1827
    %1846 = vrot.lane.b32.xlu0 %v1836, 72
    %v1847 = vpop.permute.xlu0 %1846
    %1848 = vrot.lane.b32.xlu0 %v1837, 72
    %v1849 = vpop.permute.xlu0 %1848
    %1850 = vrot.lane.b32.xlu0 %v1838, 72
    %v1851 = vpop.permute.xlu0 %1850
    %1852 = vrot.lane.b32.xlu0 %v1839, 72
    %v1853 = vpop.permute.xlu0 %1852
    %1854 = vrot.lane.b32.xlu0 %v1840, 72
    %v1855 = vpop.permute.xlu0 %1854
    %v1856 = vsel %vm189, %v1847, %v1849
    %v1857 = vsel %vm189, %v1849, %v1851
    %v1858 = vsel %vm189, %v1851, %v1853
    %v1859 = vsel %vm189, %v1853, %v1855
    %1864 = vst [vmem:[#allocation4 + $0x20] sm:$0xf0] %v1856
    %1865 = vst [vmem:[#allocation4 + $0x28] sm:$0xf0] %v1857
    %1866 = vst [vmem:[#allocation4 + $0x30] sm:$0xf0] %v1858
    %1867 = vst [vmem:[#allocation4 + $0x38] sm:$0xf0] %v1859
    %v1868 = vld [vmem:[%s202] ss:$8 sm:$0xf]
    %v1869 = vld [vmem:[#allocation2] sm:$0xf0]
    %v1870 = vld [vmem:[#allocation2 + $0x8] sm:$0xf0]
    %v1871 = vld [vmem:[#allocation2 + $0x10] sm:$0xf0]
    %v1872 = vld [vmem:[#allocation2 + $0x18] sm:$0xf0]
    %v1873 = vld [vmem:[#allocation2 + $0x20] sm:$0xf0]
    %v1875 = vperm.slane %v1868, 0
    %v1876 = vperm.slane %v1868, 1
    %v1877 = vperm.slane %v1868, 2
    %v1878 = vperm.slane %v1868, 3
    %1879 = vrot.lane.b32.xlu0 %v1875, 57
    %v1880 = vpop.permute.xlu0 %1879
    %1881 = vrot.lane.b32.xlu0 %v1876, 57
    %v1882 = vpop.permute.xlu0 %1881
    %1883 = vrot.lane.b32.xlu0 %v1877, 57
    %v1884 = vpop.permute.xlu0 %1883
    %1885 = vrot.lane.b32.xlu0 %v1878, 57
    %v1886 = vpop.permute.xlu0 %1885
    %v1887 = vsel %vm222, %v1880, %v1882
    %v1888 = vsel %vm222, %v1882, %v1884
    %v1889 = vsel %vm222, %v1884, %v1886
    %v1895 = vmul.f32 %v1869, %v1880
    %v1896 = vmul.f32 %v1870, %v1887
    %v1897 = vmul.f32 %v1871, %v1888
    %v1898 = vmul.f32 %v1872, %v1889
    %v1899 = vmul.f32 %v1873, %v1886
    %v1905 = vrot.slane %v1895, 4
    %v1906 = vrot.slane %v1896, 4
    %v1907 = vrot.slane %v1897, 4
    %v1908 = vrot.slane %v1898, 4
    %v1909 = vrot.slane %v1899, 4
    %1910 = vrot.lane.b32.xlu0 %v1905, 71
    %v1911 = vpop.permute.xlu0 %1910
    %1912 = vrot.lane.b32.xlu0 %v1906, 71
    %v1913 = vpop.permute.xlu0 %1912
    %1914 = vrot.lane.b32.xlu0 %v1907, 71
    %v1915 = vpop.permute.xlu0 %1914
    %1916 = vrot.lane.b32.xlu0 %v1908, 71
    %v1917 = vpop.permute.xlu0 %1916
    %1918 = vrot.lane.b32.xlu0 %v1909, 71
    %v1919 = vpop.permute.xlu0 %1918
    %v1920 = vsel %vm251, %v1911, %v1913
    %v1921 = vsel %vm251, %v1913, %v1915
    %v1922 = vsel %vm251, %v1915, %v1917
    %v1923 = vsel %vm251, %v1917, %v1919
    %1928 = vst [vmem:[#allocation4 + $0x60] sm:$0xf] %v1920
    %1929 = vst [vmem:[#allocation4 + $0x68] sm:$0xf] %v1921
    %1930 = vst [vmem:[#allocation4 + $0x70] sm:$0xf] %v1922
    %1931 = vst [vmem:[#allocation4 + $0x78] sm:$0xf] %v1923
    %v1932 = vld [vmem:[%s264] ss:$8 sm:$0xf]
    %v1933 = vld [vmem:[#allocation2] sm:$0xf0]
    %v1934 = vld [vmem:[#allocation2 + $0x8] sm:$0xf0]
    %v1935 = vld [vmem:[#allocation2 + $0x10] sm:$0xf0]
    %v1936 = vld [vmem:[#allocation2 + $0x18] sm:$0xf0]
    %v1937 = vld [vmem:[#allocation2 + $0x20] sm:$0xf0]
    %v1939 = vperm.slane %v1932, 0
    %v1940 = vperm.slane %v1932, 1
    %v1941 = vperm.slane %v1932, 2
    %v1942 = vperm.slane %v1932, 3
    %1943 = vrot.lane.b32.xlu0 %v1939, 63
    %v1944 = vpop.permute.xlu0 %1943
    %1945 = vrot.lane.b32.xlu0 %v1940, 63
    %v1946 = vpop.permute.xlu0 %1945
    %1947 = vrot.lane.b32.xlu0 %v1941, 63
    %v1948 = vpop.permute.xlu0 %1947
    %1949 = vrot.lane.b32.xlu0 %v1942, 63
    %v1950 = vpop.permute.xlu0 %1949
    %v1951 = vsel %vm284, %v1944, %v1946
    %v1952 = vsel %vm284, %v1946, %v1948
    %v1953 = vsel %vm284, %v1948, %v1950
    %v1959 = vmul.f32 %v1933, %v1944
    %v1960 = vmul.f32 %v1934, %v1951
    %v1961 = vmul.f32 %v1935, %v1952
    %v1962 = vmul.f32 %v1936, %v1953
    %v1963 = vmul.f32 %v1937, %v1950
    %1969 = vrot.lane.b32.xlu0 %v1959, 65
    %v1970 = vpop.permute.xlu0 %1969
    %1971 = vrot.lane.b32.xlu0 %v1960, 65
    %v1972 = vpop.permute.xlu0 %1971
    %1973 = vrot.lane.b32.xlu0 %v1961, 65
    %v1974 = vpop.permute.xlu0 %1973
    %1975 = vrot.lane.b32.xlu0 %v1962, 65
    %v1976 = vpop.permute.xlu0 %1975
    %1977 = vrot.lane.b32.xlu0 %v1963, 65
    %v1978 = vpop.permute.xlu0 %1977
    %v1979 = vsel %vm318, %v1970, %v1972
    %v1980 = vsel %vm318, %v1972, %v1974
    %v1981 = vsel %vm318, %v1974, %v1976
    %v1982 = vsel %vm318, %v1976, %v1978
    %1987 = vst [vmem:[#allocation4 + $0x60] sm:$0xf0] %v1979
    %1988 = vst [vmem:[#allocation4 + $0x68] sm:$0xf0] %v1980
    %1989 = vst [vmem:[#allocation4 + $0x70] sm:$0xf0] %v1981
    %1990 = vst [vmem:[#allocation4 + $0x78] sm:$0xf0] %v1982
    %v1991 = vld [vmem:[%s331] ss:$8 sm:$0xf]
    %v1992 = vld [vmem:[#allocation2] sm:$0xf0]
    %v1993 = vld [vmem:[#allocation2 + $0x8] sm:$0xf0]
    %v1994 = vld [vmem:[#allocation2 + $0x10] sm:$0xf0]
    %v1995 = vld [vmem:[#allocation2 + $0x18] sm:$0xf0]
    %v1996 = vld [vmem:[#allocation2 + $0x20] sm:$0xf0]
    %v1998 = vperm.slane %v1991, 0
    %v1999 = vperm.slane %v1991, 1
    %v2000 = vperm.slane %v1991, 2
    %v2001 = vperm.slane %v1991, 3
    %2002 = vrot.lane.b32.xlu0 %v1998, 64
    %v2003 = vpop.permute.xlu0 %2002
    %2004 = vrot.lane.b32.xlu0 %v1999, 64
    %v2005 = vpop.permute.xlu0 %2004
    %2006 = vrot.lane.b32.xlu0 %v2000, 64
    %v2007 = vpop.permute.xlu0 %2006
    %2008 = vrot.lane.b32.xlu0 %v2001, 64
    %v2009 = vpop.permute.xlu0 %2008
    %v2010 = vsel %vm351, %v2003, %v2005
    %v2011 = vsel %vm351, %v2005, %v2007
    %v2012 = vsel %vm351, %v2007, %v2009
    %v2018 = vmul.f32 %v1992, %v2003
    %v2019 = vmul.f32 %v1993, %v2010
    %v2020 = vmul.f32 %v1994, %v2011
    %v2021 = vmul.f32 %v1995, %v2012
    %v2022 = vmul.f32 %v1996, %v2009
    %v2028 = vrot.slane %v2018, 4
    %v2029 = vrot.slane %v2019, 4
    %v2030 = vrot.slane %v2020, 4
    %v2031 = vrot.slane %v2021, 4
    %v2032 = vrot.slane %v2022, 4
    %2033 = vrot.lane.b32.xlu0 %v2028, 64
    %v2034 = vpop.permute.xlu0 %2033
    %2035 = vrot.lane.b32.xlu0 %v2029, 64
    %v2036 = vpop.permute.xlu0 %2035
    %2037 = vrot.lane.b32.xlu0 %v2030, 64
    %v2038 = vpop.permute.xlu0 %2037
    %2039 = vrot.lane.b32.xlu0 %v2031, 64
    %v2040 = vpop.permute.xlu0 %2039
    %2041 = vrot.lane.b32.xlu0 %v2032, 64
    %v2042 = vpop.permute.xlu0 %2041
    %v2043 = vsel %vm351, %v2034, %v2036
    %v2044 = vsel %vm351, %v2036, %v2038
    %v2045 = vsel %vm351, %v2038, %v2040
    %v2046 = vsel %vm351, %v2040, %v2042
    %2051 = vst [vmem:[#allocation4 + $0xa0] sm:$0xf] %v2043
    %2052 = vst [vmem:[#allocation4 + $0xa8] sm:$0xf] %v2044
    %2053 = vst [vmem:[#allocation4 + $0xb0] sm:$0xf] %v2045
    %2054 = vst [vmem:[#allocation4 + $0xb8] sm:$0xf] %v2046
    %v2055 = vld [vmem:[%s392] ss:$8 sm:$0xf]
    %v2056 = vld [vmem:[#allocation2] sm:$0xf0]
    %v2057 = vld [vmem:[#allocation2 + $0x8] sm:$0xf0]
    %v2058 = vld [vmem:[#allocation2 + $0x10] sm:$0xf0]
    %v2059 = vld [vmem:[#allocation2 + $0x18] sm:$0xf0]
    %v2060 = vld [vmem:[#allocation2 + $0x20] sm:$0xf0]
    %v2062 = vperm.slane %v2055, 0
    %v2063 = vperm.slane %v2055, 1
    %v2064 = vperm.slane %v2055, 2
    %v2065 = vperm.slane %v2055, 3
    %2066 = vrot.lane.b32.xlu0 %v2062, 65
    %v2067 = vpop.permute.xlu0 %2066
    %2068 = vrot.lane.b32.xlu0 %v2063, 65
    %v2069 = vpop.permute.xlu0 %2068
    %2070 = vrot.lane.b32.xlu0 %v2064, 65
    %v2071 = vpop.permute.xlu0 %2070
    %2072 = vrot.lane.b32.xlu0 %v2065, 65
    %v2073 = vpop.permute.xlu0 %2072
    %v2074 = vsel %vm318, %v2067, %v2069
    %v2075 = vsel %vm318, %v2069, %v2071
    %v2076 = vsel %vm318, %v2071, %v2073
    %v2082 = vmul.f32 %v2056, %v2067
    %v2083 = vmul.f32 %v2057, %v2074
    %v2084 = vmul.f32 %v2058, %v2075
    %v2085 = vmul.f32 %v2059, %v2076
    %v2086 = vmul.f32 %v2060, %v2073
    %2092 = vrot.lane.b32.xlu0 %v2082, 63
    %v2093 = vpop.permute.xlu0 %2092
    %2094 = vrot.lane.b32.xlu0 %v2083, 63
    %v2095 = vpop.permute.xlu0 %2094
    %2096 = vrot.lane.b32.xlu0 %v2084, 63
    %v2097 = vpop.permute.xlu0 %2096
    %2098 = vrot.lane.b32.xlu0 %v2085, 63
    %v2099 = vpop.permute.xlu0 %2098
    %2100 = vrot.lane.b32.xlu0 %v2086, 63
    %v2101 = vpop.permute.xlu0 %2100
    %v2102 = vsel %vm284, %v2093, %v2095
    %v2103 = vsel %vm284, %v2095, %v2097
    %v2104 = vsel %vm284, %v2097, %v2099
    %v2105 = vsel %vm284, %v2099, %v2101
    %2110 = vst [vmem:[#allocation4 + $0xa0] sm:$0xf0] %v2102
    %2111 = vst [vmem:[#allocation4 + $0xa8] sm:$0xf0] %v2103
    %2112 = vst [vmem:[#allocation4 + $0xb0] sm:$0xf0] %v2104
    %2113 = vst [vmem:[#allocation4 + $0xb8] sm:$0xf0] %v2105
    %v2114 = vld [vmem:[%s457] ss:$8 sm:$0xf]
    %v2115 = vld [vmem:[#allocation2] sm:$0xf0]
    %v2116 = vld [vmem:[#allocation2 + $0x8] sm:$0xf0]
    %v2117 = vld [vmem:[#allocation2 + $0x10] sm:$0xf0]
    %v2118 = vld [vmem:[#allocation2 + $0x18] sm:$0xf0]
    %v2119 = vld [vmem:[#allocation2 + $0x20] sm:$0xf0]
    %v2121 = vperm.slane %v2114, 0
    %v2122 = vperm.slane %v2114, 1
    %v2123 = vperm.slane %v2114, 2
    %v2124 = vperm.slane %v2114, 3
    %2125 = vrot.lane.b32.xlu0 %v2121, 71
    %v2126 = vpop.permute.xlu0 %2125
    %2127 = vrot.lane.b32.xlu0 %v2122, 71
    %v2128 = vpop.permute.xlu0 %2127
    %2129 = vrot.lane.b32.xlu0 %v2123, 71
    %v2130 = vpop.permute.xlu0 %2129
    %2131 = vrot.lane.b32.xlu0 %v2124, 71
    %v2132 = vpop.permute.xlu0 %2131
    %v2133 = vsel %vm251, %v2126, %v2128
    %v2134 = vsel %vm251, %v2128, %v2130
    %v2135 = vsel %vm251, %v2130, %v2132
    %v2141 = vmul.f32 %v2115, %v2126
    %v2142 = vmul.f32 %v2116, %v2133
    %v2143 = vmul.f32 %v2117, %v2134
    %v2144 = vmul.f32 %v2118, %v2135
    %v2145 = vmul.f32 %v2119, %v2132
    %v2151 = vrot.slane %v2141, 4
    %v2152 = vrot.slane %v2142, 4
    %v2153 = vrot.slane %v2143, 4
    %v2154 = vrot.slane %v2144, 4
    %v2155 = vrot.slane %v2145, 4
    %2156 = vrot.lane.b32.xlu0 %v2151, 57
    %v2157 = vpop.permute.xlu0 %2156
    %2158 = vrot.lane.b32.xlu0 %v2152, 57
    %v2159 = vpop.permute.xlu0 %2158
    %2160 = vrot.lane.b32.xlu0 %v2153, 57
    %v2161 = vpop.permute.xlu0 %2160
    %2162 = vrot.lane.b32.xlu0 %v2154, 57
    %v2163 = vpop.permute.xlu0 %2162
    %2164 = vrot.lane.b32.xlu0 %v2155, 57
    %v2165 = vpop.permute.xlu0 %2164
    %v2166 = vsel %vm222, %v2157, %v2159
    %v2167 = vsel %vm222, %v2159, %v2161
    %v2168 = vsel %vm222, %v2161, %v2163
    %v2169 = vsel %vm222, %v2163, %v2165
    %2174 = vst [vmem:[#allocation4 + $0xe0] sm:$0xf] %v2166
    %2175 = vst [vmem:[#allocation4 + $0xe8] sm:$0xf] %v2167
    %2176 = vst [vmem:[#allocation4 + $0xf0] sm:$0xf] %v2168
    %2177 = vst [vmem:[#allocation4 + $0xf8] sm:$0xf] %v2169
    %v2178 = vld [vmem:[%s517] ss:$8 sm:$0xf]
    %v2179 = vld [vmem:[#allocation2] sm:$0xf0]
    %v2180 = vld [vmem:[#allocation2 + $0x8] sm:$0xf0]
    %v2181 = vld [vmem:[#allocation2 + $0x10] sm:$0xf0]
    %v2182 = vld [vmem:[#allocation2 + $0x18] sm:$0xf0]
    %v2183 = vld [vmem:[#allocation2 + $0x20] sm:$0xf0]
    %v2185 = vperm.slane %v2178, 0
    %v2186 = vperm.slane %v2178, 1
    %v2187 = vperm.slane %v2178, 2
    %v2188 = vperm.slane %v2178, 3
    %2189 = vrot.lane.b32.xlu0 %v2185, 72
    %v2190 = vpop.permute.xlu0 %2189
    %2191 = vrot.lane.b32.xlu0 %v2186, 72
    %v2192 = vpop.permute.xlu0 %2191
    %2193 = vrot.lane.b32.xlu0 %v2187, 72
    %v2194 = vpop.permute.xlu0 %2193
    %2195 = vrot.lane.b32.xlu0 %v2188, 72
    %v2196 = vpop.permute.xlu0 %2195
    %v2197 = vsel %vm189, %v2190, %v2192
    %v2198 = vsel %vm189, %v2192, %v2194
    %v2199 = vsel %vm189, %v2194, %v2196
    %v2205 = vmul.f32 %v2179, %v2190
    %v2206 = vmul.f32 %v2180, %v2197
    %v2207 = vmul.f32 %v2181, %v2198
    %v2208 = vmul.f32 %v2182, %v2199
    %v2209 = vmul.f32 %v2183, %v2196
    %2215 = vrot.lane.b32.xlu0 %v2205, 56
    %v2216 = vpop.permute.xlu0 %2215
    %2217 = vrot.lane.b32.xlu0 %v2206, 56
    %v2218 = vpop.permute.xlu0 %2217
    %2219 = vrot.lane.b32.xlu0 %v2207, 56
    %v2220 = vpop.permute.xlu0 %2219
    %2221 = vrot.lane.b32.xlu0 %v2208, 56
    %v2222 = vpop.permute.xlu0 %2221
    %2223 = vrot.lane.b32.xlu0 %v2209, 56
    %v2224 = vpop.permute.xlu0 %2223
    %v2225 = vsel %vm155, %v2216, %v2218
    %v2226 = vsel %vm155, %v2218, %v2220
    %v2227 = vsel %vm155, %v2220, %v2222
    %v2228 = vsel %vm155, %v2222, %v2224
    %2233 = vst [vmem:[#allocation4 + $0xe0] sm:$0xf0] %v2225
    %2234 = vst [vmem:[#allocation4 + $0xe8] sm:$0xf0] %v2226
    %2235 = vst [vmem:[#allocation4 + $0xf0] sm:$0xf0] %v2227
    %2236 = vst [vmem:[#allocation4 + $0xf8] sm:$0xf0] %v2228
    %v2237 = vld [vmem:[%s582] ss:$8 sm:$0xf]
    %v2238 = vld [vmem:[#allocation2] sm:$0xf0]
    %v2239 = vld [vmem:[#allocation2 + $0x8] sm:$0xf0]
    %v2240 = vld [vmem:[#allocation2 + $0x10] sm:$0xf0]
    %v2241 = vld [vmem:[#allocation2 + $0x18] sm:$0xf0]
    %v2242 = vld [vmem:[#allocation2 + $0x20] sm:$0xf0]
    %v2244 = vperm.slane %v2237, 0
    %v2245 = vperm.slane %v2237, 1
    %v2246 = vperm.slane %v2237, 2
    %v2247 = vperm.slane %v2237, 3
    %2248 = vrot.lane.b32.xlu0 %v2244, 73
    %v2249 = vpop.permute.xlu0 %2248
    %2250 = vrot.lane.b32.xlu0 %v2245, 73
    %v2251 = vpop.permute.xlu0 %2250
    %2252 = vrot.lane.b32.xlu0 %v2246, 73
    %v2253 = vpop.permute.xlu0 %2252
    %2254 = vrot.lane.b32.xlu0 %v2247, 73
    %v2255 = vpop.permute.xlu0 %2254
    %v2256 = vsel %vm122, %v2249, %v2251
    %v2257 = vsel %vm122, %v2251, %v2253
    %v2258 = vsel %vm122, %v2253, %v2255
    %v2264 = vmul.f32 %v2238, %v2249
    %v2265 = vmul.f32 %v2239, %v2256
    %v2266 = vmul.f32 %v2240, %v2257
    %v2267 = vmul.f32 %v2241, %v2258
    %v2268 = vmul.f32 %v2242, %v2255
    %v2274 = vrot.slane %v2264, 4
    %v2275 = vrot.slane %v2265, 4
    %v2276 = vrot.slane %v2266, 4
    %v2277 = vrot.slane %v2267, 4
    %v2278 = vrot.slane %v2268, 4
    %2279 = vrot.lane.b32.xlu0 %v2274, 55
    %v2280 = vpop.permute.xlu0 %2279
    %2281 = vrot.lane.b32.xlu0 %v2275, 55
    %v2282 = vpop.permute.xlu0 %2281
    %2283 = vrot.lane.b32.xlu0 %v2276, 55
    %v2284 = vpop.permute.xlu0 %2283
    %2285 = vrot.lane.b32.xlu0 %v2277, 55
    %v2286 = vpop.permute.xlu0 %2285
    %2287 = vrot.lane.b32.xlu0 %v2278, 55
    %v2288 = vpop.permute.xlu0 %2287
    %v2289 = vsel %vm93, %v2280, %v2282
    %v2290 = vsel %vm93, %v2282, %v2284
    %v2291 = vsel %vm93, %v2284, %v2286
    %v2292 = vsel %vm93, %v2286, %v2288
    %2297 = vst [vmem:[#allocation4 + $0x120] sm:$0xf] %v2289
    %2298 = vst [vmem:[#allocation4 + $0x128] sm:$0xf] %v2290
    %2299 = vst [vmem:[#allocation4 + $0x130] sm:$0xf] %v2291
    %2300 = vst [vmem:[#allocation4 + $0x138] sm:$0xf] %v2292
    %v2301 = vld [vmem:[%s642] ss:$8 sm:$0xf]
    %v2302 = vld [vmem:[#allocation2] sm:$0xf0]
    %v2303 = vld [vmem:[#allocation2 + $0x8] sm:$0xf0]
    %v2304 = vld [vmem:[#allocation2 + $0x10] sm:$0xf0]
    %v2305 = vld [vmem:[#allocation2 + $0x18] sm:$0xf0]
    %v2306 = vld [vmem:[#allocation2 + $0x20] sm:$0xf0]
    %v2308 = vperm.slane %v2301, 0
    %v2309 = vperm.slane %v2301, 1
    %v2310 = vperm.slane %v2301, 2
    %v2311 = vperm.slane %v2301, 3
    %2312 = vrot.lane.b32.xlu0 %v2308, 119
    %v2313 = vpop.permute.xlu0 %2312
    %2314 = vrot.lane.b32.xlu0 %v2309, 119
    %v2315 = vpop.permute.xlu0 %2314
    %2316 = vrot.lane.b32.xlu0 %v2310, 119
    %v2317 = vpop.permute.xlu0 %2316
    %2318 = vrot.lane.b32.xlu0 %v2311, 119
    %v2319 = vpop.permute.xlu0 %2318
    %v2320 = vsel %vm662, %v2313, %v2315
    %v2321 = vsel %vm662, %v2315, %v2317
    %v2322 = vsel %vm662, %v2317, %v2319
    %v2328 = vmul.f32 %v2302, %v2313
    %v2329 = vmul.f32 %v2303, %v2320
    %v2330 = vmul.f32 %v2304, %v2321
    %v2331 = vmul.f32 %v2305, %v2322
    %v2332 = vmul.f32 %v2306, %v2319
    %2338 = vrot.lane.b32.xlu0 %v2328, 9
    %v2339 = vpop.permute.xlu0 %2338
    %2340 = vrot.lane.b32.xlu0 %v2329, 9
    %v2341 = vpop.permute.xlu0 %2340
    %2342 = vrot.lane.b32.xlu0 %v2330, 9
    %v2343 = vpop.permute.xlu0 %2342
    %2344 = vrot.lane.b32.xlu0 %v2331, 9
    %v2345 = vpop.permute.xlu0 %2344
    %2346 = vrot.lane.b32.xlu0 %v2332, 9
    %v2347 = vpop.permute.xlu0 %2346
    %v2348 = vsel %vm696, %v2339, %v2341
    %v2349 = vsel %vm696, %v2341, %v2343
    %v2350 = vsel %vm696, %v2343, %v2345
    %v2351 = vsel %vm696, %v2345, %v2347
    %2356 = vst [vmem:[#allocation4 + $0x120] sm:$0xf0] %v2348
    %2357 = vst [vmem:[#allocation4 + $0x128] sm:$0xf0] %v2349
    %2358 = vst [vmem:[#allocation4 + $0x130] sm:$0xf0] %v2350
    %2359 = vst [vmem:[#allocation4 + $0x138] sm:$0xf0] %v2351
    %v2360 = vld [vmem:[%s709] ss:$8 sm:$0xf]
    %v2361 = vld [vmem:[#allocation2] sm:$0xf0]
    %v2362 = vld [vmem:[#allocation2 + $0x8] sm:$0xf0]
    %v2363 = vld [vmem:[#allocation2 + $0x10] sm:$0xf0]
    %v2364 = vld [vmem:[#allocation2 + $0x18] sm:$0xf0]
    %v2365 = vld [vmem:[#allocation2 + $0x20] sm:$0xf0]
    %v2367 = vperm.slane %v2360, 0
    %v2368 = vperm.slane %v2360, 1
    %v2369 = vperm.slane %v2360, 2
    %v2370 = vperm.slane %v2360, 3
    %2371 = vrot.lane.b32.xlu0 %v2367, 120
    %v2372 = vpop.permute.xlu0 %2371
    %2373 = vrot.lane.b32.xlu0 %v2368, 120
    %v2374 = vpop.permute.xlu0 %2373
    %2375 = vrot.lane.b32.xlu0 %v2369, 120
    %v2376 = vpop.permute.xlu0 %2375
    %2377 = vrot.lane.b32.xlu0 %v2370, 120
    %v2378 = vpop.permute.xlu0 %2377
    %v2379 = vsel %vm729, %v2372, %v2374
    %v2380 = vsel %vm729, %v2374, %v2376
    %v2381 = vsel %vm729, %v2376, %v2378
    %v2387 = vmul.f32 %v2361, %v2372
    %v2388 = vmul.f32 %v2362, %v2379
    %v2389 = vmul.f32 %v2363, %v2380
    %v2390 = vmul.f32 %v2364, %v2381
    %v2391 = vmul.f32 %v2365, %v2378
    %v2397 = vrot.slane %v2387, 4
    %v2398 = vrot.slane %v2388, 4
    %v2399 = vrot.slane %v2389, 4
    %v2400 = vrot.slane %v2390, 4
    %v2401 = vrot.slane %v2391, 4
    %2402 = vrot.lane.b32.xlu0 %v2397, 8
    %v2403 = vpop.permute.xlu0 %2402
    %2404 = vrot.lane.b32.xlu0 %v2398, 8
    %v2405 = vpop.permute.xlu0 %2404
    %2406 = vrot.lane.b32.xlu0 %v2399, 8
    %v2407 = vpop.permute.xlu0 %2406
    %2408 = vrot.lane.b32.xlu0 %v2400, 8
    %v2409 = vpop.permute.xlu0 %2408
    %2410 = vrot.lane.b32.xlu0 %v2401, 8
    %v2411 = vpop.permute.xlu0 %2410
    %v2412 = vsel %vm758, %v2403, %v2405
    %v2413 = vsel %vm758, %v2405, %v2407
    %v2414 = vsel %vm758, %v2407, %v2409
    %v2415 = vsel %vm758, %v2409, %v2411
    %2420 = vst [vmem:[#allocation4 + $0x160] sm:$0xf] %v2412
    %2421 = vst [vmem:[#allocation4 + $0x168] sm:$0xf] %v2413
    %2422 = vst [vmem:[#allocation4 + $0x170] sm:$0xf] %v2414
    %2423 = vst [vmem:[#allocation4 + $0x178] sm:$0xf] %v2415
    %v2424 = vld [vmem:[%s771] ss:$8 sm:$0xf]
    %v2425 = vld [vmem:[#allocation2] sm:$0xf0]
    %v2426 = vld [vmem:[#allocation2 + $0x8] sm:$0xf0]
    %v2427 = vld [vmem:[#allocation2 + $0x10] sm:$0xf0]
    %v2428 = vld [vmem:[#allocation2 + $0x18] sm:$0xf0]
    %v2429 = vld [vmem:[#allocation2 + $0x20] sm:$0xf0]
    %v2431 = vperm.slane %v2424, 0
    %v2432 = vperm.slane %v2424, 1
    %v2433 = vperm.slane %v2424, 2
    %v2434 = vperm.slane %v2424, 3
    %2435 = vrot.lane.b32.xlu0 %v2431, 121
    %v2436 = vpop.permute.xlu0 %2435
    %2437 = vrot.lane.b32.xlu0 %v2432, 121
    %v2438 = vpop.permute.xlu0 %2437
    %2439 = vrot.lane.b32.xlu0 %v2433, 121
    %v2440 = vpop.permute.xlu0 %2439
    %2441 = vrot.lane.b32.xlu0 %v2434, 121
    %v2442 = vpop.permute.xlu0 %2441
    %v2443 = vsel %vm791, %v2436, %v2438
    %v2444 = vsel %vm791, %v2438, %v2440
    %v2445 = vsel %vm791, %v2440, %v2442
    %v2451 = vmul.f32 %v2425, %v2436
    %v2452 = vmul.f32 %v2426, %v2443
    %v2453 = vmul.f32 %v2427, %v2444
    %v2454 = vmul.f32 %v2428, %v2445
    %v2455 = vmul.f32 %v2429, %v2442
    %2461 = vrot.lane.b32.xlu0 %v2451, 7
    %v2462 = vpop.permute.xlu0 %2461
    %2463 = vrot.lane.b32.xlu0 %v2452, 7
    %v2464 = vpop.permute.xlu0 %2463
    %2465 = vrot.lane.b32.xlu0 %v2453, 7
    %v2466 = vpop.permute.xlu0 %2465
    %2467 = vrot.lane.b32.xlu0 %v2454, 7
    %v2468 = vpop.permute.xlu0 %2467
    %2469 = vrot.lane.b32.xlu0 %v2455, 7
    %v2470 = vpop.permute.xlu0 %2469
    %v2471 = vsel %vm825, %v2462, %v2464
    %v2472 = vsel %vm825, %v2464, %v2466
    %v2473 = vsel %vm825, %v2466, %v2468
    %v2474 = vsel %vm825, %v2468, %v2470
    %2479 = vst [vmem:[#allocation4 + $0x160] sm:$0xf0] %v2471
    %2480 = vst [vmem:[#allocation4 + $0x168] sm:$0xf0] %v2472
    %2481 = vst [vmem:[#allocation4 + $0x170] sm:$0xf0] %v2473
    %2482 = vst [vmem:[#allocation4 + $0x178] sm:$0xf0] %v2474
    %v2483 = vld [vmem:[%s838] ss:$8 sm:$0xf]
    %v2484 = vld [vmem:[#allocation2] sm:$0xf0]
    %v2485 = vld [vmem:[#allocation2 + $0x8] sm:$0xf0]
    %v2486 = vld [vmem:[#allocation2 + $0x10] sm:$0xf0]
    %v2487 = vld [vmem:[#allocation2 + $0x18] sm:$0xf0]
    %v2488 = vld [vmem:[#allocation2 + $0x20] sm:$0xf0]
    %v2490 = vperm.slane %v2483, 0
    %v2491 = vperm.slane %v2483, 1
    %v2492 = vperm.slane %v2483, 2
    %v2493 = vperm.slane %v2483, 3
    %2494 = vrot.lane.b32.xlu0 %v2490, 127
    %v2495 = vpop.permute.xlu0 %2494
    %2496 = vrot.lane.b32.xlu0 %v2491, 127
    %v2497 = vpop.permute.xlu0 %2496
    %2498 = vrot.lane.b32.xlu0 %v2492, 127
    %v2499 = vpop.permute.xlu0 %2498
    %2500 = vrot.lane.b32.xlu0 %v2493, 127
    %v2501 = vpop.permute.xlu0 %2500
    %v2502 = vsel %vm858, %v2495, %v2497
    %v2503 = vsel %vm858, %v2497, %v2499
    %v2504 = vsel %vm858, %v2499, %v2501
    %v2510 = vmul.f32 %v2484, %v2495
    %v2511 = vmul.f32 %v2485, %v2502
    %v2512 = vmul.f32 %v2486, %v2503
    %v2513 = vmul.f32 %v2487, %v2504
    %v2514 = vmul.f32 %v2488, %v2501
    %v2520 = vrot.slane %v2510, 4
    %v2521 = vrot.slane %v2511, 4
    %v2522 = vrot.slane %v2512, 4
    %v2523 = vrot.slane %v2513, 4
    %v2524 = vrot.slane %v2514, 4
    %2525 = vrot.lane.b32.xlu0 %v2520, 1
    %v2526 = vpop.permute.xlu0 %2525
    %2527 = vrot.lane.b32.xlu0 %v2521, 1
    %v2528 = vpop.permute.xlu0 %2527
    %2529 = vrot.lane.b32.xlu0 %v2522, 1
    %v2530 = vpop.permute.xlu0 %2529
    %2531 = vrot.lane.b32.xlu0 %v2523, 1
    %v2532 = vpop.permute.xlu0 %2531
    %2533 = vrot.lane.b32.xlu0 %v2524, 1
    %v2534 = vpop.permute.xlu0 %2533
    %v2535 = vsel %vm887, %v2526, %v2528
    %v2536 = vsel %vm887, %v2528, %v2530
    %v2537 = vsel %vm887, %v2530, %v2532
    %v2538 = vsel %vm887, %v2532, %v2534
    %2543 = vst [vmem:[#allocation4 + $0x1a0] sm:$0xf] %v2535
    %2544 = vst [vmem:[#allocation4 + $0x1a8] sm:$0xf] %v2536
    %2545 = vst [vmem:[#allocation4 + $0x1b0] sm:$0xf] %v2537
    %2546 = vst [vmem:[#allocation4 + $0x1b8] sm:$0xf] %v2538
    %v2547 = vld [vmem:[%s900] ss:$8 sm:$0xf]
    %v2548 = vld [vmem:[#allocation2 + $0x8] sm:$0xf0]
    %v2549 = vld [vmem:[#allocation2 + $0x10] sm:$0xf0]
    %v2550 = vld [vmem:[#allocation2 + $0x18] sm:$0xf0]
    %v2551 = vld [vmem:[#allocation2 + $0x20] sm:$0xf0]
    %v2553 = vperm.slane %v2547, 0
    %v2554 = vperm.slane %v2547, 1
    %v2555 = vperm.slane %v2547, 2
    %v2556 = vperm.slane %v2547, 3
    %v2561 = vmul.f32 %v2548, %v2553
    %v2562 = vmul.f32 %v2549, %v2554
    %v2563 = vmul.f32 %v2550, %v2555
    %v2564 = vmul.f32 %v2551, %v2556
    %2565 = vst [vmem:[#allocation4 + $0x1a0] sm:$0xf0] %v2561
    %2566 = vst [vmem:[#allocation4 + $0x1a8] sm:$0xf0] %v2562
    %2567 = vst [vmem:[#allocation4 + $0x1b0] sm:$0xf0] %v2563
    %2568 = vst [vmem:[#allocation4 + $0x1b8] sm:$0xf0] %v2564
    %v2569 = vld [vmem:[%s935] ss:$8 sm:$0xf]
    %v2570 = vld [vmem:[#allocation2 + $0x8] sm:$0xf0]
    %v2571 = vld [vmem:[#allocation2 + $0x10] sm:$0xf0]
    %v2572 = vld [vmem:[#allocation2 + $0x18] sm:$0xf0]
    %v2573 = vld [vmem:[#allocation2 + $0x20] sm:$0xf0]
    %v2574 = vld [vmem:[#allocation2 + $0x28] sm:$0xf0]
    %v2576 = vperm.slane %v2569, 0
    %v2577 = vperm.slane %v2569, 1
    %v2578 = vperm.slane %v2569, 2
    %v2579 = vperm.slane %v2569, 3
    %2580 = vrot.lane.b32.xlu0 %v2576, 1
    %v2581 = vpop.permute.xlu0 %2580
    %2582 = vrot.lane.b32.xlu0 %v2577, 1
    %v2583 = vpop.permute.xlu0 %2582
    %2584 = vrot.lane.b32.xlu0 %v2578, 1
    %v2585 = vpop.permute.xlu0 %2584
    %2586 = vrot.lane.b32.xlu0 %v2579, 1
    %v2587 = vpop.permute.xlu0 %2586
    %v2588 = vsel %vm887, %v2581, %v2583
    %v2589 = vsel %vm887, %v2583, %v2585
    %v2590 = vsel %vm887, %v2585, %v2587
    %v2596 = vmul.f32 %v2570, %v2581
    %v2597 = vmul.f32 %v2571, %v2588
    %v2598 = vmul.f32 %v2572, %v2589
    %v2599 = vmul.f32 %v2573, %v2590
    %v2600 = vmul.f32 %v2574, %v2587
    %v2606 = vrot.slane %v2596, 4
    %v2607 = vrot.slane %v2597, 4
    %v2608 = vrot.slane %v2598, 4
    %v2609 = vrot.slane %v2599, 4
    %v2610 = vrot.slane %v2600, 4
    %2611 = vrot.lane.b32.xlu0 %v2606, 127
    %v2612 = vpop.permute.xlu0 %2611
    %2613 = vrot.lane.b32.xlu0 %v2607, 127
    %v2614 = vpop.permute.xlu0 %2613
    %2615 = vrot.lane.b32.xlu0 %v2608, 127
    %v2616 = vpop.permute.xlu0 %2615
    %2617 = vrot.lane.b32.xlu0 %v2609, 127
    %v2618 = vpop.permute.xlu0 %2617
    %2619 = vrot.lane.b32.xlu0 %v2610, 127
    %v2620 = vpop.permute.xlu0 %2619
    %v2621 = vsel %vm858, %v2612, %v2614
    %v2622 = vsel %vm858, %v2614, %v2616
    %v2623 = vsel %vm858, %v2616, %v2618
    %v2624 = vsel %vm858, %v2618, %v2620
    %2629 = vst [vmem:[#allocation4 + $0x1e0] sm:$0xf] %v2621
    %2630 = vst [vmem:[#allocation4 + $0x1e8] sm:$0xf] %v2622
    %2631 = vst [vmem:[#allocation4 + $0x1f0] sm:$0xf] %v2623
    %2632 = vst [vmem:[#allocation4 + $0x1f8] sm:$0xf] %v2624
    %v2633 = vld [vmem:[%s995] ss:$8 sm:$0xf]
    %v2634 = vld [vmem:[#allocation2 + $0x8] sm:$0xf0]
    %v2635 = vld [vmem:[#allocation2 + $0x10] sm:$0xf0]
    %v2636 = vld [vmem:[#allocation2 + $0x18] sm:$0xf0]
    %v2637 = vld [vmem:[#allocation2 + $0x20] sm:$0xf0]
    %v2638 = vld [vmem:[#allocation2 + $0x28] sm:$0xf0]
    %v2640 = vperm.slane %v2633, 0
    %v2641 = vperm.slane %v2633, 1
    %v2642 = vperm.slane %v2633, 2
    %v2643 = vperm.slane %v2633, 3
    %2644 = vrot.lane.b32.xlu0 %v2640, 7
    %v2645 = vpop.permute.xlu0 %2644
    %2646 = vrot.lane.b32.xlu0 %v2641, 7
    %v2647 = vpop.permute.xlu0 %2646
    %2648 = vrot.lane.b32.xlu0 %v2642, 7
    %v2649 = vpop.permute.xlu0 %2648
    %2650 = vrot.lane.b32.xlu0 %v2643, 7
    %v2651 = vpop.permute.xlu0 %2650
    %v2652 = vsel %vm825, %v2645, %v2647
    %v2653 = vsel %vm825, %v2647, %v2649
    %v2654 = vsel %vm825, %v2649, %v2651
    %v2660 = vmul.f32 %v2634, %v2645
    %v2661 = vmul.f32 %v2635, %v2652
    %v2662 = vmul.f32 %v2636, %v2653
    %v2663 = vmul.f32 %v2637, %v2654
    %v2664 = vmul.f32 %v2638, %v2651
    %2670 = vrot.lane.b32.xlu0 %v2660, 121
    %v2671 = vpop.permute.xlu0 %2670
    %2672 = vrot.lane.b32.xlu0 %v2661, 121
    %v2673 = vpop.permute.xlu0 %2672
    %2674 = vrot.lane.b32.xlu0 %v2662, 121
    %v2675 = vpop.permute.xlu0 %2674
    %2676 = vrot.lane.b32.xlu0 %v2663, 121
    %v2677 = vpop.permute.xlu0 %2676
    %2678 = vrot.lane.b32.xlu0 %v2664, 121
    %v2679 = vpop.permute.xlu0 %2678
    %v2680 = vsel %vm791, %v2671, %v2673
    %v2681 = vsel %vm791, %v2673, %v2675
    %v2682 = vsel %vm791, %v2675, %v2677
    %v2683 = vsel %vm791, %v2677, %v2679
    %2688 = vst [vmem:[#allocation4 + $0x1e0] sm:$0xf0] %v2680
    %2689 = vst [vmem:[#allocation4 + $0x1e8] sm:$0xf0] %v2681
    %2690 = vst [vmem:[#allocation4 + $0x1f0] sm:$0xf0] %v2682
    %2691 = vst [vmem:[#allocation4 + $0x1f8] sm:$0xf0] %v2683
    %v2692 = vld [vmem:[%s1060] ss:$8 sm:$0xf]
    %v2693 = vld [vmem:[#allocation2 + $0x8] sm:$0xf0]
    %v2694 = vld [vmem:[#allocation2 + $0x10] sm:$0xf0]
    %v2695 = vld [vmem:[#allocation2 + $0x18] sm:$0xf0]
    %v2696 = vld [vmem:[#allocation2 + $0x20] sm:$0xf0]
    %v2697 = vld [vmem:[#allocation2 + $0x28] sm:$0xf0]
    %v2699 = vperm.slane %v2692, 0
    %v2700 = vperm.slane %v2692, 1
    %v2701 = vperm.slane %v2692, 2
    %v2702 = vperm.slane %v2692, 3
    %2703 = vrot.lane.b32.xlu0 %v2699, 8
    %v2704 = vpop.permute.xlu0 %2703
    %2705 = vrot.lane.b32.xlu0 %v2700, 8
    %v2706 = vpop.permute.xlu0 %2705
    %2707 = vrot.lane.b32.xlu0 %v2701, 8
    %v2708 = vpop.permute.xlu0 %2707
    %2709 = vrot.lane.b32.xlu0 %v2702, 8
    %v2710 = vpop.permute.xlu0 %2709
    %v2711 = vsel %vm758, %v2704, %v2706
    %v2712 = vsel %vm758, %v2706, %v2708
    %v2713 = vsel %vm758, %v2708, %v2710
    %v2719 = vmul.f32 %v2693, %v2704
    %v2720 = vmul.f32 %v2694, %v2711
    %v2721 = vmul.f32 %v2695, %v2712
    %v2722 = vmul.f32 %v2696, %v2713
    %v2723 = vmul.f32 %v2697, %v2710
    %v2729 = vrot.slane %v2719, 4
    %v2730 = vrot.slane %v2720, 4
    %v2731 = vrot.slane %v2721, 4
    %v2732 = vrot.slane %v2722, 4
    %v2733 = vrot.slane %v2723, 4
    %2734 = vrot.lane.b32.xlu0 %v2729, 120
    %v2735 = vpop.permute.xlu0 %2734
    %2736 = vrot.lane.b32.xlu0 %v2730, 120
    %v2737 = vpop.permute.xlu0 %2736
    %2738 = vrot.lane.b32.xlu0 %v2731, 120
    %v2739 = vpop.permute.xlu0 %2738
    %2740 = vrot.lane.b32.xlu0 %v2732, 120
    %v2741 = vpop.permute.xlu0 %2740
    %2742 = vrot.lane.b32.xlu0 %v2733, 120
    %v2743 = vpop.permute.xlu0 %2742
    %v2744 = vsel %vm729, %v2735, %v2737
    %v2745 = vsel %vm729, %v2737, %v2739
    %v2746 = vsel %vm729, %v2739, %v2741
    %v2747 = vsel %vm729, %v2741, %v2743
    %2752 = vst [vmem:[#allocation4 + $0x220] sm:$0xf] %v2744
    %2753 = vst [vmem:[#allocation4 + $0x228] sm:$0xf] %v2745
    %2754 = vst [vmem:[#allocation4 + $0x230] sm:$0xf] %v2746
    %2755 = vst [vmem:[#allocation4 + $0x238] sm:$0xf] %v2747
    %v2756 = vld [vmem:[%s1120] ss:$8 sm:$0xf]
    %v2757 = vld [vmem:[#allocation2 + $0x8] sm:$0xf0]
    %v2758 = vld [vmem:[#allocation2 + $0x10] sm:$0xf0]
    %v2759 = vld [vmem:[#allocation2 + $0x18] sm:$0xf0]
    %v2760 = vld [vmem:[#allocation2 + $0x20] sm:$0xf0]
    %v2761 = vld [vmem:[#allocation2 + $0x28] sm:$0xf0]
    %v2763 = vperm.slane %v2756, 0
    %v2764 = vperm.slane %v2756, 1
    %v2765 = vperm.slane %v2756, 2
    %v2766 = vperm.slane %v2756, 3
    %2767 = vrot.lane.b32.xlu0 %v2763, 9
    %v2768 = vpop.permute.xlu0 %2767
    %2769 = vrot.lane.b32.xlu0 %v2764, 9
    %v2770 = vpop.permute.xlu0 %2769
    %2771 = vrot.lane.b32.xlu0 %v2765, 9
    %v2772 = vpop.permute.xlu0 %2771
    %2773 = vrot.lane.b32.xlu0 %v2766, 9
    %v2774 = vpop.permute.xlu0 %2773
    %v2775 = vsel %vm696, %v2768, %v2770
    %v2776 = vsel %vm696, %v2770, %v2772
    %v2777 = vsel %vm696, %v2772, %v2774
    %v2783 = vmul.f32 %v2757, %v2768
    %v2784 = vmul.f32 %v2758, %v2775
    %v2785 = vmul.f32 %v2759, %v2776
    %v2786 = vmul.f32 %v2760, %v2777
    %v2787 = vmul.f32 %v2761, %v2774
    %2793 = vrot.lane.b32.xlu0 %v2783, 119
    %v2794 = vpop.permute.xlu0 %2793
    %2795 = vrot.lane.b32.xlu0 %v2784, 119
    %v2796 = vpop.permute.xlu0 %2795
    %2797 = vrot.lane.b32.xlu0 %v2785, 119
    %v2798 = vpop.permute.xlu0 %2797
    %2799 = vrot.lane.b32.xlu0 %v2786, 119
    %v2800 = vpop.permute.xlu0 %2799
    %2801 = vrot.lane.b32.xlu0 %v2787, 119
    %v2802 = vpop.permute.xlu0 %2801
    %v2803 = vsel %vm662, %v2794, %v2796
    %v2804 = vsel %vm662, %v2796, %v2798
    %v2805 = vsel %vm662, %v2798, %v2800
    %v2806 = vsel %vm662, %v2800, %v2802
    %2811 = vst [vmem:[#allocation4 + $0x220] sm:$0xf0] %v2803
    %2812 = vst [vmem:[#allocation4 + $0x228] sm:$0xf0] %v2804
    %2813 = vst [vmem:[#allocation4 + $0x230] sm:$0xf0] %v2805
    %2814 = vst [vmem:[#allocation4 + $0x238] sm:$0xf0] %v2806
    %v2815 = vld [vmem:[%s1185] ss:$8 sm:$0xf]
    %v2816 = vld [vmem:[#allocation2 + $0x8] sm:$0xf0]
    %v2817 = vld [vmem:[#allocation2 + $0x10] sm:$0xf0]
    %v2818 = vld [vmem:[#allocation2 + $0x18] sm:$0xf0]
    %v2819 = vld [vmem:[#allocation2 + $0x20] sm:$0xf0]
    %v2820 = vld [vmem:[#allocation2 + $0x28] sm:$0xf0]
    %v2822 = vperm.slane %v2815, 0
    %v2823 = vperm.slane %v2815, 1
    %v2824 = vperm.slane %v2815, 2
    %v2825 = vperm.slane %v2815, 3
    %2826 = vrot.lane.b32.xlu0 %v2822, 55
    %v2827 = vpop.permute.xlu0 %2826
    %2828 = vrot.lane.b32.xlu0 %v2823, 55
    %v2829 = vpop.permute.xlu0 %2828
    %2830 = vrot.lane.b32.xlu0 %v2824, 55
    %v2831 = vpop.permute.xlu0 %2830
    %2832 = vrot.lane.b32.xlu0 %v2825, 55
    %v2833 = vpop.permute.xlu0 %2832
    %v2834 = vsel %vm93, %v2827, %v2829
    %v2835 = vsel %vm93, %v2829, %v2831
    %v2836 = vsel %vm93, %v2831, %v2833
    %v2842 = vmul.f32 %v2816, %v2827
    %v2843 = vmul.f32 %v2817, %v2834
    %v2844 = vmul.f32 %v2818, %v2835
    %v2845 = vmul.f32 %v2819, %v2836
    %v2846 = vmul.f32 %v2820, %v2833
    %v2852 = vrot.slane %v2842, 4
    %v2853 = vrot.slane %v2843, 4
    %v2854 = vrot.slane %v2844, 4
    %v2855 = vrot.slane %v2845, 4
    %v2856 = vrot.slane %v2846, 4
    %2857 = vrot.lane.b32.xlu0 %v2852, 73
    %v2858 = vpop.permute.xlu0 %2857
    %2859 = vrot.lane.b32.xlu0 %v2853, 73
    %v2860 = vpop.permute.xlu0 %2859
    %2861 = vrot.lane.b32.xlu0 %v2854, 73
    %v2862 = vpop.permute.xlu0 %2861
    %2863 = vrot.lane.b32.xlu0 %v2855, 73
    %v2864 = vpop.permute.xlu0 %2863
    %2865 = vrot.lane.b32.xlu0 %v2856, 73
    %v2866 = vpop.permute.xlu0 %2865
    %v2867 = vsel %vm122, %v2858, %v2860
    %v2868 = vsel %vm122, %v2860, %v2862
    %v2869 = vsel %vm122, %v2862, %v2864
    %v2870 = vsel %vm122, %v2864, %v2866
    %2875 = vst [vmem:[#allocation4 + $0x260] sm:$0xf] %v2867
    %2876 = vst [vmem:[#allocation4 + $0x268] sm:$0xf] %v2868
    %2877 = vst [vmem:[#allocation4 + $0x270] sm:$0xf] %v2869
    %2878 = vst [vmem:[#allocation4 + $0x278] sm:$0xf] %v2870
    %v2879 = vld [vmem:[%s1245] ss:$8 sm:$0xf]
    %v2880 = vld [vmem:[#allocation2 + $0x8] sm:$0xf0]
    %v2881 = vld [vmem:[#allocation2 + $0x10] sm:$0xf0]
    %v2882 = vld [vmem:[#allocation2 + $0x18] sm:$0xf0]
    %v2883 = vld [vmem:[#allocation2 + $0x20] sm:$0xf0]
    %v2884 = vld [vmem:[#allocation2 + $0x28] sm:$0xf0]
    %v2886 = vperm.slane %v2879, 0
    %v2887 = vperm.slane %v2879, 1
    %v2888 = vperm.slane %v2879, 2
    %v2889 = vperm.slane %v2879, 3
    %2890 = vrot.lane.b32.xlu0 %v2886, 56
    %v2891 = vpop.permute.xlu0 %2890
    %2892 = vrot.lane.b32.xlu0 %v2887, 56
    %v2893 = vpop.permute.xlu0 %2892
    %2894 = vrot.lane.b32.xlu0 %v2888, 56
    %v2895 = vpop.permute.xlu0 %2894
    %2896 = vrot.lane.b32.xlu0 %v2889, 56
    %v2897 = vpop.permute.xlu0 %2896
    %v2898 = vsel %vm155, %v2891, %v2893
    %v2899 = vsel %vm155, %v2893, %v2895
    %v2900 = vsel %vm155, %v2895, %v2897
    %v2906 = vmul.f32 %v2880, %v2891
    %v2907 = vmul.f32 %v2881, %v2898
    %v2908 = vmul.f32 %v2882, %v2899
    %v2909 = vmul.f32 %v2883, %v2900
    %v2910 = vmul.f32 %v2884, %v2897
    %2916 = vrot.lane.b32.xlu0 %v2906, 72
    %v2917 = vpop.permute.xlu0 %2916
    %2918 = vrot.lane.b32.xlu0 %v2907, 72
    %v2919 = vpop.permute.xlu0 %2918
    %2920 = vrot.lane.b32.xlu0 %v2908, 72
    %v2921 = vpop.permute.xlu0 %2920
    %2922 = vrot.lane.b32.xlu0 %v2909, 72
    %v2923 = vpop.permute.xlu0 %2922
    %2924 = vrot.lane.b32.xlu0 %v2910, 72
    %v2925 = vpop.permute.xlu0 %2924
    %v2926 = vsel %vm189, %v2917, %v2919
    %v2927 = vsel %vm189, %v2919, %v2921
    %v2928 = vsel %vm189, %v2921, %v2923
    %v2929 = vsel %vm189, %v2923, %v2925
    %2934 = vst [vmem:[#allocation4 + $0x260] sm:$0xf0] %v2926
    %2935 = vst [vmem:[#allocation4 + $0x268] sm:$0xf0] %v2927
    %2936 = vst [vmem:[#allocation4 + $0x270] sm:$0xf0] %v2928
    %2937 = vst [vmem:[#allocation4 + $0x278] sm:$0xf0] %v2929
    %v2938 = vld [vmem:[%s1310] ss:$8 sm:$0xf]
    %v2939 = vld [vmem:[#allocation2 + $0x8] sm:$0xf0]
    %v2940 = vld [vmem:[#allocation2 + $0x10] sm:$0xf0]
    %v2941 = vld [vmem:[#allocation2 + $0x18] sm:$0xf0]
    %v2942 = vld [vmem:[#allocation2 + $0x20] sm:$0xf0]
    %v2943 = vld [vmem:[#allocation2 + $0x28] sm:$0xf0]
    %v2945 = vperm.slane %v2938, 0
    %v2946 = vperm.slane %v2938, 1
    %v2947 = vperm.slane %v2938, 2
    %v2948 = vperm.slane %v2938, 3
    %2949 = vrot.lane.b32.xlu0 %v2945, 57
    %v2950 = vpop.permute.xlu0 %2949
    %2951 = vrot.lane.b32.xlu0 %v2946, 57
    %v2952 = vpop.permute.xlu0 %2951
    %2953 = vrot.lane.b32.xlu0 %v2947, 57
    %v2954 = vpop.permute.xlu0 %2953
    %2955 = vrot.lane.b32.xlu0 %v2948, 57
    %v2956 = vpop.permute.xlu0 %2955
    %v2957 = vsel %vm222, %v2950, %v2952
    %v2958 = vsel %vm222, %v2952, %v2954
    %v2959 = vsel %vm222, %v2954, %v2956
    %v2965 = vmul.f32 %v2939, %v2950
    %v2966 = vmul.f32 %v2940, %v2957
    %v2967 = vmul.f32 %v2941, %v2958
    %v2968 = vmul.f32 %v2942, %v2959
    %v2969 = vmul.f32 %v2943, %v2956
    %v2975 = vrot.slane %v2965, 4
    %v2976 = vrot.slane %v2966, 4
    %v2977 = vrot.slane %v2967, 4
    %v2978 = vrot.slane %v2968, 4
    %v2979 = vrot.slane %v2969, 4
    %2980 = vrot.lane.b32.xlu0 %v2975, 71
    %v2981 = vpop.permute.xlu0 %2980
    %2982 = vrot.lane.b32.xlu0 %v2976, 71
    %v2983 = vpop.permute.xlu0 %2982
    %2984 = vrot.lane.b32.xlu0 %v2977, 71
    %v2985 = vpop.permute.xlu0 %2984
    %2986 = vrot.lane.b32.xlu0 %v2978, 71
    %v2987 = vpop.permute.xlu0 %2986
    %2988 = vrot.lane.b32.xlu0 %v2979, 71
    %v2989 = vpop.permute.xlu0 %2988
    %v2990 = vsel %vm251, %v2981, %v2983
    %v2991 = vsel %vm251, %v2983, %v2985
    %v2992 = vsel %vm251, %v2985, %v2987
    %v2993 = vsel %vm251, %v2987, %v2989
    %2998 = vst [vmem:[#allocation4 + $0x2a0] sm:$0xf] %v2990
    %2999 = vst [vmem:[#allocation4 + $0x2a8] sm:$0xf] %v2991
    %3000 = vst [vmem:[#allocation4 + $0x2b0] sm:$0xf] %v2992
    %3001 = vst [vmem:[#allocation4 + $0x2b8] sm:$0xf] %v2993
    %v3002 = vld [vmem:[%s1370] ss:$8 sm:$0xf]
    %v3003 = vld [vmem:[#allocation2 + $0x8] sm:$0xf0]
    %v3004 = vld [vmem:[#allocation2 + $0x10] sm:$0xf0]
    %v3005 = vld [vmem:[#allocation2 + $0x18] sm:$0xf0]
    %v3006 = vld [vmem:[#allocation2 + $0x20] sm:$0xf0]
    %v3007 = vld [vmem:[#allocation2 + $0x28] sm:$0xf0]
    %v3009 = vperm.slane %v3002, 0
    %v3010 = vperm.slane %v3002, 1
    %v3011 = vperm.slane %v3002, 2
    %v3012 = vperm.slane %v3002, 3
    %3013 = vrot.lane.b32.xlu0 %v3009, 63
    %v3014 = vpop.permute.xlu0 %3013
    %3015 = vrot.lane.b32.xlu0 %v3010, 63
    %v3016 = vpop.permute.xlu0 %3015
    %3017 = vrot.lane.b32.xlu0 %v3011, 63
    %v3018 = vpop.permute.xlu0 %3017
    %3019 = vrot.lane.b32.xlu0 %v3012, 63
    %v3020 = vpop.permute.xlu0 %3019
    %v3021 = vsel %vm284, %v3014, %v3016
    %v3022 = vsel %vm284, %v3016, %v3018
    %v3023 = vsel %vm284, %v3018, %v3020
    %v3029 = vmul.f32 %v3003, %v3014
    %v3030 = vmul.f32 %v3004, %v3021
    %v3031 = vmul.f32 %v3005, %v3022
    %v3032 = vmul.f32 %v3006, %v3023
    %v3033 = vmul.f32 %v3007, %v3020
    %3039 = vrot.lane.b32.xlu0 %v3029, 65
    %v3040 = vpop.permute.xlu0 %3039
    %3041 = vrot.lane.b32.xlu0 %v3030, 65
    %v3042 = vpop.permute.xlu0 %3041
    %3043 = vrot.lane.b32.xlu0 %v3031, 65
    %v3044 = vpop.permute.xlu0 %3043
    %3045 = vrot.lane.b32.xlu0 %v3032, 65
    %v3046 = vpop.permute.xlu0 %3045
    %3047 = vrot.lane.b32.xlu0 %v3033, 65
    %v3048 = vpop.permute.xlu0 %3047
    %v3049 = vsel %vm318, %v3040, %v3042
    %v3050 = vsel %vm318, %v3042, %v3044
    %v3051 = vsel %vm318, %v3044, %v3046
    %v3052 = vsel %vm318, %v3046, %v3048
    %3057 = vst [vmem:[#allocation4 + $0x2a0] sm:$0xf0] %v3049
    %3058 = vst [vmem:[#allocation4 + $0x2a8] sm:$0xf0] %v3050
    %3059 = vst [vmem:[#allocation4 + $0x2b0] sm:$0xf0] %v3051
    %3060 = vst [vmem:[#allocation4 + $0x2b8] sm:$0xf0] %v3052
    %v3061 = vld [vmem:[%s1435] ss:$8 sm:$0xf]
    %v3062 = vld [vmem:[#allocation2 + $0x8] sm:$0xf0]
    %v3063 = vld [vmem:[#allocation2 + $0x10] sm:$0xf0]
    %v3064 = vld [vmem:[#allocation2 + $0x18] sm:$0xf0]
    %v3065 = vld [vmem:[#allocation2 + $0x20] sm:$0xf0]
    %v3066 = vld [vmem:[#allocation2 + $0x28] sm:$0xf0]
    %v3068 = vperm.slane %v3061, 0
    %v3069 = vperm.slane %v3061, 1
    %v3070 = vperm.slane %v3061, 2
    %v3071 = vperm.slane %v3061, 3
    %3072 = vrot.lane.b32.xlu0 %v3068, 64
    %v3073 = vpop.permute.xlu0 %3072
    %3074 = vrot.lane.b32.xlu0 %v3069, 64
    %v3075 = vpop.permute.xlu0 %3074
    %3076 = vrot.lane.b32.xlu0 %v3070, 64
    %v3077 = vpop.permute.xlu0 %3076
    %3078 = vrot.lane.b32.xlu0 %v3071, 64
    %v3079 = vpop.permute.xlu0 %3078
    %v3080 = vsel %vm351, %v3073, %v3075
    %v3081 = vsel %vm351, %v3075, %v3077
    %v3082 = vsel %vm351, %v3077, %v3079
    %v3088 = vmul.f32 %v3062, %v3073
    %v3089 = vmul.f32 %v3063, %v3080
    %v3090 = vmul.f32 %v3064, %v3081
    %v3091 = vmul.f32 %v3065, %v3082
    %v3092 = vmul.f32 %v3066, %v3079
    %v3098 = vrot.slane %v3088, 4
    %v3099 = vrot.slane %v3089, 4
    %v3100 = vrot.slane %v3090, 4
    %v3101 = vrot.slane %v3091, 4
    %v3102 = vrot.slane %v3092, 4
    %3103 = vrot.lane.b32.xlu0 %v3098, 64
    %v3104 = vpop.permute.xlu0 %3103
    %3105 = vrot.lane.b32.xlu0 %v3099, 64
    %v3106 = vpop.permute.xlu0 %3105
    %3107 = vrot.lane.b32.xlu0 %v3100, 64
    %v3108 = vpop.permute.xlu0 %3107
    %3109 = vrot.lane.b32.xlu0 %v3101, 64
    %v3110 = vpop.permute.xlu0 %3109
    %3111 = vrot.lane.b32.xlu0 %v3102, 64
    %v3112 = vpop.permute.xlu0 %3111
    %v3113 = vsel %vm351, %v3104, %v3106
    %v3114 = vsel %vm351, %v3106, %v3108
    %v3115 = vsel %vm351, %v3108, %v3110
    %v3116 = vsel %vm351, %v3110, %v3112
    %3121 = vst [vmem:[#allocation4 + $0x2e0] sm:$0xf] %v3113
    %3122 = vst [vmem:[#allocation4 + $0x2e8] sm:$0xf] %v3114
    %3123 = vst [vmem:[#allocation4 + $0x2f0] sm:$0xf] %v3115
    %3124 = vst [vmem:[#allocation4 + $0x2f8] sm:$0xf] %v3116
    %v3125 = vld [vmem:[%s1495] ss:$8 sm:$0xf]
    %v3126 = vld [vmem:[#allocation2 + $0x8] sm:$0xf0]
    %v3127 = vld [vmem:[#allocation2 + $0x10] sm:$0xf0]
    %v3128 = vld [vmem:[#allocation2 + $0x18] sm:$0xf0]
    %v3129 = vld [vmem:[#allocation2 + $0x20] sm:$0xf0]
    %v3130 = vld [vmem:[#allocation2 + $0x28] sm:$0xf0]
    %v3132 = vperm.slane %v3125, 0
    %v3133 = vperm.slane %v3125, 1
    %v3134 = vperm.slane %v3125, 2
    %v3135 = vperm.slane %v3125, 3
    %3136 = vrot.lane.b32.xlu0 %v3132, 65
    %v3137 = vpop.permute.xlu0 %3136
    %3138 = vrot.lane.b32.xlu0 %v3133, 65
    %v3139 = vpop.permute.xlu0 %3138
    %3140 = vrot.lane.b32.xlu0 %v3134, 65
    %v3141 = vpop.permute.xlu0 %3140
    %3142 = vrot.lane.b32.xlu0 %v3135, 65
    %v3143 = vpop.permute.xlu0 %3142
    %v3144 = vsel %vm318, %v3137, %v3139
    %v3145 = vsel %vm318, %v3139, %v3141
    %v3146 = vsel %vm318, %v3141, %v3143
    %v3152 = vmul.f32 %v3126, %v3137
    %v3153 = vmul.f32 %v3127, %v3144
    %v3154 = vmul.f32 %v3128, %v3145
    %v3155 = vmul.f32 %v3129, %v3146
    %v3156 = vmul.f32 %v3130, %v3143
    %3162 = vrot.lane.b32.xlu0 %v3152, 63
    %v3163 = vpop.permute.xlu0 %3162
    %3164 = vrot.lane.b32.xlu0 %v3153, 63
    %v3165 = vpop.permute.xlu0 %3164
    %3166 = vrot.lane.b32.xlu0 %v3154, 63
    %v3167 = vpop.permute.xlu0 %3166
    %3168 = vrot.lane.b32.xlu0 %v3155, 63
    %v3169 = vpop.permute.xlu0 %3168
    %3170 = vrot.lane.b32.xlu0 %v3156, 63
    %v3171 = vpop.permute.xlu0 %3170
    %v3172 = vsel %vm284, %v3163, %v3165
    %v3173 = vsel %vm284, %v3165, %v3167
    %v3174 = vsel %vm284, %v3167, %v3169
    %v3175 = vsel %vm284, %v3169, %v3171
    %3180 = vst [vmem:[#allocation4 + $0x2e0] sm:$0xf0] %v3172
    %3181 = vst [vmem:[#allocation4 + $0x2e8] sm:$0xf0] %v3173
    %3182 = vst [vmem:[#allocation4 + $0x2f0] sm:$0xf0] %v3174
    %3183 = vst [vmem:[#allocation4 + $0x2f8] sm:$0xf0] %v3175
    %v3184 = vld [vmem:[%s1560] ss:$8 sm:$0xf]
    %v3185 = vld [vmem:[#allocation2 + $0x8] sm:$0xf0]
    %v3186 = vld [vmem:[#allocation2 + $0x10] sm:$0xf0]
    %v3187 = vld [vmem:[#allocation2 + $0x18] sm:$0xf0]
    %v3188 = vld [vmem:[#allocation2 + $0x20] sm:$0xf0]
    %v3189 = vld [vmem:[#allocation2 + $0x28] sm:$0xf0]
    %v3191 = vperm.slane %v3184, 0
    %v3192 = vperm.slane %v3184, 1
    %v3193 = vperm.slane %v3184, 2
    %v3194 = vperm.slane %v3184, 3
    %3195 = vrot.lane.b32.xlu0 %v3191, 71
    %v3196 = vpop.permute.xlu0 %3195
    %3197 = vrot.lane.b32.xlu0 %v3192, 71
    %v3198 = vpop.permute.xlu0 %3197
    %3199 = vrot.lane.b32.xlu0 %v3193, 71
    %v3200 = vpop.permute.xlu0 %3199
    %3201 = vrot.lane.b32.xlu0 %v3194, 71
    %v3202 = vpop.permute.xlu0 %3201
    %v3203 = vsel %vm251, %v3196, %v3198
    %v3204 = vsel %vm251, %v3198, %v3200
    %v3205 = vsel %vm251, %v3200, %v3202
    %v3211 = vmul.f32 %v3185, %v3196
    %v3212 = vmul.f32 %v3186, %v3203
    %v3213 = vmul.f32 %v3187, %v3204
    %v3214 = vmul.f32 %v3188, %v3205
    %v3215 = vmul.f32 %v3189, %v3202
    %v3221 = vrot.slane %v3211, 4
    %v3222 = vrot.slane %v3212, 4
    %v3223 = vrot.slane %v3213, 4
    %v3224 = vrot.slane %v3214, 4
    %v3225 = vrot.slane %v3215, 4
    %3226 = vrot.lane.b32.xlu0 %v3221, 57
    %v3227 = vpop.permute.xlu0 %3226
    %3228 = vrot.lane.b32.xlu0 %v3222, 57
    %v3229 = vpop.permute.xlu0 %3228
    %3230 = vrot.lane.b32.xlu0 %v3223, 57
    %v3231 = vpop.permute.xlu0 %3230
    %3232 = vrot.lane.b32.xlu0 %v3224, 57
    %v3233 = vpop.permute.xlu0 %3232
    %3234 = vrot.lane.b32.xlu0 %v3225, 57
    %v3235 = vpop.permute.xlu0 %3234
    %v3236 = vsel %vm222, %v3227, %v3229
    %v3237 = vsel %vm222, %v3229, %v3231
    %v3238 = vsel %vm222, %v3231, %v3233
    %v3239 = vsel %vm222, %v3233, %v3235
    %3244 = vst [vmem:[#allocation4 + $0x320] sm:$0xf] %v3236
    %3245 = vst [vmem:[#allocation4 + $0x328] sm:$0xf] %v3237
    %3246 = vst [vmem:[#allocation4 + $0x330] sm:$0xf] %v3238
    %3247 = vst [vmem:[#allocation4 + $0x338] sm:$0xf] %v3239
    %v3248 = vld [vmem:[%s1620] ss:$8 sm:$0xf]
    %v3249 = vld [vmem:[#allocation2 + $0x8] sm:$0xf0]
    %v3250 = vld [vmem:[#allocation2 + $0x10] sm:$0xf0]
    %v3251 = vld [vmem:[#allocation2 + $0x18] sm:$0xf0]
    %v3252 = vld [vmem:[#allocation2 + $0x20] sm:$0xf0]
    %v3253 = vld [vmem:[#allocation2 + $0x28] sm:$0xf0]
    %v3255 = vperm.slane %v3248, 0
    %v3256 = vperm.slane %v3248, 1
    %v3257 = vperm.slane %v3248, 2
    %v3258 = vperm.slane %v3248, 3
    %3259 = vrot.lane.b32.xlu0 %v3255, 72
    %v3260 = vpop.permute.xlu0 %3259
    %3261 = vrot.lane.b32.xlu0 %v3256, 72
    %v3262 = vpop.permute.xlu0 %3261
    %3263 = vrot.lane.b32.xlu0 %v3257, 72
    %v3264 = vpop.permute.xlu0 %3263
    %3265 = vrot.lane.b32.xlu0 %v3258, 72
    %v3266 = vpop.permute.xlu0 %3265
    %v3267 = vsel %vm189, %v3260, %v3262
    %v3268 = vsel %vm189, %v3262, %v3264
    %v3269 = vsel %vm189, %v3264, %v3266
    %v3275 = vmul.f32 %v3249, %v3260
    %v3276 = vmul.f32 %v3250, %v3267
    %v3277 = vmul.f32 %v3251, %v3268
    %v3278 = vmul.f32 %v3252, %v3269
    %v3279 = vmul.f32 %v3253, %v3266
    %3285 = vrot.lane.b32.xlu0 %v3275, 56
    %v3286 = vpop.permute.xlu0 %3285
    %3287 = vrot.lane.b32.xlu0 %v3276, 56
    %v3288 = vpop.permute.xlu0 %3287
    %3289 = vrot.lane.b32.xlu0 %v3277, 56
    %v3290 = vpop.permute.xlu0 %3289
    %3291 = vrot.lane.b32.xlu0 %v3278, 56
    %v3292 = vpop.permute.xlu0 %3291
    %3293 = vrot.lane.b32.xlu0 %v3279, 56
    %v3294 = vpop.permute.xlu0 %3293
    %v3295 = vsel %vm155, %v3286, %v3288
    %v3296 = vsel %vm155, %v3288, %v3290
    %v3297 = vsel %vm155, %v3290, %v3292
    %v3298 = vsel %vm155, %v3292, %v3294
    %3303 = vst [vmem:[#allocation4 + $0x320] sm:$0xf0] %v3295
    %3304 = vst [vmem:[#allocation4 + $0x328] sm:$0xf0] %v3296
    %3305 = vst [vmem:[#allocation4 + $0x330] sm:$0xf0] %v3297
    %3306 = vst [vmem:[#allocation4 + $0x338] sm:$0xf0] %v3298
    %v3307 = vld [vmem:[%s1685] ss:$8 sm:$0xf]
    %v3308 = vld [vmem:[#allocation2 + $0x8] sm:$0xf0]
    %v3309 = vld [vmem:[#allocation2 + $0x10] sm:$0xf0]
    %v3310 = vld [vmem:[#allocation2 + $0x18] sm:$0xf0]
    %v3311 = vld [vmem:[#allocation2 + $0x20] sm:$0xf0]
    %v3312 = vld [vmem:[#allocation2 + $0x28] sm:$0xf0]
    %v3314 = vperm.slane %v3307, 0
    %v3315 = vperm.slane %v3307, 1
    %v3316 = vperm.slane %v3307, 2
    %v3317 = vperm.slane %v3307, 3
    %3318 = vrot.lane.b32.xlu0 %v3314, 73
    %v3319 = vpop.permute.xlu0 %3318
    %3320 = vrot.lane.b32.xlu0 %v3315, 73
    %v3321 = vpop.permute.xlu0 %3320
    %3322 = vrot.lane.b32.xlu0 %v3316, 73
    %v3323 = vpop.permute.xlu0 %3322
    %3324 = vrot.lane.b32.xlu0 %v3317, 73
    %v3325 = vpop.permute.xlu0 %3324
    %v3326 = vsel %vm122, %v3319, %v3321
    %v3327 = vsel %vm122, %v3321, %v3323
    %v3328 = vsel %vm122, %v3323, %v3325
    %v3334 = vmul.f32 %v3308, %v3319
    %v3335 = vmul.f32 %v3309, %v3326
    %v3336 = vmul.f32 %v3310, %v3327
    %v3337 = vmul.f32 %v3311, %v3328
    %v3338 = vmul.f32 %v3312, %v3325
    %v3344 = vrot.slane %v3334, 4
    %v3345 = vrot.slane %v3335, 4
    %v3346 = vrot.slane %v3336, 4
    %v3347 = vrot.slane %v3337, 4
    %v3348 = vrot.slane %v3338, 4
    %3349 = vrot.lane.b32.xlu0 %v3344, 55
    %v3350 = vpop.permute.xlu0 %3349
    %3351 = vrot.lane.b32.xlu0 %v3345, 55
    %v3352 = vpop.permute.xlu0 %3351
    %3353 = vrot.lane.b32.xlu0 %v3346, 55
    %v3354 = vpop.permute.xlu0 %3353
    %3355 = vrot.lane.b32.xlu0 %v3347, 55
    %v3356 = vpop.permute.xlu0 %3355
    %3357 = vrot.lane.b32.xlu0 %v3348, 55
    %v3358 = vpop.permute.xlu0 %3357
    %v3359 = vsel %vm93, %v3350, %v3352
    %v3360 = vsel %vm93, %v3352, %v3354
    %v3361 = vsel %vm93, %v3354, %v3356
    %v3362 = vsel %vm93, %v3356, %v3358
    %3367 = vst [vmem:[#allocation4 + $0x360] sm:$0xf] %v3359
    %3368 = vst [vmem:[#allocation4 + $0x368] sm:$0xf] %v3360
    %3369 = vst [vmem:[#allocation4 + $0x370] sm:$0xf] %v3361
    %3370 = vst [vmem:[#allocation4 + $0x378] sm:$0xf] %v3362
    %v3371 = vld [vmem:[%s2] sm:$0xff]
    %v3372 = vld [vmem:[#allocation4] sm:$0xff]
    %v3373 = vld [vmem:[#allocation4 + $0x8] sm:$0xff]
    %v3374 = vld [vmem:[#allocation4 + $0x10] sm:$0xff]
    %v3375 = vld [vmem:[#allocation4 + $0x18] sm:$0xff]
    %v3376 = vld [vmem:[#allocation4 + $0x20] sm:$0xff]
    %v3377 = vld [vmem:[#allocation4 + $0x28] sm:$0xff]
    %v3378 = vld [vmem:[#allocation4 + $0x30] sm:$0xff]
    %v3379 = vld [vmem:[#allocation4 + $0x38] sm:$0xff]
    %v3380 = vld [vmem:[#allocation4 + $0x40] sm:$0xff]
    %v3381 = vld [vmem:[#allocation4 + $0x48] sm:$0xff]
    %v3382 = vld [vmem:[#allocation4 + $0x50] sm:$0xff]
    %v3383 = vld [vmem:[#allocation4 + $0x58] sm:$0xff]
    %v3384 = vld [vmem:[#allocation4 + $0x60] sm:$0xff]
    %v3385 = vld [vmem:[#allocation4 + $0x68] sm:$0xff]
    %v3386 = vld [vmem:[#allocation4 + $0x70] sm:$0xff]
    %v3387 = vld [vmem:[#allocation4 + $0x78] sm:$0xff]
    %v3388 = vld [vmem:[#allocation4 + $0x80] sm:$0xff]
    %v3389 = vld [vmem:[#allocation4 + $0x88] sm:$0xff]
    %v3390 = vld [vmem:[#allocation4 + $0x90] sm:$0xff]
    %v3391 = vld [vmem:[#allocation4 + $0x98] sm:$0xff]
    %v3392 = vld [vmem:[#allocation4 + $0xa0] sm:$0xff]
    %v3393 = vld [vmem:[#allocation4 + $0xa8] sm:$0xff]
    %v3394 = vld [vmem:[#allocation4 + $0xb0] sm:$0xff]
    %v3395 = vld [vmem:[#allocation4 + $0xb8] sm:$0xff]
    %v3396 = vld [vmem:[#allocation4 + $0xc0] sm:$0xff]
    %v3397 = vld [vmem:[#allocation4 + $0xc8] sm:$0xff]
    %v3398 = vld [vmem:[#allocation4 + $0xd0] sm:$0xff]
    %v3399 = vld [vmem:[#allocation4 + $0xd8] sm:$0xff]
    %v3400 = vld [vmem:[#allocation4 + $0xe0] sm:$0xff]
    %v3401 = vld [vmem:[#allocation4 + $0xe8] sm:$0xff]
    %v3402 = vld [vmem:[#allocation4 + $0xf0] sm:$0xff]
    %v3403 = vld [vmem:[#allocation4 + $0xf8] sm:$0xff]
    %v3404 = vld [vmem:[#allocation4 + $0x100] sm:$0xff]
    %v3405 = vld [vmem:[#allocation4 + $0x108] sm:$0xff]
    %v3406 = vld [vmem:[#allocation4 + $0x110] sm:$0xff]
    %v3407 = vld [vmem:[#allocation4 + $0x118] sm:$0xff]
    %v3408 = vld [vmem:[#allocation4 + $0x120] sm:$0xff]
    %v3409 = vld [vmem:[#allocation4 + $0x128] sm:$0xff]
    %v3410 = vld [vmem:[#allocation4 + $0x130] sm:$0xff]
    %v3411 = vld [vmem:[#allocation4 + $0x138] sm:$0xff]
    %v3412 = vld [vmem:[#allocation4 + $0x140] sm:$0xff]
    %v3413 = vld [vmem:[#allocation4 + $0x148] sm:$0xff]
    %v3414 = vld [vmem:[#allocation4 + $0x150] sm:$0xff]
    %v3415 = vld [vmem:[#allocation4 + $0x158] sm:$0xff]
    %v3416 = vld [vmem:[#allocation4 + $0x160] sm:$0xff]
    %v3417 = vld [vmem:[#allocation4 + $0x168] sm:$0xff]
    %v3418 = vld [vmem:[#allocation4 + $0x170] sm:$0xff]
    %v3419 = vld [vmem:[#allocation4 + $0x178] sm:$0xff]
    %v3420 = vld [vmem:[#allocation4 + $0x180] sm:$0xff]
    %v3421 = vld [vmem:[#allocation4 + $0x188] sm:$0xff]
    %v3422 = vld [vmem:[#allocation4 + $0x190] sm:$0xff]
    %v3423 = vld [vmem:[#allocation4 + $0x198] sm:$0xff]
    %v3424 = vld [vmem:[#allocation4 + $0x1a0] sm:$0xff]
    %v3425 = vld [vmem:[#allocation4 + $0x1a8] sm:$0xff]
    %v3426 = vld [vmem:[#allocation4 + $0x1b0] sm:$0xff]
    %v3427 = vld [vmem:[#allocation4 + $0x1b8] sm:$0xff]
    %v3428 = vld [vmem:[#allocation4 + $0x1c0] sm:$0xff]
    %v3429 = vld [vmem:[#allocation4 + $0x1c8] sm:$0xff]
    %v3430 = vld [vmem:[#allocation4 + $0x1d0] sm:$0xff]
    %v3431 = vld [vmem:[#allocation4 + $0x1d8] sm:$0xff]
    %v3432 = vld [vmem:[#allocation4 + $0x1e0] sm:$0xff]
    %v3433 = vld [vmem:[#allocation4 + $0x1e8] sm:$0xff]
    %v3434 = vld [vmem:[#allocation4 + $0x1f0] sm:$0xff]
    %v3435 = vld [vmem:[#allocation4 + $0x1f8] sm:$0xff]
    %v3436 = vld [vmem:[#allocation4 + $0x200] sm:$0xff]
    %v3437 = vld [vmem:[#allocation4 + $0x208] sm:$0xff]
    %v3438 = vld [vmem:[#allocation4 + $0x210] sm:$0xff]
    %v3439 = vld [vmem:[#allocation4 + $0x218] sm:$0xff]
    %v3440 = vld [vmem:[#allocation4 + $0x220] sm:$0xff]
    %v3441 = vld [vmem:[#allocation4 + $0x228] sm:$0xff]
    %v3442 = vld [vmem:[#allocation4 + $0x230] sm:$0xff]
    %v3443 = vld [vmem:[#allocation4 + $0x238] sm:$0xff]
    %v3444 = vld [vmem:[#allocation4 + $0x240] sm:$0xff]
    %v3445 = vld [vmem:[#allocation4 + $0x248] sm:$0xff]
    %v3446 = vld [vmem:[#allocation4 + $0x250] sm:$0xff]
    %v3447 = vld [vmem:[#allocation4 + $0x258] sm:$0xff]
    %v3448 = vld [vmem:[#allocation4 + $0x260] sm:$0xff]
    %v3449 = vld [vmem:[#allocation4 + $0x268] sm:$0xff]
    %v3450 = vld [vmem:[#allocation4 + $0x270] sm:$0xff]
    %v3451 = vld [vmem:[#allocation4 + $0x278] sm:$0xff]
    %v3452 = vld [vmem:[#allocation4 + $0x280] sm:$0xff]
    %v3453 = vld [vmem:[#allocation4 + $0x288] sm:$0xff]
    %v3454 = vld [vmem:[#allocation4 + $0x290] sm:$0xff]
    %v3455 = vld [vmem:[#allocation4 + $0x298] sm:$0xff]
    %v3456 = vld [vmem:[#allocation4 + $0x2a0] sm:$0xff]
    %v3457 = vld [vmem:[#allocation4 + $0x2a8] sm:$0xff]
    %v3458 = vld [vmem:[#allocation4 + $0x2b0] sm:$0xff]
    %v3459 = vld [vmem:[#allocation4 + $0x2b8] sm:$0xff]
    %v3460 = vld [vmem:[#allocation4 + $0x2c0] sm:$0xff]
    %v3461 = vld [vmem:[#allocation4 + $0x2c8] sm:$0xff]
    %v3462 = vld [vmem:[#allocation4 + $0x2d0] sm:$0xff]
    %v3463 = vld [vmem:[#allocation4 + $0x2d8] sm:$0xff]
    %v3464 = vld [vmem:[#allocation4 + $0x2e0] sm:$0xff]
    %v3465 = vld [vmem:[#allocation4 + $0x2e8] sm:$0xff]
    %v3466 = vld [vmem:[#allocation4 + $0x2f0] sm:$0xff]
    %v3467 = vld [vmem:[#allocation4 + $0x2f8] sm:$0xff]
    %v3468 = vld [vmem:[#allocation4 + $0x300] sm:$0xff]
    %v3469 = vld [vmem:[#allocation4 + $0x308] sm:$0xff]
    %v3470 = vld [vmem:[#allocation4 + $0x310] sm:$0xff]
    %v3471 = vld [vmem:[#allocation4 + $0x318] sm:$0xff]
    %v3472 = vld [vmem:[#allocation4 + $0x320] sm:$0xff]
    %v3473 = vld [vmem:[#allocation4 + $0x328] sm:$0xff]
    %v3474 = vld [vmem:[#allocation4 + $0x330] sm:$0xff]
    %v3475 = vld [vmem:[#allocation4 + $0x338] sm:$0xff]
    %v3476 = vld [vmem:[#allocation4 + $0x340] sm:$0xf]
    %v3477 = vld [vmem:[#allocation4 + $0x348] sm:$0xf]
    %v3478 = vld [vmem:[#allocation4 + $0x350] sm:$0xf]
    %v3479 = vld [vmem:[#allocation4 + $0x358] sm:$0xf]
    %v3480 = vld [vmem:[#allocation4 + $0x360] sm:$0xf]
    %v3481 = vld [vmem:[#allocation4 + $0x368] sm:$0xf]
    %v3482 = vld [vmem:[#allocation4 + $0x370] sm:$0xf]
    %v3483 = vld [vmem:[#allocation4 + $0x378] sm:$0xf]
    %vm3484 = vcmask 883712
    %v3486 = vsel %vm3484, %v3371, 0
    %vm3488 = vcmask 1043456
    %v3490 = vsel %vm3488, %v3476, 0
    %v3493 = vsel %vm3488, %v3477, 0
    %v3496 = vsel %vm3488, %v3478, 0
    %v3499 = vsel %vm3488, %v3479, 0
    %v3502 = vsel %vm3488, %v3480, 0
    %v3505 = vsel %vm3488, %v3481, 0
    %v3508 = vsel %vm3488, %v3482, 0
    %v3511 = vsel %vm3488, %v3483, 0
    %3513 = vmatpush.msra.mxu0 0.0
    %3514 = vmatpush.msra.mxu0 0.0
    %3515 = vmatpush.msra.mxu0 %v3490
    %3516 = vmatpush.msra.mxu0 %v3468
    %3517 = vmatpush.msra.mxu0 %v3460
    %3518 = vmatpush.msra.mxu0 %v3452
    %3519 = vmatpush.msra.mxu0 %v3444
    %3520 = vmatpush.msra.mxu0 %v3436
    %3521 = vmatpush.msra.mxu0 %v3428
    %3522 = vmatpush.msra.mxu0 %v3420
    %3523 = vmatpush.msra.mxu0 %v3412
    %3524 = vmatpush.msra.mxu0 %v3404
    %3525 = vmatpush.msra.mxu0 %v3396
    %3526 = vmatpush.msra.mxu0 %v3388
    %3527 = vmatpush.msra.mxu0 %v3380
    %3528 = vmatpush.msra.mxu0 %v3372
    %3529 = vmatmul.f32.gmra.mxu0 %v3486
    %v3530 = vpop.f32.mrf.mxu0
    %v3531 = vadd.f32 0.0, %v3530
    %3532 = vdwg.mxu0
    %3533 = vmatpush.msra.mxu0 0.0
    %3534 = vmatpush.msra.mxu0 0.0
    %3535 = vmatpush.msra.mxu0 %v3493
    %3536 = vmatpush.msra.mxu0 %v3469
    %3537 = vmatpush.msra.mxu0 %v3461
    %3538 = vmatpush.msra.mxu0 %v3453
    %3539 = vmatpush.msra.mxu0 %v3445
    %3540 = vmatpush.msra.mxu0 %v3437
    %3541 = vmatpush.msra.mxu0 %v3429
    %3542 = vmatpush.msra.mxu0 %v3421
    %3543 = vmatpush.msra.mxu0 %v3413
    %3544 = vmatpush.msra.mxu0 %v3405
    %3545 = vmatpush.msra.mxu0 %v3397
    %3546 = vmatpush.msra.mxu0 %v3389
    %3547 = vmatpush.msra.mxu0 %v3381
    %3548 = vmatpush.msra.mxu0 %v3373
    %3549 = vmatmul.f32.gmra.mxu0 %v3486
    %v3550 = vpop.f32.mrf.mxu0
    %v3551 = vadd.f32 0.0, %v3550
    %3552 = vdwg.mxu0
    %3553 = vmatpush.msra.mxu0 0.0
    %3554 = vmatpush.msra.mxu0 0.0
    %3555 = vmatpush.msra.mxu0 %v3496
    %3556 = vmatpush.msra.mxu0 %v3470
    %3557 = vmatpush.msra.mxu0 %v3462
    %3558 = vmatpush.msra.mxu0 %v3454
    %3559 = vmatpush.msra.mxu0 %v3446
    %3560 = vmatpush.msra.mxu0 %v3438
    %3561 = vmatpush.msra.mxu0 %v3430
    %3562 = vmatpush.msra.mxu0 %v3422
    %3563 = vmatpush.msra.mxu0 %v3414
    %3564 = vmatpush.msra.mxu0 %v3406
    %3565 = vmatpush.msra.mxu0 %v3398
    %3566 = vmatpush.msra.mxu0 %v3390
    %3567 = vmatpush.msra.mxu0 %v3382
    %3568 = vmatpush.msra.mxu0 %v3374
    %3569 = vmatmul.f32.gmra.mxu0 %v3486
    %v3570 = vpop.f32.mrf.mxu0
    %v3571 = vadd.f32 0.0, %v3570
    %3572 = vdwg.mxu0
    %3573 = vmatpush.msra.mxu0 0.0
    %3574 = vmatpush.msra.mxu0 0.0
    %3575 = vmatpush.msra.mxu0 %v3499
    %3576 = vmatpush.msra.mxu0 %v3471
    %3577 = vmatpush.msra.mxu0 %v3463
    %3578 = vmatpush.msra.mxu0 %v3455
    %3579 = vmatpush.msra.mxu0 %v3447
    %3580 = vmatpush.msra.mxu0 %v3439
    %3581 = vmatpush.msra.mxu0 %v3431
    %3582 = vmatpush.msra.mxu0 %v3423
    %3583 = vmatpush.msra.mxu0 %v3415
    %3584 = vmatpush.msra.mxu0 %v3407
    %3585 = vmatpush.msra.mxu0 %v3399
    %3586 = vmatpush.msra.mxu0 %v3391
    %3587 = vmatpush.msra.mxu0 %v3383
    %3588 = vmatpush.msra.mxu0 %v3375
    %3589 = vmatmul.f32.gmra.mxu0 %v3486
    %v3590 = vpop.f32.mrf.mxu0
    %v3591 = vadd.f32 0.0, %v3590
    %3592 = vdwg.mxu0
    %3593 = vmatpush.msra.mxu0 0.0
    %3594 = vmatpush.msra.mxu0 0.0
    %3595 = vmatpush.msra.mxu0 %v3502
    %3596 = vmatpush.msra.mxu0 %v3472
    %3597 = vmatpush.msra.mxu0 %v3464
    %3598 = vmatpush.msra.mxu0 %v3456
    %3599 = vmatpush.msra.mxu0 %v3448
    %3600 = vmatpush.msra.mxu0 %v3440
    %3601 = vmatpush.msra.mxu0 %v3432
    %3602 = vmatpush.msra.mxu0 %v3424
    %3603 = vmatpush.msra.mxu0 %v3416
    %3604 = vmatpush.msra.mxu0 %v3408
    %3605 = vmatpush.msra.mxu0 %v3400
    %3606 = vmatpush.msra.mxu0 %v3392
    %3607 = vmatpush.msra.mxu0 %v3384
    %3608 = vmatpush.msra.mxu0 %v3376
    %3609 = vmatmul.f32.gmra.mxu0 %v3486
    %v3610 = vpop.f32.mrf.mxu0
    %v3611 = vadd.f32 0.0, %v3610
    %3612 = vdwg.mxu0
    %3613 = vmatpush.msra.mxu0 0.0
    %3614 = vmatpush.msra.mxu0 0.0
    %3615 = vmatpush.msra.mxu0 %v3505
    %3616 = vmatpush.msra.mxu0 %v3473
    %3617 = vmatpush.msra.mxu0 %v3465
    %3618 = vmatpush.msra.mxu0 %v3457
    %3619 = vmatpush.msra.mxu0 %v3449
    %3620 = vmatpush.msra.mxu0 %v3441
    %3621 = vmatpush.msra.mxu0 %v3433
    %3622 = vmatpush.msra.mxu0 %v3425
    %3623 = vmatpush.msra.mxu0 %v3417
    %3624 = vmatpush.msra.mxu0 %v3409
    %3625 = vmatpush.msra.mxu0 %v3401
    %3626 = vmatpush.msra.mxu0 %v3393
    %3627 = vmatpush.msra.mxu0 %v3385
    %3628 = vmatpush.msra.mxu0 %v3377
    %3629 = vmatmul.f32.gmra.mxu0 %v3486
    %v3630 = vpop.f32.mrf.mxu0
    %v3631 = vadd.f32 0.0, %v3630
    %3632 = vdwg.mxu0
    %3633 = vmatpush.msra.mxu0 0.0
    %3634 = vmatpush.msra.mxu0 0.0
    %3635 = vmatpush.msra.mxu0 %v3508
    %3636 = vmatpush.msra.mxu0 %v3474
    %3637 = vmatpush.msra.mxu0 %v3466
    %3638 = vmatpush.msra.mxu0 %v3458
    %3639 = vmatpush.msra.mxu0 %v3450
    %3640 = vmatpush.msra.mxu0 %v3442
    %3641 = vmatpush.msra.mxu0 %v3434
    %3642 = vmatpush.msra.mxu0 %v3426
    %3643 = vmatpush.msra.mxu0 %v3418
    %3644 = vmatpush.msra.mxu0 %v3410
    %3645 = vmatpush.msra.mxu0 %v3402
    %3646 = vmatpush.msra.mxu0 %v3394
    %3647 = vmatpush.msra.mxu0 %v3386
    %3648 = vmatpush.msra.mxu0 %v3378
    %3649 = vmatmul.f32.gmra.mxu0 %v3486
    %v3650 = vpop.f32.mrf.mxu0
    %v3651 = vadd.f32 0.0, %v3650
    %3652 = vdwg.mxu0
    %3653 = vmatpush.msra.mxu0 0.0
    %3654 = vmatpush.msra.mxu0 0.0
    %3655 = vmatpush.msra.mxu0 %v3511
    %3656 = vmatpush.msra.mxu0 %v3475
    %3657 = vmatpush.msra.mxu0 %v3467
    %3658 = vmatpush.msra.mxu0 %v3459
    %3659 = vmatpush.msra.mxu0 %v3451
    %3660 = vmatpush.msra.mxu0 %v3443
    %3661 = vmatpush.msra.mxu0 %v3435
    %3662 = vmatpush.msra.mxu0 %v3427
    %3663 = vmatpush.msra.mxu0 %v3419
    %3664 = vmatpush.msra.mxu0 %v3411
    %3665 = vmatpush.msra.mxu0 %v3403
    %3666 = vmatpush.msra.mxu0 %v3395
    %3667 = vmatpush.msra.mxu0 %v3387
    %3668 = vmatpush.msra.mxu0 %v3379
    %3669 = vmatmul.f32.gmra.mxu0 %v3486
    %v3670 = vpop.f32.mrf.mxu0
    %v3671 = vadd.f32 0.0, %v3670
    %3672 = vdwg.mxu0
    %v3673 = vld [vmem:[%s3] sm:$0xff]
    %v3674 = vld [vmem:[%s4] sm:$0xff]
    %v3675 = vadd.f32 %v3531, %v3551
    %v3676 = vadd.f32 %v3675, %v3571
    %v3677 = vadd.f32 %v3676, %v3591
    %v3678 = vadd.f32 %v3677, %v3611
    %v3679 = vadd.f32 %v3678, %v3631
    %v3680 = vadd.f32 %v3679, %v3651
    %v3681 = vadd.f32 %v3680, %v3671
    %3682 = vadd.xlane.f32.xlu0 %v3681
    %v3683 = vpop.xlane.xlu0 %3682
    %v3684 = vmul.f32 %v3531, %v3531
    %v3685 = vmul.f32 %v3551, %v3551
    %v3686 = vmul.f32 %v3571, %v3571
    %v3687 = vmul.f32 %v3591, %v3591
    %v3688 = vmul.f32 %v3611, %v3611
    %v3689 = vmul.f32 %v3631, %v3631
    %v3690 = vmul.f32 %v3651, %v3651
    %v3691 = vmul.f32 %v3671, %v3671
    %v3692 = vadd.f32 %v3684, %v3685
    %v3693 = vadd.f32 %v3692, %v3686
    %v3694 = vadd.f32 %v3693, %v3687
    %v3695 = vadd.f32 %v3694, %v3688
    %v3696 = vadd.f32 %v3695, %v3689
    %v3697 = vadd.f32 %v3696, %v3690
    %v3698 = vadd.f32 %v3697, %v3691
    %3699 = vadd.xlane.f32.xlu0 %v3698
    %v3700 = vpop.xlane.xlu0 %3699
    %v3701 = vmul.f32 %v3683, 0.0009765625
    %v3702 = vmul.f32 %v3700, 0.0009765625
    %v3703 = vmul.f32 %v3701, %v3701
    %v3704 = vsub.f32 %v3702, %v3703
    %v3705 = vadd.f32 %v3704, 1e-05
    %v3706 = vrsqrt.pop %v3705
    %v3707 = vmul.f32 %v3706, %v3705
    %v3708 = vmul.f32 %v3707, %v3706
    %v3709 = vmul.f32 0.5, %v3708
    %v3710 = vsub.f32 1.5, %v3709
    %v3711 = vmul.f32 %v3706, %v3710
    %vm3712 = vweird.f32 %v3705
    %vm3713 = vweird.f32 %v3706
    %vm3714 = vmor %vm3712, %vm3713
    %v3715 = vsel %vm3714, %v3706, %v3711
    %v3716 = vmul.f32 %v3715, %v3673
    %v3717 = vmul.f32 %v3701, %v3716
    %v3718 = vsub.f32 %v3674, %v3717
    %3720 = vset.pattern.permute.xlu0 0
    %3721 = vperm.xlu0 %3720, %v3716
    %v3722 = vpop.permute.xlu0 %3721
    %v3724 = vmul.f32 %v3531, %v3722
    %v3725 = vmul.f32 %v3551, %v3722
    %v3726 = vmul.f32 %v3571, %v3722
    %v3727 = vmul.f32 %v3591, %v3722
    %v3728 = vmul.f32 %v3611, %v3722
    %v3729 = vmul.f32 %v3631, %v3722
    %v3730 = vmul.f32 %v3651, %v3722
    %v3731 = vmul.f32 %v3671, %v3722
    %3733 = vset.pattern.permute.xlu0 0
    %3734 = vperm.xlu0 %3733, %v3718
    %v3735 = vpop.permute.xlu0 %3734
    %v3737 = vadd.f32 %v3724, %v3735
    %v3738 = vadd.f32 %v3725, %v3735
    %v3739 = vadd.f32 %v3726, %v3735
    %v3740 = vadd.f32 %v3727, %v3735
    %v3741 = vadd.f32 %v3728, %v3735
    %v3742 = vadd.f32 %v3729, %v3735
    %v3743 = vadd.f32 %v3730, %v3735
    %v3744 = vadd.f32 %v3731, %v3735
    %v3745 = vmax.f32 %v3737, 0.0
    %v3746 = vmax.f32 %v3738, 0.0
    %v3747 = vmax.f32 %v3739, 0.0
    %v3748 = vmax.f32 %v3740, 0.0
    %v3749 = vmax.f32 %v3741, 0.0
    %v3750 = vmax.f32 %v3742, 0.0
    %v3751 = vmax.f32 %v3743, 0.0
    %v3752 = vmax.f32 %v3744, 0.0
    %3753 = vst [vmem:[#allocation3] sm:$0xff] 0.0
    %3754 = vst [vmem:[#allocation3 + $0x8] sm:$0xff] 0.0
    %3755 = vst [vmem:[#allocation3 + $0x10] sm:$0xff] 0.0
    %3756 = vst [vmem:[#allocation3 + $0x18] sm:$0xff] 0.0
    %3757 = vst [vmem:[#allocation3 + $0x20] sm:$0xff] 0.0
    %3758 = vst [vmem:[#allocation3 + $0x28] sm:$0xff] 0.0
    %3759 = vst [vmem:[#allocation3 + $0x30] sm:$0xff] 0.0
    %3760 = vst [vmem:[#allocation3 + $0x38] sm:$0xff] 0.0
    %3761 = vst [vmem:[#allocation3 + $0x40] sm:$0xff] 0.0
    %3762 = vst [vmem:[#allocation3 + $0x48] sm:$0xff] 0.0
    %3763 = vst [vmem:[#allocation3 + $0x50] sm:$0xff] 0.0
    %3764 = vst [vmem:[#allocation3 + $0x58] sm:$0xff] 0.0
    %3765 = vst [vmem:[#allocation3 + $0x8] sm:$0xff] %v3745
    %3766 = vst [vmem:[#allocation3 + $0x10] sm:$0xff] %v3746
    %3767 = vst [vmem:[#allocation3 + $0x18] sm:$0xff] %v3747
    %3768 = vst [vmem:[#allocation3 + $0x20] sm:$0xff] %v3748
    %3769 = vst [vmem:[#allocation3 + $0x38] sm:$0xff] %v3749
    %3770 = vst [vmem:[#allocation3 + $0x40] sm:$0xff] %v3750
    %3771 = vst [vmem:[#allocation3 + $0x48] sm:$0xff] %v3751
    %3772 = vst [vmem:[#allocation3 + $0x50] sm:$0xff] %v3752
    %v3773 = vld [vmem:[#allocation8] ss:$8 sm:$0xf]
    %v3774 = vld [vmem:[#allocation3] sm:$0xff]
    %v3775 = vld [vmem:[#allocation3 + $0x8] sm:$0xff]
    %v3776 = vld [vmem:[#allocation3 + $0x10] sm:$0xff]
    %v3777 = vld [vmem:[#allocation3 + $0x18] sm:$0xff]
    %v3778 = vld [vmem:[#allocation3 + $0x20] sm:$0xff]
    %v3780 = vperm.slane %v3773, 0
    %v3781 = vperm.slane %v3773, 1
    %v3782 = vperm.slane %v3773, 2
    %v3783 = vperm.slane %v3773, 3
    %3784 = vrot.lane.b32.xlu0 %v3780, 55
    %v3785 = vpop.permute.xlu0 %3784
    %3786 = vrot.lane.b32.xlu0 %v3781, 55
    %v3787 = vpop.permute.xlu0 %3786
    %3788 = vrot.lane.b32.xlu0 %v3782, 55
    %v3789 = vpop.permute.xlu0 %3788
    %3790 = vrot.lane.b32.xlu0 %v3783, 55
    %v3791 = vpop.permute.xlu0 %3790
    %v3792 = vsel %vm93, %v3785, %v3787
    %v3793 = vsel %vm93, %v3787, %v3789
    %v3794 = vsel %vm93, %v3789, %v3791
    %v3800 = vmul.f32 %v3774, %v3785
    %v3801 = vmul.f32 %v3775, %v3792
    %v3802 = vmul.f32 %v3776, %v3793
    %v3803 = vmul.f32 %v3777, %v3794
    %v3804 = vmul.f32 %v3778, %v3791
    %3810 = vrot.lane.b32.xlu0 %v3800, 73
    %v3811 = vpop.permute.xlu0 %3810
    %3812 = vrot.lane.b32.xlu0 %v3801, 73
    %v3813 = vpop.permute.xlu0 %3812
    %3814 = vrot.lane.b32.xlu0 %v3802, 73
    %v3815 = vpop.permute.xlu0 %3814
    %3816 = vrot.lane.b32.xlu0 %v3803, 73
    %v3817 = vpop.permute.xlu0 %3816
    %3818 = vrot.lane.b32.xlu0 %v3804, 73
    %v3819 = vpop.permute.xlu0 %3818
    %v3820 = vsel %vm122, %v3811, %v3813
    %v3821 = vsel %vm122, %v3813, %v3815
    %v3822 = vsel %vm122, %v3815, %v3817
    %v3823 = vsel %vm122, %v3817, %v3819
    %3828 = vst [vmem:[#allocation4] sm:$0xff] %v3820
    %3829 = vst [vmem:[#allocation4 + $0x8] sm:$0xff] %v3821
    %3830 = vst [vmem:[#allocation4 + $0x10] sm:$0xff] %v3822
    %3831 = vst [vmem:[#allocation4 + $0x18] sm:$0xff] %v3823
    %v3832 = vld [vmem:[%s135] ss:$8 sm:$0xf]
    %v3833 = vld [vmem:[#allocation3] sm:$0xff]
    %v3834 = vld [vmem:[#allocation3 + $0x8] sm:$0xff]
    %v3835 = vld [vmem:[#allocation3 + $0x10] sm:$0xff]
    %v3836 = vld [vmem:[#allocation3 + $0x18] sm:$0xff]
    %v3837 = vld [vmem:[#allocation3 + $0x20] sm:$0xff]
    %v3839 = vperm.slane %v3832, 0
    %v3840 = vperm.slane %v3832, 1
    %v3841 = vperm.slane %v3832, 2
    %v3842 = vperm.slane %v3832, 3
    %3843 = vrot.lane.b32.xlu0 %v3839, 56
    %v3844 = vpop.permute.xlu0 %3843
    %3845 = vrot.lane.b32.xlu0 %v3840, 56
    %v3846 = vpop.permute.xlu0 %3845
    %3847 = vrot.lane.b32.xlu0 %v3841, 56
    %v3848 = vpop.permute.xlu0 %3847
    %3849 = vrot.lane.b32.xlu0 %v3842, 56
    %v3850 = vpop.permute.xlu0 %3849
    %v3851 = vsel %vm155, %v3844, %v3846
    %v3852 = vsel %vm155, %v3846, %v3848
    %v3853 = vsel %vm155, %v3848, %v3850
    %v3859 = vmul.f32 %v3833, %v3844
    %v3860 = vmul.f32 %v3834, %v3851
    %v3861 = vmul.f32 %v3835, %v3852
    %v3862 = vmul.f32 %v3836, %v3853
    %v3863 = vmul.f32 %v3837, %v3850
    %3869 = vrot.lane.b32.xlu0 %v3859, 72
    %v3870 = vpop.permute.xlu0 %3869
    %3871 = vrot.lane.b32.xlu0 %v3860, 72
    %v3872 = vpop.permute.xlu0 %3871
    %3873 = vrot.lane.b32.xlu0 %v3861, 72
    %v3874 = vpop.permute.xlu0 %3873
    %3875 = vrot.lane.b32.xlu0 %v3862, 72
    %v3876 = vpop.permute.xlu0 %3875
    %3877 = vrot.lane.b32.xlu0 %v3863, 72
    %v3878 = vpop.permute.xlu0 %3877
    %v3879 = vsel %vm189, %v3870, %v3872
    %v3880 = vsel %vm189, %v3872, %v3874
    %v3881 = vsel %vm189, %v3874, %v3876
    %v3882 = vsel %vm189, %v3876, %v3878
    %3887 = vst [vmem:[#allocation4 + $0x40] sm:$0xff] %v3879
    %3888 = vst [vmem:[#allocation4 + $0x48] sm:$0xff] %v3880
    %3889 = vst [vmem:[#allocation4 + $0x50] sm:$0xff] %v3881
    %3890 = vst [vmem:[#allocation4 + $0x58] sm:$0xff] %v3882
    %v3891 = vld [vmem:[%s202] ss:$8 sm:$0xf]
    %v3892 = vld [vmem:[#allocation3] sm:$0xff]
    %v3893 = vld [vmem:[#allocation3 + $0x8] sm:$0xff]
    %v3894 = vld [vmem:[#allocation3 + $0x10] sm:$0xff]
    %v3895 = vld [vmem:[#allocation3 + $0x18] sm:$0xff]
    %v3896 = vld [vmem:[#allocation3 + $0x20] sm:$0xff]
    %v3898 = vperm.slane %v3891, 0
    %v3899 = vperm.slane %v3891, 1
    %v3900 = vperm.slane %v3891, 2
    %v3901 = vperm.slane %v3891, 3
    %3902 = vrot.lane.b32.xlu0 %v3898, 57
    %v3903 = vpop.permute.xlu0 %3902
    %3904 = vrot.lane.b32.xlu0 %v3899, 57
    %v3905 = vpop.permute.xlu0 %3904
    %3906 = vrot.lane.b32.xlu0 %v3900, 57
    %v3907 = vpop.permute.xlu0 %3906
    %3908 = vrot.lane.b32.xlu0 %v3901, 57
    %v3909 = vpop.permute.xlu0 %3908
    %v3910 = vsel %vm222, %v3903, %v3905
    %v3911 = vsel %vm222, %v3905, %v3907
    %v3912 = vsel %vm222, %v3907, %v3909
    %v3918 = vmul.f32 %v3892, %v3903
    %v3919 = vmul.f32 %v3893, %v3910
    %v3920 = vmul.f32 %v3894, %v3911
    %v3921 = vmul.f32 %v3895, %v3912
    %v3922 = vmul.f32 %v3896, %v3909
    %3928 = vrot.lane.b32.xlu0 %v3918, 71
    %v3929 = vpop.permute.xlu0 %3928
    %3930 = vrot.lane.b32.xlu0 %v3919, 71
    %v3931 = vpop.permute.xlu0 %3930
    %3932 = vrot.lane.b32.xlu0 %v3920, 71
    %v3933 = vpop.permute.xlu0 %3932
    %3934 = vrot.lane.b32.xlu0 %v3921, 71
    %v3935 = vpop.permute.xlu0 %3934
    %3936 = vrot.lane.b32.xlu0 %v3922, 71
    %v3937 = vpop.permute.xlu0 %3936
    %v3938 = vsel %vm251, %v3929, %v3931
    %v3939 = vsel %vm251, %v3931, %v3933
    %v3940 = vsel %vm251, %v3933, %v3935
    %v3941 = vsel %vm251, %v3935, %v3937
    %3946 = vst [vmem:[#allocation4 + $0x80] sm:$0xff] %v3938
    %3947 = vst [vmem:[#allocation4 + $0x88] sm:$0xff] %v3939
    %3948 = vst [vmem:[#allocation4 + $0x90] sm:$0xff] %v3940
    %3949 = vst [vmem:[#allocation4 + $0x98] sm:$0xff] %v3941
    %v3950 = vld [vmem:[%s264] ss:$8 sm:$0xf]
    %v3951 = vld [vmem:[#allocation3] sm:$0xff]
    %v3952 = vld [vmem:[#allocation3 + $0x8] sm:$0xff]
    %v3953 = vld [vmem:[#allocation3 + $0x10] sm:$0xff]
    %v3954 = vld [vmem:[#allocation3 + $0x18] sm:$0xff]
    %v3955 = vld [vmem:[#allocation3 + $0x20] sm:$0xff]
    %v3957 = vperm.slane %v3950, 0
    %v3958 = vperm.slane %v3950, 1
    %v3959 = vperm.slane %v3950, 2
    %v3960 = vperm.slane %v3950, 3
    %3961 = vrot.lane.b32.xlu0 %v3957, 63
    %v3962 = vpop.permute.xlu0 %3961
    %3963 = vrot.lane.b32.xlu0 %v3958, 63
    %v3964 = vpop.permute.xlu0 %3963
    %3965 = vrot.lane.b32.xlu0 %v3959, 63
    %v3966 = vpop.permute.xlu0 %3965
    %3967 = vrot.lane.b32.xlu0 %v3960, 63
    %v3968 = vpop.permute.xlu0 %3967
    %v3969 = vsel %vm284, %v3962, %v3964
    %v3970 = vsel %vm284, %v3964, %v3966
    %v3971 = vsel %vm284, %v3966, %v3968
    %v3977 = vmul.f32 %v3951, %v3962
    %v3978 = vmul.f32 %v3952, %v3969
    %v3979 = vmul.f32 %v3953, %v3970
    %v3980 = vmul.f32 %v3954, %v3971
    %v3981 = vmul.f32 %v3955, %v3968
    %3987 = vrot.lane.b32.xlu0 %v3977, 65
    %v3988 = vpop.permute.xlu0 %3987
    %3989 = vrot.lane.b32.xlu0 %v3978, 65
    %v3990 = vpop.permute.xlu0 %3989
    %3991 = vrot.lane.b32.xlu0 %v3979, 65
    %v3992 = vpop.permute.xlu0 %3991
    %3993 = vrot.lane.b32.xlu0 %v3980, 65
    %v3994 = vpop.permute.xlu0 %3993
    %3995 = vrot.lane.b32.xlu0 %v3981, 65
    %v3996 = vpop.permute.xlu0 %3995
    %v3997 = vsel %vm318, %v3988, %v3990
    %v3998 = vsel %vm318, %v3990, %v3992
    %v3999 = vsel %vm318, %v3992, %v3994
    %v4000 = vsel %vm318, %v3994, %v3996
    %4005 = vst [vmem:[#allocation4 + $0xc0] sm:$0xff] %v3997
    %4006 = vst [vmem:[#allocation4 + $0xc8] sm:$0xff] %v3998
    %4007 = vst [vmem:[#allocation4 + $0xd0] sm:$0xff] %v3999
    %4008 = vst [vmem:[#allocation4 + $0xd8] sm:$0xff] %v4000
    %v4009 = vld [vmem:[%s331] ss:$8 sm:$0xf]
    %v4010 = vld [vmem:[#allocation3] sm:$0xff]
    %v4011 = vld [vmem:[#allocation3 + $0x8] sm:$0xff]
    %v4012 = vld [vmem:[#allocation3 + $0x10] sm:$0xff]
    %v4013 = vld [vmem:[#allocation3 + $0x18] sm:$0xff]
    %v4014 = vld [vmem:[#allocation3 + $0x20] sm:$0xff]
    %v4016 = vperm.slane %v4009, 0
    %v4017 = vperm.slane %v4009, 1
    %v4018 = vperm.slane %v4009, 2
    %v4019 = vperm.slane %v4009, 3
    %4020 = vrot.lane.b32.xlu0 %v4016, 64
    %v4021 = vpop.permute.xlu0 %4020
    %4022 = vrot.lane.b32.xlu0 %v4017, 64
    %v4023 = vpop.permute.xlu0 %4022
    %4024 = vrot.lane.b32.xlu0 %v4018, 64
    %v4025 = vpop.permute.xlu0 %4024
    %4026 = vrot.lane.b32.xlu0 %v4019, 64
    %v4027 = vpop.permute.xlu0 %4026
    %v4028 = vsel %vm351, %v4021, %v4023
    %v4029 = vsel %vm351, %v4023, %v4025
    %v4030 = vsel %vm351, %v4025, %v4027
    %v4036 = vmul.f32 %v4010, %v4021
    %v4037 = vmul.f32 %v4011, %v4028
    %v4038 = vmul.f32 %v4012, %v4029
    %v4039 = vmul.f32 %v4013, %v4030
    %v4040 = vmul.f32 %v4014, %v4027
    %4046 = vrot.lane.b32.xlu0 %v4036, 64
    %v4047 = vpop.permute.xlu0 %4046
    %4048 = vrot.lane.b32.xlu0 %v4037, 64
    %v4049 = vpop.permute.xlu0 %4048
    %4050 = vrot.lane.b32.xlu0 %v4038, 64
    %v4051 = vpop.permute.xlu0 %4050
    %4052 = vrot.lane.b32.xlu0 %v4039, 64
    %v4053 = vpop.permute.xlu0 %4052
    %4054 = vrot.lane.b32.xlu0 %v4040, 64
    %v4055 = vpop.permute.xlu0 %4054
    %v4056 = vsel %vm351, %v4047, %v4049
    %v4057 = vsel %vm351, %v4049, %v4051
    %v4058 = vsel %vm351, %v4051, %v4053
    %v4059 = vsel %vm351, %v4053, %v4055
    %4064 = vst [vmem:[#allocation4 + $0x100] sm:$0xff] %v4056
    %4065 = vst [vmem:[#allocation4 + $0x108] sm:$0xff] %v4057
    %4066 = vst [vmem:[#allocation4 + $0x110] sm:$0xff] %v4058
    %4067 = vst [vmem:[#allocation4 + $0x118] sm:$0xff] %v4059
    %v4068 = vld [vmem:[%s392] ss:$8 sm:$0xf]
    %v4069 = vld [vmem:[#allocation3] sm:$0xff]
    %v4070 = vld [vmem:[#allocation3 + $0x8] sm:$0xff]
    %v4071 = vld [vmem:[#allocation3 + $0x10] sm:$0xff]
    %v4072 = vld [vmem:[#allocation3 + $0x18] sm:$0xff]
    %v4073 = vld [vmem:[#allocation3 + $0x20] sm:$0xff]
    %v4075 = vperm.slane %v4068, 0
    %v4076 = vperm.slane %v4068, 1
    %v4077 = vperm.slane %v4068, 2
    %v4078 = vperm.slane %v4068, 3
    %4079 = vrot.lane.b32.xlu0 %v4075, 65
    %v4080 = vpop.permute.xlu0 %4079
    %4081 = vrot.lane.b32.xlu0 %v4076, 65
    %v4082 = vpop.permute.xlu0 %4081
    %4083 = vrot.lane.b32.xlu0 %v4077, 65
    %v4084 = vpop.permute.xlu0 %4083
    %4085 = vrot.lane.b32.xlu0 %v4078, 65
    %v4086 = vpop.permute.xlu0 %4085
    %v4087 = vsel %vm318, %v4080, %v4082
    %v4088 = vsel %vm318, %v4082, %v4084
    %v4089 = vsel %vm318, %v4084, %v4086
    %v4095 = vmul.f32 %v4069, %v4080
    %v4096 = vmul.f32 %v4070, %v4087
    %v4097 = vmul.f32 %v4071, %v4088
    %v4098 = vmul.f32 %v4072, %v4089
    %v4099 = vmul.f32 %v4073, %v4086
    %4105 = vrot.lane.b32.xlu0 %v4095, 63
    %v4106 = vpop.permute.xlu0 %4105
    %4107 = vrot.lane.b32.xlu0 %v4096, 63
    %v4108 = vpop.permute.xlu0 %4107
    %4109 = vrot.lane.b32.xlu0 %v4097, 63
    %v4110 = vpop.permute.xlu0 %4109
    %4111 = vrot.lane.b32.xlu0 %v4098, 63
    %v4112 = vpop.permute.xlu0 %4111
    %4113 = vrot.lane.b32.xlu0 %v4099, 63
    %v4114 = vpop.permute.xlu0 %4113
    %v4115 = vsel %vm284, %v4106, %v4108
    %v4116 = vsel %vm284, %v4108, %v4110
    %v4117 = vsel %vm284, %v4110, %v4112
    %v4118 = vsel %vm284, %v4112, %v4114
    %4123 = vst [vmem:[#allocation4 + $0x140] sm:$0xff] %v4115
    %4124 = vst [vmem:[#allocation4 + $0x148] sm:$0xff] %v4116
    %4125 = vst [vmem:[#allocation4 + $0x150] sm:$0xff] %v4117
    %4126 = vst [vmem:[#allocation4 + $0x158] sm:$0xff] %v4118
    %v4127 = vld [vmem:[%s457] ss:$8 sm:$0xf]
    %v4128 = vld [vmem:[#allocation3] sm:$0xff]
    %v4129 = vld [vmem:[#allocation3 + $0x8] sm:$0xff]
    %v4130 = vld [vmem:[#allocation3 + $0x10] sm:$0xff]
    %v4131 = vld [vmem:[#allocation3 + $0x18] sm:$0xff]
    %v4132 = vld [vmem:[#allocation3 + $0x20] sm:$0xff]
    %v4134 = vperm.slane %v4127, 0
    %v4135 = vperm.slane %v4127, 1
    %v4136 = vperm.slane %v4127, 2
    %v4137 = vperm.slane %v4127, 3
    %4138 = vrot.lane.b32.xlu0 %v4134, 71
    %v4139 = vpop.permute.xlu0 %4138
    %4140 = vrot.lane.b32.xlu0 %v4135, 71
    %v4141 = vpop.permute.xlu0 %4140
    %4142 = vrot.lane.b32.xlu0 %v4136, 71
    %v4143 = vpop.permute.xlu0 %4142
    %4144 = vrot.lane.b32.xlu0 %v4137, 71
    %v4145 = vpop.permute.xlu0 %4144
    %v4146 = vsel %vm251, %v4139, %v4141
    %v4147 = vsel %vm251, %v4141, %v4143
    %v4148 = vsel %vm251, %v4143, %v4145
    %v4154 = vmul.f32 %v4128, %v4139
    %v4155 = vmul.f32 %v4129, %v4146
    %v4156 = vmul.f32 %v4130, %v4147
    %v4157 = vmul.f32 %v4131, %v4148
    %v4158 = vmul.f32 %v4132, %v4145
    %4164 = vrot.lane.b32.xlu0 %v4154, 57
    %v4165 = vpop.permute.xlu0 %4164
    %4166 = vrot.lane.b32.xlu0 %v4155, 57
    %v4167 = vpop.permute.xlu0 %4166
    %4168 = vrot.lane.b32.xlu0 %v4156, 57
    %v4169 = vpop.permute.xlu0 %4168
    %4170 = vrot.lane.b32.xlu0 %v4157, 57
    %v4171 = vpop.permute.xlu0 %4170
    %4172 = vrot.lane.b32.xlu0 %v4158, 57
    %v4173 = vpop.permute.xlu0 %4172
    %v4174 = vsel %vm222, %v4165, %v4167
    %v4175 = vsel %vm222, %v4167, %v4169
    %v4176 = vsel %vm222, %v4169, %v4171
    %v4177 = vsel %vm222, %v4171, %v4173
    %4182 = vst [vmem:[#allocation4 + $0x180] sm:$0xff] %v4174
    %4183 = vst [vmem:[#allocation4 + $0x188] sm:$0xff] %v4175
    %4184 = vst [vmem:[#allocation4 + $0x190] sm:$0xff] %v4176
    %4185 = vst [vmem:[#allocation4 + $0x198] sm:$0xff] %v4177
    %v4186 = vld [vmem:[%s517] ss:$8 sm:$0xf]
    %v4187 = vld [vmem:[#allocation3] sm:$0xff]
    %v4188 = vld [vmem:[#allocation3 + $0x8] sm:$0xff]
    %v4189 = vld [vmem:[#allocation3 + $0x10] sm:$0xff]
    %v4190 = vld [vmem:[#allocation3 + $0x18] sm:$0xff]
    %v4191 = vld [vmem:[#allocation3 + $0x20] sm:$0xff]
    %v4193 = vperm.slane %v4186, 0
    %v4194 = vperm.slane %v4186, 1
    %v4195 = vperm.slane %v4186, 2
    %v4196 = vperm.slane %v4186, 3
    %4197 = vrot.lane.b32.xlu0 %v4193, 72
    %v4198 = vpop.permute.xlu0 %4197
    %4199 = vrot.lane.b32.xlu0 %v4194, 72
    %v4200 = vpop.permute.xlu0 %4199
    %4201 = vrot.lane.b32.xlu0 %v4195, 72
    %v4202 = vpop.permute.xlu0 %4201
    %4203 = vrot.lane.b32.xlu0 %v4196, 72
    %v4204 = vpop.permute.xlu0 %4203
    %v4205 = vsel %vm189, %v4198, %v4200
    %v4206 = vsel %vm189, %v4200, %v4202
    %v4207 = vsel %vm189, %v4202, %v4204
    %v4213 = vmul.f32 %v4187, %v4198
    %v4214 = vmul.f32 %v4188, %v4205
    %v4215 = vmul.f32 %v4189, %v4206
    %v4216 = vmul.f32 %v4190, %v4207
    %v4217 = vmul.f32 %v4191, %v4204
    %4223 = vrot.lane.b32.xlu0 %v4213, 56
    %v4224 = vpop.permute.xlu0 %4223
    %4225 = vrot.lane.b32.xlu0 %v4214, 56
    %v4226 = vpop.permute.xlu0 %4225
    %4227 = vrot.lane.b32.xlu0 %v4215, 56
    %v4228 = vpop.permute.xlu0 %4227
    %4229 = vrot.lane.b32.xlu0 %v4216, 56
    %v4230 = vpop.permute.xlu0 %4229
    %4231 = vrot.lane.b32.xlu0 %v4217, 56
    %v4232 = vpop.permute.xlu0 %4231
    %v4233 = vsel %vm155, %v4224, %v4226
    %v4234 = vsel %vm155, %v4226, %v4228
    %v4235 = vsel %vm155, %v4228, %v4230
    %v4236 = vsel %vm155, %v4230, %v4232
    %4241 = vst [vmem:[#allocation4 + $0x1c0] sm:$0xff] %v4233
    %4242 = vst [vmem:[#allocation4 + $0x1c8] sm:$0xff] %v4234
    %4243 = vst [vmem:[#allocation4 + $0x1d0] sm:$0xff] %v4235
    %4244 = vst [vmem:[#allocation4 + $0x1d8] sm:$0xff] %v4236
    %v4245 = vld [vmem:[%s582] ss:$8 sm:$0xf]
    %v4246 = vld [vmem:[#allocation3] sm:$0xff]
    %v4247 = vld [vmem:[#allocation3 + $0x8] sm:$0xff]
    %v4248 = vld [vmem:[#allocation3 + $0x10] sm:$0xff]
    %v4249 = vld [vmem:[#allocation3 + $0x18] sm:$0xff]
    %v4250 = vld [vmem:[#allocation3 + $0x20] sm:$0xff]
    %v4252 = vperm.slane %v4245, 0
    %v4253 = vperm.slane %v4245, 1
    %v4254 = vperm.slane %v4245, 2
    %v4255 = vperm.slane %v4245, 3
    %4256 = vrot.lane.b32.xlu0 %v4252, 73
    %v4257 = vpop.permute.xlu0 %4256
    %4258 = vrot.lane.b32.xlu0 %v4253, 73
    %v4259 = vpop.permute.xlu0 %4258
    %4260 = vrot.lane.b32.xlu0 %v4254, 73
    %v4261 = vpop.permute.xlu0 %4260
    %4262 = vrot.lane.b32.xlu0 %v4255, 73
    %v4263 = vpop.permute.xlu0 %4262
    %v4264 = vsel %vm122, %v4257, %v4259
    %v4265 = vsel %vm122, %v4259, %v4261
    %v4266 = vsel %vm122, %v4261, %v4263
    %v4272 = vmul.f32 %v4246, %v4257
    %v4273 = vmul.f32 %v4247, %v4264
    %v4274 = vmul.f32 %v4248, %v4265
    %v4275 = vmul.f32 %v4249, %v4266
    %v4276 = vmul.f32 %v4250, %v4263
    %4282 = vrot.lane.b32.xlu0 %v4272, 55
    %v4283 = vpop.permute.xlu0 %4282
    %4284 = vrot.lane.b32.xlu0 %v4273, 55
    %v4285 = vpop.permute.xlu0 %4284
    %4286 = vrot.lane.b32.xlu0 %v4274, 55
    %v4287 = vpop.permute.xlu0 %4286
    %4288 = vrot.lane.b32.xlu0 %v4275, 55
    %v4289 = vpop.permute.xlu0 %4288
    %4290 = vrot.lane.b32.xlu0 %v4276, 55
    %v4291 = vpop.permute.xlu0 %4290
    %v4292 = vsel %vm93, %v4283, %v4285
    %v4293 = vsel %vm93, %v4285, %v4287
    %v4294 = vsel %vm93, %v4287, %v4289
    %v4295 = vsel %vm93, %v4289, %v4291
    %4300 = vst [vmem:[#allocation4 + $0x200] sm:$0xff] %v4292
    %4301 = vst [vmem:[#allocation4 + $0x208] sm:$0xff] %v4293
    %4302 = vst [vmem:[#allocation4 + $0x210] sm:$0xff] %v4294
    %4303 = vst [vmem:[#allocation4 + $0x218] sm:$0xff] %v4295
    %v4304 = vld [vmem:[%s642] ss:$8 sm:$0xf]
    %v4305 = vld [vmem:[#allocation3] sm:$0xff]
    %v4306 = vld [vmem:[#allocation3 + $0x8] sm:$0xff]
    %v4307 = vld [vmem:[#allocation3 + $0x10] sm:$0xff]
    %v4308 = vld [vmem:[#allocation3 + $0x18] sm:$0xff]
    %v4309 = vld [vmem:[#allocation3 + $0x20] sm:$0xff]
    %v4311 = vperm.slane %v4304, 0
    %v4312 = vperm.slane %v4304, 1
    %v4313 = vperm.slane %v4304, 2
    %v4314 = vperm.slane %v4304, 3
    %4315 = vrot.lane.b32.xlu0 %v4311, 119
    %v4316 = vpop.permute.xlu0 %4315
    %4317 = vrot.lane.b32.xlu0 %v4312, 119
    %v4318 = vpop.permute.xlu0 %4317
    %4319 = vrot.lane.b32.xlu0 %v4313, 119
    %v4320 = vpop.permute.xlu0 %4319
    %4321 = vrot.lane.b32.xlu0 %v4314, 119
    %v4322 = vpop.permute.xlu0 %4321
    %v4323 = vsel %vm662, %v4316, %v4318
    %v4324 = vsel %vm662, %v4318, %v4320
    %v4325 = vsel %vm662, %v4320, %v4322
    %v4331 = vmul.f32 %v4305, %v4316
    %v4332 = vmul.f32 %v4306, %v4323
    %v4333 = vmul.f32 %v4307, %v4324
    %v4334 = vmul.f32 %v4308, %v4325
    %v4335 = vmul.f32 %v4309, %v4322
    %4341 = vrot.lane.b32.xlu0 %v4331, 9
    %v4342 = vpop.permute.xlu0 %4341
    %4343 = vrot.lane.b32.xlu0 %v4332, 9
    %v4344 = vpop.permute.xlu0 %4343
    %4345 = vrot.lane.b32.xlu0 %v4333, 9
    %v4346 = vpop.permute.xlu0 %4345
    %4347 = vrot.lane.b32.xlu0 %v4334, 9
    %v4348 = vpop.permute.xlu0 %4347
    %4349 = vrot.lane.b32.xlu0 %v4335, 9
    %v4350 = vpop.permute.xlu0 %4349
    %v4351 = vsel %vm696, %v4342, %v4344
    %v4352 = vsel %vm696, %v4344, %v4346
    %v4353 = vsel %vm696, %v4346, %v4348
    %v4354 = vsel %vm696, %v4348, %v4350
    %4359 = vst [vmem:[#allocation4 + $0x240] sm:$0xff] %v4351
    %4360 = vst [vmem:[#allocation4 + $0x248] sm:$0xff] %v4352
    %4361 = vst [vmem:[#allocation4 + $0x250] sm:$0xff] %v4353
    %4362 = vst [vmem:[#allocation4 + $0x258] sm:$0xff] %v4354
    %v4363 = vld [vmem:[%s709] ss:$8 sm:$0xf]
    %v4364 = vld [vmem:[#allocation3] sm:$0xff]
    %v4365 = vld [vmem:[#allocation3 + $0x8] sm:$0xff]
    %v4366 = vld [vmem:[#allocation3 + $0x10] sm:$0xff]
    %v4367 = vld [vmem:[#allocation3 + $0x18] sm:$0xff]
    %v4368 = vld [vmem:[#allocation3 + $0x20] sm:$0xff]
    %v4370 = vperm.slane %v4363, 0
    %v4371 = vperm.slane %v4363, 1
    %v4372 = vperm.slane %v4363, 2
    %v4373 = vperm.slane %v4363, 3
    %4374 = vrot.lane.b32.xlu0 %v4370, 120
    %v4375 = vpop.permute.xlu0 %4374
    %4376 = vrot.lane.b32.xlu0 %v4371, 120
    %v4377 = vpop.permute.xlu0 %4376
    %4378 = vrot.lane.b32.xlu0 %v4372, 120
    %v4379 = vpop.permute.xlu0 %4378
    %4380 = vrot.lane.b32.xlu0 %v4373, 120
    %v4381 = vpop.permute.xlu0 %4380
    %v4382 = vsel %vm729, %v4375, %v4377
    %v4383 = vsel %vm729, %v4377, %v4379
    %v4384 = vsel %vm729, %v4379, %v4381
    %v4390 = vmul.f32 %v4364, %v4375
    %v4391 = vmul.f32 %v4365, %v4382
    %v4392 = vmul.f32 %v4366, %v4383
    %v4393 = vmul.f32 %v4367, %v4384
    %v4394 = vmul.f32 %v4368, %v4381
    %4400 = vrot.lane.b32.xlu0 %v4390, 8
    %v4401 = vpop.permute.xlu0 %4400
    %4402 = vrot.lane.b32.xlu0 %v4391, 8
    %v4403 = vpop.permute.xlu0 %4402
    %4404 = vrot.lane.b32.xlu0 %v4392, 8
    %v4405 = vpop.permute.xlu0 %4404
    %4406 = vrot.lane.b32.xlu0 %v4393, 8
    %v4407 = vpop.permute.xlu0 %4406
    %4408 = vrot.lane.b32.xlu0 %v4394, 8
    %v4409 = vpop.permute.xlu0 %4408
    %v4410 = vsel %vm758, %v4401, %v4403
    %v4411 = vsel %vm758, %v4403, %v4405
    %v4412 = vsel %vm758, %v4405, %v4407
    %v4413 = vsel %vm758, %v4407, %v4409
    %4418 = vst [vmem:[#allocation4 + $0x280] sm:$0xff] %v4410
    %4419 = vst [vmem:[#allocation4 + $0x288] sm:$0xff] %v4411
    %4420 = vst [vmem:[#allocation4 + $0x290] sm:$0xff] %v4412
    %4421 = vst [vmem:[#allocation4 + $0x298] sm:$0xff] %v4413
    %v4422 = vld [vmem:[%s771] ss:$8 sm:$0xf]
    %v4423 = vld [vmem:[#allocation3] sm:$0xff]
    %v4424 = vld [vmem:[#allocation3 + $0x8] sm:$0xff]
    %v4425 = vld [vmem:[#allocation3 + $0x10] sm:$0xff]
    %v4426 = vld [vmem:[#allocation3 + $0x18] sm:$0xff]
    %v4427 = vld [vmem:[#allocation3 + $0x20] sm:$0xff]
    %v4429 = vperm.slane %v4422, 0
    %v4430 = vperm.slane %v4422, 1
    %v4431 = vperm.slane %v4422, 2
    %v4432 = vperm.slane %v4422, 3
    %4433 = vrot.lane.b32.xlu0 %v4429, 121
    %v4434 = vpop.permute.xlu0 %4433
    %4435 = vrot.lane.b32.xlu0 %v4430, 121
    %v4436 = vpop.permute.xlu0 %4435
    %4437 = vrot.lane.b32.xlu0 %v4431, 121
    %v4438 = vpop.permute.xlu0 %4437
    %4439 = vrot.lane.b32.xlu0 %v4432, 121
    %v4440 = vpop.permute.xlu0 %4439
    %v4441 = vsel %vm791, %v4434, %v4436
    %v4442 = vsel %vm791, %v4436, %v4438
    %v4443 = vsel %vm791, %v4438, %v4440
    %v4449 = vmul.f32 %v4423, %v4434
    %v4450 = vmul.f32 %v4424, %v4441
    %v4451 = vmul.f32 %v4425, %v4442
    %v4452 = vmul.f32 %v4426, %v4443
    %v4453 = vmul.f32 %v4427, %v4440
    %4459 = vrot.lane.b32.xlu0 %v4449, 7
    %v4460 = vpop.permute.xlu0 %4459
    %4461 = vrot.lane.b32.xlu0 %v4450, 7
    %v4462 = vpop.permute.xlu0 %4461
    %4463 = vrot.lane.b32.xlu0 %v4451, 7
    %v4464 = vpop.permute.xlu0 %4463
    %4465 = vrot.lane.b32.xlu0 %v4452, 7
    %v4466 = vpop.permute.xlu0 %4465
    %4467 = vrot.lane.b32.xlu0 %v4453, 7
    %v4468 = vpop.permute.xlu0 %4467
    %v4469 = vsel %vm825, %v4460, %v4462
    %v4470 = vsel %vm825, %v4462, %v4464
    %v4471 = vsel %vm825, %v4464, %v4466
    %v4472 = vsel %vm825, %v4466, %v4468
    %4477 = vst [vmem:[#allocation4 + $0x2c0] sm:$0xff] %v4469
    %4478 = vst [vmem:[#allocation4 + $0x2c8] sm:$0xff] %v4470
    %4479 = vst [vmem:[#allocation4 + $0x2d0] sm:$0xff] %v4471
    %4480 = vst [vmem:[#allocation4 + $0x2d8] sm:$0xff] %v4472
    %v4481 = vld [vmem:[%s838] ss:$8 sm:$0xf]
    %v4482 = vld [vmem:[#allocation3] sm:$0xff]
    %v4483 = vld [vmem:[#allocation3 + $0x8] sm:$0xff]
    %v4484 = vld [vmem:[#allocation3 + $0x10] sm:$0xff]
    %v4485 = vld [vmem:[#allocation3 + $0x18] sm:$0xff]
    %v4486 = vld [vmem:[#allocation3 + $0x20] sm:$0xff]
    %v4488 = vperm.slane %v4481, 0
    %v4489 = vperm.slane %v4481, 1
    %v4490 = vperm.slane %v4481, 2
    %v4491 = vperm.slane %v4481, 3
    %4492 = vrot.lane.b32.xlu0 %v4488, 127
    %v4493 = vpop.permute.xlu0 %4492
    %4494 = vrot.lane.b32.xlu0 %v4489, 127
    %v4495 = vpop.permute.xlu0 %4494
    %4496 = vrot.lane.b32.xlu0 %v4490, 127
    %v4497 = vpop.permute.xlu0 %4496
    %4498 = vrot.lane.b32.xlu0 %v4491, 127
    %v4499 = vpop.permute.xlu0 %4498
    %v4500 = vsel %vm858, %v4493, %v4495
    %v4501 = vsel %vm858, %v4495, %v4497
    %v4502 = vsel %vm858, %v4497, %v4499
    %v4508 = vmul.f32 %v4482, %v4493
    %v4509 = vmul.f32 %v4483, %v4500
    %v4510 = vmul.f32 %v4484, %v4501
    %v4511 = vmul.f32 %v4485, %v4502
    %v4512 = vmul.f32 %v4486, %v4499
    %4518 = vrot.lane.b32.xlu0 %v4508, 1
    %v4519 = vpop.permute.xlu0 %4518
    %4520 = vrot.lane.b32.xlu0 %v4509, 1
    %v4521 = vpop.permute.xlu0 %4520
    %4522 = vrot.lane.b32.xlu0 %v4510, 1
    %v4523 = vpop.permute.xlu0 %4522
    %4524 = vrot.lane.b32.xlu0 %v4511, 1
    %v4525 = vpop.permute.xlu0 %4524
    %4526 = vrot.lane.b32.xlu0 %v4512, 1
    %v4527 = vpop.permute.xlu0 %4526
    %v4528 = vsel %vm887, %v4519, %v4521
    %v4529 = vsel %vm887, %v4521, %v4523
    %v4530 = vsel %vm887, %v4523, %v4525
    %v4531 = vsel %vm887, %v4525, %v4527
    %4536 = vst [vmem:[#allocation4 + $0x300] sm:$0xff] %v4528
    %4537 = vst [vmem:[#allocation4 + $0x308] sm:$0xff] %v4529
    %4538 = vst [vmem:[#allocation4 + $0x310] sm:$0xff] %v4530
    %4539 = vst [vmem:[#allocation4 + $0x318] sm:$0xff] %v4531
    %v4540 = vld [vmem:[%s900] ss:$8 sm:$0xf]
    %v4541 = vld [vmem:[#allocation3 + $0x8] sm:$0xff]
    %v4542 = vld [vmem:[#allocation3 + $0x10] sm:$0xff]
    %v4543 = vld [vmem:[#allocation3 + $0x18] sm:$0xff]
    %v4544 = vld [vmem:[#allocation3 + $0x20] sm:$0xff]
    %v4546 = vperm.slane %v4540, 0
    %v4547 = vperm.slane %v4540, 1
    %v4548 = vperm.slane %v4540, 2
    %v4549 = vperm.slane %v4540, 3
    %v4554 = vmul.f32 %v4541, %v4546
    %v4555 = vmul.f32 %v4542, %v4547
    %v4556 = vmul.f32 %v4543, %v4548
    %v4557 = vmul.f32 %v4544, %v4549
    %4558 = vst [vmem:[#allocation4 + $0x340] sm:$0xff] %v4554
    %4559 = vst [vmem:[#allocation4 + $0x348] sm:$0xff] %v4555
    %4560 = vst [vmem:[#allocation4 + $0x350] sm:$0xff] %v4556
    %4561 = vst [vmem:[#allocation4 + $0x358] sm:$0xff] %v4557
    %v4562 = vld [vmem:[%s935] ss:$8 sm:$0xf]
    %v4563 = vld [vmem:[#allocation3 + $0x8] sm:$0xff]
    %v4564 = vld [vmem:[#allocation3 + $0x10] sm:$0xff]
    %v4565 = vld [vmem:[#allocation3 + $0x18] sm:$0xff]
    %v4566 = vld [vmem:[#allocation3 + $0x20] sm:$0xff]
    %v4567 = vld [vmem:[#allocation3 + $0x28] sm:$0xff]
    %v4569 = vperm.slane %v4562, 0
    %v4570 = vperm.slane %v4562, 1
    %v4571 = vperm.slane %v4562, 2
    %v4572 = vperm.slane %v4562, 3
    %4573 = vrot.lane.b32.xlu0 %v4569, 1
    %v4574 = vpop.permute.xlu0 %4573
    %4575 = vrot.lane.b32.xlu0 %v4570, 1
    %v4576 = vpop.permute.xlu0 %4575
    %4577 = vrot.lane.b32.xlu0 %v4571, 1
    %v4578 = vpop.permute.xlu0 %4577
    %4579 = vrot.lane.b32.xlu0 %v4572, 1
    %v4580 = vpop.permute.xlu0 %4579
    %v4581 = vsel %vm887, %v4574, %v4576
    %v4582 = vsel %vm887, %v4576, %v4578
    %v4583 = vsel %vm887, %v4578, %v4580
    %v4589 = vmul.f32 %v4563, %v4574
    %v4590 = vmul.f32 %v4564, %v4581
    %v4591 = vmul.f32 %v4565, %v4582
    %v4592 = vmul.f32 %v4566, %v4583
    %v4593 = vmul.f32 %v4567, %v4580
    %4599 = vrot.lane.b32.xlu0 %v4589, 127
    %v4600 = vpop.permute.xlu0 %4599
    %4601 = vrot.lane.b32.xlu0 %v4590, 127
    %v4602 = vpop.permute.xlu0 %4601
    %4603 = vrot.lane.b32.xlu0 %v4591, 127
    %v4604 = vpop.permute.xlu0 %4603
    %4605 = vrot.lane.b32.xlu0 %v4592, 127
    %v4606 = vpop.permute.xlu0 %4605
    %4607 = vrot.lane.b32.xlu0 %v4593, 127
    %v4608 = vpop.permute.xlu0 %4607
    %v4609 = vsel %vm858, %v4600, %v4602
    %v4610 = vsel %vm858, %v4602, %v4604
    %v4611 = vsel %vm858, %v4604, %v4606
    %v4612 = vsel %vm858, %v4606, %v4608
    %4617 = vst [vmem:[#allocation4 + $0x380] sm:$0xff] %v4609
    %4618 = vst [vmem:[#allocation4 + $0x388] sm:$0xff] %v4610
    %4619 = vst [vmem:[#allocation4 + $0x390] sm:$0xff] %v4611
    %4620 = vst [vmem:[#allocation4 + $0x398] sm:$0xff] %v4612
    %v4621 = vld [vmem:[%s995] ss:$8 sm:$0xf]
    %v4622 = vld [vmem:[#allocation3 + $0x8] sm:$0xff]
    %v4623 = vld [vmem:[#allocation3 + $0x10] sm:$0xff]
    %v4624 = vld [vmem:[#allocation3 + $0x18] sm:$0xff]
    %v4625 = vld [vmem:[#allocation3 + $0x20] sm:$0xff]
    %v4626 = vld [vmem:[#allocation3 + $0x28] sm:$0xff]
    %v4628 = vperm.slane %v4621, 0
    %v4629 = vperm.slane %v4621, 1
    %v4630 = vperm.slane %v4621, 2
    %v4631 = vperm.slane %v4621, 3
    %4632 = vrot.lane.b32.xlu0 %v4628, 7
    %v4633 = vpop.permute.xlu0 %4632
    %4634 = vrot.lane.b32.xlu0 %v4629, 7
    %v4635 = vpop.permute.xlu0 %4634
    %4636 = vrot.lane.b32.xlu0 %v4630, 7
    %v4637 = vpop.permute.xlu0 %4636
    %4638 = vrot.lane.b32.xlu0 %v4631, 7
    %v4639 = vpop.permute.xlu0 %4638
    %v4640 = vsel %vm825, %v4633, %v4635
    %v4641 = vsel %vm825, %v4635, %v4637
    %v4642 = vsel %vm825, %v4637, %v4639
    %v4648 = vmul.f32 %v4622, %v4633
    %v4649 = vmul.f32 %v4623, %v4640
    %v4650 = vmul.f32 %v4624, %v4641
    %v4651 = vmul.f32 %v4625, %v4642
    %v4652 = vmul.f32 %v4626, %v4639
    %4658 = vrot.lane.b32.xlu0 %v4648, 121
    %v4659 = vpop.permute.xlu0 %4658
    %4660 = vrot.lane.b32.xlu0 %v4649, 121
    %v4661 = vpop.permute.xlu0 %4660
    %4662 = vrot.lane.b32.xlu0 %v4650, 121
    %v4663 = vpop.permute.xlu0 %4662
    %4664 = vrot.lane.b32.xlu0 %v4651, 121
    %v4665 = vpop.permute.xlu0 %4664
    %4666 = vrot.lane.b32.xlu0 %v4652, 121
    %v4667 = vpop.permute.xlu0 %4666
    %v4668 = vsel %vm791, %v4659, %v4661
    %v4669 = vsel %vm791, %v4661, %v4663
    %v4670 = vsel %vm791, %v4663, %v4665
    %v4671 = vsel %vm791, %v4665, %v4667
    %4676 = vst [vmem:[#allocation4 + $0x3c0] sm:$0xff] %v4668
    %4677 = vst [vmem:[#allocation4 + $0x3c8] sm:$0xff] %v4669
    %4678 = vst [vmem:[#allocation4 + $0x3d0] sm:$0xff] %v4670
    %4679 = vst [vmem:[#allocation4 + $0x3d8] sm:$0xff] %v4671
    %v4680 = vld [vmem:[%s1060] ss:$8 sm:$0xf]
    %v4681 = vld [vmem:[#allocation3 + $0x8] sm:$0xff]
    %v4682 = vld [vmem:[#allocation3 + $0x10] sm:$0xff]
    %v4683 = vld [vmem:[#allocation3 + $0x18] sm:$0xff]
    %v4684 = vld [vmem:[#allocation3 + $0x20] sm:$0xff]
    %v4685 = vld [vmem:[#allocation3 + $0x28] sm:$0xff]
    %v4687 = vperm.slane %v4680, 0
    %v4688 = vperm.slane %v4680, 1
    %v4689 = vperm.slane %v4680, 2
    %v4690 = vperm.slane %v4680, 3
    %4691 = vrot.lane.b32.xlu0 %v4687, 8
    %v4692 = vpop.permute.xlu0 %4691
    %4693 = vrot.lane.b32.xlu0 %v4688, 8
    %v4694 = vpop.permute.xlu0 %4693
    %4695 = vrot.lane.b32.xlu0 %v4689, 8
    %v4696 = vpop.permute.xlu0 %4695
    %4697 = vrot.lane.b32.xlu0 %v4690, 8
    %v4698 = vpop.permute.xlu0 %4697
    %v4699 = vsel %vm758, %v4692, %v4694
    %v4700 = vsel %vm758, %v4694, %v4696
    %v4701 = vsel %vm758, %v4696, %v4698
    %v4707 = vmul.f32 %v4681, %v4692
    %v4708 = vmul.f32 %v4682, %v4699
    %v4709 = vmul.f32 %v4683, %v4700
    %v4710 = vmul.f32 %v4684, %v4701
    %v4711 = vmul.f32 %v4685, %v4698
    %4717 = vrot.lane.b32.xlu0 %v4707, 120
    %v4718 = vpop.permute.xlu0 %4717
    %4719 = vrot.lane.b32.xlu0 %v4708, 120
    %v4720 = vpop.permute.xlu0 %4719
    %4721 = vrot.lane.b32.xlu0 %v4709, 120
    %v4722 = vpop.permute.xlu0 %4721
    %4723 = vrot.lane.b32.xlu0 %v4710, 120
    %v4724 = vpop.permute.xlu0 %4723
    %4725 = vrot.lane.b32.xlu0 %v4711, 120
    %v4726 = vpop.permute.xlu0 %4725
    %v4727 = vsel %vm729, %v4718, %v4720
    %v4728 = vsel %vm729, %v4720, %v4722
    %v4729 = vsel %vm729, %v4722, %v4724
    %v4730 = vsel %vm729, %v4724, %v4726
    %4735 = vst [vmem:[#allocation4 + $0x400] sm:$0xff] %v4727
    %4736 = vst [vmem:[#allocation4 + $0x408] sm:$0xff] %v4728
    %4737 = vst [vmem:[#allocation4 + $0x410] sm:$0xff] %v4729
    %4738 = vst [vmem:[#allocation4 + $0x418] sm:$0xff] %v4730
    %v4739 = vld [vmem:[%s1120] ss:$8 sm:$0xf]
    %v4740 = vld [vmem:[#allocation3 + $0x8] sm:$0xff]
    %v4741 = vld [vmem:[#allocation3 + $0x10] sm:$0xff]
    %v4742 = vld [vmem:[#allocation3 + $0x18] sm:$0xff]
    %v4743 = vld [vmem:[#allocation3 + $0x20] sm:$0xff]
    %v4744 = vld [vmem:[#allocation3 + $0x28] sm:$0xff]
    %v4746 = vperm.slane %v4739, 0
    %v4747 = vperm.slane %v4739, 1
    %v4748 = vperm.slane %v4739, 2
    %v4749 = vperm.slane %v4739, 3
    %4750 = vrot.lane.b32.xlu0 %v4746, 9
    %v4751 = vpop.permute.xlu0 %4750
    %4752 = vrot.lane.b32.xlu0 %v4747, 9
    %v4753 = vpop.permute.xlu0 %4752
    %4754 = vrot.lane.b32.xlu0 %v4748, 9
    %v4755 = vpop.permute.xlu0 %4754
    %4756 = vrot.lane.b32.xlu0 %v4749, 9
    %v4757 = vpop.permute.xlu0 %4756
    %v4758 = vsel %vm696, %v4751, %v4753
    %v4759 = vsel %vm696, %v4753, %v4755
    %v4760 = vsel %vm696, %v4755, %v4757
    %v4766 = vmul.f32 %v4740, %v4751
    %v4767 = vmul.f32 %v4741, %v4758
    %v4768 = vmul.f32 %v4742, %v4759
    %v4769 = vmul.f32 %v4743, %v4760
    %v4770 = vmul.f32 %v4744, %v4757
    %4776 = vrot.lane.b32.xlu0 %v4766, 119
    %v4777 = vpop.permute.xlu0 %4776
    %4778 = vrot.lane.b32.xlu0 %v4767, 119
    %v4779 = vpop.permute.xlu0 %4778
    %4780 = vrot.lane.b32.xlu0 %v4768, 119
    %v4781 = vpop.permute.xlu0 %4780
    %4782 = vrot.lane.b32.xlu0 %v4769, 119
    %v4783 = vpop.permute.xlu0 %4782
    %4784 = vrot.lane.b32.xlu0 %v4770, 119
    %v4785 = vpop.permute.xlu0 %4784
    %v4786 = vsel %vm662, %v4777, %v4779
    %v4787 = vsel %vm662, %v4779, %v4781
    %v4788 = vsel %vm662, %v4781, %v4783
    %v4789 = vsel %vm662, %v4783, %v4785
    %4794 = vst [vmem:[#allocation4 + $0x440] sm:$0xff] %v4786
    %4795 = vst [vmem:[#allocation4 + $0x448] sm:$0xff] %v4787
    %4796 = vst [vmem:[#allocation4 + $0x450] sm:$0xff] %v4788
    %4797 = vst [vmem:[#allocation4 + $0x458] sm:$0xff] %v4789
    %v4798 = vld [vmem:[%s1185] ss:$8 sm:$0xf]
    %v4799 = vld [vmem:[#allocation3 + $0x8] sm:$0xff]
    %v4800 = vld [vmem:[#allocation3 + $0x10] sm:$0xff]
    %v4801 = vld [vmem:[#allocation3 + $0x18] sm:$0xff]
    %v4802 = vld [vmem:[#allocation3 + $0x20] sm:$0xff]
    %v4803 = vld [vmem:[#allocation3 + $0x28] sm:$0xff]
    %v4805 = vperm.slane %v4798, 0
    %v4806 = vperm.slane %v4798, 1
    %v4807 = vperm.slane %v4798, 2
    %v4808 = vperm.slane %v4798, 3
    %4809 = vrot.lane.b32.xlu0 %v4805, 55
    %v4810 = vpop.permute.xlu0 %4809
    %4811 = vrot.lane.b32.xlu0 %v4806, 55
    %v4812 = vpop.permute.xlu0 %4811
    %4813 = vrot.lane.b32.xlu0 %v4807, 55
    %v4814 = vpop.permute.xlu0 %4813
    %4815 = vrot.lane.b32.xlu0 %v4808, 55
    %v4816 = vpop.permute.xlu0 %4815
    %v4817 = vsel %vm93, %v4810, %v4812
    %v4818 = vsel %vm93, %v4812, %v4814
    %v4819 = vsel %vm93, %v4814, %v4816
    %v4825 = vmul.f32 %v4799, %v4810
    %v4826 = vmul.f32 %v4800, %v4817
    %v4827 = vmul.f32 %v4801, %v4818
    %v4828 = vmul.f32 %v4802, %v4819
    %v4829 = vmul.f32 %v4803, %v4816
    %4835 = vrot.lane.b32.xlu0 %v4825, 73
    %v4836 = vpop.permute.xlu0 %4835
    %4837 = vrot.lane.b32.xlu0 %v4826, 73
    %v4838 = vpop.permute.xlu0 %4837
    %4839 = vrot.lane.b32.xlu0 %v4827, 73
    %v4840 = vpop.permute.xlu0 %4839
    %4841 = vrot.lane.b32.xlu0 %v4828, 73
    %v4842 = vpop.permute.xlu0 %4841
    %4843 = vrot.lane.b32.xlu0 %v4829, 73
    %v4844 = vpop.permute.xlu0 %4843
    %v4845 = vsel %vm122, %v4836, %v4838
    %v4846 = vsel %vm122, %v4838, %v4840
    %v4847 = vsel %vm122, %v4840, %v4842
    %v4848 = vsel %vm122, %v4842, %v4844
    %4853 = vst [vmem:[#allocation4 + $0x480] sm:$0xff] %v4845
    %4854 = vst [vmem:[#allocation4 + $0x488] sm:$0xff] %v4846
    %4855 = vst [vmem:[#allocation4 + $0x490] sm:$0xff] %v4847
    %4856 = vst [vmem:[#allocation4 + $0x498] sm:$0xff] %v4848
    %v4857 = vld [vmem:[%s1245] ss:$8 sm:$0xf]
    %v4858 = vld [vmem:[#allocation3 + $0x8] sm:$0xff]
    %v4859 = vld [vmem:[#allocation3 + $0x10] sm:$0xff]
    %v4860 = vld [vmem:[#allocation3 + $0x18] sm:$0xff]
    %v4861 = vld [vmem:[#allocation3 + $0x20] sm:$0xff]
    %v4862 = vld [vmem:[#allocation3 + $0x28] sm:$0xff]
    %v4864 = vperm.slane %v4857, 0
    %v4865 = vperm.slane %v4857, 1
    %v4866 = vperm.slane %v4857, 2
    %v4867 = vperm.slane %v4857, 3
    %4868 = vrot.lane.b32.xlu0 %v4864, 56
    %v4869 = vpop.permute.xlu0 %4868
    %4870 = vrot.lane.b32.xlu0 %v4865, 56
    %v4871 = vpop.permute.xlu0 %4870
    %4872 = vrot.lane.b32.xlu0 %v4866, 56
    %v4873 = vpop.permute.xlu0 %4872
    %4874 = vrot.lane.b32.xlu0 %v4867, 56
    %v4875 = vpop.permute.xlu0 %4874
    %v4876 = vsel %vm155, %v4869, %v4871
    %v4877 = vsel %vm155, %v4871, %v4873
    %v4878 = vsel %vm155, %v4873, %v4875
    %v4884 = vmul.f32 %v4858, %v4869
    %v4885 = vmul.f32 %v4859, %v4876
    %v4886 = vmul.f32 %v4860, %v4877
    %v4887 = vmul.f32 %v4861, %v4878
    %v4888 = vmul.f32 %v4862, %v4875
    %4894 = vrot.lane.b32.xlu0 %v4884, 72
    %v4895 = vpop.permute.xlu0 %4894
    %4896 = vrot.lane.b32.xlu0 %v4885, 72
    %v4897 = vpop.permute.xlu0 %4896
    %4898 = vrot.lane.b32.xlu0 %v4886, 72
    %v4899 = vpop.permute.xlu0 %4898
    %4900 = vrot.lane.b32.xlu0 %v4887, 72
    %v4901 = vpop.permute.xlu0 %4900
    %4902 = vrot.lane.b32.xlu0 %v4888, 72
    %v4903 = vpop.permute.xlu0 %4902
    %v4904 = vsel %vm189, %v4895, %v4897
    %v4905 = vsel %vm189, %v4897, %v4899
    %v4906 = vsel %vm189, %v4899, %v4901
    %v4907 = vsel %vm189, %v4901, %v4903
    %4912 = vst [vmem:[#allocation4 + $0x4c0] sm:$0xff] %v4904
    %4913 = vst [vmem:[#allocation4 + $0x4c8] sm:$0xff] %v4905
    %4914 = vst [vmem:[#allocation4 + $0x4d0] sm:$0xff] %v4906
    %4915 = vst [vmem:[#allocation4 + $0x4d8] sm:$0xff] %v4907
    %v4916 = vld [vmem:[%s1310] ss:$8 sm:$0xf]
    %v4917 = vld [vmem:[#allocation3 + $0x8] sm:$0xff]
    %v4918 = vld [vmem:[#allocation3 + $0x10] sm:$0xff]
    %v4919 = vld [vmem:[#allocation3 + $0x18] sm:$0xff]
    %v4920 = vld [vmem:[#allocation3 + $0x20] sm:$0xff]
    %v4921 = vld [vmem:[#allocation3 + $0x28] sm:$0xff]
    %v4923 = vperm.slane %v4916, 0
    %v4924 = vperm.slane %v4916, 1
    %v4925 = vperm.slane %v4916, 2
    %v4926 = vperm.slane %v4916, 3
    %4927 = vrot.lane.b32.xlu0 %v4923, 57
    %v4928 = vpop.permute.xlu0 %4927
    %4929 = vrot.lane.b32.xlu0 %v4924, 57
    %v4930 = vpop.permute.xlu0 %4929
    %4931 = vrot.lane.b32.xlu0 %v4925, 57
    %v4932 = vpop.permute.xlu0 %4931
    %4933 = vrot.lane.b32.xlu0 %v4926, 57
    %v4934 = vpop.permute.xlu0 %4933
    %v4935 = vsel %vm222, %v4928, %v4930
    %v4936 = vsel %vm222, %v4930, %v4932
    %v4937 = vsel %vm222, %v4932, %v4934
    %v4943 = vmul.f32 %v4917, %v4928
    %v4944 = vmul.f32 %v4918, %v4935
    %v4945 = vmul.f32 %v4919, %v4936
    %v4946 = vmul.f32 %v4920, %v4937
    %v4947 = vmul.f32 %v4921, %v4934
    %4953 = vrot.lane.b32.xlu0 %v4943, 71
    %v4954 = vpop.permute.xlu0 %4953
    %4955 = vrot.lane.b32.xlu0 %v4944, 71
    %v4956 = vpop.permute.xlu0 %4955
    %4957 = vrot.lane.b32.xlu0 %v4945, 71
    %v4958 = vpop.permute.xlu0 %4957
    %4959 = vrot.lane.b32.xlu0 %v4946, 71
    %v4960 = vpop.permute.xlu0 %4959
    %4961 = vrot.lane.b32.xlu0 %v4947, 71
    %v4962 = vpop.permute.xlu0 %4961
    %v4963 = vsel %vm251, %v4954, %v4956
    %v4964 = vsel %vm251, %v4956, %v4958
    %v4965 = vsel %vm251, %v4958, %v4960
    %v4966 = vsel %vm251, %v4960, %v4962
    %4971 = vst [vmem:[#allocation4 + $0x500] sm:$0xff] %v4963
    %4972 = vst [vmem:[#allocation4 + $0x508] sm:$0xff] %v4964
    %4973 = vst [vmem:[#allocation4 + $0x510] sm:$0xff] %v4965
    %4974 = vst [vmem:[#allocation4 + $0x518] sm:$0xff] %v4966
    %v4975 = vld [vmem:[%s1370] ss:$8 sm:$0xf]
    %v4976 = vld [vmem:[#allocation3 + $0x8] sm:$0xff]
    %v4977 = vld [vmem:[#allocation3 + $0x10] sm:$0xff]
    %v4978 = vld [vmem:[#allocation3 + $0x18] sm:$0xff]
    %v4979 = vld [vmem:[#allocation3 + $0x20] sm:$0xff]
    %v4980 = vld [vmem:[#allocation3 + $0x28] sm:$0xff]
    %v4982 = vperm.slane %v4975, 0
    %v4983 = vperm.slane %v4975, 1
    %v4984 = vperm.slane %v4975, 2
    %v4985 = vperm.slane %v4975, 3
    %4986 = vrot.lane.b32.xlu0 %v4982, 63
    %v4987 = vpop.permute.xlu0 %4986
    %4988 = vrot.lane.b32.xlu0 %v4983, 63
    %v4989 = vpop.permute.xlu0 %4988
    %4990 = vrot.lane.b32.xlu0 %v4984, 63
    %v4991 = vpop.permute.xlu0 %4990
    %4992 = vrot.lane.b32.xlu0 %v4985, 63
    %v4993 = vpop.permute.xlu0 %4992
    %v4994 = vsel %vm284, %v4987, %v4989
    %v4995 = vsel %vm284, %v4989, %v4991
    %v4996 = vsel %vm284, %v4991, %v4993
    %v5002 = vmul.f32 %v4976, %v4987
    %v5003 = vmul.f32 %v4977, %v4994
    %v5004 = vmul.f32 %v4978, %v4995
    %v5005 = vmul.f32 %v4979, %v4996
    %v5006 = vmul.f32 %v4980, %v4993
    %5012 = vrot.lane.b32.xlu0 %v5002, 65
    %v5013 = vpop.permute.xlu0 %5012
    %5014 = vrot.lane.b32.xlu0 %v5003, 65
    %v5015 = vpop.permute.xlu0 %5014
    %5016 = vrot.lane.b32.xlu0 %v5004, 65
    %v5017 = vpop.permute.xlu0 %5016
    %5018 = vrot.lane.b32.xlu0 %v5005, 65
    %v5019 = vpop.permute.xlu0 %5018
    %5020 = vrot.lane.b32.xlu0 %v5006, 65
    %v5021 = vpop.permute.xlu0 %5020
    %v5022 = vsel %vm318, %v5013, %v5015
    %v5023 = vsel %vm318, %v5015, %v5017
    %v5024 = vsel %vm318, %v5017, %v5019
    %v5025 = vsel %vm318, %v5019, %v5021
    %5030 = vst [vmem:[#allocation4 + $0x540] sm:$0xff] %v5022
    %5031 = vst [vmem:[#allocation4 + $0x548] sm:$0xff] %v5023
    %5032 = vst [vmem:[#allocation4 + $0x550] sm:$0xff] %v5024
    %5033 = vst [vmem:[#allocation4 + $0x558] sm:$0xff] %v5025
    %v5034 = vld [vmem:[%s1435] ss:$8 sm:$0xf]
    %v5035 = vld [vmem:[#allocation3 + $0x8] sm:$0xff]
    %v5036 = vld [vmem:[#allocation3 + $0x10] sm:$0xff]
    %v5037 = vld [vmem:[#allocation3 + $0x18] sm:$0xff]
    %v5038 = vld [vmem:[#allocation3 + $0x20] sm:$0xff]
    %v5039 = vld [vmem:[#allocation3 + $0x28] sm:$0xff]
    %v5041 = vperm.slane %v5034, 0
    %v5042 = vperm.slane %v5034, 1
    %v5043 = vperm.slane %v5034, 2
    %v5044 = vperm.slane %v5034, 3
    %5045 = vrot.lane.b32.xlu0 %v5041, 64
    %v5046 = vpop.permute.xlu0 %5045
    %5047 = vrot.lane.b32.xlu0 %v5042, 64
    %v5048 = vpop.permute.xlu0 %5047
    %5049 = vrot.lane.b32.xlu0 %v5043, 64
    %v5050 = vpop.permute.xlu0 %5049
    %5051 = vrot.lane.b32.xlu0 %v5044, 64
    %v5052 = vpop.permute.xlu0 %5051
    %v5053 = vsel %vm351, %v5046, %v5048
    %v5054 = vsel %vm351, %v5048, %v5050
    %v5055 = vsel %vm351, %v5050, %v5052
    %v5061 = vmul.f32 %v5035, %v5046
    %v5062 = vmul.f32 %v5036, %v5053
    %v5063 = vmul.f32 %v5037, %v5054
    %v5064 = vmul.f32 %v5038, %v5055
    %v5065 = vmul.f32 %v5039, %v5052
    %5071 = vrot.lane.b32.xlu0 %v5061, 64
    %v5072 = vpop.permute.xlu0 %5071
    %5073 = vrot.lane.b32.xlu0 %v5062, 64
    %v5074 = vpop.permute.xlu0 %5073
    %5075 = vrot.lane.b32.xlu0 %v5063, 64
    %v5076 = vpop.permute.xlu0 %5075
    %5077 = vrot.lane.b32.xlu0 %v5064, 64
    %v5078 = vpop.permute.xlu0 %5077
    %5079 = vrot.lane.b32.xlu0 %v5065, 64
    %v5080 = vpop.permute.xlu0 %5079
    %v5081 = vsel %vm351, %v5072, %v5074
    %v5082 = vsel %vm351, %v5074, %v5076
    %v5083 = vsel %vm351, %v5076, %v5078
    %v5084 = vsel %vm351, %v5078, %v5080
    %5089 = vst [vmem:[#allocation4 + $0x580] sm:$0xff] %v5081
    %5090 = vst [vmem:[#allocation4 + $0x588] sm:$0xff] %v5082
    %5091 = vst [vmem:[#allocation4 + $0x590] sm:$0xff] %v5083
    %5092 = vst [vmem:[#allocation4 + $0x598] sm:$0xff] %v5084
    %v5093 = vld [vmem:[%s1495] ss:$8 sm:$0xf]
    %v5094 = vld [vmem:[#allocation3 + $0x8] sm:$0xff]
    %v5095 = vld [vmem:[#allocation3 + $0x10] sm:$0xff]
    %v5096 = vld [vmem:[#allocation3 + $0x18] sm:$0xff]
    %v5097 = vld [vmem:[#allocation3 + $0x20] sm:$0xff]
    %v5098 = vld [vmem:[#allocation3 + $0x28] sm:$0xff]
    %v5100 = vperm.slane %v5093, 0
    %v5101 = vperm.slane %v5093, 1
    %v5102 = vperm.slane %v5093, 2
    %v5103 = vperm.slane %v5093, 3
    %5104 = vrot.lane.b32.xlu0 %v5100, 65
    %v5105 = vpop.permute.xlu0 %5104
    %5106 = vrot.lane.b32.xlu0 %v5101, 65
    %v5107 = vpop.permute.xlu0 %5106
    %5108 = vrot.lane.b32.xlu0 %v5102, 65
    %v5109 = vpop.permute.xlu0 %5108
    %5110 = vrot.lane.b32.xlu0 %v5103, 65
    %v5111 = vpop.permute.xlu0 %5110
    %v5112 = vsel %vm318, %v5105, %v5107
    %v5113 = vsel %vm318, %v5107, %v5109
    %v5114 = vsel %vm318, %v5109, %v5111
    %v5120 = vmul.f32 %v5094, %v5105
    %v5121 = vmul.f32 %v5095, %v5112
    %v5122 = vmul.f32 %v5096, %v5113
    %v5123 = vmul.f32 %v5097, %v5114
    %v5124 = vmul.f32 %v5098, %v5111
    %5130 = vrot.lane.b32.xlu0 %v5120, 63
    %v5131 = vpop.permute.xlu0 %5130
    %5132 = vrot.lane.b32.xlu0 %v5121, 63
    %v5133 = vpop.permute.xlu0 %5132
    %5134 = vrot.lane.b32.xlu0 %v5122, 63
    %v5135 = vpop.permute.xlu0 %5134
    %5136 = vrot.lane.b32.xlu0 %v5123, 63
    %v5137 = vpop.permute.xlu0 %5136
    %5138 = vrot.lane.b32.xlu0 %v5124, 63
    %v5139 = vpop.permute.xlu0 %5138
    %v5140 = vsel %vm284, %v5131, %v5133
    %v5141 = vsel %vm284, %v5133, %v5135
    %v5142 = vsel %vm284, %v5135, %v5137
    %v5143 = vsel %vm284, %v5137, %v5139
    %5148 = vst [vmem:[#allocation4 + $0x5c0] sm:$0xff] %v5140
    %5149 = vst [vmem:[#allocation4 + $0x5c8] sm:$0xff] %v5141
    %5150 = vst [vmem:[#allocation4 + $0x5d0] sm:$0xff] %v5142
    %5151 = vst [vmem:[#allocation4 + $0x5d8] sm:$0xff] %v5143
    %v5152 = vld [vmem:[%s1560] ss:$8 sm:$0xf]
    %v5153 = vld [vmem:[#allocation3 + $0x8] sm:$0xff]
    %v5154 = vld [vmem:[#allocation3 + $0x10] sm:$0xff]
    %v5155 = vld [vmem:[#allocation3 + $0x18] sm:$0xff]
    %v5156 = vld [vmem:[#allocation3 + $0x20] sm:$0xff]
    %v5157 = vld [vmem:[#allocation3 + $0x28] sm:$0xff]
    %v5159 = vperm.slane %v5152, 0
    %v5160 = vperm.slane %v5152, 1
    %v5161 = vperm.slane %v5152, 2
    %v5162 = vperm.slane %v5152, 3
    %5163 = vrot.lane.b32.xlu0 %v5159, 71
    %v5164 = vpop.permute.xlu0 %5163
    %5165 = vrot.lane.b32.xlu0 %v5160, 71
    %v5166 = vpop.permute.xlu0 %5165
    %5167 = vrot.lane.b32.xlu0 %v5161, 71
    %v5168 = vpop.permute.xlu0 %5167
    %5169 = vrot.lane.b32.xlu0 %v5162, 71
    %v5170 = vpop.permute.xlu0 %5169
    %v5171 = vsel %vm251, %v5164, %v5166
    %v5172 = vsel %vm251, %v5166, %v5168
    %v5173 = vsel %vm251, %v5168, %v5170
    %v5179 = vmul.f32 %v5153, %v5164
    %v5180 = vmul.f32 %v5154, %v5171
    %v5181 = vmul.f32 %v5155, %v5172
    %v5182 = vmul.f32 %v5156, %v5173
    %v5183 = vmul.f32 %v5157, %v5170
    %5189 = vrot.lane.b32.xlu0 %v5179, 57
    %v5190 = vpop.permute.xlu0 %5189
    %5191 = vrot.lane.b32.xlu0 %v5180, 57
    %v5192 = vpop.permute.xlu0 %5191
    %5193 = vrot.lane.b32.xlu0 %v5181, 57
    %v5194 = vpop.permute.xlu0 %5193
    %5195 = vrot.lane.b32.xlu0 %v5182, 57
    %v5196 = vpop.permute.xlu0 %5195
    %5197 = vrot.lane.b32.xlu0 %v5183, 57
    %v5198 = vpop.permute.xlu0 %5197
    %v5199 = vsel %vm222, %v5190, %v5192
    %v5200 = vsel %vm222, %v5192, %v5194
    %v5201 = vsel %vm222, %v5194, %v5196
    %v5202 = vsel %vm222, %v5196, %v5198
    %5207 = vst [vmem:[#allocation4 + $0x600] sm:$0xff] %v5199
    %5208 = vst [vmem:[#allocation4 + $0x608] sm:$0xff] %v5200
    %5209 = vst [vmem:[#allocation4 + $0x610] sm:$0xff] %v5201
    %5210 = vst [vmem:[#allocation4 + $0x618] sm:$0xff] %v5202
    %v5211 = vld [vmem:[%s1620] ss:$8 sm:$0xf]
    %v5212 = vld [vmem:[#allocation3 + $0x8] sm:$0xff]
    %v5213 = vld [vmem:[#allocation3 + $0x10] sm:$0xff]
    %v5214 = vld [vmem:[#allocation3 + $0x18] sm:$0xff]
    %v5215 = vld [vmem:[#allocation3 + $0x20] sm:$0xff]
    %v5216 = vld [vmem:[#allocation3 + $0x28] sm:$0xff]
    %v5218 = vperm.slane %v5211, 0
    %v5219 = vperm.slane %v5211, 1
    %v5220 = vperm.slane %v5211, 2
    %v5221 = vperm.slane %v5211, 3
    %5222 = vrot.lane.b32.xlu0 %v5218, 72
    %v5223 = vpop.permute.xlu0 %5222
    %5224 = vrot.lane.b32.xlu0 %v5219, 72
    %v5225 = vpop.permute.xlu0 %5224
    %5226 = vrot.lane.b32.xlu0 %v5220, 72
    %v5227 = vpop.permute.xlu0 %5226
    %5228 = vrot.lane.b32.xlu0 %v5221, 72
    %v5229 = vpop.permute.xlu0 %5228
    %v5230 = vsel %vm189, %v5223, %v5225
    %v5231 = vsel %vm189, %v5225, %v5227
    %v5232 = vsel %vm189, %v5227, %v5229
    %v5238 = vmul.f32 %v5212, %v5223
    %v5239 = vmul.f32 %v5213, %v5230
    %v5240 = vmul.f32 %v5214, %v5231
    %v5241 = vmul.f32 %v5215, %v5232
    %v5242 = vmul.f32 %v5216, %v5229
    %5248 = vrot.lane.b32.xlu0 %v5238, 56
    %v5249 = vpop.permute.xlu0 %5248
    %5250 = vrot.lane.b32.xlu0 %v5239, 56
    %v5251 = vpop.permute.xlu0 %5250
    %5252 = vrot.lane.b32.xlu0 %v5240, 56
    %v5253 = vpop.permute.xlu0 %5252
    %5254 = vrot.lane.b32.xlu0 %v5241, 56
    %v5255 = vpop.permute.xlu0 %5254
    %5256 = vrot.lane.b32.xlu0 %v5242, 56
    %v5257 = vpop.permute.xlu0 %5256
    %v5258 = vsel %vm155, %v5249, %v5251
    %v5259 = vsel %vm155, %v5251, %v5253
    %v5260 = vsel %vm155, %v5253, %v5255
    %v5261 = vsel %vm155, %v5255, %v5257
    %5266 = vst [vmem:[#allocation4 + $0x640] sm:$0xff] %v5258
    %5267 = vst [vmem:[#allocation4 + $0x648] sm:$0xff] %v5259
    %5268 = vst [vmem:[#allocation4 + $0x650] sm:$0xff] %v5260
    %5269 = vst [vmem:[#allocation4 + $0x658] sm:$0xff] %v5261
    %v5270 = vld [vmem:[%s1685] ss:$8 sm:$0xf]
    %v5271 = vld [vmem:[#allocation3 + $0x8] sm:$0xff]
    %v5272 = vld [vmem:[#allocation3 + $0x10] sm:$0xff]
    %v5273 = vld [vmem:[#allocation3 + $0x18] sm:$0xff]
    %v5274 = vld [vmem:[#allocation3 + $0x20] sm:$0xff]
    %v5275 = vld [vmem:[#allocation3 + $0x28] sm:$0xff]
    %v5277 = vperm.slane %v5270, 0
    %v5278 = vperm.slane %v5270, 1
    %v5279 = vperm.slane %v5270, 2
    %v5280 = vperm.slane %v5270, 3
    %5281 = vrot.lane.b32.xlu0 %v5277, 73
    %v5282 = vpop.permute.xlu0 %5281
    %5283 = vrot.lane.b32.xlu0 %v5278, 73
    %v5284 = vpop.permute.xlu0 %5283
    %5285 = vrot.lane.b32.xlu0 %v5279, 73
    %v5286 = vpop.permute.xlu0 %5285
    %5287 = vrot.lane.b32.xlu0 %v5280, 73
    %v5288 = vpop.permute.xlu0 %5287
    %v5289 = vsel %vm122, %v5282, %v5284
    %v5290 = vsel %vm122, %v5284, %v5286
    %v5291 = vsel %vm122, %v5286, %v5288
    %v5297 = vmul.f32 %v5271, %v5282
    %v5298 = vmul.f32 %v5272, %v5289
    %v5299 = vmul.f32 %v5273, %v5290
    %v5300 = vmul.f32 %v5274, %v5291
    %v5301 = vmul.f32 %v5275, %v5288
    %5307 = vrot.lane.b32.xlu0 %v5297, 55
    %v5308 = vpop.permute.xlu0 %5307
    %5309 = vrot.lane.b32.xlu0 %v5298, 55
    %v5310 = vpop.permute.xlu0 %5309
    %5311 = vrot.lane.b32.xlu0 %v5299, 55
    %v5312 = vpop.permute.xlu0 %5311
    %5313 = vrot.lane.b32.xlu0 %v5300, 55
    %v5314 = vpop.permute.xlu0 %5313
    %5315 = vrot.lane.b32.xlu0 %v5301, 55
    %v5316 = vpop.permute.xlu0 %5315
    %v5317 = vsel %vm93, %v5308, %v5310
    %v5318 = vsel %vm93, %v5310, %v5312
    %v5319 = vsel %vm93, %v5312, %v5314
    %v5320 = vsel %vm93, %v5314, %v5316
    %5325 = vst [vmem:[#allocation4 + $0x680] sm:$0xff] %v5317
    %5326 = vst [vmem:[#allocation4 + $0x688] sm:$0xff] %v5318
    %5327 = vst [vmem:[#allocation4 + $0x690] sm:$0xff] %v5319
    %5328 = vst [vmem:[#allocation4 + $0x698] sm:$0xff] %v5320
    %v5329 = vld [vmem:[#allocation8] ss:$8 sm:$0xf]
    %v5330 = vld [vmem:[#allocation3 + $0x30] sm:$0xff]
    %v5331 = vld [vmem:[#allocation3 + $0x38] sm:$0xff]
    %v5332 = vld [vmem:[#allocation3 + $0x40] sm:$0xff]
    %v5333 = vld [vmem:[#allocation3 + $0x48] sm:$0xff]
    %v5334 = vld [vmem:[#allocation3 + $0x50] sm:$0xff]
    %v5336 = vperm.slane %v5329, 0
    %v5337 = vperm.slane %v5329, 1
    %v5338 = vperm.slane %v5329, 2
    %v5339 = vperm.slane %v5329, 3
    %5340 = vrot.lane.b32.xlu0 %v5336, 55
    %v5341 = vpop.permute.xlu0 %5340
    %5342 = vrot.lane.b32.xlu0 %v5337, 55
    %v5343 = vpop.permute.xlu0 %5342
    %5344 = vrot.lane.b32.xlu0 %v5338, 55
    %v5345 = vpop.permute.xlu0 %5344
    %5346 = vrot.lane.b32.xlu0 %v5339, 55
    %v5347 = vpop.permute.xlu0 %5346
    %v5348 = vsel %vm93, %v5341, %v5343
    %v5349 = vsel %vm93, %v5343, %v5345
    %v5350 = vsel %vm93, %v5345, %v5347
    %v5356 = vmul.f32 %v5330, %v5341
    %v5357 = vmul.f32 %v5331, %v5348
    %v5358 = vmul.f32 %v5332, %v5349
    %v5359 = vmul.f32 %v5333, %v5350
    %v5360 = vmul.f32 %v5334, %v5347
    %5366 = vrot.lane.b32.xlu0 %v5356, 73
    %v5367 = vpop.permute.xlu0 %5366
    %5368 = vrot.lane.b32.xlu0 %v5357, 73
    %v5369 = vpop.permute.xlu0 %5368
    %5370 = vrot.lane.b32.xlu0 %v5358, 73
    %v5371 = vpop.permute.xlu0 %5370
    %5372 = vrot.lane.b32.xlu0 %v5359, 73
    %v5373 = vpop.permute.xlu0 %5372
    %5374 = vrot.lane.b32.xlu0 %v5360, 73
    %v5375 = vpop.permute.xlu0 %5374
    %v5376 = vsel %vm122, %v5367, %v5369
    %v5377 = vsel %vm122, %v5369, %v5371
    %v5378 = vsel %vm122, %v5371, %v5373
    %v5379 = vsel %vm122, %v5373, %v5375
    %5384 = vst [vmem:[#allocation4 + $0x20] sm:$0xff] %v5376
    %5385 = vst [vmem:[#allocation4 + $0x28] sm:$0xff] %v5377
    %5386 = vst [vmem:[#allocation4 + $0x30] sm:$0xff] %v5378
    %5387 = vst [vmem:[#allocation4 + $0x38] sm:$0xff] %v5379
    %v5388 = vld [vmem:[%s135] ss:$8 sm:$0xf]
    %v5389 = vld [vmem:[#allocation3 + $0x30] sm:$0xff]
    %v5390 = vld [vmem:[#allocation3 + $0x38] sm:$0xff]
    %v5391 = vld [vmem:[#allocation3 + $0x40] sm:$0xff]
    %v5392 = vld [vmem:[#allocation3 + $0x48] sm:$0xff]
    %v5393 = vld [vmem:[#allocation3 + $0x50] sm:$0xff]
    %v5395 = vperm.slane %v5388, 0
    %v5396 = vperm.slane %v5388, 1
    %v5397 = vperm.slane %v5388, 2
    %v5398 = vperm.slane %v5388, 3
    %5399 = vrot.lane.b32.xlu0 %v5395, 56
    %v5400 = vpop.permute.xlu0 %5399
    %5401 = vrot.lane.b32.xlu0 %v5396, 56
    %v5402 = vpop.permute.xlu0 %5401
    %5403 = vrot.lane.b32.xlu0 %v5397, 56
    %v5404 = vpop.permute.xlu0 %5403
    %5405 = vrot.lane.b32.xlu0 %v5398, 56
    %v5406 = vpop.permute.xlu0 %5405
    %v5407 = vsel %vm155, %v5400, %v5402
    %v5408 = vsel %vm155, %v5402, %v5404
    %v5409 = vsel %vm155, %v5404, %v5406
    %v5415 = vmul.f32 %v5389, %v5400
    %v5416 = vmul.f32 %v5390, %v5407
    %v5417 = vmul.f32 %v5391, %v5408
    %v5418 = vmul.f32 %v5392, %v5409
    %v5419 = vmul.f32 %v5393, %v5406
    %5425 = vrot.lane.b32.xlu0 %v5415, 72
    %v5426 = vpop.permute.xlu0 %5425
    %5427 = vrot.lane.b32.xlu0 %v5416, 72
    %v5428 = vpop.permute.xlu0 %5427
    %5429 = vrot.lane.b32.xlu0 %v5417, 72
    %v5430 = vpop.permute.xlu0 %5429
    %5431 = vrot.lane.b32.xlu0 %v5418, 72
    %v5432 = vpop.permute.xlu0 %5431
    %5433 = vrot.lane.b32.xlu0 %v5419, 72
    %v5434 = vpop.permute.xlu0 %5433
    %v5435 = vsel %vm189, %v5426, %v5428
    %v5436 = vsel %vm189, %v5428, %v5430
    %v5437 = vsel %vm189, %v5430, %v5432
    %v5438 = vsel %vm189, %v5432, %v5434
    %5443 = vst [vmem:[#allocation4 + $0x60] sm:$0xff] %v5435
    %5444 = vst [vmem:[#allocation4 + $0x68] sm:$0xff] %v5436
    %5445 = vst [vmem:[#allocation4 + $0x70] sm:$0xff] %v5437
    %5446 = vst [vmem:[#allocation4 + $0x78] sm:$0xff] %v5438
    %v5447 = vld [vmem:[%s202] ss:$8 sm:$0xf]
    %v5448 = vld [vmem:[#allocation3 + $0x30] sm:$0xff]
    %v5449 = vld [vmem:[#allocation3 + $0x38] sm:$0xff]
    %v5450 = vld [vmem:[#allocation3 + $0x40] sm:$0xff]
    %v5451 = vld [vmem:[#allocation3 + $0x48] sm:$0xff]
    %v5452 = vld [vmem:[#allocation3 + $0x50] sm:$0xff]
    %v5454 = vperm.slane %v5447, 0
    %v5455 = vperm.slane %v5447, 1
    %v5456 = vperm.slane %v5447, 2
    %v5457 = vperm.slane %v5447, 3
    %5458 = vrot.lane.b32.xlu0 %v5454, 57
    %v5459 = vpop.permute.xlu0 %5458
    %5460 = vrot.lane.b32.xlu0 %v5455, 57
    %v5461 = vpop.permute.xlu0 %5460
    %5462 = vrot.lane.b32.xlu0 %v5456, 57
    %v5463 = vpop.permute.xlu0 %5462
    %5464 = vrot.lane.b32.xlu0 %v5457, 57
    %v5465 = vpop.permute.xlu0 %5464
    %v5466 = vsel %vm222, %v5459, %v5461
    %v5467 = vsel %vm222, %v5461, %v5463
    %v5468 = vsel %vm222, %v5463, %v5465
    %v5474 = vmul.f32 %v5448, %v5459
    %v5475 = vmul.f32 %v5449, %v5466
    %v5476 = vmul.f32 %v5450, %v5467
    %v5477 = vmul.f32 %v5451, %v5468
    %v5478 = vmul.f32 %v5452, %v5465
    %5484 = vrot.lane.b32.xlu0 %v5474, 71
    %v5485 = vpop.permute.xlu0 %5484
    %5486 = vrot.lane.b32.xlu0 %v5475, 71
    %v5487 = vpop.permute.xlu0 %5486
    %5488 = vrot.lane.b32.xlu0 %v5476, 71
    %v5489 = vpop.permute.xlu0 %5488
    %5490 = vrot.lane.b32.xlu0 %v5477, 71
    %v5491 = vpop.permute.xlu0 %5490
    %5492 = vrot.lane.b32.xlu0 %v5478, 71
    %v5493 = vpop.permute.xlu0 %5492
    %v5494 = vsel %vm251, %v5485, %v5487
    %v5495 = vsel %vm251, %v5487, %v5489
    %v5496 = vsel %vm251, %v5489, %v5491
    %v5497 = vsel %vm251, %v5491, %v5493
    %5502 = vst [vmem:[#allocation4 + $0xa0] sm:$0xff] %v5494
    %5503 = vst [vmem:[#allocation4 + $0xa8] sm:$0xff] %v5495
    %5504 = vst [vmem:[#allocation4 + $0xb0] sm:$0xff] %v5496
    %5505 = vst [vmem:[#allocation4 + $0xb8] sm:$0xff] %v5497
    %v5506 = vld [vmem:[%s264] ss:$8 sm:$0xf]
    %v5507 = vld [vmem:[#allocation3 + $0x30] sm:$0xff]
    %v5508 = vld [vmem:[#allocation3 + $0x38] sm:$0xff]
    %v5509 = vld [vmem:[#allocation3 + $0x40] sm:$0xff]
    %v5510 = vld [vmem:[#allocation3 + $0x48] sm:$0xff]
    %v5511 = vld [vmem:[#allocation3 + $0x50] sm:$0xff]
    %v5513 = vperm.slane %v5506, 0
    %v5514 = vperm.slane %v5506, 1
    %v5515 = vperm.slane %v5506, 2
    %v5516 = vperm.slane %v5506, 3
    %5517 = vrot.lane.b32.xlu0 %v5513, 63
    %v5518 = vpop.permute.xlu0 %5517
    %5519 = vrot.lane.b32.xlu0 %v5514, 63
    %v5520 = vpop.permute.xlu0 %5519
    %5521 = vrot.lane.b32.xlu0 %v5515, 63
    %v5522 = vpop.permute.xlu0 %5521
    %5523 = vrot.lane.b32.xlu0 %v5516, 63
    %v5524 = vpop.permute.xlu0 %5523
    %v5525 = vsel %vm284, %v5518, %v5520
    %v5526 = vsel %vm284, %v5520, %v5522
    %v5527 = vsel %vm284, %v5522, %v5524
    %v5533 = vmul.f32 %v5507, %v5518
    %v5534 = vmul.f32 %v5508, %v5525
    %v5535 = vmul.f32 %v5509, %v5526
    %v5536 = vmul.f32 %v5510, %v5527
    %v5537 = vmul.f32 %v5511, %v5524
    %5543 = vrot.lane.b32.xlu0 %v5533, 65
    %v5544 = vpop.permute.xlu0 %5543
    %5545 = vrot.lane.b32.xlu0 %v5534, 65
    %v5546 = vpop.permute.xlu0 %5545
    %5547 = vrot.lane.b32.xlu0 %v5535, 65
    %v5548 = vpop.permute.xlu0 %5547
    %5549 = vrot.lane.b32.xlu0 %v5536, 65
    %v5550 = vpop.permute.xlu0 %5549
    %5551 = vrot.lane.b32.xlu0 %v5537, 65
    %v5552 = vpop.permute.xlu0 %5551
    %v5553 = vsel %vm318, %v5544, %v5546
    %v5554 = vsel %vm318, %v5546, %v5548
    %v5555 = vsel %vm318, %v5548, %v5550
    %v5556 = vsel %vm318, %v5550, %v5552
    %5561 = vst [vmem:[#allocation4 + $0xe0] sm:$0xff] %v5553
    %5562 = vst [vmem:[#allocation4 + $0xe8] sm:$0xff] %v5554
    %5563 = vst [vmem:[#allocation4 + $0xf0] sm:$0xff] %v5555
    %5564 = vst [vmem:[#allocation4 + $0xf8] sm:$0xff] %v5556
    %v5565 = vld [vmem:[%s331] ss:$8 sm:$0xf]
    %v5566 = vld [vmem:[#allocation3 + $0x30] sm:$0xff]
    %v5567 = vld [vmem:[#allocation3 + $0x38] sm:$0xff]
    %v5568 = vld [vmem:[#allocation3 + $0x40] sm:$0xff]
    %v5569 = vld [vmem:[#allocation3 + $0x48] sm:$0xff]
    %v5570 = vld [vmem:[#allocation3 + $0x50] sm:$0xff]
    %v5572 = vperm.slane %v5565, 0
    %v5573 = vperm.slane %v5565, 1
    %v5574 = vperm.slane %v5565, 2
    %v5575 = vperm.slane %v5565, 3
    %5576 = vrot.lane.b32.xlu0 %v5572, 64
    %v5577 = vpop.permute.xlu0 %5576
    %5578 = vrot.lane.b32.xlu0 %v5573, 64
    %v5579 = vpop.permute.xlu0 %5578
    %5580 = vrot.lane.b32.xlu0 %v5574, 64
    %v5581 = vpop.permute.xlu0 %5580
    %5582 = vrot.lane.b32.xlu0 %v5575, 64
    %v5583 = vpop.permute.xlu0 %5582
    %v5584 = vsel %vm351, %v5577, %v5579
    %v5585 = vsel %vm351, %v5579, %v5581
    %v5586 = vsel %vm351, %v5581, %v5583
    %v5592 = vmul.f32 %v5566, %v5577
    %v5593 = vmul.f32 %v5567, %v5584
    %v5594 = vmul.f32 %v5568, %v5585
    %v5595 = vmul.f32 %v5569, %v5586
    %v5596 = vmul.f32 %v5570, %v5583
    %5602 = vrot.lane.b32.xlu0 %v5592, 64
    %v5603 = vpop.permute.xlu0 %5602
    %5604 = vrot.lane.b32.xlu0 %v5593, 64
    %v5605 = vpop.permute.xlu0 %5604
    %5606 = vrot.lane.b32.xlu0 %v5594, 64
    %v5607 = vpop.permute.xlu0 %5606
    %5608 = vrot.lane.b32.xlu0 %v5595, 64
    %v5609 = vpop.permute.xlu0 %5608
    %5610 = vrot.lane.b32.xlu0 %v5596, 64
    %v5611 = vpop.permute.xlu0 %5610
    %v5612 = vsel %vm351, %v5603, %v5605
    %v5613 = vsel %vm351, %v5605, %v5607
    %v5614 = vsel %vm351, %v5607, %v5609
    %v5615 = vsel %vm351, %v5609, %v5611
    %5620 = vst [vmem:[#allocation4 + $0x120] sm:$0xff] %v5612
    %5621 = vst [vmem:[#allocation4 + $0x128] sm:$0xff] %v5613
    %5622 = vst [vmem:[#allocation4 + $0x130] sm:$0xff] %v5614
    %5623 = vst [vmem:[#allocation4 + $0x138] sm:$0xff] %v5615
    %v5624 = vld [vmem:[%s392] ss:$8 sm:$0xf]
    %v5625 = vld [vmem:[#allocation3 + $0x30] sm:$0xff]
    %v5626 = vld [vmem:[#allocation3 + $0x38] sm:$0xff]
    %v5627 = vld [vmem:[#allocation3 + $0x40] sm:$0xff]
    %v5628 = vld [vmem:[#allocation3 + $0x48] sm:$0xff]
    %v5629 = vld [vmem:[#allocation3 + $0x50] sm:$0xff]
    %v5631 = vperm.slane %v5624, 0
    %v5632 = vperm.slane %v5624, 1
    %v5633 = vperm.slane %v5624, 2
    %v5634 = vperm.slane %v5624, 3
    %5635 = vrot.lane.b32.xlu0 %v5631, 65
    %v5636 = vpop.permute.xlu0 %5635
    %5637 = vrot.lane.b32.xlu0 %v5632, 65
    %v5638 = vpop.permute.xlu0 %5637
    %5639 = vrot.lane.b32.xlu0 %v5633, 65
    %v5640 = vpop.permute.xlu0 %5639
    %5641 = vrot.lane.b32.xlu0 %v5634, 65
    %v5642 = vpop.permute.xlu0 %5641
    %v5643 = vsel %vm318, %v5636, %v5638
    %v5644 = vsel %vm318, %v5638, %v5640
    %v5645 = vsel %vm318, %v5640, %v5642
    %v5651 = vmul.f32 %v5625, %v5636
    %v5652 = vmul.f32 %v5626, %v5643
    %v5653 = vmul.f32 %v5627, %v5644
    %v5654 = vmul.f32 %v5628, %v5645
    %v5655 = vmul.f32 %v5629, %v5642
    %5661 = vrot.lane.b32.xlu0 %v5651, 63
    %v5662 = vpop.permute.xlu0 %5661
    %5663 = vrot.lane.b32.xlu0 %v5652, 63
    %v5664 = vpop.permute.xlu0 %5663
    %5665 = vrot.lane.b32.xlu0 %v5653, 63
    %v5666 = vpop.permute.xlu0 %5665
    %5667 = vrot.lane.b32.xlu0 %v5654, 63
    %v5668 = vpop.permute.xlu0 %5667
    %5669 = vrot.lane.b32.xlu0 %v5655, 63
    %v5670 = vpop.permute.xlu0 %5669
    %v5671 = vsel %vm284, %v5662, %v5664
    %v5672 = vsel %vm284, %v5664, %v5666
    %v5673 = vsel %vm284, %v5666, %v5668
    %v5674 = vsel %vm284, %v5668, %v5670
    %5679 = vst [vmem:[#allocation4 + $0x160] sm:$0xff] %v5671
    %5680 = vst [vmem:[#allocation4 + $0x168] sm:$0xff] %v5672
    %5681 = vst [vmem:[#allocation4 + $0x170] sm:$0xff] %v5673
    %5682 = vst [vmem:[#allocation4 + $0x178] sm:$0xff] %v5674
    %v5683 = vld [vmem:[%s457] ss:$8 sm:$0xf]
    %v5684 = vld [vmem:[#allocation3 + $0x30] sm:$0xff]
    %v5685 = vld [vmem:[#allocation3 + $0x38] sm:$0xff]
    %v5686 = vld [vmem:[#allocation3 + $0x40] sm:$0xff]
    %v5687 = vld [vmem:[#allocation3 + $0x48] sm:$0xff]
    %v5688 = vld [vmem:[#allocation3 + $0x50] sm:$0xff]
    %v5690 = vperm.slane %v5683, 0
    %v5691 = vperm.slane %v5683, 1
    %v5692 = vperm.slane %v5683, 2
    %v5693 = vperm.slane %v5683, 3
    %5694 = vrot.lane.b32.xlu0 %v5690, 71
    %v5695 = vpop.permute.xlu0 %5694
    %5696 = vrot.lane.b32.xlu0 %v5691, 71
    %v5697 = vpop.permute.xlu0 %5696
    %5698 = vrot.lane.b32.xlu0 %v5692, 71
    %v5699 = vpop.permute.xlu0 %5698
    %5700 = vrot.lane.b32.xlu0 %v5693, 71
    %v5701 = vpop.permute.xlu0 %5700
    %v5702 = vsel %vm251, %v5695, %v5697
    %v5703 = vsel %vm251, %v5697, %v5699
    %v5704 = vsel %vm251, %v5699, %v5701
    %v5710 = vmul.f32 %v5684, %v5695
    %v5711 = vmul.f32 %v5685, %v5702
    %v5712 = vmul.f32 %v5686, %v5703
    %v5713 = vmul.f32 %v5687, %v5704
    %v5714 = vmul.f32 %v5688, %v5701
    %5720 = vrot.lane.b32.xlu0 %v5710, 57
    %v5721 = vpop.permute.xlu0 %5720
    %5722 = vrot.lane.b32.xlu0 %v5711, 57
    %v5723 = vpop.permute.xlu0 %5722
    %5724 = vrot.lane.b32.xlu0 %v5712, 57
    %v5725 = vpop.permute.xlu0 %5724
    %5726 = vrot.lane.b32.xlu0 %v5713, 57
    %v5727 = vpop.permute.xlu0 %5726
    %5728 = vrot.lane.b32.xlu0 %v5714, 57
    %v5729 = vpop.permute.xlu0 %5728
    %v5730 = vsel %vm222, %v5721, %v5723
    %v5731 = vsel %vm222, %v5723, %v5725
    %v5732 = vsel %vm222, %v5725, %v5727
    %v5733 = vsel %vm222, %v5727, %v5729
    %5738 = vst [vmem:[#allocation4 + $0x1a0] sm:$0xff] %v5730
    %5739 = vst [vmem:[#allocation4 + $0x1a8] sm:$0xff] %v5731
    %5740 = vst [vmem:[#allocation4 + $0x1b0] sm:$0xff] %v5732
    %5741 = vst [vmem:[#allocation4 + $0x1b8] sm:$0xff] %v5733
    %v5742 = vld [vmem:[%s517] ss:$8 sm:$0xf]
    %v5743 = vld [vmem:[#allocation3 + $0x30] sm:$0xff]
    %v5744 = vld [vmem:[#allocation3 + $0x38] sm:$0xff]
    %v5745 = vld [vmem:[#allocation3 + $0x40] sm:$0xff]
    %v5746 = vld [vmem:[#allocation3 + $0x48] sm:$0xff]
    %v5747 = vld [vmem:[#allocation3 + $0x50] sm:$0xff]
    %v5749 = vperm.slane %v5742, 0
    %v5750 = vperm.slane %v5742, 1
    %v5751 = vperm.slane %v5742, 2
    %v5752 = vperm.slane %v5742, 3
    %5753 = vrot.lane.b32.xlu0 %v5749, 72
    %v5754 = vpop.permute.xlu0 %5753
    %5755 = vrot.lane.b32.xlu0 %v5750, 72
    %v5756 = vpop.permute.xlu0 %5755
    %5757 = vrot.lane.b32.xlu0 %v5751, 72
    %v5758 = vpop.permute.xlu0 %5757
    %5759 = vrot.lane.b32.xlu0 %v5752, 72
    %v5760 = vpop.permute.xlu0 %5759
    %v5761 = vsel %vm189, %v5754, %v5756
    %v5762 = vsel %vm189, %v5756, %v5758
    %v5763 = vsel %vm189, %v5758, %v5760
    %v5769 = vmul.f32 %v5743, %v5754
    %v5770 = vmul.f32 %v5744, %v5761
    %v5771 = vmul.f32 %v5745, %v5762
    %v5772 = vmul.f32 %v5746, %v5763
    %v5773 = vmul.f32 %v5747, %v5760
    %5779 = vrot.lane.b32.xlu0 %v5769, 56
    %v5780 = vpop.permute.xlu0 %5779
    %5781 = vrot.lane.b32.xlu0 %v5770, 56
    %v5782 = vpop.permute.xlu0 %5781
    %5783 = vrot.lane.b32.xlu0 %v5771, 56
    %v5784 = vpop.permute.xlu0 %5783
    %5785 = vrot.lane.b32.xlu0 %v5772, 56
    %v5786 = vpop.permute.xlu0 %5785
    %5787 = vrot.lane.b32.xlu0 %v5773, 56
    %v5788 = vpop.permute.xlu0 %5787
    %v5789 = vsel %vm155, %v5780, %v5782
    %v5790 = vsel %vm155, %v5782, %v5784
    %v5791 = vsel %vm155, %v5784, %v5786
    %v5792 = vsel %vm155, %v5786, %v5788
    %5797 = vst [vmem:[#allocation4 + $0x1e0] sm:$0xff] %v5789
    %5798 = vst [vmem:[#allocation4 + $0x1e8] sm:$0xff] %v5790
    %5799 = vst [vmem:[#allocation4 + $0x1f0] sm:$0xff] %v5791
    %5800 = vst [vmem:[#allocation4 + $0x1f8] sm:$0xff] %v5792
    %v5801 = vld [vmem:[%s582] ss:$8 sm:$0xf]
    %v5802 = vld [vmem:[#allocation3 + $0x30] sm:$0xff]
    %v5803 = vld [vmem:[#allocation3 + $0x38] sm:$0xff]
    %v5804 = vld [vmem:[#allocation3 + $0x40] sm:$0xff]
    %v5805 = vld [vmem:[#allocation3 + $0x48] sm:$0xff]
    %v5806 = vld [vmem:[#allocation3 + $0x50] sm:$0xff]
    %v5808 = vperm.slane %v5801, 0
    %v5809 = vperm.slane %v5801, 1
    %v5810 = vperm.slane %v5801, 2
    %v5811 = vperm.slane %v5801, 3
    %5812 = vrot.lane.b32.xlu0 %v5808, 73
    %v5813 = vpop.permute.xlu0 %5812
    %5814 = vrot.lane.b32.xlu0 %v5809, 73
    %v5815 = vpop.permute.xlu0 %5814
    %5816 = vrot.lane.b32.xlu0 %v5810, 73
    %v5817 = vpop.permute.xlu0 %5816
    %5818 = vrot.lane.b32.xlu0 %v5811, 73
    %v5819 = vpop.permute.xlu0 %5818
    %v5820 = vsel %vm122, %v5813, %v5815
    %v5821 = vsel %vm122, %v5815, %v5817
    %v5822 = vsel %vm122, %v5817, %v5819
    %v5828 = vmul.f32 %v5802, %v5813
    %v5829 = vmul.f32 %v5803, %v5820
    %v5830 = vmul.f32 %v5804, %v5821
    %v5831 = vmul.f32 %v5805, %v5822
    %v5832 = vmul.f32 %v5806, %v5819
    %5838 = vrot.lane.b32.xlu0 %v5828, 55
    %v5839 = vpop.permute.xlu0 %5838
    %5840 = vrot.lane.b32.xlu0 %v5829, 55
    %v5841 = vpop.permute.xlu0 %5840
    %5842 = vrot.lane.b32.xlu0 %v5830, 55
    %v5843 = vpop.permute.xlu0 %5842
    %5844 = vrot.lane.b32.xlu0 %v5831, 55
    %v5845 = vpop.permute.xlu0 %5844
    %5846 = vrot.lane.b32.xlu0 %v5832, 55
    %v5847 = vpop.permute.xlu0 %5846
    %v5848 = vsel %vm93, %v5839, %v5841
    %v5849 = vsel %vm93, %v5841, %v5843
    %v5850 = vsel %vm93, %v5843, %v5845
    %v5851 = vsel %vm93, %v5845, %v5847
    %5856 = vst [vmem:[#allocation4 + $0x220] sm:$0xff] %v5848
    %5857 = vst [vmem:[#allocation4 + $0x228] sm:$0xff] %v5849
    %5858 = vst [vmem:[#allocation4 + $0x230] sm:$0xff] %v5850
    %5859 = vst [vmem:[#allocation4 + $0x238] sm:$0xff] %v5851
    %v5860 = vld [vmem:[%s642] ss:$8 sm:$0xf]
    %v5861 = vld [vmem:[#allocation3 + $0x30] sm:$0xff]
    %v5862 = vld [vmem:[#allocation3 + $0x38] sm:$0xff]
    %v5863 = vld [vmem:[#allocation3 + $0x40] sm:$0xff]
    %v5864 = vld [vmem:[#allocation3 + $0x48] sm:$0xff]
    %v5865 = vld [vmem:[#allocation3 + $0x50] sm:$0xff]
    %v5867 = vperm.slane %v5860, 0
    %v5868 = vperm.slane %v5860, 1
    %v5869 = vperm.slane %v5860, 2
    %v5870 = vperm.slane %v5860, 3
    %5871 = vrot.lane.b32.xlu0 %v5867, 119
    %v5872 = vpop.permute.xlu0 %5871
    %5873 = vrot.lane.b32.xlu0 %v5868, 119
    %v5874 = vpop.permute.xlu0 %5873
    %5875 = vrot.lane.b32.xlu0 %v5869, 119
    %v5876 = vpop.permute.xlu0 %5875
    %5877 = vrot.lane.b32.xlu0 %v5870, 119
    %v5878 = vpop.permute.xlu0 %5877
    %v5879 = vsel %vm662, %v5872, %v5874
    %v5880 = vsel %vm662, %v5874, %v5876
    %v5881 = vsel %vm662, %v5876, %v5878
    %v5887 = vmul.f32 %v5861, %v5872
    %v5888 = vmul.f32 %v5862, %v5879
    %v5889 = vmul.f32 %v5863, %v5880
    %v5890 = vmul.f32 %v5864, %v5881
    %v5891 = vmul.f32 %v5865, %v5878
    %5897 = vrot.lane.b32.xlu0 %v5887, 9
    %v5898 = vpop.permute.xlu0 %5897
    %5899 = vrot.lane.b32.xlu0 %v5888, 9
    %v5900 = vpop.permute.xlu0 %5899
    %5901 = vrot.lane.b32.xlu0 %v5889, 9
    %v5902 = vpop.permute.xlu0 %5901
    %5903 = vrot.lane.b32.xlu0 %v5890, 9
    %v5904 = vpop.permute.xlu0 %5903
    %5905 = vrot.lane.b32.xlu0 %v5891, 9
    %v5906 = vpop.permute.xlu0 %5905
    %v5907 = vsel %vm696, %v5898, %v5900
    %v5908 = vsel %vm696, %v5900, %v5902
    %v5909 = vsel %vm696, %v5902, %v5904
    %v5910 = vsel %vm696, %v5904, %v5906
    %5915 = vst [vmem:[#allocation4 + $0x260] sm:$0xff] %v5907
    %5916 = vst [vmem:[#allocation4 + $0x268] sm:$0xff] %v5908
    %5917 = vst [vmem:[#allocation4 + $0x270] sm:$0xff] %v5909
    %5918 = vst [vmem:[#allocation4 + $0x278] sm:$0xff] %v5910
    %v5919 = vld [vmem:[%s709] ss:$8 sm:$0xf]
    %v5920 = vld [vmem:[#allocation3 + $0x30] sm:$0xff]
    %v5921 = vld [vmem:[#allocation3 + $0x38] sm:$0xff]
    %v5922 = vld [vmem:[#allocation3 + $0x40] sm:$0xff]
    %v5923 = vld [vmem:[#allocation3 + $0x48] sm:$0xff]
    %v5924 = vld [vmem:[#allocation3 + $0x50] sm:$0xff]
    %v5926 = vperm.slane %v5919, 0
    %v5927 = vperm.slane %v5919, 1
    %v5928 = vperm.slane %v5919, 2
    %v5929 = vperm.slane %v5919, 3
    %5930 = vrot.lane.b32.xlu0 %v5926, 120
    %v5931 = vpop.permute.xlu0 %5930
    %5932 = vrot.lane.b32.xlu0 %v5927, 120
    %v5933 = vpop.permute.xlu0 %5932
    %5934 = vrot.lane.b32.xlu0 %v5928, 120
    %v5935 = vpop.permute.xlu0 %5934
    %5936 = vrot.lane.b32.xlu0 %v5929, 120
    %v5937 = vpop.permute.xlu0 %5936
    %v5938 = vsel %vm729, %v5931, %v5933
    %v5939 = vsel %vm729, %v5933, %v5935
    %v5940 = vsel %vm729, %v5935, %v5937
    %v5946 = vmul.f32 %v5920, %v5931
    %v5947 = vmul.f32 %v5921, %v5938
    %v5948 = vmul.f32 %v5922, %v5939
    %v5949 = vmul.f32 %v5923, %v5940
    %v5950 = vmul.f32 %v5924, %v5937
    %5956 = vrot.lane.b32.xlu0 %v5946, 8
    %v5957 = vpop.permute.xlu0 %5956
    %5958 = vrot.lane.b32.xlu0 %v5947, 8
    %v5959 = vpop.permute.xlu0 %5958
    %5960 = vrot.lane.b32.xlu0 %v5948, 8
    %v5961 = vpop.permute.xlu0 %5960
    %5962 = vrot.lane.b32.xlu0 %v5949, 8
    %v5963 = vpop.permute.xlu0 %5962
    %5964 = vrot.lane.b32.xlu0 %v5950, 8
    %v5965 = vpop.permute.xlu0 %5964
    %v5966 = vsel %vm758, %v5957, %v5959
    %v5967 = vsel %vm758, %v5959, %v5961
    %v5968 = vsel %vm758, %v5961, %v5963
    %v5969 = vsel %vm758, %v5963, %v5965
    %5974 = vst [vmem:[#allocation4 + $0x2a0] sm:$0xff] %v5966
    %5975 = vst [vmem:[#allocation4 + $0x2a8] sm:$0xff] %v5967
    %5976 = vst [vmem:[#allocation4 + $0x2b0] sm:$0xff] %v5968
    %5977 = vst [vmem:[#allocation4 + $0x2b8] sm:$0xff] %v5969
    %v5978 = vld [vmem:[%s771] ss:$8 sm:$0xf]
    %v5979 = vld [vmem:[#allocation3 + $0x30] sm:$0xff]
    %v5980 = vld [vmem:[#allocation3 + $0x38] sm:$0xff]
    %v5981 = vld [vmem:[#allocation3 + $0x40] sm:$0xff]
    %v5982 = vld [vmem:[#allocation3 + $0x48] sm:$0xff]
    %v5983 = vld [vmem:[#allocation3 + $0x50] sm:$0xff]
    %v5985 = vperm.slane %v5978, 0
    %v5986 = vperm.slane %v5978, 1
    %v5987 = vperm.slane %v5978, 2
    %v5988 = vperm.slane %v5978, 3
    %5989 = vrot.lane.b32.xlu0 %v5985, 121
    %v5990 = vpop.permute.xlu0 %5989
    %5991 = vrot.lane.b32.xlu0 %v5986, 121
    %v5992 = vpop.permute.xlu0 %5991
    %5993 = vrot.lane.b32.xlu0 %v5987, 121
    %v5994 = vpop.permute.xlu0 %5993
    %5995 = vrot.lane.b32.xlu0 %v5988, 121
    %v5996 = vpop.permute.xlu0 %5995
    %v5997 = vsel %vm791, %v5990, %v5992
    %v5998 = vsel %vm791, %v5992, %v5994
    %v5999 = vsel %vm791, %v5994, %v5996
    %v6005 = vmul.f32 %v5979, %v5990
    %v6006 = vmul.f32 %v5980, %v5997
    %v6007 = vmul.f32 %v5981, %v5998
    %v6008 = vmul.f32 %v5982, %v5999
    %v6009 = vmul.f32 %v5983, %v5996
    %6015 = vrot.lane.b32.xlu0 %v6005, 7
    %v6016 = vpop.permute.xlu0 %6015
    %6017 = vrot.lane.b32.xlu0 %v6006, 7
    %v6018 = vpop.permute.xlu0 %6017
    %6019 = vrot.lane.b32.xlu0 %v6007, 7
    %v6020 = vpop.permute.xlu0 %6019
    %6021 = vrot.lane.b32.xlu0 %v6008, 7
    %v6022 = vpop.permute.xlu0 %6021
    %6023 = vrot.lane.b32.xlu0 %v6009, 7
    %v6024 = vpop.permute.xlu0 %6023
    %v6025 = vsel %vm825, %v6016, %v6018
    %v6026 = vsel %vm825, %v6018, %v6020
    %v6027 = vsel %vm825, %v6020, %v6022
    %v6028 = vsel %vm825, %v6022, %v6024
    %6033 = vst [vmem:[#allocation4 + $0x2e0] sm:$0xff] %v6025
    %6034 = vst [vmem:[#allocation4 + $0x2e8] sm:$0xff] %v6026
    %6035 = vst [vmem:[#allocation4 + $0x2f0] sm:$0xff] %v6027
    %6036 = vst [vmem:[#allocation4 + $0x2f8] sm:$0xff] %v6028
    %v6037 = vld [vmem:[%s838] ss:$8 sm:$0xf]
    %v6038 = vld [vmem:[#allocation3 + $0x30] sm:$0xff]
    %v6039 = vld [vmem:[#allocation3 + $0x38] sm:$0xff]
    %v6040 = vld [vmem:[#allocation3 + $0x40] sm:$0xff]
    %v6041 = vld [vmem:[#allocation3 + $0x48] sm:$0xff]
    %v6042 = vld [vmem:[#allocation3 + $0x50] sm:$0xff]
    %v6044 = vperm.slane %v6037, 0
    %v6045 = vperm.slane %v6037, 1
    %v6046 = vperm.slane %v6037, 2
    %v6047 = vperm.slane %v6037, 3
    %6048 = vrot.lane.b32.xlu0 %v6044, 127
    %v6049 = vpop.permute.xlu0 %6048
    %6050 = vrot.lane.b32.xlu0 %v6045, 127
    %v6051 = vpop.permute.xlu0 %6050
    %6052 = vrot.lane.b32.xlu0 %v6046, 127
    %v6053 = vpop.permute.xlu0 %6052
    %6054 = vrot.lane.b32.xlu0 %v6047, 127
    %v6055 = vpop.permute.xlu0 %6054
    %v6056 = vsel %vm858, %v6049, %v6051
    %v6057 = vsel %vm858, %v6051, %v6053
    %v6058 = vsel %vm858, %v6053, %v6055
    %v6064 = vmul.f32 %v6038, %v6049
    %v6065 = vmul.f32 %v6039, %v6056
    %v6066 = vmul.f32 %v6040, %v6057
    %v6067 = vmul.f32 %v6041, %v6058
    %v6068 = vmul.f32 %v6042, %v6055
    %6074 = vrot.lane.b32.xlu0 %v6064, 1
    %v6075 = vpop.permute.xlu0 %6074
    %6076 = vrot.lane.b32.xlu0 %v6065, 1
    %v6077 = vpop.permute.xlu0 %6076
    %6078 = vrot.lane.b32.xlu0 %v6066, 1
    %v6079 = vpop.permute.xlu0 %6078
    %6080 = vrot.lane.b32.xlu0 %v6067, 1
    %v6081 = vpop.permute.xlu0 %6080
    %6082 = vrot.lane.b32.xlu0 %v6068, 1
    %v6083 = vpop.permute.xlu0 %6082
    %v6084 = vsel %vm887, %v6075, %v6077
    %v6085 = vsel %vm887, %v6077, %v6079
    %v6086 = vsel %vm887, %v6079, %v6081
    %v6087 = vsel %vm887, %v6081, %v6083
    %6092 = vst [vmem:[#allocation4 + $0x320] sm:$0xff] %v6084
    %6093 = vst [vmem:[#allocation4 + $0x328] sm:$0xff] %v6085
    %6094 = vst [vmem:[#allocation4 + $0x330] sm:$0xff] %v6086
    %6095 = vst [vmem:[#allocation4 + $0x338] sm:$0xff] %v6087
    %v6096 = vld [vmem:[%s900] ss:$8 sm:$0xf]
    %v6097 = vld [vmem:[#allocation3 + $0x38] sm:$0xff]
    %v6098 = vld [vmem:[#allocation3 + $0x40] sm:$0xff]
    %v6099 = vld [vmem:[#allocation3 + $0x48] sm:$0xff]
    %v6100 = vld [vmem:[#allocation3 + $0x50] sm:$0xff]
    %v6102 = vperm.slane %v6096, 0
    %v6103 = vperm.slane %v6096, 1
    %v6104 = vperm.slane %v6096, 2
    %v6105 = vperm.slane %v6096, 3
    %v6110 = vmul.f32 %v6097, %v6102
    %v6111 = vmul.f32 %v6098, %v6103
    %v6112 = vmul.f32 %v6099, %v6104
    %v6113 = vmul.f32 %v6100, %v6105
    %6114 = vst [vmem:[#allocation4 + $0x360] sm:$0xff] %v6110
    %6115 = vst [vmem:[#allocation4 + $0x368] sm:$0xff] %v6111
    %6116 = vst [vmem:[#allocation4 + $0x370] sm:$0xff] %v6112
    %6117 = vst [vmem:[#allocation4 + $0x378] sm:$0xff] %v6113
    %v6118 = vld [vmem:[%s935] ss:$8 sm:$0xf]
    %v6119 = vld [vmem:[#allocation3 + $0x38] sm:$0xff]
    %v6120 = vld [vmem:[#allocation3 + $0x40] sm:$0xff]
    %v6121 = vld [vmem:[#allocation3 + $0x48] sm:$0xff]
    %v6122 = vld [vmem:[#allocation3 + $0x50] sm:$0xff]
    %v6123 = vld [vmem:[#allocation3 + $0x58] sm:$0xff]
    %v6125 = vperm.slane %v6118, 0
    %v6126 = vperm.slane %v6118, 1
    %v6127 = vperm.slane %v6118, 2
    %v6128 = vperm.slane %v6118, 3
    %6129 = vrot.lane.b32.xlu0 %v6125, 1
    %v6130 = vpop.permute.xlu0 %6129
    %6131 = vrot.lane.b32.xlu0 %v6126, 1
    %v6132 = vpop.permute.xlu0 %6131
    %6133 = vrot.lane.b32.xlu0 %v6127, 1
    %v6134 = vpop.permute.xlu0 %6133
    %6135 = vrot.lane.b32.xlu0 %v6128, 1
    %v6136 = vpop.permute.xlu0 %6135
    %v6137 = vsel %vm887, %v6130, %v6132
    %v6138 = vsel %vm887, %v6132, %v6134
    %v6139 = vsel %vm887, %v6134, %v6136
    %v6145 = vmul.f32 %v6119, %v6130
    %v6146 = vmul.f32 %v6120, %v6137
    %v6147 = vmul.f32 %v6121, %v6138
    %v6148 = vmul.f32 %v6122, %v6139
    %v6149 = vmul.f32 %v6123, %v6136
    %6155 = vrot.lane.b32.xlu0 %v6145, 127
    %v6156 = vpop.permute.xlu0 %6155
    %6157 = vrot.lane.b32.xlu0 %v6146, 127
    %v6158 = vpop.permute.xlu0 %6157
    %6159 = vrot.lane.b32.xlu0 %v6147, 127
    %v6160 = vpop.permute.xlu0 %6159
    %6161 = vrot.lane.b32.xlu0 %v6148, 127
    %v6162 = vpop.permute.xlu0 %6161
    %6163 = vrot.lane.b32.xlu0 %v6149, 127
    %v6164 = vpop.permute.xlu0 %6163
    %v6165 = vsel %vm858, %v6156, %v6158
    %v6166 = vsel %vm858, %v6158, %v6160
    %v6167 = vsel %vm858, %v6160, %v6162
    %v6168 = vsel %vm858, %v6162, %v6164
    %6173 = vst [vmem:[#allocation4 + $0x3a0] sm:$0xff] %v6165
    %6174 = vst [vmem:[#allocation4 + $0x3a8] sm:$0xff] %v6166
    %6175 = vst [vmem:[#allocation4 + $0x3b0] sm:$0xff] %v6167
    %6176 = vst [vmem:[#allocation4 + $0x3b8] sm:$0xff] %v6168
    %v6177 = vld [vmem:[%s995] ss:$8 sm:$0xf]
    %v6178 = vld [vmem:[#allocation3 + $0x38] sm:$0xff]
    %v6179 = vld [vmem:[#allocation3 + $0x40] sm:$0xff]
    %v6180 = vld [vmem:[#allocation3 + $0x48] sm:$0xff]
    %v6181 = vld [vmem:[#allocation3 + $0x50] sm:$0xff]
    %v6182 = vld [vmem:[#allocation3 + $0x58] sm:$0xff]
    %v6184 = vperm.slane %v6177, 0
    %v6185 = vperm.slane %v6177, 1
    %v6186 = vperm.slane %v6177, 2
    %v6187 = vperm.slane %v6177, 3
    %6188 = vrot.lane.b32.xlu0 %v6184, 7
    %v6189 = vpop.permute.xlu0 %6188
    %6190 = vrot.lane.b32.xlu0 %v6185, 7
    %v6191 = vpop.permute.xlu0 %6190
    %6192 = vrot.lane.b32.xlu0 %v6186, 7
    %v6193 = vpop.permute.xlu0 %6192
    %6194 = vrot.lane.b32.xlu0 %v6187, 7
    %v6195 = vpop.permute.xlu0 %6194
    %v6196 = vsel %vm825, %v6189, %v6191
    %v6197 = vsel %vm825, %v6191, %v6193
    %v6198 = vsel %vm825, %v6193, %v6195
    %v6204 = vmul.f32 %v6178, %v6189
    %v6205 = vmul.f32 %v6179, %v6196
    %v6206 = vmul.f32 %v6180, %v6197
    %v6207 = vmul.f32 %v6181, %v6198
    %v6208 = vmul.f32 %v6182, %v6195
    %6214 = vrot.lane.b32.xlu0 %v6204, 121
    %v6215 = vpop.permute.xlu0 %6214
    %6216 = vrot.lane.b32.xlu0 %v6205, 121
    %v6217 = vpop.permute.xlu0 %6216
    %6218 = vrot.lane.b32.xlu0 %v6206, 121
    %v6219 = vpop.permute.xlu0 %6218
    %6220 = vrot.lane.b32.xlu0 %v6207, 121
    %v6221 = vpop.permute.xlu0 %6220
    %6222 = vrot.lane.b32.xlu0 %v6208, 121
    %v6223 = vpop.permute.xlu0 %6222
    %v6224 = vsel %vm791, %v6215, %v6217
    %v6225 = vsel %vm791, %v6217, %v6219
    %v6226 = vsel %vm791, %v6219, %v6221
    %v6227 = vsel %vm791, %v6221, %v6223
    %6232 = vst [vmem:[#allocation4 + $0x3e0] sm:$0xff] %v6224
    %6233 = vst [vmem:[#allocation4 + $0x3e8] sm:$0xff] %v6225
    %6234 = vst [vmem:[#allocation4 + $0x3f0] sm:$0xff] %v6226
    %6235 = vst [vmem:[#allocation4 + $0x3f8] sm:$0xff] %v6227
    %v6236 = vld [vmem:[%s1060] ss:$8 sm:$0xf]
    %v6237 = vld [vmem:[#allocation3 + $0x38] sm:$0xff]
    %v6238 = vld [vmem:[#allocation3 + $0x40] sm:$0xff]
    %v6239 = vld [vmem:[#allocation3 + $0x48] sm:$0xff]
    %v6240 = vld [vmem:[#allocation3 + $0x50] sm:$0xff]
    %v6241 = vld [vmem:[#allocation3 + $0x58] sm:$0xff]
    %v6243 = vperm.slane %v6236, 0
    %v6244 = vperm.slane %v6236, 1
    %v6245 = vperm.slane %v6236, 2
    %v6246 = vperm.slane %v6236, 3
    %6247 = vrot.lane.b32.xlu0 %v6243, 8
    %v6248 = vpop.permute.xlu0 %6247
    %6249 = vrot.lane.b32.xlu0 %v6244, 8
    %v6250 = vpop.permute.xlu0 %6249
    %6251 = vrot.lane.b32.xlu0 %v6245, 8
    %v6252 = vpop.permute.xlu0 %6251
    %6253 = vrot.lane.b32.xlu0 %v6246, 8
    %v6254 = vpop.permute.xlu0 %6253
    %v6255 = vsel %vm758, %v6248, %v6250
    %v6256 = vsel %vm758, %v6250, %v6252
    %v6257 = vsel %vm758, %v6252, %v6254
    %v6263 = vmul.f32 %v6237, %v6248
    %v6264 = vmul.f32 %v6238, %v6255
    %v6265 = vmul.f32 %v6239, %v6256
    %v6266 = vmul.f32 %v6240, %v6257
    %v6267 = vmul.f32 %v6241, %v6254
    %6273 = vrot.lane.b32.xlu0 %v6263, 120
    %v6274 = vpop.permute.xlu0 %6273
    %6275 = vrot.lane.b32.xlu0 %v6264, 120
    %v6276 = vpop.permute.xlu0 %6275
    %6277 = vrot.lane.b32.xlu0 %v6265, 120
    %v6278 = vpop.permute.xlu0 %6277
    %6279 = vrot.lane.b32.xlu0 %v6266, 120
    %v6280 = vpop.permute.xlu0 %6279
    %6281 = vrot.lane.b32.xlu0 %v6267, 120
    %v6282 = vpop.permute.xlu0 %6281
    %v6283 = vsel %vm729, %v6274, %v6276
    %v6284 = vsel %vm729, %v6276, %v6278
    %v6285 = vsel %vm729, %v6278, %v6280
    %v6286 = vsel %vm729, %v6280, %v6282
    %6291 = vst [vmem:[#allocation4 + $0x420] sm:$0xff] %v6283
    %6292 = vst [vmem:[#allocation4 + $0x428] sm:$0xff] %v6284
    %6293 = vst [vmem:[#allocation4 + $0x430] sm:$0xff] %v6285
    %6294 = vst [vmem:[#allocation4 + $0x438] sm:$0xff] %v6286
    %v6295 = vld [vmem:[%s1120] ss:$8 sm:$0xf]
    %v6296 = vld [vmem:[#allocation3 + $0x38] sm:$0xff]
    %v6297 = vld [vmem:[#allocation3 + $0x40] sm:$0xff]
    %v6298 = vld [vmem:[#allocation3 + $0x48] sm:$0xff]
    %v6299 = vld [vmem:[#allocation3 + $0x50] sm:$0xff]
    %v6300 = vld [vmem:[#allocation3 + $0x58] sm:$0xff]
    %v6302 = vperm.slane %v6295, 0
    %v6303 = vperm.slane %v6295, 1
    %v6304 = vperm.slane %v6295, 2
    %v6305 = vperm.slane %v6295, 3
    %6306 = vrot.lane.b32.xlu0 %v6302, 9
    %v6307 = vpop.permute.xlu0 %6306
    %6308 = vrot.lane.b32.xlu0 %v6303, 9
    %v6309 = vpop.permute.xlu0 %6308
    %6310 = vrot.lane.b32.xlu0 %v6304, 9
    %v6311 = vpop.permute.xlu0 %6310
    %6312 = vrot.lane.b32.xlu0 %v6305, 9
    %v6313 = vpop.permute.xlu0 %6312
    %v6314 = vsel %vm696, %v6307, %v6309
    %v6315 = vsel %vm696, %v6309, %v6311
    %v6316 = vsel %vm696, %v6311, %v6313
    %v6322 = vmul.f32 %v6296, %v6307
    %v6323 = vmul.f32 %v6297, %v6314
    %v6324 = vmul.f32 %v6298, %v6315
    %v6325 = vmul.f32 %v6299, %v6316
    %v6326 = vmul.f32 %v6300, %v6313
    %6332 = vrot.lane.b32.xlu0 %v6322, 119
    %v6333 = vpop.permute.xlu0 %6332
    %6334 = vrot.lane.b32.xlu0 %v6323, 119
    %v6335 = vpop.permute.xlu0 %6334
    %6336 = vrot.lane.b32.xlu0 %v6324, 119
    %v6337 = vpop.permute.xlu0 %6336
    %6338 = vrot.lane.b32.xlu0 %v6325, 119
    %v6339 = vpop.permute.xlu0 %6338
    %6340 = vrot.lane.b32.xlu0 %v6326, 119
    %v6341 = vpop.permute.xlu0 %6340
    %v6342 = vsel %vm662, %v6333, %v6335
    %v6343 = vsel %vm662, %v6335, %v6337
    %v6344 = vsel %vm662, %v6337, %v6339
    %v6345 = vsel %vm662, %v6339, %v6341
    %6350 = vst [vmem:[#allocation4 + $0x460] sm:$0xff] %v6342
    %6351 = vst [vmem:[#allocation4 + $0x468] sm:$0xff] %v6343
    %6352 = vst [vmem:[#allocation4 + $0x470] sm:$0xff] %v6344
    %6353 = vst [vmem:[#allocation4 + $0x478] sm:$0xff] %v6345
    %v6354 = vld [vmem:[%s1185] ss:$8 sm:$0xf]
    %v6355 = vld [vmem:[#allocation3 + $0x38] sm:$0xff]
    %v6356 = vld [vmem:[#allocation3 + $0x40] sm:$0xff]
    %v6357 = vld [vmem:[#allocation3 + $0x48] sm:$0xff]
    %v6358 = vld [vmem:[#allocation3 + $0x50] sm:$0xff]
    %v6359 = vld [vmem:[#allocation3 + $0x58] sm:$0xff]
    %v6361 = vperm.slane %v6354, 0
    %v6362 = vperm.slane %v6354, 1
    %v6363 = vperm.slane %v6354, 2
    %v6364 = vperm.slane %v6354, 3
    %6365 = vrot.lane.b32.xlu0 %v6361, 55
    %v6366 = vpop.permute.xlu0 %6365
    %6367 = vrot.lane.b32.xlu0 %v6362, 55
    %v6368 = vpop.permute.xlu0 %6367
    %6369 = vrot.lane.b32.xlu0 %v6363, 55
    %v6370 = vpop.permute.xlu0 %6369
    %6371 = vrot.lane.b32.xlu0 %v6364, 55
    %v6372 = vpop.permute.xlu0 %6371
    %v6373 = vsel %vm93, %v6366, %v6368
    %v6374 = vsel %vm93, %v6368, %v6370
    %v6375 = vsel %vm93, %v6370, %v6372
    %v6381 = vmul.f32 %v6355, %v6366
    %v6382 = vmul.f32 %v6356, %v6373
    %v6383 = vmul.f32 %v6357, %v6374
    %v6384 = vmul.f32 %v6358, %v6375
    %v6385 = vmul.f32 %v6359, %v6372
    %6391 = vrot.lane.b32.xlu0 %v6381, 73
    %v6392 = vpop.permute.xlu0 %6391
    %6393 = vrot.lane.b32.xlu0 %v6382, 73
    %v6394 = vpop.permute.xlu0 %6393
    %6395 = vrot.lane.b32.xlu0 %v6383, 73
    %v6396 = vpop.permute.xlu0 %6395
    %6397 = vrot.lane.b32.xlu0 %v6384, 73
    %v6398 = vpop.permute.xlu0 %6397
    %6399 = vrot.lane.b32.xlu0 %v6385, 73
    %v6400 = vpop.permute.xlu0 %6399
    %v6401 = vsel %vm122, %v6392, %v6394
    %v6402 = vsel %vm122, %v6394, %v6396
    %v6403 = vsel %vm122, %v6396, %v6398
    %v6404 = vsel %vm122, %v6398, %v6400
    %6409 = vst [vmem:[#allocation4 + $0x4a0] sm:$0xff] %v6401
    %6410 = vst [vmem:[#allocation4 + $0x4a8] sm:$0xff] %v6402
    %6411 = vst [vmem:[#allocation4 + $0x4b0] sm:$0xff] %v6403
    %6412 = vst [vmem:[#allocation4 + $0x4b8] sm:$0xff] %v6404
    %v6413 = vld [vmem:[%s1245] ss:$8 sm:$0xf]
    %v6414 = vld [vmem:[#allocation3 + $0x38] sm:$0xff]
    %v6415 = vld [vmem:[#allocation3 + $0x40] sm:$0xff]
    %v6416 = vld [vmem:[#allocation3 + $0x48] sm:$0xff]
    %v6417 = vld [vmem:[#allocation3 + $0x50] sm:$0xff]
    %v6418 = vld [vmem:[#allocation3 + $0x58] sm:$0xff]
    %v6420 = vperm.slane %v6413, 0
    %v6421 = vperm.slane %v6413, 1
    %v6422 = vperm.slane %v6413, 2
    %v6423 = vperm.slane %v6413, 3
    %6424 = vrot.lane.b32.xlu0 %v6420, 56
    %v6425 = vpop.permute.xlu0 %6424
    %6426 = vrot.lane.b32.xlu0 %v6421, 56
    %v6427 = vpop.permute.xlu0 %6426
    %6428 = vrot.lane.b32.xlu0 %v6422, 56
    %v6429 = vpop.permute.xlu0 %6428
    %6430 = vrot.lane.b32.xlu0 %v6423, 56
    %v6431 = vpop.permute.xlu0 %6430
    %v6432 = vsel %vm155, %v6425, %v6427
    %v6433 = vsel %vm155, %v6427, %v6429
    %v6434 = vsel %vm155, %v6429, %v6431
    %v6440 = vmul.f32 %v6414, %v6425
    %v6441 = vmul.f32 %v6415, %v6432
    %v6442 = vmul.f32 %v6416, %v6433
    %v6443 = vmul.f32 %v6417, %v6434
    %v6444 = vmul.f32 %v6418, %v6431
    %6450 = vrot.lane.b32.xlu0 %v6440, 72
    %v6451 = vpop.permute.xlu0 %6450
    %6452 = vrot.lane.b32.xlu0 %v6441, 72
    %v6453 = vpop.permute.xlu0 %6452
    %6454 = vrot.lane.b32.xlu0 %v6442, 72
    %v6455 = vpop.permute.xlu0 %6454
    %6456 = vrot.lane.b32.xlu0 %v6443, 72
    %v6457 = vpop.permute.xlu0 %6456
    %6458 = vrot.lane.b32.xlu0 %v6444, 72
    %v6459 = vpop.permute.xlu0 %6458
    %v6460 = vsel %vm189, %v6451, %v6453
    %v6461 = vsel %vm189, %v6453, %v6455
    %v6462 = vsel %vm189, %v6455, %v6457
    %v6463 = vsel %vm189, %v6457, %v6459
    %6468 = vst [vmem:[#allocation4 + $0x4e0] sm:$0xff] %v6460
    %6469 = vst [vmem:[#allocation4 + $0x4e8] sm:$0xff] %v6461
    %6470 = vst [vmem:[#allocation4 + $0x4f0] sm:$0xff] %v6462
    %6471 = vst [vmem:[#allocation4 + $0x4f8] sm:$0xff] %v6463
    %v6472 = vld [vmem:[%s1310] ss:$8 sm:$0xf]
    %v6473 = vld [vmem:[#allocation3 + $0x38] sm:$0xff]
    %v6474 = vld [vmem:[#allocation3 + $0x40] sm:$0xff]
    %v6475 = vld [vmem:[#allocation3 + $0x48] sm:$0xff]
    %v6476 = vld [vmem:[#allocation3 + $0x50] sm:$0xff]
    %v6477 = vld [vmem:[#allocation3 + $0x58] sm:$0xff]
    %v6479 = vperm.slane %v6472, 0
    %v6480 = vperm.slane %v6472, 1
    %v6481 = vperm.slane %v6472, 2
    %v6482 = vperm.slane %v6472, 3
    %6483 = vrot.lane.b32.xlu0 %v6479, 57
    %v6484 = vpop.permute.xlu0 %6483
    %6485 = vrot.lane.b32.xlu0 %v6480, 57
    %v6486 = vpop.permute.xlu0 %6485
    %6487 = vrot.lane.b32.xlu0 %v6481, 57
    %v6488 = vpop.permute.xlu0 %6487
    %6489 = vrot.lane.b32.xlu0 %v6482, 57
    %v6490 = vpop.permute.xlu0 %6489
    %v6491 = vsel %vm222, %v6484, %v6486
    %v6492 = vsel %vm222, %v6486, %v6488
    %v6493 = vsel %vm222, %v6488, %v6490
    %v6499 = vmul.f32 %v6473, %v6484
    %v6500 = vmul.f32 %v6474, %v6491
    %v6501 = vmul.f32 %v6475, %v6492
    %v6502 = vmul.f32 %v6476, %v6493
    %v6503 = vmul.f32 %v6477, %v6490
    %6509 = vrot.lane.b32.xlu0 %v6499, 71
    %v6510 = vpop.permute.xlu0 %6509
    %6511 = vrot.lane.b32.xlu0 %v6500, 71
    %v6512 = vpop.permute.xlu0 %6511
    %6513 = vrot.lane.b32.xlu0 %v6501, 71
    %v6514 = vpop.permute.xlu0 %6513
    %6515 = vrot.lane.b32.xlu0 %v6502, 71
    %v6516 = vpop.permute.xlu0 %6515
    %6517 = vrot.lane.b32.xlu0 %v6503, 71
    %v6518 = vpop.permute.xlu0 %6517
    %v6519 = vsel %vm251, %v6510, %v6512
    %v6520 = vsel %vm251, %v6512, %v6514
    %v6521 = vsel %vm251, %v6514, %v6516
    %v6522 = vsel %vm251, %v6516, %v6518
    %6527 = vst [vmem:[#allocation4 + $0x520] sm:$0xff] %v6519
    %6528 = vst [vmem:[#allocation4 + $0x528] sm:$0xff] %v6520
    %6529 = vst [vmem:[#allocation4 + $0x530] sm:$0xff] %v6521
    %6530 = vst [vmem:[#allocation4 + $0x538] sm:$0xff] %v6522
    %v6531 = vld [vmem:[%s1370] ss:$8 sm:$0xf]
    %v6532 = vld [vmem:[#allocation3 + $0x38] sm:$0xff]
    %v6533 = vld [vmem:[#allocation3 + $0x40] sm:$0xff]
    %v6534 = vld [vmem:[#allocation3 + $0x48] sm:$0xff]
    %v6535 = vld [vmem:[#allocation3 + $0x50] sm:$0xff]
    %v6536 = vld [vmem:[#allocation3 + $0x58] sm:$0xff]
    %v6538 = vperm.slane %v6531, 0
    %v6539 = vperm.slane %v6531, 1
    %v6540 = vperm.slane %v6531, 2
    %v6541 = vperm.slane %v6531, 3
    %6542 = vrot.lane.b32.xlu0 %v6538, 63
    %v6543 = vpop.permute.xlu0 %6542
    %6544 = vrot.lane.b32.xlu0 %v6539, 63
    %v6545 = vpop.permute.xlu0 %6544
    %6546 = vrot.lane.b32.xlu0 %v6540, 63
    %v6547 = vpop.permute.xlu0 %6546
    %6548 = vrot.lane.b32.xlu0 %v6541, 63
    %v6549 = vpop.permute.xlu0 %6548
    %v6550 = vsel %vm284, %v6543, %v6545
    %v6551 = vsel %vm284, %v6545, %v6547
    %v6552 = vsel %vm284, %v6547, %v6549
    %v6558 = vmul.f32 %v6532, %v6543
    %v6559 = vmul.f32 %v6533, %v6550
    %v6560 = vmul.f32 %v6534, %v6551
    %v6561 = vmul.f32 %v6535, %v6552
    %v6562 = vmul.f32 %v6536, %v6549
    %6568 = vrot.lane.b32.xlu0 %v6558, 65
    %v6569 = vpop.permute.xlu0 %6568
    %6570 = vrot.lane.b32.xlu0 %v6559, 65
    %v6571 = vpop.permute.xlu0 %6570
    %6572 = vrot.lane.b32.xlu0 %v6560, 65
    %v6573 = vpop.permute.xlu0 %6572
    %6574 = vrot.lane.b32.xlu0 %v6561, 65
    %v6575 = vpop.permute.xlu0 %6574
    %6576 = vrot.lane.b32.xlu0 %v6562, 65
    %v6577 = vpop.permute.xlu0 %6576
    %v6578 = vsel %vm318, %v6569, %v6571
    %v6579 = vsel %vm318, %v6571, %v6573
    %v6580 = vsel %vm318, %v6573, %v6575
    %v6581 = vsel %vm318, %v6575, %v6577
    %6586 = vst [vmem:[#allocation4 + $0x560] sm:$0xff] %v6578
    %6587 = vst [vmem:[#allocation4 + $0x568] sm:$0xff] %v6579
    %6588 = vst [vmem:[#allocation4 + $0x570] sm:$0xff] %v6580
    %6589 = vst [vmem:[#allocation4 + $0x578] sm:$0xff] %v6581
    %v6590 = vld [vmem:[%s1435] ss:$8 sm:$0xf]
    %v6591 = vld [vmem:[#allocation3 + $0x38] sm:$0xff]
    %v6592 = vld [vmem:[#allocation3 + $0x40] sm:$0xff]
    %v6593 = vld [vmem:[#allocation3 + $0x48] sm:$0xff]
    %v6594 = vld [vmem:[#allocation3 + $0x50] sm:$0xff]
    %v6595 = vld [vmem:[#allocation3 + $0x58] sm:$0xff]
    %v6597 = vperm.slane %v6590, 0
    %v6598 = vperm.slane %v6590, 1
    %v6599 = vperm.slane %v6590, 2
    %v6600 = vperm.slane %v6590, 3
    %6601 = vrot.lane.b32.xlu0 %v6597, 64
    %v6602 = vpop.permute.xlu0 %6601
    %6603 = vrot.lane.b32.xlu0 %v6598, 64
    %v6604 = vpop.permute.xlu0 %6603
    %6605 = vrot.lane.b32.xlu0 %v6599, 64
    %v6606 = vpop.permute.xlu0 %6605
    %6607 = vrot.lane.b32.xlu0 %v6600, 64
    %v6608 = vpop.permute.xlu0 %6607
    %v6609 = vsel %vm351, %v6602, %v6604
    %v6610 = vsel %vm351, %v6604, %v6606
    %v6611 = vsel %vm351, %v6606, %v6608
    %v6617 = vmul.f32 %v6591, %v6602
    %v6618 = vmul.f32 %v6592, %v6609
    %v6619 = vmul.f32 %v6593, %v6610
    %v6620 = vmul.f32 %v6594, %v6611
    %v6621 = vmul.f32 %v6595, %v6608
    %6627 = vrot.lane.b32.xlu0 %v6617, 64
    %v6628 = vpop.permute.xlu0 %6627
    %6629 = vrot.lane.b32.xlu0 %v6618, 64
    %v6630 = vpop.permute.xlu0 %6629
    %6631 = vrot.lane.b32.xlu0 %v6619, 64
    %v6632 = vpop.permute.xlu0 %6631
    %6633 = vrot.lane.b32.xlu0 %v6620, 64
    %v6634 = vpop.permute.xlu0 %6633
    %6635 = vrot.lane.b32.xlu0 %v6621, 64
    %v6636 = vpop.permute.xlu0 %6635
    %v6637 = vsel %vm351, %v6628, %v6630
    %v6638 = vsel %vm351, %v6630, %v6632
    %v6639 = vsel %vm351, %v6632, %v6634
    %v6640 = vsel %vm351, %v6634, %v6636
    %6645 = vst [vmem:[#allocation4 + $0x5a0] sm:$0xff] %v6637
    %6646 = vst [vmem:[#allocation4 + $0x5a8] sm:$0xff] %v6638
    %6647 = vst [vmem:[#allocation4 + $0x5b0] sm:$0xff] %v6639
    %6648 = vst [vmem:[#allocation4 + $0x5b8] sm:$0xff] %v6640
    %v6649 = vld [vmem:[%s1495] ss:$8 sm:$0xf]
    %v6650 = vld [vmem:[#allocation3 + $0x38] sm:$0xff]
    %v6651 = vld [vmem:[#allocation3 + $0x40] sm:$0xff]
    %v6652 = vld [vmem:[#allocation3 + $0x48] sm:$0xff]
    %v6653 = vld [vmem:[#allocation3 + $0x50] sm:$0xff]
    %v6654 = vld [vmem:[#allocation3 + $0x58] sm:$0xff]
    %v6656 = vperm.slane %v6649, 0
    %v6657 = vperm.slane %v6649, 1
    %v6658 = vperm.slane %v6649, 2
    %v6659 = vperm.slane %v6649, 3
    %6660 = vrot.lane.b32.xlu0 %v6656, 65
    %v6661 = vpop.permute.xlu0 %6660
    %6662 = vrot.lane.b32.xlu0 %v6657, 65
    %v6663 = vpop.permute.xlu0 %6662
    %6664 = vrot.lane.b32.xlu0 %v6658, 65
    %v6665 = vpop.permute.xlu0 %6664
    %6666 = vrot.lane.b32.xlu0 %v6659, 65
    %v6667 = vpop.permute.xlu0 %6666
    %v6668 = vsel %vm318, %v6661, %v6663
    %v6669 = vsel %vm318, %v6663, %v6665
    %v6670 = vsel %vm318, %v6665, %v6667
    %v6676 = vmul.f32 %v6650, %v6661
    %v6677 = vmul.f32 %v6651, %v6668
    %v6678 = vmul.f32 %v6652, %v6669
    %v6679 = vmul.f32 %v6653, %v6670
    %v6680 = vmul.f32 %v6654, %v6667
    %6686 = vrot.lane.b32.xlu0 %v6676, 63
    %v6687 = vpop.permute.xlu0 %6686
    %6688 = vrot.lane.b32.xlu0 %v6677, 63
    %v6689 = vpop.permute.xlu0 %6688
    %6690 = vrot.lane.b32.xlu0 %v6678, 63
    %v6691 = vpop.permute.xlu0 %6690
    %6692 = vrot.lane.b32.xlu0 %v6679, 63
    %v6693 = vpop.permute.xlu0 %6692
    %6694 = vrot.lane.b32.xlu0 %v6680, 63
    %v6695 = vpop.permute.xlu0 %6694
    %v6696 = vsel %vm284, %v6687, %v6689
    %v6697 = vsel %vm284, %v6689, %v6691
    %v6698 = vsel %vm284, %v6691, %v6693
    %v6699 = vsel %vm284, %v6693, %v6695
    %6704 = vst [vmem:[#allocation4 + $0x5e0] sm:$0xff] %v6696
    %6705 = vst [vmem:[#allocation4 + $0x5e8] sm:$0xff] %v6697
    %6706 = vst [vmem:[#allocation4 + $0x5f0] sm:$0xff] %v6698
    %6707 = vst [vmem:[#allocation4 + $0x5f8] sm:$0xff] %v6699
    %v6708 = vld [vmem:[%s1560] ss:$8 sm:$0xf]
    %v6709 = vld [vmem:[#allocation3 + $0x38] sm:$0xff]
    %v6710 = vld [vmem:[#allocation3 + $0x40] sm:$0xff]
    %v6711 = vld [vmem:[#allocation3 + $0x48] sm:$0xff]
    %v6712 = vld [vmem:[#allocation3 + $0x50] sm:$0xff]
    %v6713 = vld [vmem:[#allocation3 + $0x58] sm:$0xff]
    %v6715 = vperm.slane %v6708, 0
    %v6716 = vperm.slane %v6708, 1
    %v6717 = vperm.slane %v6708, 2
    %v6718 = vperm.slane %v6708, 3
    %6719 = vrot.lane.b32.xlu0 %v6715, 71
    %v6720 = vpop.permute.xlu0 %6719
    %6721 = vrot.lane.b32.xlu0 %v6716, 71
    %v6722 = vpop.permute.xlu0 %6721
    %6723 = vrot.lane.b32.xlu0 %v6717, 71
    %v6724 = vpop.permute.xlu0 %6723
    %6725 = vrot.lane.b32.xlu0 %v6718, 71
    %v6726 = vpop.permute.xlu0 %6725
    %v6727 = vsel %vm251, %v6720, %v6722
    %v6728 = vsel %vm251, %v6722, %v6724
    %v6729 = vsel %vm251, %v6724, %v6726
    %v6735 = vmul.f32 %v6709, %v6720
    %v6736 = vmul.f32 %v6710, %v6727
    %v6737 = vmul.f32 %v6711, %v6728
    %v6738 = vmul.f32 %v6712, %v6729
    %v6739 = vmul.f32 %v6713, %v6726
    %6745 = vrot.lane.b32.xlu0 %v6735, 57
    %v6746 = vpop.permute.xlu0 %6745
    %6747 = vrot.lane.b32.xlu0 %v6736, 57
    %v6748 = vpop.permute.xlu0 %6747
    %6749 = vrot.lane.b32.xlu0 %v6737, 57
    %v6750 = vpop.permute.xlu0 %6749
    %6751 = vrot.lane.b32.xlu0 %v6738, 57
    %v6752 = vpop.permute.xlu0 %6751
    %6753 = vrot.lane.b32.xlu0 %v6739, 57
    %v6754 = vpop.permute.xlu0 %6753
    %v6755 = vsel %vm222, %v6746, %v6748
    %v6756 = vsel %vm222, %v6748, %v6750
    %v6757 = vsel %vm222, %v6750, %v6752
    %v6758 = vsel %vm222, %v6752, %v6754
    %6763 = vst [vmem:[#allocation4 + $0x620] sm:$0xff] %v6755
    %6764 = vst [vmem:[#allocation4 + $0x628] sm:$0xff] %v6756
    %6765 = vst [vmem:[#allocation4 + $0x630] sm:$0xff] %v6757
    %6766 = vst [vmem:[#allocation4 + $0x638] sm:$0xff] %v6758
    %v6767 = vld [vmem:[%s1620] ss:$8 sm:$0xf]
    %v6768 = vld [vmem:[#allocation3 + $0x38] sm:$0xff]
    %v6769 = vld [vmem:[#allocation3 + $0x40] sm:$0xff]
    %v6770 = vld [vmem:[#allocation3 + $0x48] sm:$0xff]
    %v6771 = vld [vmem:[#allocation3 + $0x50] sm:$0xff]
    %v6772 = vld [vmem:[#allocation3 + $0x58] sm:$0xff]
    %v6774 = vperm.slane %v6767, 0
    %v6775 = vperm.slane %v6767, 1
    %v6776 = vperm.slane %v6767, 2
    %v6777 = vperm.slane %v6767, 3
    %6778 = vrot.lane.b32.xlu0 %v6774, 72
    %v6779 = vpop.permute.xlu0 %6778
    %6780 = vrot.lane.b32.xlu0 %v6775, 72
    %v6781 = vpop.permute.xlu0 %6780
    %6782 = vrot.lane.b32.xlu0 %v6776, 72
    %v6783 = vpop.permute.xlu0 %6782
    %6784 = vrot.lane.b32.xlu0 %v6777, 72
    %v6785 = vpop.permute.xlu0 %6784
    %v6786 = vsel %vm189, %v6779, %v6781
    %v6787 = vsel %vm189, %v6781, %v6783
    %v6788 = vsel %vm189, %v6783, %v6785
    %v6794 = vmul.f32 %v6768, %v6779
    %v6795 = vmul.f32 %v6769, %v6786
    %v6796 = vmul.f32 %v6770, %v6787
    %v6797 = vmul.f32 %v6771, %v6788
    %v6798 = vmul.f32 %v6772, %v6785
    %6804 = vrot.lane.b32.xlu0 %v6794, 56
    %v6805 = vpop.permute.xlu0 %6804
    %6806 = vrot.lane.b32.xlu0 %v6795, 56
    %v6807 = vpop.permute.xlu0 %6806
    %6808 = vrot.lane.b32.xlu0 %v6796, 56
    %v6809 = vpop.permute.xlu0 %6808
    %6810 = vrot.lane.b32.xlu0 %v6797, 56
    %v6811 = vpop.permute.xlu0 %6810
    %6812 = vrot.lane.b32.xlu0 %v6798, 56
    %v6813 = vpop.permute.xlu0 %6812
    %v6814 = vsel %vm155, %v6805, %v6807
    %v6815 = vsel %vm155, %v6807, %v6809
    %v6816 = vsel %vm155, %v6809, %v6811
    %v6817 = vsel %vm155, %v6811, %v6813
    %6822 = vst [vmem:[#allocation4 + $0x660] sm:$0xff] %v6814
    %6823 = vst [vmem:[#allocation4 + $0x668] sm:$0xff] %v6815
    %6824 = vst [vmem:[#allocation4 + $0x670] sm:$0xff] %v6816
    %6825 = vst [vmem:[#allocation4 + $0x678] sm:$0xff] %v6817
    %v6826 = vld [vmem:[%s1685] ss:$8 sm:$0xf]
    %v6827 = vld [vmem:[#allocation3 + $0x38] sm:$0xff]
    %v6828 = vld [vmem:[#allocation3 + $0x40] sm:$0xff]
    %v6829 = vld [vmem:[#allocation3 + $0x48] sm:$0xff]
    %v6830 = vld [vmem:[#allocation3 + $0x50] sm:$0xff]
    %v6831 = vld [vmem:[#allocation3 + $0x58] sm:$0xff]
    %v6833 = vperm.slane %v6826, 0
    %v6834 = vperm.slane %v6826, 1
    %v6835 = vperm.slane %v6826, 2
    %v6836 = vperm.slane %v6826, 3
    %6837 = vrot.lane.b32.xlu0 %v6833, 73
    %v6838 = vpop.permute.xlu0 %6837
    %6839 = vrot.lane.b32.xlu0 %v6834, 73
    %v6840 = vpop.permute.xlu0 %6839
    %6841 = vrot.lane.b32.xlu0 %v6835, 73
    %v6842 = vpop.permute.xlu0 %6841
    %6843 = vrot.lane.b32.xlu0 %v6836, 73
    %v6844 = vpop.permute.xlu0 %6843
    %v6845 = vsel %vm122, %v6838, %v6840
    %v6846 = vsel %vm122, %v6840, %v6842
    %v6847 = vsel %vm122, %v6842, %v6844
    %v6853 = vmul.f32 %v6827, %v6838
    %v6854 = vmul.f32 %v6828, %v6845
    %v6855 = vmul.f32 %v6829, %v6846
    %v6856 = vmul.f32 %v6830, %v6847
    %v6857 = vmul.f32 %v6831, %v6844
    %6863 = vrot.lane.b32.xlu0 %v6853, 55
    %v6864 = vpop.permute.xlu0 %6863
    %6865 = vrot.lane.b32.xlu0 %v6854, 55
    %v6866 = vpop.permute.xlu0 %6865
    %6867 = vrot.lane.b32.xlu0 %v6855, 55
    %v6868 = vpop.permute.xlu0 %6867
    %6869 = vrot.lane.b32.xlu0 %v6856, 55
    %v6870 = vpop.permute.xlu0 %6869
    %6871 = vrot.lane.b32.xlu0 %v6857, 55
    %v6872 = vpop.permute.xlu0 %6871
    %v6873 = vsel %vm93, %v6864, %v6866
    %v6874 = vsel %vm93, %v6866, %v6868
    %v6875 = vsel %vm93, %v6868, %v6870
    %v6876 = vsel %vm93, %v6870, %v6872
    %6881 = vst [vmem:[#allocation4 + $0x6a0] sm:$0xff] %v6873
    %6882 = vst [vmem:[#allocation4 + $0x6a8] sm:$0xff] %v6874
    %6883 = vst [vmem:[#allocation4 + $0x6b0] sm:$0xff] %v6875
    %6884 = vst [vmem:[#allocation4 + $0x6b8] sm:$0xff] %v6876
    %v6885 = vld [vmem:[%s5] sm:$0xff]
    %v6886 = vld [vmem:[%s5 + $0x8] sm:$0xff]
    %v6887 = vld [vmem:[#allocation4] sm:$0xff]
    %v6888 = vld [vmem:[#allocation4 + $0x8] sm:$0xff]
    %v6889 = vld [vmem:[#allocation4 + $0x10] sm:$0xff]
    %v6890 = vld [vmem:[#allocation4 + $0x18] sm:$0xff]
    %v6891 = vld [vmem:[#allocation4 + $0x20] sm:$0xff]
    %v6892 = vld [vmem:[#allocation4 + $0x28] sm:$0xff]
    %v6893 = vld [vmem:[#allocation4 + $0x30] sm:$0xff]
    %v6894 = vld [vmem:[#allocation4 + $0x38] sm:$0xff]
    %v6895 = vld [vmem:[#allocation4 + $0x40] sm:$0xff]
    %v6896 = vld [vmem:[#allocation4 + $0x48] sm:$0xff]
    %v6897 = vld [vmem:[#allocation4 + $0x50] sm:$0xff]
    %v6898 = vld [vmem:[#allocation4 + $0x58] sm:$0xff]
    %v6899 = vld [vmem:[#allocation4 + $0x60] sm:$0xff]
    %v6900 = vld [vmem:[#allocation4 + $0x68] sm:$0xff]
    %v6901 = vld [vmem:[#allocation4 + $0x70] sm:$0xff]
    %v6902 = vld [vmem:[#allocation4 + $0x78] sm:$0xff]
    %v6903 = vld [vmem:[#allocation4 + $0x80] sm:$0xff]
    %v6904 = vld [vmem:[#allocation4 + $0x88] sm:$0xff]
    %v6905 = vld [vmem:[#allocation4 + $0x90] sm:$0xff]
    %v6906 = vld [vmem:[#allocation4 + $0x98] sm:$0xff]
    %v6907 = vld [vmem:[#allocation4 + $0xa0] sm:$0xff]
    %v6908 = vld [vmem:[#allocation4 + $0xa8] sm:$0xff]
    %v6909 = vld [vmem:[#allocation4 + $0xb0] sm:$0xff]
    %v6910 = vld [vmem:[#allocation4 + $0xb8] sm:$0xff]
    %v6911 = vld [vmem:[#allocation4 + $0xc0] sm:$0xff]
    %v6912 = vld [vmem:[#allocation4 + $0xc8] sm:$0xff]
    %v6913 = vld [vmem:[#allocation4 + $0xd0] sm:$0xff]
    %v6914 = vld [vmem:[#allocation4 + $0xd8] sm:$0xff]
    %v6915 = vld [vmem:[#allocation4 + $0xe0] sm:$0xff]
    %v6916 = vld [vmem:[#allocation4 + $0xe8] sm:$0xff]
    %v6917 = vld [vmem:[#allocation4 + $0xf0] sm:$0xff]
    %v6918 = vld [vmem:[#allocation4 + $0xf8] sm:$0xff]
    %v6919 = vld [vmem:[#allocation4 + $0x100] sm:$0xff]
    %v6920 = vld [vmem:[#allocation4 + $0x108] sm:$0xff]
    %v6921 = vld [vmem:[#allocation4 + $0x110] sm:$0xff]
    %v6922 = vld [vmem:[#allocation4 + $0x118] sm:$0xff]
    %v6923 = vld [vmem:[#allocation4 + $0x120] sm:$0xff]
    %v6924 = vld [vmem:[#allocation4 + $0x128] sm:$0xff]
    %v6925 = vld [vmem:[#allocation4 + $0x130] sm:$0xff]
    %v6926 = vld [vmem:[#allocation4 + $0x138] sm:$0xff]
    %v6927 = vld [vmem:[#allocation4 + $0x140] sm:$0xff]
    %v6928 = vld [vmem:[#allocation4 + $0x148] sm:$0xff]
    %v6929 = vld [vmem:[#allocation4 + $0x150] sm:$0xff]
    %v6930 = vld [vmem:[#allocation4 + $0x158] sm:$0xff]
    %v6931 = vld [vmem:[#allocation4 + $0x160] sm:$0xff]
    %v6932 = vld [vmem:[#allocation4 + $0x168] sm:$0xff]
    %v6933 = vld [vmem:[#allocation4 + $0x170] sm:$0xff]
    %v6934 = vld [vmem:[#allocation4 + $0x178] sm:$0xff]
    %v6935 = vld [vmem:[#allocation4 + $0x180] sm:$0xff]
    %v6936 = vld [vmem:[#allocation4 + $0x188] sm:$0xff]
    %v6937 = vld [vmem:[#allocation4 + $0x190] sm:$0xff]
    %v6938 = vld [vmem:[#allocation4 + $0x198] sm:$0xff]
    %v6939 = vld [vmem:[#allocation4 + $0x1a0] sm:$0xff]
    %v6940 = vld [vmem:[#allocation4 + $0x1a8] sm:$0xff]
    %v6941 = vld [vmem:[#allocation4 + $0x1b0] sm:$0xff]
    %v6942 = vld [vmem:[#allocation4 + $0x1b8] sm:$0xff]
    %v6943 = vld [vmem:[#allocation4 + $0x1c0] sm:$0xff]
    %v6944 = vld [vmem:[#allocation4 + $0x1c8] sm:$0xff]
    %v6945 = vld [vmem:[#allocation4 + $0x1d0] sm:$0xff]
    %v6946 = vld [vmem:[#allocation4 + $0x1d8] sm:$0xff]
    %v6947 = vld [vmem:[#allocation4 + $0x1e0] sm:$0xff]
    %v6948 = vld [vmem:[#allocation4 + $0x1e8] sm:$0xff]
    %v6949 = vld [vmem:[#allocation4 + $0x1f0] sm:$0xff]
    %v6950 = vld [vmem:[#allocation4 + $0x1f8] sm:$0xff]
    %v6951 = vld [vmem:[#allocation4 + $0x200] sm:$0xff]
    %v6952 = vld [vmem:[#allocation4 + $0x208] sm:$0xff]
    %v6953 = vld [vmem:[#allocation4 + $0x210] sm:$0xff]
    %v6954 = vld [vmem:[#allocation4 + $0x218] sm:$0xff]
    %v6955 = vld [vmem:[#allocation4 + $0x220] sm:$0xff]
    %v6956 = vld [vmem:[#allocation4 + $0x228] sm:$0xff]
    %v6957 = vld [vmem:[#allocation4 + $0x230] sm:$0xff]
    %v6958 = vld [vmem:[#allocation4 + $0x238] sm:$0xff]
    %v6959 = vld [vmem:[#allocation4 + $0x240] sm:$0xff]
    %v6960 = vld [vmem:[#allocation4 + $0x248] sm:$0xff]
    %v6961 = vld [vmem:[#allocation4 + $0x250] sm:$0xff]
    %v6962 = vld [vmem:[#allocation4 + $0x258] sm:$0xff]
    %v6963 = vld [vmem:[#allocation4 + $0x260] sm:$0xff]
    %v6964 = vld [vmem:[#allocation4 + $0x268] sm:$0xff]
    %v6965 = vld [vmem:[#allocation4 + $0x270] sm:$0xff]
    %v6966 = vld [vmem:[#allocation4 + $0x278] sm:$0xff]
    %v6967 = vld [vmem:[#allocation4 + $0x280] sm:$0xff]
    %v6968 = vld [vmem:[#allocation4 + $0x288] sm:$0xff]
    %v6969 = vld [vmem:[#allocation4 + $0x290] sm:$0xff]
    %v6970 = vld [vmem:[#allocation4 + $0x298] sm:$0xff]
    %v6971 = vld [vmem:[#allocation4 + $0x2a0] sm:$0xff]
    %v6972 = vld [vmem:[#allocation4 + $0x2a8] sm:$0xff]
    %v6973 = vld [vmem:[#allocation4 + $0x2b0] sm:$0xff]
    %v6974 = vld [vmem:[#allocation4 + $0x2b8] sm:$0xff]
    %v6975 = vld [vmem:[#allocation4 + $0x2c0] sm:$0xff]
    %v6976 = vld [vmem:[#allocation4 + $0x2c8] sm:$0xff]
    %v6977 = vld [vmem:[#allocation4 + $0x2d0] sm:$0xff]
    %v6978 = vld [vmem:[#allocation4 + $0x2d8] sm:$0xff]
    %v6979 = vld [vmem:[#allocation4 + $0x2e0] sm:$0xff]
    %v6980 = vld [vmem:[#allocation4 + $0x2e8] sm:$0xff]
    %v6981 = vld [vmem:[#allocation4 + $0x2f0] sm:$0xff]
    %v6982 = vld [vmem:[#allocation4 + $0x2f8] sm:$0xff]
    %v6983 = vld [vmem:[#allocation4 + $0x300] sm:$0xff]
    %v6984 = vld [vmem:[#allocation4 + $0x308] sm:$0xff]
    %v6985 = vld [vmem:[#allocation4 + $0x310] sm:$0xff]
    %v6986 = vld [vmem:[#allocation4 + $0x318] sm:$0xff]
    %v6987 = vld [vmem:[#allocation4 + $0x320] sm:$0xff]
    %v6988 = vld [vmem:[#allocation4 + $0x328] sm:$0xff]
    %v6989 = vld [vmem:[#allocation4 + $0x330] sm:$0xff]
    %v6990 = vld [vmem:[#allocation4 + $0x338] sm:$0xff]
    %v6991 = vld [vmem:[#allocation4 + $0x340] sm:$0xff]
    %v6992 = vld [vmem:[#allocation4 + $0x348] sm:$0xff]
    %v6993 = vld [vmem:[#allocation4 + $0x350] sm:$0xff]
    %v6994 = vld [vmem:[#allocation4 + $0x358] sm:$0xff]
    %v6995 = vld [vmem:[#allocation4 + $0x360] sm:$0xff]
    %v6996 = vld [vmem:[#allocation4 + $0x368] sm:$0xff]
    %v6997 = vld [vmem:[#allocation4 + $0x370] sm:$0xff]
    %v6998 = vld [vmem:[#allocation4 + $0x378] sm:$0xff]
    %v6999 = vld [vmem:[#allocation4 + $0x380] sm:$0xff]
    %v7000 = vld [vmem:[#allocation4 + $0x388] sm:$0xff]
    %v7001 = vld [vmem:[#allocation4 + $0x390] sm:$0xff]
    %v7002 = vld [vmem:[#allocation4 + $0x398] sm:$0xff]
    %v7003 = vld [vmem:[#allocation4 + $0x3a0] sm:$0xff]
    %v7004 = vld [vmem:[#allocation4 + $0x3a8] sm:$0xff]
    %v7005 = vld [vmem:[#allocation4 + $0x3b0] sm:$0xff]
    %v7006 = vld [vmem:[#allocation4 + $0x3b8] sm:$0xff]
    %v7007 = vld [vmem:[#allocation4 + $0x3c0] sm:$0xff]
    %v7008 = vld [vmem:[#allocation4 + $0x3c8] sm:$0xff]
    %v7009 = vld [vmem:[#allocation4 + $0x3d0] sm:$0xff]
    %v7010 = vld [vmem:[#allocation4 + $0x3d8] sm:$0xff]
    %v7011 = vld [vmem:[#allocation4 + $0x3e0] sm:$0xff]
    %v7012 = vld [vmem:[#allocation4 + $0x3e8] sm:$0xff]
    %v7013 = vld [vmem:[#allocation4 + $0x3f0] sm:$0xff]
    %v7014 = vld [vmem:[#allocation4 + $0x3f8] sm:$0xff]
    %v7015 = vld [vmem:[#allocation4 + $0x400] sm:$0xff]
    %v7016 = vld [vmem:[#allocation4 + $0x408] sm:$0xff]
    %v7017 = vld [vmem:[#allocation4 + $0x410] sm:$0xff]
    %v7018 = vld [vmem:[#allocation4 + $0x418] sm:$0xff]
    %v7019 = vld [vmem:[#allocation4 + $0x420] sm:$0xff]
    %v7020 = vld [vmem:[#allocation4 + $0x428] sm:$0xff]
    %v7021 = vld [vmem:[#allocation4 + $0x430] sm:$0xff]
    %v7022 = vld [vmem:[#allocation4 + $0x438] sm:$0xff]
    %v7023 = vld [vmem:[#allocation4 + $0x440] sm:$0xff]
    %v7024 = vld [vmem:[#allocation4 + $0x448] sm:$0xff]
    %v7025 = vld [vmem:[#allocation4 + $0x450] sm:$0xff]
    %v7026 = vld [vmem:[#allocation4 + $0x458] sm:$0xff]
    %v7027 = vld [vmem:[#allocation4 + $0x460] sm:$0xff]
    %v7028 = vld [vmem:[#allocation4 + $0x468] sm:$0xff]
    %v7029 = vld [vmem:[#allocation4 + $0x470] sm:$0xff]
    %v7030 = vld [vmem:[#allocation4 + $0x478] sm:$0xff]
    %v7031 = vld [vmem:[#allocation4 + $0x480] sm:$0xff]
    %v7032 = vld [vmem:[#allocation4 + $0x488] sm:$0xff]
    %v7033 = vld [vmem:[#allocation4 + $0x490] sm:$0xff]
    %v7034 = vld [vmem:[#allocation4 + $0x498] sm:$0xff]
    %v7035 = vld [vmem:[#allocation4 + $0x4a0] sm:$0xff]
    %v7036 = vld [vmem:[#allocation4 + $0x4a8] sm:$0xff]
    %v7037 = vld [vmem:[#allocation4 + $0x4b0] sm:$0xff]
    %v7038 = vld [vmem:[#allocation4 + $0x4b8] sm:$0xff]
    %v7039 = vld [vmem:[#allocation4 + $0x4c0] sm:$0xff]
    %v7040 = vld [vmem:[#allocation4 + $0x4c8] sm:$0xff]
    %v7041 = vld [vmem:[#allocation4 + $0x4d0] sm:$0xff]
    %v7042 = vld [vmem:[#allocation4 + $0x4d8] sm:$0xff]
    %v7043 = vld [vmem:[#allocation4 + $0x4e0] sm:$0xff]
    %v7044 = vld [vmem:[#allocation4 + $0x4e8] sm:$0xff]
    %v7045 = vld [vmem:[#allocation4 + $0x4f0] sm:$0xff]
    %v7046 = vld [vmem:[#allocation4 + $0x4f8] sm:$0xff]
    %v7047 = vld [vmem:[#allocation4 + $0x500] sm:$0xff]
    %v7048 = vld [vmem:[#allocation4 + $0x508] sm:$0xff]
    %v7049 = vld [vmem:[#allocation4 + $0x510] sm:$0xff]
    %v7050 = vld [vmem:[#allocation4 + $0x518] sm:$0xff]
    %v7051 = vld [vmem:[#allocation4 + $0x520] sm:$0xff]
    %v7052 = vld [vmem:[#allocation4 + $0x528] sm:$0xff]
    %v7053 = vld [vmem:[#allocation4 + $0x530] sm:$0xff]
    %v7054 = vld [vmem:[#allocation4 + $0x538] sm:$0xff]
    %v7055 = vld [vmem:[#allocation4 + $0x540] sm:$0xff]
    %v7056 = vld [vmem:[#allocation4 + $0x548] sm:$0xff]
    %v7057 = vld [vmem:[#allocation4 + $0x550] sm:$0xff]
    %v7058 = vld [vmem:[#allocation4 + $0x558] sm:$0xff]
    %v7059 = vld [vmem:[#allocation4 + $0x560] sm:$0xff]
    %v7060 = vld [vmem:[#allocation4 + $0x568] sm:$0xff]
    %v7061 = vld [vmem:[#allocation4 + $0x570] sm:$0xff]
    %v7062 = vld [vmem:[#allocation4 + $0x578] sm:$0xff]
    %v7063 = vld [vmem:[#allocation4 + $0x580] sm:$0xff]
    %v7064 = vld [vmem:[#allocation4 + $0x588] sm:$0xff]
    %v7065 = vld [vmem:[#allocation4 + $0x590] sm:$0xff]
    %v7066 = vld [vmem:[#allocation4 + $0x598] sm:$0xff]
    %v7067 = vld [vmem:[#allocation4 + $0x5a0] sm:$0xff]
    %v7068 = vld [vmem:[#allocation4 + $0x5a8] sm:$0xff]
    %v7069 = vld [vmem:[#allocation4 + $0x5b0] sm:$0xff]
    %v7070 = vld [vmem:[#allocation4 + $0x5b8] sm:$0xff]
    %v7071 = vld [vmem:[#allocation4 + $0x5c0] sm:$0xff]
    %v7072 = vld [vmem:[#allocation4 + $0x5c8] sm:$0xff]
    %v7073 = vld [vmem:[#allocation4 + $0x5d0] sm:$0xff]
    %v7074 = vld [vmem:[#allocation4 + $0x5d8] sm:$0xff]
    %v7075 = vld [vmem:[#allocation4 + $0x5e0] sm:$0xff]
    %v7076 = vld [vmem:[#allocation4 + $0x5e8] sm:$0xff]
    %v7077 = vld [vmem:[#allocation4 + $0x5f0] sm:$0xff]
    %v7078 = vld [vmem:[#allocation4 + $0x5f8] sm:$0xff]
    %v7079 = vld [vmem:[#allocation4 + $0x600] sm:$0xff]
    %v7080 = vld [vmem:[#allocation4 + $0x608] sm:$0xff]
    %v7081 = vld [vmem:[#allocation4 + $0x610] sm:$0xff]
    %v7082 = vld [vmem:[#allocation4 + $0x618] sm:$0xff]
    %v7083 = vld [vmem:[#allocation4 + $0x620] sm:$0xff]
    %v7084 = vld [vmem:[#allocation4 + $0x628] sm:$0xff]
    %v7085 = vld [vmem:[#allocation4 + $0x630] sm:$0xff]
    %v7086 = vld [vmem:[#allocation4 + $0x638] sm:$0xff]
    %v7087 = vld [vmem:[#allocation4 + $0x640] sm:$0xff]
    %v7088 = vld [vmem:[#allocation4 + $0x648] sm:$0xff]
    %v7089 = vld [vmem:[#allocation4 + $0x650] sm:$0xff]
    %v7090 = vld [vmem:[#allocation4 + $0x658] sm:$0xff]
    %v7091 = vld [vmem:[#allocation4 + $0x660] sm:$0xff]
    %v7092 = vld [vmem:[#allocation4 + $0x668] sm:$0xff]
    %v7093 = vld [vmem:[#allocation4 + $0x670] sm:$0xff]
    %v7094 = vld [vmem:[#allocation4 + $0x678] sm:$0xff]
    %v7095 = vld [vmem:[#allocation4 + $0x680] sm:$0xff]
    %v7096 = vld [vmem:[#allocation4 + $0x688] sm:$0xff]
    %v7097 = vld [vmem:[#allocation4 + $0x690] sm:$0xff]
    %v7098 = vld [vmem:[#allocation4 + $0x698] sm:$0xff]
    %v7099 = vld [vmem:[#allocation4 + $0x6a0] sm:$0xff]
    %v7100 = vld [vmem:[#allocation4 + $0x6a8] sm:$0xff]
    %v7101 = vld [vmem:[#allocation4 + $0x6b0] sm:$0xff]
    %v7102 = vld [vmem:[#allocation4 + $0x6b8] sm:$0xff]
    %vm7103 = vcmask 719872
    %v7105 = vsel %vm7103, %v6886, 0
    %7107 = vmatpush.msra.mxu0 %v7007
    %7108 = vmatpush.msra.mxu0 %v6999
    %7109 = vmatpush.msra.mxu0 %v6991
    %7110 = vmatpush.msra.mxu0 %v6983
    %7111 = vmatpush.msra.mxu0 %v6975
    %7112 = vmatpush.msra.mxu0 %v6967
    %7113 = vmatpush.msra.mxu0 %v6959
    %7114 = vmatpush.msra.mxu0 %v6951
    %7115 = vmatpush.msra.mxu0 %v6943
    %7116 = vmatpush.msra.mxu0 %v6935
    %7117 = vmatpush.msra.mxu0 %v6927
    %7118 = vmatpush.msra.mxu0 %v6919
    %7119 = vmatpush.msra.mxu0 %v6911
    %7120 = vmatpush.msra.mxu0 %v6903
    %7121 = vmatpush.msra.mxu0 %v6895
    %7122 = vmatpush.msra.mxu0 %v6887
    %7123 = vmatmul.f32.gmra.mxu0 %v6885
    %v7124 = vpop.f32.mrf.mxu0
    %v7125 = vadd.f32 0.0, %v7124
    %7126 = vdwg.mxu0
    %7127 = vmatpush.msra.mxu0 0.0
    %7128 = vmatpush.msra.mxu0 0.0
    %7129 = vmatpush.msra.mxu0 0.0
    %7130 = vmatpush.msra.mxu0 0.0
    %7131 = vmatpush.msra.mxu0 0.0
    %7132 = vmatpush.msra.mxu0 %v7095
    %7133 = vmatpush.msra.mxu0 %v7087
    %7134 = vmatpush.msra.mxu0 %v7079
    %7135 = vmatpush.msra.mxu0 %v7071
    %7136 = vmatpush.msra.mxu0 %v7063
    %7137 = vmatpush.msra.mxu0 %v7055
    %7138 = vmatpush.msra.mxu0 %v7047
    %7139 = vmatpush.msra.mxu0 %v7039
    %7140 = vmatpush.msra.mxu0 %v7031
    %7141 = vmatpush.msra.mxu0 %v7023
    %7142 = vmatpush.msra.mxu0 %v7015
    %7143 = vmatmul.f32.gmra.mxu0 %v7105
    %v7144 = vpop.f32.mrf.mxu0
    %v7145 = vadd.f32 %v7125, %v7144
    %7146 = vdwg.mxu0
    %7147 = vmatpush.msra.mxu0 %v7008
    %7148 = vmatpush.msra.mxu0 %v7000
    %7149 = vmatpush.msra.mxu0 %v6992
    %7150 = vmatpush.msra.mxu0 %v6984
    %7151 = vmatpush.msra.mxu0 %v6976
    %7152 = vmatpush.msra.mxu0 %v6968
    %7153 = vmatpush.msra.mxu0 %v6960
    %7154 = vmatpush.msra.mxu0 %v6952
    %7155 = vmatpush.msra.mxu0 %v6944
    %7156 = vmatpush.msra.mxu0 %v6936
    %7157 = vmatpush.msra.mxu0 %v6928
    %7158 = vmatpush.msra.mxu0 %v6920
    %7159 = vmatpush.msra.mxu0 %v6912
    %7160 = vmatpush.msra.mxu0 %v6904
    %7161 = vmatpush.msra.mxu0 %v6896
    %7162 = vmatpush.msra.mxu0 %v6888
    %7163 = vmatmul.f32.gmra.mxu0 %v6885
    %v7164 = vpop.f32.mrf.mxu0
    %v7165 = vadd.f32 0.0, %v7164
    %7166 = vdwg.mxu0
    %7167 = vmatpush.msra.mxu0 0.0
    %7168 = vmatpush.msra.mxu0 0.0
    %7169 = vmatpush.msra.mxu0 0.0
    %7170 = vmatpush.msra.mxu0 0.0
    %7171 = vmatpush.msra.mxu0 0.0
    %7172 = vmatpush.msra.mxu0 %v7096
    %7173 = vmatpush.msra.mxu0 %v7088
    %7174 = vmatpush.msra.mxu0 %v7080
    %7175 = vmatpush.msra.mxu0 %v7072
    %7176 = vmatpush.msra.mxu0 %v7064
    %7177 = vmatpush.msra.mxu0 %v7056
    %7178 = vmatpush.msra.mxu0 %v7048
    %7179 = vmatpush.msra.mxu0 %v7040
    %7180 = vmatpush.msra.mxu0 %v7032
    %7181 = vmatpush.msra.mxu0 %v7024
    %7182 = vmatpush.msra.mxu0 %v7016
    %7183 = vmatmul.f32.gmra.mxu0 %v7105
    %v7184 = vpop.f32.mrf.mxu0
    %v7185 = vadd.f32 %v7165, %v7184
    %7186 = vdwg.mxu0
    %7187 = vmatpush.msra.mxu0 %v7009
    %7188 = vmatpush.msra.mxu0 %v7001
    %7189 = vmatpush.msra.mxu0 %v6993
    %7190 = vmatpush.msra.mxu0 %v6985
    %7191 = vmatpush.msra.mxu0 %v6977
    %7192 = vmatpush.msra.mxu0 %v6969
    %7193 = vmatpush.msra.mxu0 %v6961
    %7194 = vmatpush.msra.mxu0 %v6953
    %7195 = vmatpush.msra.mxu0 %v6945
    %7196 = vmatpush.msra.mxu0 %v6937
    %7197 = vmatpush.msra.mxu0 %v6929
    %7198 = vmatpush.msra.mxu0 %v6921
    %7199 = vmatpush.msra.mxu0 %v6913
    %7200 = vmatpush.msra.mxu0 %v6905
    %7201 = vmatpush.msra.mxu0 %v6897
    %7202 = vmatpush.msra.mxu0 %v6889
    %7203 = vmatmul.f32.gmra.mxu0 %v6885
    %v7204 = vpop.f32.mrf.mxu0
    %v7205 = vadd.f32 0.0, %v7204
    %7206 = vdwg.mxu0
    %7207 = vmatpush.msra.mxu0 0.0
    %7208 = vmatpush.msra.mxu0 0.0
    %7209 = vmatpush.msra.mxu0 0.0
    %7210 = vmatpush.msra.mxu0 0.0
    %7211 = vmatpush.msra.mxu0 0.0
    %7212 = vmatpush.msra.mxu0 %v7097
    %7213 = vmatpush.msra.mxu0 %v7089
    %7214 = vmatpush.msra.mxu0 %v7081
    %7215 = vmatpush.msra.mxu0 %v7073
    %7216 = vmatpush.msra.mxu0 %v7065
    %7217 = vmatpush.msra.mxu0 %v7057
    %7218 = vmatpush.msra.mxu0 %v7049
    %7219 = vmatpush.msra.mxu0 %v7041
    %7220 = vmatpush.msra.mxu0 %v7033
    %7221 = vmatpush.msra.mxu0 %v7025
    %7222 = vmatpush.msra.mxu0 %v7017
    %7223 = vmatmul.f32.gmra.mxu0 %v7105
    %v7224 = vpop.f32.mrf.mxu0
    %v7225 = vadd.f32 %v7205, %v7224
    %7226 = vdwg.mxu0
    %7227 = vmatpush.msra.mxu0 %v7010
    %7228 = vmatpush.msra.mxu0 %v7002
    %7229 = vmatpush.msra.mxu0 %v6994
    %7230 = vmatpush.msra.mxu0 %v6986
    %7231 = vmatpush.msra.mxu0 %v6978
    %7232 = vmatpush.msra.mxu0 %v6970
    %7233 = vmatpush.msra.mxu0 %v6962
    %7234 = vmatpush.msra.mxu0 %v6954
    %7235 = vmatpush.msra.mxu0 %v6946
    %7236 = vmatpush.msra.mxu0 %v6938
    %7237 = vmatpush.msra.mxu0 %v6930
    %7238 = vmatpush.msra.mxu0 %v6922
    %7239 = vmatpush.msra.mxu0 %v6914
    %7240 = vmatpush.msra.mxu0 %v6906
    %7241 = vmatpush.msra.mxu0 %v6898
    %7242 = vmatpush.msra.mxu0 %v6890
    %7243 = vmatmul.f32.gmra.mxu0 %v6885
    %v7244 = vpop.f32.mrf.mxu0
    %v7245 = vadd.f32 0.0, %v7244
    %7246 = vdwg.mxu0
    %7247 = vmatpush.msra.mxu0 0.0
    %7248 = vmatpush.msra.mxu0 0.0
    %7249 = vmatpush.msra.mxu0 0.0
    %7250 = vmatpush.msra.mxu0 0.0
    %7251 = vmatpush.msra.mxu0 0.0
    %7252 = vmatpush.msra.mxu0 %v7098
    %7253 = vmatpush.msra.mxu0 %v7090
    %7254 = vmatpush.msra.mxu0 %v7082
    %7255 = vmatpush.msra.mxu0 %v7074
    %7256 = vmatpush.msra.mxu0 %v7066
    %7257 = vmatpush.msra.mxu0 %v7058
    %7258 = vmatpush.msra.mxu0 %v7050
    %7259 = vmatpush.msra.mxu0 %v7042
    %7260 = vmatpush.msra.mxu0 %v7034
    %7261 = vmatpush.msra.mxu0 %v7026
    %7262 = vmatpush.msra.mxu0 %v7018
    %7263 = vmatmul.f32.gmra.mxu0 %v7105
    %v7264 = vpop.f32.mrf.mxu0
    %v7265 = vadd.f32 %v7245, %v7264
    %7266 = vdwg.mxu0
    %7267 = vmatpush.msra.mxu0 %v7011
    %7268 = vmatpush.msra.mxu0 %v7003
    %7269 = vmatpush.msra.mxu0 %v6995
    %7270 = vmatpush.msra.mxu0 %v6987
    %7271 = vmatpush.msra.mxu0 %v6979
    %7272 = vmatpush.msra.mxu0 %v6971
    %7273 = vmatpush.msra.mxu0 %v6963
    %7274 = vmatpush.msra.mxu0 %v6955
    %7275 = vmatpush.msra.mxu0 %v6947
    %7276 = vmatpush.msra.mxu0 %v6939
    %7277 = vmatpush.msra.mxu0 %v6931
    %7278 = vmatpush.msra.mxu0 %v6923
    %7279 = vmatpush.msra.mxu0 %v6915
    %7280 = vmatpush.msra.mxu0 %v6907
    %7281 = vmatpush.msra.mxu0 %v6899
    %7282 = vmatpush.msra.mxu0 %v6891
    %7283 = vmatmul.f32.gmra.mxu0 %v6885
    %v7284 = vpop.f32.mrf.mxu0
    %v7285 = vadd.f32 0.0, %v7284
    %7286 = vdwg.mxu0
    %7287 = vmatpush.msra.mxu0 0.0
    %7288 = vmatpush.msra.mxu0 0.0
    %7289 = vmatpush.msra.mxu0 0.0
    %7290 = vmatpush.msra.mxu0 0.0
    %7291 = vmatpush.msra.mxu0 0.0
    %7292 = vmatpush.msra.mxu0 %v7099
    %7293 = vmatpush.msra.mxu0 %v7091
    %7294 = vmatpush.msra.mxu0 %v7083
    %7295 = vmatpush.msra.mxu0 %v7075
    %7296 = vmatpush.msra.mxu0 %v7067
    %7297 = vmatpush.msra.mxu0 %v7059
    %7298 = vmatpush.msra.mxu0 %v7051
    %7299 = vmatpush.msra.mxu0 %v7043
    %7300 = vmatpush.msra.mxu0 %v7035
    %7301 = vmatpush.msra.mxu0 %v7027
    %7302 = vmatpush.msra.mxu0 %v7019
    %7303 = vmatmul.f32.gmra.mxu0 %v7105
    %v7304 = vpop.f32.mrf.mxu0
    %v7305 = vadd.f32 %v7285, %v7304
    %7306 = vdwg.mxu0
    %7307 = vmatpush.msra.mxu0 %v7012
    %7308 = vmatpush.msra.mxu0 %v7004
    %7309 = vmatpush.msra.mxu0 %v6996
    %7310 = vmatpush.msra.mxu0 %v6988
    %7311 = vmatpush.msra.mxu0 %v6980
    %7312 = vmatpush.msra.mxu0 %v6972
    %7313 = vmatpush.msra.mxu0 %v6964
    %7314 = vmatpush.msra.mxu0 %v6956
    %7315 = vmatpush.msra.mxu0 %v6948
    %7316 = vmatpush.msra.mxu0 %v6940
    %7317 = vmatpush.msra.mxu0 %v6932
    %7318 = vmatpush.msra.mxu0 %v6924
    %7319 = vmatpush.msra.mxu0 %v6916
    %7320 = vmatpush.msra.mxu0 %v6908
    %7321 = vmatpush.msra.mxu0 %v6900
    %7322 = vmatpush.msra.mxu0 %v6892
    %7323 = vmatmul.f32.gmra.mxu0 %v6885
    %v7324 = vpop.f32.mrf.mxu0
    %v7325 = vadd.f32 0.0, %v7324
    %7326 = vdwg.mxu0
    %7327 = vmatpush.msra.mxu0 0.0
    %7328 = vmatpush.msra.mxu0 0.0
    %7329 = vmatpush.msra.mxu0 0.0
    %7330 = vmatpush.msra.mxu0 0.0
    %7331 = vmatpush.msra.mxu0 0.0
    %7332 = vmatpush.msra.mxu0 %v7100
    %7333 = vmatpush.msra.mxu0 %v7092
    %7334 = vmatpush.msra.mxu0 %v7084
    %7335 = vmatpush.msra.mxu0 %v7076
    %7336 = vmatpush.msra.mxu0 %v7068
    %7337 = vmatpush.msra.mxu0 %v7060
    %7338 = vmatpush.msra.mxu0 %v7052
    %7339 = vmatpush.msra.mxu0 %v7044
    %7340 = vmatpush.msra.mxu0 %v7036
    %7341 = vmatpush.msra.mxu0 %v7028
    %7342 = vmatpush.msra.mxu0 %v7020
    %7343 = vmatmul.f32.gmra.mxu0 %v7105
    %v7344 = vpop.f32.mrf.mxu0
    %v7345 = vadd.f32 %v7325, %v7344
    %7346 = vdwg.mxu0
    %7347 = vmatpush.msra.mxu0 %v7013
    %7348 = vmatpush.msra.mxu0 %v7005
    %7349 = vmatpush.msra.mxu0 %v6997
    %7350 = vmatpush.msra.mxu0 %v6989
    %7351 = vmatpush.msra.mxu0 %v6981
    %7352 = vmatpush.msra.mxu0 %v6973
    %7353 = vmatpush.msra.mxu0 %v6965
    %7354 = vmatpush.msra.mxu0 %v6957
    %7355 = vmatpush.msra.mxu0 %v6949
    %7356 = vmatpush.msra.mxu0 %v6941
    %7357 = vmatpush.msra.mxu0 %v6933
    %7358 = vmatpush.msra.mxu0 %v6925
    %7359 = vmatpush.msra.mxu0 %v6917
    %7360 = vmatpush.msra.mxu0 %v6909
    %7361 = vmatpush.msra.mxu0 %v6901
    %7362 = vmatpush.msra.mxu0 %v6893
    %7363 = vmatmul.f32.gmra.mxu0 %v6885
    %v7364 = vpop.f32.mrf.mxu0
    %v7365 = vadd.f32 0.0, %v7364
    %7366 = vdwg.mxu0
    %7367 = vmatpush.msra.mxu0 0.0
    %7368 = vmatpush.msra.mxu0 0.0
    %7369 = vmatpush.msra.mxu0 0.0
    %7370 = vmatpush.msra.mxu0 0.0
    %7371 = vmatpush.msra.mxu0 0.0
    %7372 = vmatpush.msra.mxu0 %v7101
    %7373 = vmatpush.msra.mxu0 %v7093
    %7374 = vmatpush.msra.mxu0 %v7085
    %7375 = vmatpush.msra.mxu0 %v7077
    %7376 = vmatpush.msra.mxu0 %v7069
    %7377 = vmatpush.msra.mxu0 %v7061
    %7378 = vmatpush.msra.mxu0 %v7053
    %7379 = vmatpush.msra.mxu0 %v7045
    %7380 = vmatpush.msra.mxu0 %v7037
    %7381 = vmatpush.msra.mxu0 %v7029
    %7382 = vmatpush.msra.mxu0 %v7021
    %7383 = vmatmul.f32.gmra.mxu0 %v7105
    %v7384 = vpop.f32.mrf.mxu0
    %v7385 = vadd.f32 %v7365, %v7384
    %7386 = vdwg.mxu0
    %7387 = vmatpush.msra.mxu0 %v7014
    %7388 = vmatpush.msra.mxu0 %v7006
    %7389 = vmatpush.msra.mxu0 %v6998
    %7390 = vmatpush.msra.mxu0 %v6990
    %7391 = vmatpush.msra.mxu0 %v6982
    %7392 = vmatpush.msra.mxu0 %v6974
    %7393 = vmatpush.msra.mxu0 %v6966
    %7394 = vmatpush.msra.mxu0 %v6958
    %7395 = vmatpush.msra.mxu0 %v6950
    %7396 = vmatpush.msra.mxu0 %v6942
    %7397 = vmatpush.msra.mxu0 %v6934
    %7398 = vmatpush.msra.mxu0 %v6926
    %7399 = vmatpush.msra.mxu0 %v6918
    %7400 = vmatpush.msra.mxu0 %v6910
    %7401 = vmatpush.msra.mxu0 %v6902
    %7402 = vmatpush.msra.mxu0 %v6894
    %7403 = vmatmul.f32.gmra.mxu0 %v6885
    %v7404 = vpop.f32.mrf.mxu0
    %v7405 = vadd.f32 0.0, %v7404
    %7406 = vdwg.mxu0
    %7407 = vmatpush.msra.mxu0 0.0
    %7408 = vmatpush.msra.mxu0 0.0
    %7409 = vmatpush.msra.mxu0 0.0
    %7410 = vmatpush.msra.mxu0 0.0
    %7411 = vmatpush.msra.mxu0 0.0
    %7412 = vmatpush.msra.mxu0 %v7102
    %7413 = vmatpush.msra.mxu0 %v7094
    %7414 = vmatpush.msra.mxu0 %v7086
    %7415 = vmatpush.msra.mxu0 %v7078
    %7416 = vmatpush.msra.mxu0 %v7070
    %7417 = vmatpush.msra.mxu0 %v7062
    %7418 = vmatpush.msra.mxu0 %v7054
    %7419 = vmatpush.msra.mxu0 %v7046
    %7420 = vmatpush.msra.mxu0 %v7038
    %7421 = vmatpush.msra.mxu0 %v7030
    %7422 = vmatpush.msra.mxu0 %v7022
    %7423 = vmatmul.f32.gmra.mxu0 %v7105
    %v7424 = vpop.f32.mrf.mxu0
    %v7425 = vadd.f32 %v7405, %v7424
    %7426 = vdwg.mxu0
    %v7427 = vld [vmem:[%s6] sm:$0xff]
    %v7428 = vld [vmem:[%s7] sm:$0xff]
    %v7429 = vadd.f32 %v7145, %v7185
    %v7430 = vadd.f32 %v7429, %v7225
    %v7431 = vadd.f32 %v7430, %v7265
    %v7432 = vadd.f32 %v7431, %v7305
    %v7433 = vadd.f32 %v7432, %v7345
    %v7434 = vadd.f32 %v7433, %v7385
    %v7435 = vadd.f32 %v7434, %v7425
    %7436 = vadd.xlane.f32.xlu0 %v7435
    %v7437 = vpop.xlane.xlu0 %7436
    %v7438 = vmul.f32 %v7145, %v7145
    %v7439 = vmul.f32 %v7185, %v7185
    %v7440 = vmul.f32 %v7225, %v7225
    %v7441 = vmul.f32 %v7265, %v7265
    %v7442 = vmul.f32 %v7305, %v7305
    %v7443 = vmul.f32 %v7345, %v7345
    %v7444 = vmul.f32 %v7385, %v7385
    %v7445 = vmul.f32 %v7425, %v7425
    %v7446 = vadd.f32 %v7438, %v7439
    %v7447 = vadd.f32 %v7446, %v7440
    %v7448 = vadd.f32 %v7447, %v7441
    %v7449 = vadd.f32 %v7448, %v7442
    %v7450 = vadd.f32 %v7449, %v7443
    %v7451 = vadd.f32 %v7450, %v7444
    %v7452 = vadd.f32 %v7451, %v7445
    %7453 = vadd.xlane.f32.xlu0 %v7452
    %v7454 = vpop.xlane.xlu0 %7453
    %v7455 = vmul.f32 %v7437, 0.0009765625
    %v7456 = vmul.f32 %v7454, 0.0009765625
    %v7457 = vmul.f32 %v7455, %v7455
    %v7458 = vsub.f32 %v7456, %v7457
    %v7459 = vadd.f32 %v7458, 1e-05
    %v7460 = vrsqrt.pop %v7459
    %v7461 = vmul.f32 %v7460, %v7459
    %v7462 = vmul.f32 %v7461, %v7460
    %v7463 = vmul.f32 0.5, %v7462
    %v7464 = vsub.f32 1.5, %v7463
    %v7465 = vmul.f32 %v7460, %v7464
    %vm7466 = vweird.f32 %v7459
    %vm7467 = vweird.f32 %v7460
    %vm7468 = vmor %vm7466, %vm7467
    %v7469 = vsel %vm7468, %v7460, %v7465
    %v7470 = vmul.f32 %v7469, %v7427
    %v7471 = vmul.f32 %v7455, %v7470
    %v7472 = vsub.f32 %v7428, %v7471
    %7474 = vset.pattern.permute.xlu0 0
    %7475 = vperm.xlu0 %7474, %v7470
    %v7476 = vpop.permute.xlu0 %7475
    %v7478 = vmul.f32 %v7145, %v7476
    %v7479 = vmul.f32 %v7185, %v7476
    %v7480 = vmul.f32 %v7225, %v7476
    %v7481 = vmul.f32 %v7265, %v7476
    %v7482 = vmul.f32 %v7305, %v7476
    %v7483 = vmul.f32 %v7345, %v7476
    %v7484 = vmul.f32 %v7385, %v7476
    %v7485 = vmul.f32 %v7425, %v7476
    %7487 = vset.pattern.permute.xlu0 0
    %7488 = vperm.xlu0 %7487, %v7472
    %v7489 = vpop.permute.xlu0 %7488
    %v7491 = vadd.f32 %v7478, %v7489
    %v7492 = vadd.f32 %v7479, %v7489
    %v7493 = vadd.f32 %v7480, %v7489
    %v7494 = vadd.f32 %v7481, %v7489
    %v7495 = vadd.f32 %v7482, %v7489
    %v7496 = vadd.f32 %v7483, %v7489
    %v7497 = vadd.f32 %v7484, %v7489
    %v7498 = vadd.f32 %v7485, %v7489
    %v7499 = vmax.f32 %v7491, 0.0
    %v7500 = vmax.f32 %v7492, 0.0
    %v7501 = vmax.f32 %v7493, 0.0
    %v7502 = vmax.f32 %v7494, 0.0
    %v7503 = vmax.f32 %v7495, 0.0
    %v7504 = vmax.f32 %v7496, 0.0
    %v7505 = vmax.f32 %v7497, 0.0
    %v7506 = vmax.f32 %v7498, 0.0
    %7507 = vst [vmem:[#allocation10] sm:$0xff] %v7499
    %7508 = vst [vmem:[#allocation10 + $0x8] sm:$0xff] %v7500
    %7509 = vst [vmem:[#allocation10 + $0x10] sm:$0xff] %v7501
    %7510 = vst [vmem:[#allocation10 + $0x18] sm:$0xff] %v7502
    %s7511 = scalar_lea.vmem [#allocation10], 32
    %7512 = vst [vmem:[%s7511] sm:$0xff] %v7503
    %7513 = vst [vmem:[%s7511 + $0x8] sm:$0xff] %v7504
    %7514 = vst [vmem:[%s7511 + $0x10] sm:$0xff] %v7505
    %7515 = vst [vmem:[%s7511 + $0x18] sm:$0xff] %v7506
    // Predicated region
    $region42: #{tpu_custom_call.1} parent=1 // pred_check
      _
    $region43: #{tpu_custom_call.1} parent=1 // pred_check_branch
      %7517 = sbr.rel (0) target = $region45
    $region44: #{tpu_custom_call.1} parent=1 // pred_region
      %7519 = vsyncadd [#allocation7], 0
      %s7520 = sshll.u32 [#allocation10], 4
      %s7521 = int_to_ptr.vmem [resolvable:$true] %s7520
      %s7522 = sshll.u32 %s8, 4
      %s7523 = int_to_ptr.hbm [resolvable:$true] %s7522
      %7528 = dma.vmem_to_hbm [thread:$0]  %s7521, 1024, %s7523, [#allocation7], 512, 512, 32
    $region45: #{tpu_custom_call.1} parent=1 // pred_fallthru
      _
    // Predicated region
    $region46: #{tpu_custom_call.1} parent=1 // pred_check
      _
    $region47: #{tpu_custom_call.1} parent=1 // pred_check_branch
      %7530 = sbr.rel (0) target = $region49
    $region48: #{tpu_custom_call.1} parent=1 // pred_region
      %7532 = dma.done [#allocation7], 1024
    $region49: #{tpu_custom_call.1} parent=1 // pred_fallthru
      _
    %7533 = vsyncpa [#allocation6], 1
    %7534 = vsyncpa [#allocation9], 1
    %7535 = vsyncpa [#allocation7], 1

</llo_original>
